<compile_context>
chip_gen: v7x
topology: tpu7x:2x2x1
jax: 0.10.0
libtpu: 0.0.40
codegen_flags: <defaults>
</compile_context>

<pallas_src>
import jax
import jax.numpy as jnp
from jax.experimental import pallas as pl
from jax.experimental.pallas import tpu as pltpu

BP = 8              # batch rows padded to one sublane tile (raise to batch more sentences)
_UNROLL_T_MAX = 32  # fully unroll the recurrence below this sequence length


# -----------------------------------------------------------------------------------
# Fused kernel: tag BiLSTM -> word BiLSTM -> masked attention pooling -> MLP -> logits
# -----------------------------------------------------------------------------------
def _fused_forward_kernel(
    # activations
    w2d_ref, t2d_ref, mask_ref,
    # tag BiLSTM (fwd+bwd input projection fused along N)
    wih_t, whh_tf, whh_tb, b_t,
    # word BiLSTM (input projection split by source block, fwd+bwd fused along N)
    ww, wtf, wtb, whh_wf, whh_wb, b_w,
    # self-attention
    waf, wab, ba, va, vb,
    # mlp + classifier
    wmf, wmb, bm, wc, bc,
    # output
    out_ref,
    # scratch
    gx_t, gx_w, h_tf, h_tb, h_wf, h_wb,
):
    f32 = jnp.float32
    T, B, _ = mask_ref.shape          # B == BP (padded batch, one sublane tile)
    Ht = h_tf.shape[1]                # true tag-LSTM hidden width
    Hw = h_wf.shape[1]                # true word-LSTM hidden width

    def mm(a, b):
        return jnp.dot(a, b, preferred_element_type=f32)

    def lstm_cell(gx, h_prev, c_prev, m, whh, H):
        # gx/gates: [B, 4H] packed (i|f|g|o).  One sigmoid + one tanh over the packed
        # vreg, then cheap static lane slices pick the four gates.
        gates = gx + mm(h_prev, whh)
        sig = jax.nn.sigmoid(gates)
        tnh = jnp.tanh(gates)
        i = sig[:, 0:H]
        f = sig[:, H:2 * H]
        g = tnh[:, 2 * H:3 * H]
        o = sig[:, 3 * H:4 * H]
        c_new = f * c_prev + i * g
        h_new = o * jnp.tanh(c_new)
        h_out = m * h_new                               # packed-seq: zero output at pads
        h_keep = h_out + (1.0 - m) * h_prev             # freeze carries at pads
        c_keep = m * c_new + (1.0 - m) * c_prev
        return h_out, h_keep, c_keep

    def bilstm(gx_ref, whh_f_ref, whh_b_ref, hf_ref, hb_ref, H):
        whhf = whh_f_ref[...]                           # hoisted out of the serial loop
        whhb = whh_b_ref[...]
        zero = jnp.zeros((B, H), f32)

        def step(s_rows, r_rows, m_s, m_r, carry):
            hf, cf, hb, cb = carry
            of, hf, cf = lstm_cell(gx_ref[s_rows, 0:4 * H], hf, cf, m_s, whhf, H)
            ob, hb, cb = lstm_cell(gx_ref[r_rows, 4 * H:8 * H], hb, cb, m_r, whhb, H)
            hf_ref[s_rows, :] = of
            hb_ref[r_rows, :] = ob
            return hf, cf, hb, cb

        if T <= _UNROLL_T_MAX:
            # Small T: static Python unroll (full LLO scheduler visibility).
            carry = (zero, zero, zero, zero)
            for s in range(T):
                r = T - 1 - s
                carry = step(slice(s * B, (s + 1) * B), slice(r * B, (r + 1) * B),
                             mask_ref[s], mask_ref[r], carry)
        else:
            # Large T: rolled loop keeps vreg pressure and compile time bounded.
            def body(s, carry):
                r = T - 1 - s
                s_rows = pl.ds(pl.multiple_of(s * B, B), B)
                r_rows = pl.ds(pl.multiple_of(r * B, B), B)
                return step(s_rows, r_rows, mask_ref[s], mask_ref[r], carry)
            jax.lax.fori_loop(0, T, body, (zero, zero, zero, zero))

    # ---- Phase 1: tag BiLSTM -------------------------------------------------------
    # Input projection hoisted out of the recurrence; fwd+bwd fused along N.
    gx_t[...] = mm(t2d_ref[...], wih_t[...]) + b_t[...]            # [T*B, 8*Ht]
    bilstm(gx_t, whh_tf, whh_tb, h_tf, h_tb, Ht)

    # ---- Phase 2: word BiLSTM ------------------------------------------------------
    # cat([word_emb, h_tag_fwd, h_tag_bwd]) @ W_ih realised block-wise (no concat).
    gx_w[...] = (mm(w2d_ref[...], ww[...]) + mm(h_tf[...], wtf[...])
                 + mm(h_tb[...], wtb[...]) + b_w[...])             # [T*B, 8*Hw]
    bilstm(gx_w, whh_wf, whh_wb, h_wf, h_wb, Hw)

    # ---- Phase 3: masked self-attention pooling + MLP + classifier ------------------
    u = jnp.tanh(mm(h_wf[...], waf[...]) + mm(h_wb[...], wab[...]) + ba[...])   # [T*B, A]
    sc = jnp.sum(u * va[...], axis=-1, keepdims=True) + vb[...]                 # [T*B, 1]

    NEG = -1e30
    sc_m = [jnp.where(mask_ref[s] > 0.0, sc[s * B:(s + 1) * B, :], NEG) for s in range(T)]
    mx = sc_m[0]
    for s in range(1, T):
        mx = jnp.maximum(mx, sc_m[s])
    e = [jnp.exp(sc_m[s] - mx) for s in range(T)]        # masked terms underflow to 0 exactly
    denom = e[0]
    for s in range(1, T):
        denom = denom + e[s]
    inv = pl.reciprocal(denom, approx=True)              # denom >= 1 always (no clamp needed)

    sent_f = jnp.zeros((B, Hw), f32)
    sent_b = jnp.zeros((B, Hw), f32)
    for s in range(T):
        a_s = e[s] * inv                                  # [B, 1]
        sent_f = sent_f + a_s * h_wf[s * B:(s + 1) * B, :]
        sent_b = sent_b + a_s * h_wb[s * B:(s + 1) * B, :]

    mlp = mm(sent_f, wmf[...]) + mm(sent_b, wmb[...]) + bm[...]    # [B, mlp_dim]
    logits = mm(mlp, wc[...]) + bc[...]                            # [B, n_class]
    out_ref[...] = logits.astype(out_ref.dtype)


# -----------------------------------------------------------------------------------
# Parameter init (true shapes, deterministic synthetic) and packing to kernel layout.
# -----------------------------------------------------------------------------------
def init_params(key, vocab_size, word_dim, n_sentiment_tag, tag_dim,
                lstm_tag_dim, lstm_dim, mlp_dim, n_class):
    scale = 0.1
    keys = iter(jax.random.split(key, 24))

    def nrm(shape):
        return jax.random.normal(next(keys), shape, jnp.float32) * scale

    def lstm_dir(din, h):
        # weights stored [in_dim, 4*h] with PyTorch gate order (i, f, g, o)
        return {"w_ih": nrm((din, 4 * h)), "w_hh": nrm((h, 4 * h)), "b": nrm((1, 4 * h))}

    word_emb = nrm((vocab_size, word_dim))
    tag_emb = nrm((n_sentiment_tag + 1, tag_dim)).at[0].set(0.0)   # padding_idx=0
    din_word = word_dim + 2 * lstm_tag_dim                         # == lstm_dim
    return {
        "word_emb": word_emb,
        "tag_emb": tag_emb,
        "tag_f": lstm_dir(tag_dim, lstm_tag_dim),
        "tag_b": lstm_dir(tag_dim, lstm_tag_dim),
        "word_f": lstm_dir(din_word, lstm_dim),
        "word_b": lstm_dir(din_word, lstm_dim),
        "attn_w": nrm((2 * lstm_dim, lstm_dim)),
        "attn_b": nrm((1, lstm_dim)),
        "attn_v": nrm((1, lstm_dim)),
        "attn_vb": nrm((1, 1)),
        "mlp_w": nrm((2 * lstm_dim, mlp_dim)),
        "mlp_b": nrm((1, mlp_dim)),
        "cls_w": nrm((mlp_dim, n_class)),
        "cls_b": nrm((1, n_class)),
    }


def pack_kernel_weights(p):
    """Pack weights at their true widths; fuse fwd/bwd input projections along N."""
    f32 = jnp.float32

    def catn(a, b):
        return jnp.concatenate([jnp.asarray(a, f32), jnp.asarray(b, f32)], axis=1)

    Ht = p["tag_f"]["w_hh"].shape[0]
    Hw = p["word_f"]["w_hh"].shape[0]
    wd = p["word_emb"].shape[1]

    # tag layer
    wih_t = catn(p["tag_f"]["w_ih"], p["tag_b"]["w_ih"])    # [tag_dim, 8*Ht]
    b_t = catn(p["tag_f"]["b"], p["tag_b"]["b"])            # [1, 8*Ht]
    whh_tf = jnp.asarray(p["tag_f"]["w_hh"], f32)           # [Ht, 4*Ht]
    whh_tb = jnp.asarray(p["tag_b"]["w_hh"], f32)

    # word layer: split w_ih by input block (word_emb | h_tag_fwd | h_tag_bwd)
    wf, wb = p["word_f"]["w_ih"], p["word_b"]["w_ih"]       # [wd + 2*Ht, 4*Hw]
    ww = catn(wf[:wd], wb[:wd])                             # [wd, 8*Hw]
    wtf = catn(wf[wd:wd + Ht], wb[wd:wd + Ht])              # [Ht, 8*Hw]
    wtb = catn(wf[wd + Ht:], wb[wd + Ht:])                  # [Ht, 8*Hw]
    b_w = catn(p["word_f"]["b"], p["word_b"]["b"])          # [1, 8*Hw]
    whh_wf = jnp.asarray(p["word_f"]["w_hh"], f32)          # [Hw, 4*Hw]
    whh_wb = jnp.asarray(p["word_b"]["w_hh"], f32)

    # attention / mlp: split their 2*Hw input dim into fwd/bwd row blocks
    waf = jnp.asarray(p["attn_w"][:Hw], f32)
    wab = jnp.asarray(p["attn_w"][Hw:], f32)
    wmf = jnp.asarray(p["mlp_w"][:Hw], f32)
    wmb = jnp.asarray(p["mlp_w"][Hw:], f32)

    return (wih_t, whh_tf, whh_tb, b_t,
            ww, wtf, wtb, whh_wf, whh_wb, b_w,
            waf, wab,
            jnp.asarray(p["attn_b"], f32), jnp.asarray(p["attn_v"], f32),
            jnp.asarray(p["attn_vb"], f32),
            wmf, wmb, jnp.asarray(p["mlp_b"], f32),
            jnp.asarray(p["cls_w"], f32), jnp.asarray(p["cls_b"], f32))


# -----------------------------------------------------------------------------------
# Forward pass (embedding lookups in XLA, everything else in the fused Pallas kernel).
# -----------------------------------------------------------------------------------
def forward(params, word_inputs, tag_inputs, seq_lengths, mask):
    del seq_lengths  # sequence lengths are fully encoded by `mask` in the masked recurrence
    B, T = word_inputs.shape
    assert B <= BP, "raise BP (multiple of 8) to fit the batch"
    Ht = params["tag_f"]["w_hh"].shape[0]
    Hw = params["word_f"]["w_hh"].shape[0]
    n_class = params["cls_w"].shape[1]

    # Embedding lookups (XLA gather glue).
    # TODO(synk): nn.Dropout(p=0.5) is treated as eval-mode identity (no training dropout).
    word_emb = jnp.take(params["word_emb"], word_inputs, axis=0)          # [B, T, word_dim]
    tag_emb = jnp.take(params["tag_emb"], tag_inputs + 1, axis=0)         # [B, T, tag_dim]

    # Pad batch to BP sublanes, go time-major and flatten to [T*BP, feat].
    def to_rows(x):
        x = jnp.pad(x.astype(jnp.float32), ((0, BP - B), (0, 0), (0, 0)))
        return jnp.transpose(x, (1, 0, 2)).reshape(T * BP, x.shape[-1])

    w2d = to_rows(word_emb)
    t2d = to_rows(tag_emb)
    m3 = jnp.transpose(jnp.pad(mask.astype(jnp.float32), ((0, BP - B), (0, 0))),
                       (1, 0))[:, :, None]                                # [T, BP, 1]

    weights = pack_kernel_weights(params)

    logits_padded = pl.pallas_call(
        _fused_forward_kernel,
        out_shape=jax.ShapeDtypeStruct((BP, n_class), jnp.float32),
        scratch_shapes=[
            pltpu.VMEM((T * BP, 8 * Ht), jnp.float32),  # gx_tag  (fwd | bwd gates)
            pltpu.VMEM((T * BP, 8 * Hw), jnp.float32),  # gx_word (fwd | bwd gates)
            pltpu.VMEM((T * BP, Ht), jnp.float32),      # h_tag_fwd
            pltpu.VMEM((T * BP, Ht), jnp.float32),      # h_tag_bwd
            pltpu.VMEM((T * BP, Hw), jnp.float32),      # h_word_fwd
            pltpu.VMEM((T * BP, Hw), jnp.float32),      # h_word_bwd
        ],
    )(w2d, t2d, m3, *weights)

    return logits_padded[:B, :]


# -----------------------------------------------------------------------------------
# Pure-JAX reference (unpadded) for a correctness cross-check.
# -----------------------------------------------------------------------------------
def _reference_forward(params, word_inputs, tag_inputs, mask, lstm_tag_dim, lstm_dim):
    hi = jax.lax.Precision.HIGHEST
    B, T = word_inputs.shape
    word_emb = jnp.take(params["word_emb"], word_inputs, axis=0)
    tag_emb = jnp.take(params["tag_emb"], tag_inputs + 1, axis=0)
    m = mask.astype(jnp.float32)[:, :, None]                              # [B, T, 1]

    def run_dir(x, d, h_dim, reverse):
        def cell(carry, inp):
            h, c = carry
            x_t, m_t = inp
            gates = (jnp.dot(x_t, d["w_ih"], precision=hi)
                     + jnp.dot(h, d["w_hh"], precision=hi) + d["b"])
            i, f, g, o = jnp.split(gates, 4, axis=-1)
            i, f, o = jax.nn.sigmoid(i), jax.nn.sigmoid(f), jax.nn.sigmoid(o)
            g = jnp.tanh(g)
            c_new = f * c + i * g
            h_new = o * jnp.tanh(c_new)
            h_out = m_t * h_new
            return (h_out + (1 - m_t) * h, m_t * c_new + (1 - m_t) * c), h_out

        xs = (jnp.transpose(x, (1, 0, 2)), jnp.transpose(m, (1, 0, 2)))
        if reverse:
            xs = (xs[0][::-1], xs[1][::-1])
        init = (jnp.zeros((B, h_dim), jnp.float32), jnp.zeros((B, h_dim), jnp.float32))
        _, hs = jax.lax.scan(cell, init, xs)
        if reverse:
            hs = hs[::-1]
        return jnp.transpose(hs, (1, 0, 2))

    hs_tag = jnp.concatenate([run_dir(tag_emb, params["tag_f"], lstm_tag_dim, False),
                              run_dir(tag_emb, params["tag_b"], lstm_tag_dim, True)], -1)
    x2 = jnp.concatenate([word_emb, hs_tag], -1)
    hs = jnp.concatenate([run_dir(x2, params["word_f"], lstm_dim, False),
                          run_dir(x2, params["word_b"], lstm_dim, True)], -1)

    u = jnp.tanh(jnp.einsum("btd,dh->bth", hs, params["attn_w"], precision=hi)
                 + params["attn_b"])
    sc = jnp.einsum("bth,h->bt", u, params["attn_v"][0], precision=hi) + params["attn_vb"][0, 0]
    sc = jnp.where(mask > 0, sc, -1e30)
    alpha = jax.nn.softmax(sc, axis=1)
    sentence = jnp.einsum("bt,btd->bd", alpha, hs, precision=hi)
    mlp = jnp.dot(sentence, params["mlp_w"], precision=hi) + params["mlp_b"]
    return jnp.dot(mlp, params["cls_w"], precision=hi) + params["cls_b"]


if __name__ == "__main__":
    # Small shapes consistent with the module (lstm_dim must equal word_dim + 2*lstm_tag_dim
    # for torch.cat -> bilstm to typecheck, and lstm_dim > 2*lstm_tag_dim per the assert).
    vocab_size, word_dim = 50, 16
    n_sentiment_tag, tag_dim = 5, 8
    lstm_tag_dim = 8
    lstm_dim = word_dim + 2 * lstm_tag_dim            # 32
    mlp_dim, n_class = 32, 3
    B, T = 2, 8
    assert lstm_dim > 2 * lstm_tag_dim

    key = jax.random.PRNGKey(0)
    kp, kw, kt = jax.random.split(key, 3)
    params = init_params(kp, vocab_size, word_dim, n_sentiment_tag, tag_dim,
                         lstm_tag_dim, lstm_dim, mlp_dim, n_class)

    word_inputs = jax.random.randint(kw, (B, T), 1, vocab_size, dtype=jnp.int32)
    tag_inputs = jax.random.randint(kt, (B, T), 0, n_sentiment_tag, dtype=jnp.int32)
    seq_lengths = jnp.array([T, 5], dtype=jnp.int32)
    mask = (jnp.arange(T)[None, :] < seq_lengths[:, None]).astype(jnp.float32)

    fwd = jax.jit(forward)
    logits = fwd(params, word_inputs, tag_inputs, seq_lengths, mask)
    logits = jax.block_until_ready(logits)

    assert logits.shape == (B, n_class)
    assert bool(jnp.all(jnp.isfinite(logits)))

    ref = _reference_forward(params, word_inputs, tag_inputs, mask, lstm_tag_dim, lstm_dim)
    assert bool(jnp.allclose(logits, ref, rtol=2e-3, atol=2e-3))

    print("KERNEL_OK")
</pallas_src>

<mosaic_0001>
module attributes {stable_mosaic.version = 11 : i64} {
  func.func @_fused_forward_kernel(%arg0: memref<64x16xf32, #tpu.memory_space<vmem>>, %arg1: memref<64x8xf32, #tpu.memory_space<vmem>>, %arg2: memref<8x8x1xf32, #tpu.memory_space<vmem>>, %arg3: memref<8x64xf32, #tpu.memory_space<vmem>>, %arg4: memref<8x32xf32, #tpu.memory_space<vmem>>, %arg5: memref<8x32xf32, #tpu.memory_space<vmem>>, %arg6: memref<1x64xf32, #tpu.memory_space<vmem>>, %arg7: memref<16x256xf32, #tpu.memory_space<vmem>>, %arg8: memref<8x256xf32, #tpu.memory_space<vmem>>, %arg9: memref<8x256xf32, #tpu.memory_space<vmem>>, %arg10: memref<32x128xf32, #tpu.memory_space<vmem>>, %arg11: memref<32x128xf32, #tpu.memory_space<vmem>>, %arg12: memref<1x256xf32, #tpu.memory_space<vmem>>, %arg13: memref<32x32xf32, #tpu.memory_space<vmem>>, %arg14: memref<32x32xf32, #tpu.memory_space<vmem>>, %arg15: memref<1x32xf32, #tpu.memory_space<vmem>>, %arg16: memref<1x32xf32, #tpu.memory_space<vmem>>, %arg17: memref<1x1xf32, #tpu.memory_space<vmem>>, %arg18: memref<32x32xf32, #tpu.memory_space<vmem>>, %arg19: memref<32x32xf32, #tpu.memory_space<vmem>>, %arg20: memref<1x32xf32, #tpu.memory_space<vmem>>, %arg21: memref<32x3xf32, #tpu.memory_space<vmem>>, %arg22: memref<1x3xf32, #tpu.memory_space<vmem>>, %arg23: memref<8x3xf32, #tpu.memory_space<vmem>>, %arg24: memref<64x64xf32, #tpu.memory_space<vmem>>, %arg25: memref<64x256xf32, #tpu.memory_space<vmem>>, %arg26: memref<64x8xf32, #tpu.memory_space<vmem>>, %arg27: memref<64x8xf32, #tpu.memory_space<vmem>>, %arg28: memref<64x32xf32, #tpu.memory_space<vmem>>, %arg29: memref<64x32xf32, #tpu.memory_space<vmem>>) attributes {dimension_semantics = [], scalar_prefetch = 0 : i64, scratch_operands = 6 : i64, tpu.core_type = #tpu.core_type<tc>} {
    %c0 = arith.constant 0 : index
    %c0_0 = arith.constant 0 : index
    %0 = vector.load %arg1[%c0, %c0_0] : memref<64x8xf32, #tpu.memory_space<vmem>>, vector<64x8xf32>
    %c0_1 = arith.constant 0 : index
    %c0_2 = arith.constant 0 : index
    %1 = vector.load %arg3[%c0_1, %c0_2] : memref<8x64xf32, #tpu.memory_space<vmem>>, vector<8x64xf32>
    %cst = arith.constant dense<0.000000e+00> : vector<64x64xf32>
    %2 = tpu.matmul %0, %1, %cst {dimension_numbers = #tpu.dot_dimension_numbers<[1], [0], [0], [1], [0, 0, 1, 1], [], []>} : vector<64x8xf32>, vector<8x64xf32>, vector<64x64xf32> -> vector<64x64xf32>
    %c0_3 = arith.constant 0 : index
    %c0_4 = arith.constant 0 : index
    %3 = vector.load %arg6[%c0_3, %c0_4] : memref<1x64xf32, #tpu.memory_space<vmem>>, vector<1x64xf32>
    %4 = vector.broadcast %3 : vector<1x64xf32> to vector<64x64xf32>
    %5 = arith.addf %2, %4 : vector<64x64xf32>
    %c0_5 = arith.constant 0 : index
    %c0_6 = arith.constant 0 : index
    %6 = vector.load %arg24[%c0_5, %c0_6] : memref<64x64xf32, #tpu.memory_space<vmem>>, vector<64x64xf32>
    tpu.vector_store %arg24[%c0_5, %c0_6], %5 {strides = array<i32>} : memref<64x64xf32, #tpu.memory_space<vmem>>, vector<64x64xf32>,
    %c0_7 = arith.constant 0 : index
    %c0_8 = arith.constant 0 : index
    %7 = vector.load %arg4[%c0_7, %c0_8] : memref<8x32xf32, #tpu.memory_space<vmem>>, vector<8x32xf32>
    %c0_9 = arith.constant 0 : index
    %c0_10 = arith.constant 0 : index
    %8 = vector.load %arg5[%c0_9, %c0_10] : memref<8x32xf32, #tpu.memory_space<vmem>>, vector<8x32xf32>
    %cst_11 = arith.constant 0.000000e+00 : f32
    %9 = vector.broadcast %cst_11 : f32 to vector<8x8xf32>
    %c0_12 = arith.constant 0 : index
    %c0_13 = arith.constant 0 : index
    %c0_14 = arith.constant 0 : index
    %10 = vector.load %arg2[%c0_12, %c0_13, %c0_14] : memref<8x8x1xf32, #tpu.memory_space<vmem>>, vector<1x8x1xf32>
    %11 = vector.shape_cast %10 : vector<1x8x1xf32> to vector<8x1xf32>
    %c7 = arith.constant 7 : index
    %c0_15 = arith.constant 0 : index
    %c0_16 = arith.constant 0 : index
    %12 = vector.load %arg2[%c7, %c0_15, %c0_16] : memref<8x8x1xf32, #tpu.memory_space<vmem>>, vector<1x8x1xf32>
    %13 = vector.shape_cast %12 : vector<1x8x1xf32> to vector<8x1xf32>
    %c0_17 = arith.constant 0 : index
    %c0_18 = arith.constant 0 : index
    %14 = vector.load %arg24[%c0_17, %c0_18] : memref<64x64xf32, #tpu.memory_space<vmem>>, vector<8x32xf32>
    %cst_19 = arith.constant dense<0.000000e+00> : vector<8x32xf32>
    %15 = tpu.matmul %9, %7, %cst_19 {dimension_numbers = #tpu.dot_dimension_numbers<[1], [0], [0], [1], [0, 0, 1, 1], [], []>} : vector<8x8xf32>, vector<8x32xf32>, vector<8x32xf32> -> vector<8x32xf32>
    %16 = arith.addf %14, %15 : vector<8x32xf32>
    %17 = arith.negf %16 : vector<8x32xf32>
    %18 = math.exp %17 : vector<8x32xf32>
    %cst_20 = arith.constant 1.000000e+00 : f32
    %19 = vector.broadcast %cst_20 : f32 to vector<8x32xf32>
    %20 = arith.addf %19, %18 : vector<8x32xf32>
    %21 = arith.divf %19, %20 : vector<8x32xf32>
    %22 = math.tanh %16 : vector<8x32xf32>
    %23 = vector.extract_strided_slice %21 {offsets = [0, 0], sizes = [8, 8], strides = [1, 1]} : vector<8x32xf32> to vector<8x8xf32>
    %24 = vector.extract_strided_slice %21 {offsets = [0, 8], sizes = [8, 8], strides = [1, 1]} : vector<8x32xf32> to vector<8x8xf32>
    %25 = vector.extract_strided_slice %22 {offsets = [0, 16], sizes = [8, 8], strides = [1, 1]} : vector<8x32xf32> to vector<8x8xf32>
    %26 = vector.extract_strided_slice %21 {offsets = [0, 24], sizes = [8, 8], strides = [1, 1]} : vector<8x32xf32> to vector<8x8xf32>
    %27 = arith.mulf %24, %9 : vector<8x8xf32>
    %28 = arith.mulf %23, %25 : vector<8x8xf32>
    %29 = arith.addf %27, %28 : vector<8x8xf32>
    %30 = math.tanh %29 : vector<8x8xf32>
    %31 = arith.mulf %26, %30 : vector<8x8xf32>
    %32 = vector.broadcast %11 : vector<8x1xf32> to vector<8x8xf32>
    %33 = arith.mulf %32, %31 : vector<8x8xf32>
    %cst_21 = arith.constant 1.000000e+00 : f32
    %34 = vector.broadcast %cst_21 : f32 to vector<8x1xf32>
    %35 = arith.subf %34, %11 : vector<8x1xf32>
    %36 = vector.broadcast %35 : vector<8x1xf32> to vector<8x8xf32>
    %37 = arith.mulf %36, %9 : vector<8x8xf32>
    %38 = arith.addf %33, %37 : vector<8x8xf32>
    %39 = vector.broadcast %11 : vector<8x1xf32> to vector<8x8xf32>
    %40 = arith.mulf %39, %29 : vector<8x8xf32>
    %cst_22 = arith.constant 1.000000e+00 : f32
    %41 = vector.broadcast %cst_22 : f32 to vector<8x1xf32>
    %42 = arith.subf %41, %11 : vector<8x1xf32>
    %43 = vector.broadcast %42 : vector<8x1xf32> to vector<8x8xf32>
    %44 = arith.mulf %43, %9 : vector<8x8xf32>
    %45 = arith.addf %40, %44 : vector<8x8xf32>
    %c56 = arith.constant 56 : index
    %c32 = arith.constant 32 : index
    %46 = vector.load %arg24[%c56, %c32] : memref<64x64xf32, #tpu.memory_space<vmem>>, vector<8x32xf32>
    %cst_23 = arith.constant dense<0.000000e+00> : vector<8x32xf32>
    %47 = tpu.matmul %9, %8, %cst_23 {dimension_numbers = #tpu.dot_dimension_numbers<[1], [0], [0], [1], [0, 0, 1, 1], [], []>} : vector<8x8xf32>, vector<8x32xf32>, vector<8x32xf32> -> vector<8x32xf32>
    %48 = arith.addf %46, %47 : vector<8x32xf32>
    %49 = arith.negf %48 : vector<8x32xf32>
    %50 = math.exp %49 : vector<8x32xf32>
    %cst_24 = arith.constant 1.000000e+00 : f32
    %51 = vector.broadcast %cst_24 : f32 to vector<8x32xf32>
    %52 = arith.addf %51, %50 : vector<8x32xf32>
    %53 = arith.divf %51, %52 : vector<8x32xf32>
    %54 = math.tanh %48 : vector<8x32xf32>
    %55 = vector.extract_strided_slice %53 {offsets = [0, 0], sizes = [8, 8], strides = [1, 1]} : vector<8x32xf32> to vector<8x8xf32>
    %56 = vector.extract_strided_slice %53 {offsets = [0, 8], sizes = [8, 8], strides = [1, 1]} : vector<8x32xf32> to vector<8x8xf32>
    %57 = vector.extract_strided_slice %54 {offsets = [0, 16], sizes = [8, 8], strides = [1, 1]} : vector<8x32xf32> to vector<8x8xf32>
    %58 = vector.extract_strided_slice %53 {offsets = [0, 24], sizes = [8, 8], strides = [1, 1]} : vector<8x32xf32> to vector<8x8xf32>
    %59 = arith.mulf %56, %9 : vector<8x8xf32>
    %60 = arith.mulf %55, %57 : vector<8x8xf32>
    %61 = arith.addf %59, %60 : vector<8x8xf32>
    %62 = math.tanh %61 : vector<8x8xf32>
    %63 = arith.mulf %58, %62 : vector<8x8xf32>
    %64 = vector.broadcast %13 : vector<8x1xf32> to vector<8x8xf32>
    %65 = arith.mulf %64, %63 : vector<8x8xf32>
    %cst_25 = arith.constant 1.000000e+00 : f32
    %66 = vector.broadcast %cst_25 : f32 to vector<8x1xf32>
    %67 = arith.subf %66, %13 : vector<8x1xf32>
    %68 = vector.broadcast %67 : vector<8x1xf32> to vector<8x8xf32>
    %69 = arith.mulf %68, %9 : vector<8x8xf32>
    %70 = arith.addf %65, %69 : vector<8x8xf32>
    %71 = vector.broadcast %13 : vector<8x1xf32> to vector<8x8xf32>
    %72 = arith.mulf %71, %61 : vector<8x8xf32>
    %cst_26 = arith.constant 1.000000e+00 : f32
    %73 = vector.broadcast %cst_26 : f32 to vector<8x1xf32>
    %74 = arith.subf %73, %13 : vector<8x1xf32>
    %75 = vector.broadcast %74 : vector<8x1xf32> to vector<8x8xf32>
    %76 = arith.mulf %75, %9 : vector<8x8xf32>
    %77 = arith.addf %72, %76 : vector<8x8xf32>
    %c0_27 = arith.constant 0 : index
    %c0_28 = arith.constant 0 : index
    %78 = vector.load %arg26[%c0_27, %c0_28] : memref<64x8xf32, #tpu.memory_space<vmem>>, vector<8x8xf32>
    tpu.vector_store %arg26[%c0_27, %c0_28], %33 {strides = array<i32>} : memref<64x8xf32, #tpu.memory_space<vmem>>, vector<8x8xf32>,
    %c56_29 = arith.constant 56 : index
    %c0_30 = arith.constant 0 : index
    %79 = vector.load %arg27[%c56_29, %c0_30] : memref<64x8xf32, #tpu.memory_space<vmem>>, vector<8x8xf32>
    tpu.vector_store %arg27[%c56_29, %c0_30], %65 {strides = array<i32>} : memref<64x8xf32, #tpu.memory_space<vmem>>, vector<8x8xf32>,
    %c1 = arith.constant 1 : index
    %c0_31 = arith.constant 0 : index
    %c0_32 = arith.constant 0 : index
    %80 = vector.load %arg2[%c1, %c0_31, %c0_32] : memref<8x8x1xf32, #tpu.memory_space<vmem>>, vector<1x8x1xf32>
    %81 = vector.shape_cast %80 : vector<1x8x1xf32> to vector<8x1xf32>
    %c6 = arith.constant 6 : index
    %c0_33 = arith.constant 0 : index
    %c0_34 = arith.constant 0 : index
    %82 = vector.load %arg2[%c6, %c0_33, %c0_34] : memref<8x8x1xf32, #tpu.memory_space<vmem>>, vector<1x8x1xf32>
    %83 = vector.shape_cast %82 : vector<1x8x1xf32> to vector<8x1xf32>
    %c8 = arith.constant 8 : index
    %c0_35 = arith.constant 0 : index
    %84 = vector.load %arg24[%c8, %c0_35] : memref<64x64xf32, #tpu.memory_space<vmem>>, vector<8x32xf32>
    %cst_36 = arith.constant dense<0.000000e+00> : vector<8x32xf32>
    %85 = tpu.matmul %38, %7, %cst_36 {dimension_numbers = #tpu.dot_dimension_numbers<[1], [0], [0], [1], [0, 0, 1, 1], [], []>} : vector<8x8xf32>, vector<8x32xf32>, vector<8x32xf32> -> vector<8x32xf32>
    %86 = arith.addf %84, %85 : vector<8x32xf32>
    %87 = arith.negf %86 : vector<8x32xf32>
    %88 = math.exp %87 : vector<8x32xf32>
    %cst_37 = arith.constant 1.000000e+00 : f32
    %89 = vector.broadcast %cst_37 : f32 to vector<8x32xf32>
    %90 = arith.addf %89, %88 : vector<8x32xf32>
    %91 = arith.divf %89, %90 : vector<8x32xf32>
    %92 = math.tanh %86 : vector<8x32xf32>
    %93 = vector.extract_strided_slice %91 {offsets = [0, 0], sizes = [8, 8], strides = [1, 1]} : vector<8x32xf32> to vector<8x8xf32>
    %94 = vector.extract_strided_slice %91 {offsets = [0, 8], sizes = [8, 8], strides = [1, 1]} : vector<8x32xf32> to vector<8x8xf32>
    %95 = vector.extract_strided_slice %92 {offsets = [0, 16], sizes = [8, 8], strides = [1, 1]} : vector<8x32xf32> to vector<8x8xf32>
    %96 = vector.extract_strided_slice %91 {offsets = [0, 24], sizes = [8, 8], strides = [1, 1]} : vector<8x32xf32> to vector<8x8xf32>
    %97 = arith.mulf %94, %45 : vector<8x8xf32>
    %98 = arith.mulf %93, %95 : vector<8x8xf32>
    %99 = arith.addf %97, %98 : vector<8x8xf32>
    %100 = math.tanh %99 : vector<8x8xf32>
    %101 = arith.mulf %96, %100 : vector<8x8xf32>
    %102 = vector.broadcast %81 : vector<8x1xf32> to vector<8x8xf32>
    %103 = arith.mulf %102, %101 : vector<8x8xf32>
    %cst_38 = arith.constant 1.000000e+00 : f32
    %104 = vector.broadcast %cst_38 : f32 to vector<8x1xf32>
    %105 = arith.subf %104, %81 : vector<8x1xf32>
    %106 = vector.broadcast %105 : vector<8x1xf32> to vector<8x8xf32>
    %107 = arith.mulf %106, %38 : vector<8x8xf32>
    %108 = arith.addf %103, %107 : vector<8x8xf32>
    %109 = vector.broadcast %81 : vector<8x1xf32> to vector<8x8xf32>
    %110 = arith.mulf %109, %99 : vector<8x8xf32>
    %cst_39 = arith.constant 1.000000e+00 : f32
    %111 = vector.broadcast %cst_39 : f32 to vector<8x1xf32>
    %112 = arith.subf %111, %81 : vector<8x1xf32>
    %113 = vector.broadcast %112 : vector<8x1xf32> to vector<8x8xf32>
    %114 = arith.mulf %113, %45 : vector<8x8xf32>
    %115 = arith.addf %110, %114 : vector<8x8xf32>
    %c48 = arith.constant 48 : index
    %c32_40 = arith.constant 32 : index
    %116 = vector.load %arg24[%c48, %c32_40] : memref<64x64xf32, #tpu.memory_space<vmem>>, vector<8x32xf32>
    %cst_41 = arith.constant dense<0.000000e+00> : vector<8x32xf32>
    %117 = tpu.matmul %70, %8, %cst_41 {dimension_numbers = #tpu.dot_dimension_numbers<[1], [0], [0], [1], [0, 0, 1, 1], [], []>} : vector<8x8xf32>, vector<8x32xf32>, vector<8x32xf32> -> vector<8x32xf32>
    %118 = arith.addf %116, %117 : vector<8x32xf32>
    %119 = arith.negf %118 : vector<8x32xf32>
    %120 = math.exp %119 : vector<8x32xf32>
    %cst_42 = arith.constant 1.000000e+00 : f32
    %121 = vector.broadcast %cst_42 : f32 to vector<8x32xf32>
    %122 = arith.addf %121, %120 : vector<8x32xf32>
    %123 = arith.divf %121, %122 : vector<8x32xf32>
    %124 = math.tanh %118 : vector<8x32xf32>
    %125 = vector.extract_strided_slice %123 {offsets = [0, 0], sizes = [8, 8], strides = [1, 1]} : vector<8x32xf32> to vector<8x8xf32>
    %126 = vector.extract_strided_slice %123 {offsets = [0, 8], sizes = [8, 8], strides = [1, 1]} : vector<8x32xf32> to vector<8x8xf32>
    %127 = vector.extract_strided_slice %124 {offsets = [0, 16], sizes = [8, 8], strides = [1, 1]} : vector<8x32xf32> to vector<8x8xf32>
    %128 = vector.extract_strided_slice %123 {offsets = [0, 24], sizes = [8, 8], strides = [1, 1]} : vector<8x32xf32> to vector<8x8xf32>
    %129 = arith.mulf %126, %77 : vector<8x8xf32>
    %130 = arith.mulf %125, %127 : vector<8x8xf32>
    %131 = arith.addf %129, %130 : vector<8x8xf32>
    %132 = math.tanh %131 : vector<8x8xf32>
    %133 = arith.mulf %128, %132 : vector<8x8xf32>
    %134 = vector.broadcast %83 : vector<8x1xf32> to vector<8x8xf32>
    %135 = arith.mulf %134, %133 : vector<8x8xf32>
    %cst_43 = arith.constant 1.000000e+00 : f32
    %136 = vector.broadcast %cst_43 : f32 to vector<8x1xf32>
    %137 = arith.subf %136, %83 : vector<8x1xf32>
    %138 = vector.broadcast %137 : vector<8x1xf32> to vector<8x8xf32>
    %139 = arith.mulf %138, %70 : vector<8x8xf32>
    %140 = arith.addf %135, %139 : vector<8x8xf32>
    %141 = vector.broadcast %83 : vector<8x1xf32> to vector<8x8xf32>
    %142 = arith.mulf %141, %131 : vector<8x8xf32>
    %cst_44 = arith.constant 1.000000e+00 : f32
    %143 = vector.broadcast %cst_44 : f32 to vector<8x1xf32>
    %144 = arith.subf %143, %83 : vector<8x1xf32>
    %145 = vector.broadcast %144 : vector<8x1xf32> to vector<8x8xf32>
    %146 = arith.mulf %145, %77 : vector<8x8xf32>
    %147 = arith.addf %142, %146 : vector<8x8xf32>
    %c8_45 = arith.constant 8 : index
    %c0_46 = arith.constant 0 : index
    %148 = vector.load %arg26[%c8_45, %c0_46] : memref<64x8xf32, #tpu.memory_space<vmem>>, vector<8x8xf32>
    tpu.vector_store %arg26[%c8_45, %c0_46], %103 {strides = array<i32>} : memref<64x8xf32, #tpu.memory_space<vmem>>, vector<8x8xf32>,
    %c48_47 = arith.constant 48 : index
    %c0_48 = arith.constant 0 : index
    %149 = vector.load %arg27[%c48_47, %c0_48] : memref<64x8xf32, #tpu.memory_space<vmem>>, vector<8x8xf32>
    tpu.vector_store %arg27[%c48_47, %c0_48], %135 {strides = array<i32>} : memref<64x8xf32, #tpu.memory_space<vmem>>, vector<8x8xf32>,
    %c2 = arith.constant 2 : index
    %c0_49 = arith.constant 0 : index
    %c0_50 = arith.constant 0 : index
    %150 = vector.load %arg2[%c2, %c0_49, %c0_50] : memref<8x8x1xf32, #tpu.memory_space<vmem>>, vector<1x8x1xf32>
    %151 = vector.shape_cast %150 : vector<1x8x1xf32> to vector<8x1xf32>
    %c5 = arith.constant 5 : index
    %c0_51 = arith.constant 0 : index
    %c0_52 = arith.constant 0 : index
    %152 = vector.load %arg2[%c5, %c0_51, %c0_52] : memref<8x8x1xf32, #tpu.memory_space<vmem>>, vector<1x8x1xf32>
    %153 = vector.shape_cast %152 : vector<1x8x1xf32> to vector<8x1xf32>
    %c16 = arith.constant 16 : index
    %c0_53 = arith.constant 0 : index
    %154 = vector.load %arg24[%c16, %c0_53] : memref<64x64xf32, #tpu.memory_space<vmem>>, vector<8x32xf32>
    %cst_54 = arith.constant dense<0.000000e+00> : vector<8x32xf32>
    %155 = tpu.matmul %108, %7, %cst_54 {dimension_numbers = #tpu.dot_dimension_numbers<[1], [0], [0], [1], [0, 0, 1, 1], [], []>} : vector<8x8xf32>, vector<8x32xf32>, vector<8x32xf32> -> vector<8x32xf32>
    %156 = arith.addf %154, %155 : vector<8x32xf32>
    %157 = arith.negf %156 : vector<8x32xf32>
    %158 = math.exp %157 : vector<8x32xf32>
    %cst_55 = arith.constant 1.000000e+00 : f32
    %159 = vector.broadcast %cst_55 : f32 to vector<8x32xf32>
    %160 = arith.addf %159, %158 : vector<8x32xf32>
    %161 = arith.divf %159, %160 : vector<8x32xf32>
    %162 = math.tanh %156 : vector<8x32xf32>
    %163 = vector.extract_strided_slice %161 {offsets = [0, 0], sizes = [8, 8], strides = [1, 1]} : vector<8x32xf32> to vector<8x8xf32>
    %164 = vector.extract_strided_slice %161 {offsets = [0, 8], sizes = [8, 8], strides = [1, 1]} : vector<8x32xf32> to vector<8x8xf32>
    %165 = vector.extract_strided_slice %162 {offsets = [0, 16], sizes = [8, 8], strides = [1, 1]} : vector<8x32xf32> to vector<8x8xf32>
    %166 = vector.extract_strided_slice %161 {offsets = [0, 24], sizes = [8, 8], strides = [1, 1]} : vector<8x32xf32> to vector<8x8xf32>
    %167 = arith.mulf %164, %115 : vector<8x8xf32>
    %168 = arith.mulf %163, %165 : vector<8x8xf32>
    %169 = arith.addf %167, %168 : vector<8x8xf32>
    %170 = math.tanh %169 : vector<8x8xf32>
    %171 = arith.mulf %166, %170 : vector<8x8xf32>
    %172 = vector.broadcast %151 : vector<8x1xf32> to vector<8x8xf32>
    %173 = arith.mulf %172, %171 : vector<8x8xf32>
    %cst_56 = arith.constant 1.000000e+00 : f32
    %174 = vector.broadcast %cst_56 : f32 to vector<8x1xf32>
    %175 = arith.subf %174, %151 : vector<8x1xf32>
    %176 = vector.broadcast %175 : vector<8x1xf32> to vector<8x8xf32>
    %177 = arith.mulf %176, %108 : vector<8x8xf32>
    %178 = arith.addf %173, %177 : vector<8x8xf32>
    %179 = vector.broadcast %151 : vector<8x1xf32> to vector<8x8xf32>
    %180 = arith.mulf %179, %169 : vector<8x8xf32>
    %cst_57 = arith.constant 1.000000e+00 : f32
    %181 = vector.broadcast %cst_57 : f32 to vector<8x1xf32>
    %182 = arith.subf %181, %151 : vector<8x1xf32>
    %183 = vector.broadcast %182 : vector<8x1xf32> to vector<8x8xf32>
    %184 = arith.mulf %183, %115 : vector<8x8xf32>
    %185 = arith.addf %180, %184 : vector<8x8xf32>
    %c40 = arith.constant 40 : index
    %c32_58 = arith.constant 32 : index
    %186 = vector.load %arg24[%c40, %c32_58] : memref<64x64xf32, #tpu.memory_space<vmem>>, vector<8x32xf32>
    %cst_59 = arith.constant dense<0.000000e+00> : vector<8x32xf32>
    %187 = tpu.matmul %140, %8, %cst_59 {dimension_numbers = #tpu.dot_dimension_numbers<[1], [0], [0], [1], [0, 0, 1, 1], [], []>} : vector<8x8xf32>, vector<8x32xf32>, vector<8x32xf32> -> vector<8x32xf32>
    %188 = arith.addf %186, %187 : vector<8x32xf32>
    %189 = arith.negf %188 : vector<8x32xf32>
    %190 = math.exp %189 : vector<8x32xf32>
    %cst_60 = arith.constant 1.000000e+00 : f32
    %191 = vector.broadcast %cst_60 : f32 to vector<8x32xf32>
    %192 = arith.addf %191, %190 : vector<8x32xf32>
    %193 = arith.divf %191, %192 : vector<8x32xf32>
    %194 = math.tanh %188 : vector<8x32xf32>
    %195 = vector.extract_strided_slice %193 {offsets = [0, 0], sizes = [8, 8], strides = [1, 1]} : vector<8x32xf32> to vector<8x8xf32>
    %196 = vector.extract_strided_slice %193 {offsets = [0, 8], sizes = [8, 8], strides = [1, 1]} : vector<8x32xf32> to vector<8x8xf32>
    %197 = vector.extract_strided_slice %194 {offsets = [0, 16], sizes = [8, 8], strides = [1, 1]} : vector<8x32xf32> to vector<8x8xf32>
    %198 = vector.extract_strided_slice %193 {offsets = [0, 24], sizes = [8, 8], strides = [1, 1]} : vector<8x32xf32> to vector<8x8xf32>
    %199 = arith.mulf %196, %147 : vector<8x8xf32>
    %200 = arith.mulf %195, %197 : vector<8x8xf32>
    %201 = arith.addf %199, %200 : vector<8x8xf32>
    %202 = math.tanh %201 : vector<8x8xf32>
    %203 = arith.mulf %198, %202 : vector<8x8xf32>
    %204 = vector.broadcast %153 : vector<8x1xf32> to vector<8x8xf32>
    %205 = arith.mulf %204, %203 : vector<8x8xf32>
    %cst_61 = arith.constant 1.000000e+00 : f32
    %206 = vector.broadcast %cst_61 : f32 to vector<8x1xf32>
    %207 = arith.subf %206, %153 : vector<8x1xf32>
    %208 = vector.broadcast %207 : vector<8x1xf32> to vector<8x8xf32>
    %209 = arith.mulf %208, %140 : vector<8x8xf32>
    %210 = arith.addf %205, %209 : vector<8x8xf32>
    %211 = vector.broadcast %153 : vector<8x1xf32> to vector<8x8xf32>
    %212 = arith.mulf %211, %201 : vector<8x8xf32>
    %cst_62 = arith.constant 1.000000e+00 : f32
    %213 = vector.broadcast %cst_62 : f32 to vector<8x1xf32>
    %214 = arith.subf %213, %153 : vector<8x1xf32>
    %215 = vector.broadcast %214 : vector<8x1xf32> to vector<8x8xf32>
    %216 = arith.mulf %215, %147 : vector<8x8xf32>
    %217 = arith.addf %212, %216 : vector<8x8xf32>
    %c16_63 = arith.constant 16 : index
    %c0_64 = arith.constant 0 : index
    %218 = vector.load %arg26[%c16_63, %c0_64] : memref<64x8xf32, #tpu.memory_space<vmem>>, vector<8x8xf32>
    tpu.vector_store %arg26[%c16_63, %c0_64], %173 {strides = array<i32>} : memref<64x8xf32, #tpu.memory_space<vmem>>, vector<8x8xf32>,
    %c40_65 = arith.constant 40 : index
    %c0_66 = arith.constant 0 : index
    %219 = vector.load %arg27[%c40_65, %c0_66] : memref<64x8xf32, #tpu.memory_space<vmem>>, vector<8x8xf32>
    tpu.vector_store %arg27[%c40_65, %c0_66], %205 {strides = array<i32>} : memref<64x8xf32, #tpu.memory_space<vmem>>, vector<8x8xf32>,
    %c3 = arith.constant 3 : index
    %c0_67 = arith.constant 0 : index
    %c0_68 = arith.constant 0 : index
    %220 = vector.load %arg2[%c3, %c0_67, %c0_68] : memref<8x8x1xf32, #tpu.memory_space<vmem>>, vector<1x8x1xf32>
    %221 = vector.shape_cast %220 : vector<1x8x1xf32> to vector<8x1xf32>
    %c4 = arith.constant 4 : index
    %c0_69 = arith.constant 0 : index
    %c0_70 = arith.constant 0 : index
    %222 = vector.load %arg2[%c4, %c0_69, %c0_70] : memref<8x8x1xf32, #tpu.memory_space<vmem>>, vector<1x8x1xf32>
    %223 = vector.shape_cast %222 : vector<1x8x1xf32> to vector<8x1xf32>
    %c24 = arith.constant 24 : index
    %c0_71 = arith.constant 0 : index
    %224 = vector.load %arg24[%c24, %c0_71] : memref<64x64xf32, #tpu.memory_space<vmem>>, vector<8x32xf32>
    %cst_72 = arith.constant dense<0.000000e+00> : vector<8x32xf32>
    %225 = tpu.matmul %178, %7, %cst_72 {dimension_numbers = #tpu.dot_dimension_numbers<[1], [0], [0], [1], [0, 0, 1, 1], [], []>} : vector<8x8xf32>, vector<8x32xf32>, vector<8x32xf32> -> vector<8x32xf32>
    %226 = arith.addf %224, %225 : vector<8x32xf32>
    %227 = arith.negf %226 : vector<8x32xf32>
    %228 = math.exp %227 : vector<8x32xf32>
    %cst_73 = arith.constant 1.000000e+00 : f32
    %229 = vector.broadcast %cst_73 : f32 to vector<8x32xf32>
    %230 = arith.addf %229, %228 : vector<8x32xf32>
    %231 = arith.divf %229, %230 : vector<8x32xf32>
    %232 = math.tanh %226 : vector<8x32xf32>
    %233 = vector.extract_strided_slice %231 {offsets = [0, 0], sizes = [8, 8], strides = [1, 1]} : vector<8x32xf32> to vector<8x8xf32>
    %234 = vector.extract_strided_slice %231 {offsets = [0, 8], sizes = [8, 8], strides = [1, 1]} : vector<8x32xf32> to vector<8x8xf32>
    %235 = vector.extract_strided_slice %232 {offsets = [0, 16], sizes = [8, 8], strides = [1, 1]} : vector<8x32xf32> to vector<8x8xf32>
    %236 = vector.extract_strided_slice %231 {offsets = [0, 24], sizes = [8, 8], strides = [1, 1]} : vector<8x32xf32> to vector<8x8xf32>
    %237 = arith.mulf %234, %185 : vector<8x8xf32>
    %238 = arith.mulf %233, %235 : vector<8x8xf32>
    %239 = arith.addf %237, %238 : vector<8x8xf32>
    %240 = math.tanh %239 : vector<8x8xf32>
    %241 = arith.mulf %236, %240 : vector<8x8xf32>
    %242 = vector.broadcast %221 : vector<8x1xf32> to vector<8x8xf32>
    %243 = arith.mulf %242, %241 : vector<8x8xf32>
    %cst_74 = arith.constant 1.000000e+00 : f32
    %244 = vector.broadcast %cst_74 : f32 to vector<8x1xf32>
    %245 = arith.subf %244, %221 : vector<8x1xf32>
    %246 = vector.broadcast %245 : vector<8x1xf32> to vector<8x8xf32>
    %247 = arith.mulf %246, %178 : vector<8x8xf32>
    %248 = arith.addf %243, %247 : vector<8x8xf32>
    %249 = vector.broadcast %221 : vector<8x1xf32> to vector<8x8xf32>
    %250 = arith.mulf %249, %239 : vector<8x8xf32>
    %cst_75 = arith.constant 1.000000e+00 : f32
    %251 = vector.broadcast %cst_75 : f32 to vector<8x1xf32>
    %252 = arith.subf %251, %221 : vector<8x1xf32>
    %253 = vector.broadcast %252 : vector<8x1xf32> to vector<8x8xf32>
    %254 = arith.mulf %253, %185 : vector<8x8xf32>
    %255 = arith.addf %250, %254 : vector<8x8xf32>
    %c32_76 = arith.constant 32 : index
    %c32_77 = arith.constant 32 : index
    %256 = vector.load %arg24[%c32_76, %c32_77] : memref<64x64xf32, #tpu.memory_space<vmem>>, vector<8x32xf32>
    %cst_78 = arith.constant dense<0.000000e+00> : vector<8x32xf32>
    %257 = tpu.matmul %210, %8, %cst_78 {dimension_numbers = #tpu.dot_dimension_numbers<[1], [0], [0], [1], [0, 0, 1, 1], [], []>} : vector<8x8xf32>, vector<8x32xf32>, vector<8x32xf32> -> vector<8x32xf32>
    %258 = arith.addf %256, %257 : vector<8x32xf32>
    %259 = arith.negf %258 : vector<8x32xf32>
    %260 = math.exp %259 : vector<8x32xf32>
    %cst_79 = arith.constant 1.000000e+00 : f32
    %261 = vector.broadcast %cst_79 : f32 to vector<8x32xf32>
    %262 = arith.addf %261, %260 : vector<8x32xf32>
    %263 = arith.divf %261, %262 : vector<8x32xf32>
    %264 = math.tanh %258 : vector<8x32xf32>
    %265 = vector.extract_strided_slice %263 {offsets = [0, 0], sizes = [8, 8], strides = [1, 1]} : vector<8x32xf32> to vector<8x8xf32>
    %266 = vector.extract_strided_slice %263 {offsets = [0, 8], sizes = [8, 8], strides = [1, 1]} : vector<8x32xf32> to vector<8x8xf32>
    %267 = vector.extract_strided_slice %264 {offsets = [0, 16], sizes = [8, 8], strides = [1, 1]} : vector<8x32xf32> to vector<8x8xf32>
    %268 = vector.extract_strided_slice %263 {offsets = [0, 24], sizes = [8, 8], strides = [1, 1]} : vector<8x32xf32> to vector<8x8xf32>
    %269 = arith.mulf %266, %217 : vector<8x8xf32>
    %270 = arith.mulf %265, %267 : vector<8x8xf32>
    %271 = arith.addf %269, %270 : vector<8x8xf32>
    %272 = math.tanh %271 : vector<8x8xf32>
    %273 = arith.mulf %268, %272 : vector<8x8xf32>
    %274 = vector.broadcast %223 : vector<8x1xf32> to vector<8x8xf32>
    %275 = arith.mulf %274, %273 : vector<8x8xf32>
    %cst_80 = arith.constant 1.000000e+00 : f32
    %276 = vector.broadcast %cst_80 : f32 to vector<8x1xf32>
    %277 = arith.subf %276, %223 : vector<8x1xf32>
    %278 = vector.broadcast %277 : vector<8x1xf32> to vector<8x8xf32>
    %279 = arith.mulf %278, %210 : vector<8x8xf32>
    %280 = arith.addf %275, %279 : vector<8x8xf32>
    %281 = vector.broadcast %223 : vector<8x1xf32> to vector<8x8xf32>
    %282 = arith.mulf %281, %271 : vector<8x8xf32>
    %cst_81 = arith.constant 1.000000e+00 : f32
    %283 = vector.broadcast %cst_81 : f32 to vector<8x1xf32>
    %284 = arith.subf %283, %223 : vector<8x1xf32>
    %285 = vector.broadcast %284 : vector<8x1xf32> to vector<8x8xf32>
    %286 = arith.mulf %285, %217 : vector<8x8xf32>
    %287 = arith.addf %282, %286 : vector<8x8xf32>
    %c24_82 = arith.constant 24 : index
    %c0_83 = arith.constant 0 : index
    %288 = vector.load %arg26[%c24_82, %c0_83] : memref<64x8xf32, #tpu.memory_space<vmem>>, vector<8x8xf32>
    tpu.vector_store %arg26[%c24_82, %c0_83], %243 {strides = array<i32>} : memref<64x8xf32, #tpu.memory_space<vmem>>, vector<8x8xf32>,
    %c32_84 = arith.constant 32 : index
    %c0_85 = arith.constant 0 : index
    %289 = vector.load %arg27[%c32_84, %c0_85] : memref<64x8xf32, #tpu.memory_space<vmem>>, vector<8x8xf32>
    tpu.vector_store %arg27[%c32_84, %c0_85], %275 {strides = array<i32>} : memref<64x8xf32, #tpu.memory_space<vmem>>, vector<8x8xf32>,
    %c4_86 = arith.constant 4 : index
    %c0_87 = arith.constant 0 : index
    %c0_88 = arith.constant 0 : index
    %290 = vector.load %arg2[%c4_86, %c0_87, %c0_88] : memref<8x8x1xf32, #tpu.memory_space<vmem>>, vector<1x8x1xf32>
    %291 = vector.shape_cast %290 : vector<1x8x1xf32> to vector<8x1xf32>
    %c3_89 = arith.constant 3 : index
    %c0_90 = arith.constant 0 : index
    %c0_91 = arith.constant 0 : index
    %292 = vector.load %arg2[%c3_89, %c0_90, %c0_91] : memref<8x8x1xf32, #tpu.memory_space<vmem>>, vector<1x8x1xf32>
    %293 = vector.shape_cast %292 : vector<1x8x1xf32> to vector<8x1xf32>
    %c32_92 = arith.constant 32 : index
    %c0_93 = arith.constant 0 : index
    %294 = vector.load %arg24[%c32_92, %c0_93] : memref<64x64xf32, #tpu.memory_space<vmem>>, vector<8x32xf32>
    %cst_94 = arith.constant dense<0.000000e+00> : vector<8x32xf32>
    %295 = tpu.matmul %248, %7, %cst_94 {dimension_numbers = #tpu.dot_dimension_numbers<[1], [0], [0], [1], [0, 0, 1, 1], [], []>} : vector<8x8xf32>, vector<8x32xf32>, vector<8x32xf32> -> vector<8x32xf32>
    %296 = arith.addf %294, %295 : vector<8x32xf32>
    %297 = arith.negf %296 : vector<8x32xf32>
    %298 = math.exp %297 : vector<8x32xf32>
    %cst_95 = arith.constant 1.000000e+00 : f32
    %299 = vector.broadcast %cst_95 : f32 to vector<8x32xf32>
    %300 = arith.addf %299, %298 : vector<8x32xf32>
    %301 = arith.divf %299, %300 : vector<8x32xf32>
    %302 = math.tanh %296 : vector<8x32xf32>
    %303 = vector.extract_strided_slice %301 {offsets = [0, 0], sizes = [8, 8], strides = [1, 1]} : vector<8x32xf32> to vector<8x8xf32>
    %304 = vector.extract_strided_slice %301 {offsets = [0, 8], sizes = [8, 8], strides = [1, 1]} : vector<8x32xf32> to vector<8x8xf32>
    %305 = vector.extract_strided_slice %302 {offsets = [0, 16], sizes = [8, 8], strides = [1, 1]} : vector<8x32xf32> to vector<8x8xf32>
    %306 = vector.extract_strided_slice %301 {offsets = [0, 24], sizes = [8, 8], strides = [1, 1]} : vector<8x32xf32> to vector<8x8xf32>
    %307 = arith.mulf %304, %255 : vector<8x8xf32>
    %308 = arith.mulf %303, %305 : vector<8x8xf32>
    %309 = arith.addf %307, %308 : vector<8x8xf32>
    %310 = math.tanh %309 : vector<8x8xf32>
    %311 = arith.mulf %306, %310 : vector<8x8xf32>
    %312 = vector.broadcast %291 : vector<8x1xf32> to vector<8x8xf32>
    %313 = arith.mulf %312, %311 : vector<8x8xf32>
    %cst_96 = arith.constant 1.000000e+00 : f32
    %314 = vector.broadcast %cst_96 : f32 to vector<8x1xf32>
    %315 = arith.subf %314, %291 : vector<8x1xf32>
    %316 = vector.broadcast %315 : vector<8x1xf32> to vector<8x8xf32>
    %317 = arith.mulf %316, %248 : vector<8x8xf32>
    %318 = arith.addf %313, %317 : vector<8x8xf32>
    %319 = vector.broadcast %291 : vector<8x1xf32> to vector<8x8xf32>
    %320 = arith.mulf %319, %309 : vector<8x8xf32>
    %cst_97 = arith.constant 1.000000e+00 : f32
    %321 = vector.broadcast %cst_97 : f32 to vector<8x1xf32>
    %322 = arith.subf %321, %291 : vector<8x1xf32>
    %323 = vector.broadcast %322 : vector<8x1xf32> to vector<8x8xf32>
    %324 = arith.mulf %323, %255 : vector<8x8xf32>
    %325 = arith.addf %320, %324 : vector<8x8xf32>
    %c24_98 = arith.constant 24 : index
    %c32_99 = arith.constant 32 : index
    %326 = vector.load %arg24[%c24_98, %c32_99] : memref<64x64xf32, #tpu.memory_space<vmem>>, vector<8x32xf32>
    %cst_100 = arith.constant dense<0.000000e+00> : vector<8x32xf32>
    %327 = tpu.matmul %280, %8, %cst_100 {dimension_numbers = #tpu.dot_dimension_numbers<[1], [0], [0], [1], [0, 0, 1, 1], [], []>} : vector<8x8xf32>, vector<8x32xf32>, vector<8x32xf32> -> vector<8x32xf32>
    %328 = arith.addf %326, %327 : vector<8x32xf32>
    %329 = arith.negf %328 : vector<8x32xf32>
    %330 = math.exp %329 : vector<8x32xf32>
    %cst_101 = arith.constant 1.000000e+00 : f32
    %331 = vector.broadcast %cst_101 : f32 to vector<8x32xf32>
    %332 = arith.addf %331, %330 : vector<8x32xf32>
    %333 = arith.divf %331, %332 : vector<8x32xf32>
    %334 = math.tanh %328 : vector<8x32xf32>
    %335 = vector.extract_strided_slice %333 {offsets = [0, 0], sizes = [8, 8], strides = [1, 1]} : vector<8x32xf32> to vector<8x8xf32>
    %336 = vector.extract_strided_slice %333 {offsets = [0, 8], sizes = [8, 8], strides = [1, 1]} : vector<8x32xf32> to vector<8x8xf32>
    %337 = vector.extract_strided_slice %334 {offsets = [0, 16], sizes = [8, 8], strides = [1, 1]} : vector<8x32xf32> to vector<8x8xf32>
    %338 = vector.extract_strided_slice %333 {offsets = [0, 24], sizes = [8, 8], strides = [1, 1]} : vector<8x32xf32> to vector<8x8xf32>
    %339 = arith.mulf %336, %287 : vector<8x8xf32>
    %340 = arith.mulf %335, %337 : vector<8x8xf32>
    %341 = arith.addf %339, %340 : vector<8x8xf32>
    %342 = math.tanh %341 : vector<8x8xf32>
    %343 = arith.mulf %338, %342 : vector<8x8xf32>
    %344 = vector.broadcast %293 : vector<8x1xf32> to vector<8x8xf32>
    %345 = arith.mulf %344, %343 : vector<8x8xf32>
    %cst_102 = arith.constant 1.000000e+00 : f32
    %346 = vector.broadcast %cst_102 : f32 to vector<8x1xf32>
    %347 = arith.subf %346, %293 : vector<8x1xf32>
    %348 = vector.broadcast %347 : vector<8x1xf32> to vector<8x8xf32>
    %349 = arith.mulf %348, %280 : vector<8x8xf32>
    %350 = arith.addf %345, %349 : vector<8x8xf32>
    %351 = vector.broadcast %293 : vector<8x1xf32> to vector<8x8xf32>
    %352 = arith.mulf %351, %341 : vector<8x8xf32>
    %cst_103 = arith.constant 1.000000e+00 : f32
    %353 = vector.broadcast %cst_103 : f32 to vector<8x1xf32>
    %354 = arith.subf %353, %293 : vector<8x1xf32>
    %355 = vector.broadcast %354 : vector<8x1xf32> to vector<8x8xf32>
    %356 = arith.mulf %355, %287 : vector<8x8xf32>
    %357 = arith.addf %352, %356 : vector<8x8xf32>
    %c32_104 = arith.constant 32 : index
    %c0_105 = arith.constant 0 : index
    %358 = vector.load %arg26[%c32_104, %c0_105] : memref<64x8xf32, #tpu.memory_space<vmem>>, vector<8x8xf32>
    tpu.vector_store %arg26[%c32_104, %c0_105], %313 {strides = array<i32>} : memref<64x8xf32, #tpu.memory_space<vmem>>, vector<8x8xf32>,
    %c24_106 = arith.constant 24 : index
    %c0_107 = arith.constant 0 : index
    %359 = vector.load %arg27[%c24_106, %c0_107] : memref<64x8xf32, #tpu.memory_space<vmem>>, vector<8x8xf32>
    tpu.vector_store %arg27[%c24_106, %c0_107], %345 {strides = array<i32>} : memref<64x8xf32, #tpu.memory_space<vmem>>, vector<8x8xf32>,
    %c5_108 = arith.constant 5 : index
    %c0_109 = arith.constant 0 : index
    %c0_110 = arith.constant 0 : index
    %360 = vector.load %arg2[%c5_108, %c0_109, %c0_110] : memref<8x8x1xf32, #tpu.memory_space<vmem>>, vector<1x8x1xf32>
    %361 = vector.shape_cast %360 : vector<1x8x1xf32> to vector<8x1xf32>
    %c2_111 = arith.constant 2 : index
    %c0_112 = arith.constant 0 : index
    %c0_113 = arith.constant 0 : index
    %362 = vector.load %arg2[%c2_111, %c0_112, %c0_113] : memref<8x8x1xf32, #tpu.memory_space<vmem>>, vector<1x8x1xf32>
    %363 = vector.shape_cast %362 : vector<1x8x1xf32> to vector<8x1xf32>
    %c40_114 = arith.constant 40 : index
    %c0_115 = arith.constant 0 : index
    %364 = vector.load %arg24[%c40_114, %c0_115] : memref<64x64xf32, #tpu.memory_space<vmem>>, vector<8x32xf32>
    %cst_116 = arith.constant dense<0.000000e+00> : vector<8x32xf32>
    %365 = tpu.matmul %318, %7, %cst_116 {dimension_numbers = #tpu.dot_dimension_numbers<[1], [0], [0], [1], [0, 0, 1, 1], [], []>} : vector<8x8xf32>, vector<8x32xf32>, vector<8x32xf32> -> vector<8x32xf32>
    %366 = arith.addf %364, %365 : vector<8x32xf32>
    %367 = arith.negf %366 : vector<8x32xf32>
    %368 = math.exp %367 : vector<8x32xf32>
    %cst_117 = arith.constant 1.000000e+00 : f32
    %369 = vector.broadcast %cst_117 : f32 to vector<8x32xf32>
    %370 = arith.addf %369, %368 : vector<8x32xf32>
    %371 = arith.divf %369, %370 : vector<8x32xf32>
    %372 = math.tanh %366 : vector<8x32xf32>
    %373 = vector.extract_strided_slice %371 {offsets = [0, 0], sizes = [8, 8], strides = [1, 1]} : vector<8x32xf32> to vector<8x8xf32>
    %374 = vector.extract_strided_slice %371 {offsets = [0, 8], sizes = [8, 8], strides = [1, 1]} : vector<8x32xf32> to vector<8x8xf32>
    %375 = vector.extract_strided_slice %372 {offsets = [0, 16], sizes = [8, 8], strides = [1, 1]} : vector<8x32xf32> to vector<8x8xf32>
    %376 = vector.extract_strided_slice %371 {offsets = [0, 24], sizes = [8, 8], strides = [1, 1]} : vector<8x32xf32> to vector<8x8xf32>
    %377 = arith.mulf %374, %325 : vector<8x8xf32>
    %378 = arith.mulf %373, %375 : vector<8x8xf32>
    %379 = arith.addf %377, %378 : vector<8x8xf32>
    %380 = math.tanh %379 : vector<8x8xf32>
    %381 = arith.mulf %376, %380 : vector<8x8xf32>
    %382 = vector.broadcast %361 : vector<8x1xf32> to vector<8x8xf32>
    %383 = arith.mulf %382, %381 : vector<8x8xf32>
    %cst_118 = arith.constant 1.000000e+00 : f32
    %384 = vector.broadcast %cst_118 : f32 to vector<8x1xf32>
    %385 = arith.subf %384, %361 : vector<8x1xf32>
    %386 = vector.broadcast %385 : vector<8x1xf32> to vector<8x8xf32>
    %387 = arith.mulf %386, %318 : vector<8x8xf32>
    %388 = arith.addf %383, %387 : vector<8x8xf32>
    %389 = vector.broadcast %361 : vector<8x1xf32> to vector<8x8xf32>
    %390 = arith.mulf %389, %379 : vector<8x8xf32>
    %cst_119 = arith.constant 1.000000e+00 : f32
    %391 = vector.broadcast %cst_119 : f32 to vector<8x1xf32>
    %392 = arith.subf %391, %361 : vector<8x1xf32>
    %393 = vector.broadcast %392 : vector<8x1xf32> to vector<8x8xf32>
    %394 = arith.mulf %393, %325 : vector<8x8xf32>
    %395 = arith.addf %390, %394 : vector<8x8xf32>
    %c16_120 = arith.constant 16 : index
    %c32_121 = arith.constant 32 : index
    %396 = vector.load %arg24[%c16_120, %c32_121] : memref<64x64xf32, #tpu.memory_space<vmem>>, vector<8x32xf32>
    %cst_122 = arith.constant dense<0.000000e+00> : vector<8x32xf32>
    %397 = tpu.matmul %350, %8, %cst_122 {dimension_numbers = #tpu.dot_dimension_numbers<[1], [0], [0], [1], [0, 0, 1, 1], [], []>} : vector<8x8xf32>, vector<8x32xf32>, vector<8x32xf32> -> vector<8x32xf32>
    %398 = arith.addf %396, %397 : vector<8x32xf32>
    %399 = arith.negf %398 : vector<8x32xf32>
    %400 = math.exp %399 : vector<8x32xf32>
    %cst_123 = arith.constant 1.000000e+00 : f32
    %401 = vector.broadcast %cst_123 : f32 to vector<8x32xf32>
    %402 = arith.addf %401, %400 : vector<8x32xf32>
    %403 = arith.divf %401, %402 : vector<8x32xf32>
    %404 = math.tanh %398 : vector<8x32xf32>
    %405 = vector.extract_strided_slice %403 {offsets = [0, 0], sizes = [8, 8], strides = [1, 1]} : vector<8x32xf32> to vector<8x8xf32>
    %406 = vector.extract_strided_slice %403 {offsets = [0, 8], sizes = [8, 8], strides = [1, 1]} : vector<8x32xf32> to vector<8x8xf32>
    %407 = vector.extract_strided_slice %404 {offsets = [0, 16], sizes = [8, 8], strides = [1, 1]} : vector<8x32xf32> to vector<8x8xf32>
    %408 = vector.extract_strided_slice %403 {offsets = [0, 24], sizes = [8, 8], strides = [1, 1]} : vector<8x32xf32> to vector<8x8xf32>
    %409 = arith.mulf %406, %357 : vector<8x8xf32>
    %410 = arith.mulf %405, %407 : vector<8x8xf32>
    %411 = arith.addf %409, %410 : vector<8x8xf32>
    %412 = math.tanh %411 : vector<8x8xf32>
    %413 = arith.mulf %408, %412 : vector<8x8xf32>
    %414 = vector.broadcast %363 : vector<8x1xf32> to vector<8x8xf32>
    %415 = arith.mulf %414, %413 : vector<8x8xf32>
    %cst_124 = arith.constant 1.000000e+00 : f32
    %416 = vector.broadcast %cst_124 : f32 to vector<8x1xf32>
    %417 = arith.subf %416, %363 : vector<8x1xf32>
    %418 = vector.broadcast %417 : vector<8x1xf32> to vector<8x8xf32>
    %419 = arith.mulf %418, %350 : vector<8x8xf32>
    %420 = arith.addf %415, %419 : vector<8x8xf32>
    %421 = vector.broadcast %363 : vector<8x1xf32> to vector<8x8xf32>
    %422 = arith.mulf %421, %411 : vector<8x8xf32>
    %cst_125 = arith.constant 1.000000e+00 : f32
    %423 = vector.broadcast %cst_125 : f32 to vector<8x1xf32>
    %424 = arith.subf %423, %363 : vector<8x1xf32>
    %425 = vector.broadcast %424 : vector<8x1xf32> to vector<8x8xf32>
    %426 = arith.mulf %425, %357 : vector<8x8xf32>
    %427 = arith.addf %422, %426 : vector<8x8xf32>
    %c40_126 = arith.constant 40 : index
    %c0_127 = arith.constant 0 : index
    %428 = vector.load %arg26[%c40_126, %c0_127] : memref<64x8xf32, #tpu.memory_space<vmem>>, vector<8x8xf32>
    tpu.vector_store %arg26[%c40_126, %c0_127], %383 {strides = array<i32>} : memref<64x8xf32, #tpu.memory_space<vmem>>, vector<8x8xf32>,
    %c16_128 = arith.constant 16 : index
    %c0_129 = arith.constant 0 : index
    %429 = vector.load %arg27[%c16_128, %c0_129] : memref<64x8xf32, #tpu.memory_space<vmem>>, vector<8x8xf32>
    tpu.vector_store %arg27[%c16_128, %c0_129], %415 {strides = array<i32>} : memref<64x8xf32, #tpu.memory_space<vmem>>, vector<8x8xf32>,
    %c6_130 = arith.constant 6 : index
    %c0_131 = arith.constant 0 : index
    %c0_132 = arith.constant 0 : index
    %430 = vector.load %arg2[%c6_130, %c0_131, %c0_132] : memref<8x8x1xf32, #tpu.memory_space<vmem>>, vector<1x8x1xf32>
    %431 = vector.shape_cast %430 : vector<1x8x1xf32> to vector<8x1xf32>
    %c1_133 = arith.constant 1 : index
    %c0_134 = arith.constant 0 : index
    %c0_135 = arith.constant 0 : index
    %432 = vector.load %arg2[%c1_133, %c0_134, %c0_135] : memref<8x8x1xf32, #tpu.memory_space<vmem>>, vector<1x8x1xf32>
    %433 = vector.shape_cast %432 : vector<1x8x1xf32> to vector<8x1xf32>
    %c48_136 = arith.constant 48 : index
    %c0_137 = arith.constant 0 : index
    %434 = vector.load %arg24[%c48_136, %c0_137] : memref<64x64xf32, #tpu.memory_space<vmem>>, vector<8x32xf32>
    %cst_138 = arith.constant dense<0.000000e+00> : vector<8x32xf32>
    %435 = tpu.matmul %388, %7, %cst_138 {dimension_numbers = #tpu.dot_dimension_numbers<[1], [0], [0], [1], [0, 0, 1, 1], [], []>} : vector<8x8xf32>, vector<8x32xf32>, vector<8x32xf32> -> vector<8x32xf32>
    %436 = arith.addf %434, %435 : vector<8x32xf32>
    %437 = arith.negf %436 : vector<8x32xf32>
    %438 = math.exp %437 : vector<8x32xf32>
    %cst_139 = arith.constant 1.000000e+00 : f32
    %439 = vector.broadcast %cst_139 : f32 to vector<8x32xf32>
    %440 = arith.addf %439, %438 : vector<8x32xf32>
    %441 = arith.divf %439, %440 : vector<8x32xf32>
    %442 = math.tanh %436 : vector<8x32xf32>
    %443 = vector.extract_strided_slice %441 {offsets = [0, 0], sizes = [8, 8], strides = [1, 1]} : vector<8x32xf32> to vector<8x8xf32>
    %444 = vector.extract_strided_slice %441 {offsets = [0, 8], sizes = [8, 8], strides = [1, 1]} : vector<8x32xf32> to vector<8x8xf32>
    %445 = vector.extract_strided_slice %442 {offsets = [0, 16], sizes = [8, 8], strides = [1, 1]} : vector<8x32xf32> to vector<8x8xf32>
    %446 = vector.extract_strided_slice %441 {offsets = [0, 24], sizes = [8, 8], strides = [1, 1]} : vector<8x32xf32> to vector<8x8xf32>
    %447 = arith.mulf %444, %395 : vector<8x8xf32>
    %448 = arith.mulf %443, %445 : vector<8x8xf32>
    %449 = arith.addf %447, %448 : vector<8x8xf32>
    %450 = math.tanh %449 : vector<8x8xf32>
    %451 = arith.mulf %446, %450 : vector<8x8xf32>
    %452 = vector.broadcast %431 : vector<8x1xf32> to vector<8x8xf32>
    %453 = arith.mulf %452, %451 : vector<8x8xf32>
    %cst_140 = arith.constant 1.000000e+00 : f32
    %454 = vector.broadcast %cst_140 : f32 to vector<8x1xf32>
    %455 = arith.subf %454, %431 : vector<8x1xf32>
    %456 = vector.broadcast %455 : vector<8x1xf32> to vector<8x8xf32>
    %457 = arith.mulf %456, %388 : vector<8x8xf32>
    %458 = arith.addf %453, %457 : vector<8x8xf32>
    %459 = vector.broadcast %431 : vector<8x1xf32> to vector<8x8xf32>
    %460 = arith.mulf %459, %449 : vector<8x8xf32>
    %cst_141 = arith.constant 1.000000e+00 : f32
    %461 = vector.broadcast %cst_141 : f32 to vector<8x1xf32>
    %462 = arith.subf %461, %431 : vector<8x1xf32>
    %463 = vector.broadcast %462 : vector<8x1xf32> to vector<8x8xf32>
    %464 = arith.mulf %463, %395 : vector<8x8xf32>
    %465 = arith.addf %460, %464 : vector<8x8xf32>
    %c8_142 = arith.constant 8 : index
    %c32_143 = arith.constant 32 : index
    %466 = vector.load %arg24[%c8_142, %c32_143] : memref<64x64xf32, #tpu.memory_space<vmem>>, vector<8x32xf32>
    %cst_144 = arith.constant dense<0.000000e+00> : vector<8x32xf32>
    %467 = tpu.matmul %420, %8, %cst_144 {dimension_numbers = #tpu.dot_dimension_numbers<[1], [0], [0], [1], [0, 0, 1, 1], [], []>} : vector<8x8xf32>, vector<8x32xf32>, vector<8x32xf32> -> vector<8x32xf32>
    %468 = arith.addf %466, %467 : vector<8x32xf32>
    %469 = arith.negf %468 : vector<8x32xf32>
    %470 = math.exp %469 : vector<8x32xf32>
    %cst_145 = arith.constant 1.000000e+00 : f32
    %471 = vector.broadcast %cst_145 : f32 to vector<8x32xf32>
    %472 = arith.addf %471, %470 : vector<8x32xf32>
    %473 = arith.divf %471, %472 : vector<8x32xf32>
    %474 = math.tanh %468 : vector<8x32xf32>
    %475 = vector.extract_strided_slice %473 {offsets = [0, 0], sizes = [8, 8], strides = [1, 1]} : vector<8x32xf32> to vector<8x8xf32>
    %476 = vector.extract_strided_slice %473 {offsets = [0, 8], sizes = [8, 8], strides = [1, 1]} : vector<8x32xf32> to vector<8x8xf32>
    %477 = vector.extract_strided_slice %474 {offsets = [0, 16], sizes = [8, 8], strides = [1, 1]} : vector<8x32xf32> to vector<8x8xf32>
    %478 = vector.extract_strided_slice %473 {offsets = [0, 24], sizes = [8, 8], strides = [1, 1]} : vector<8x32xf32> to vector<8x8xf32>
    %479 = arith.mulf %476, %427 : vector<8x8xf32>
    %480 = arith.mulf %475, %477 : vector<8x8xf32>
    %481 = arith.addf %479, %480 : vector<8x8xf32>
    %482 = math.tanh %481 : vector<8x8xf32>
    %483 = arith.mulf %478, %482 : vector<8x8xf32>
    %484 = vector.broadcast %433 : vector<8x1xf32> to vector<8x8xf32>
    %485 = arith.mulf %484, %483 : vector<8x8xf32>
    %cst_146 = arith.constant 1.000000e+00 : f32
    %486 = vector.broadcast %cst_146 : f32 to vector<8x1xf32>
    %487 = arith.subf %486, %433 : vector<8x1xf32>
    %488 = vector.broadcast %487 : vector<8x1xf32> to vector<8x8xf32>
    %489 = arith.mulf %488, %420 : vector<8x8xf32>
    %490 = arith.addf %485, %489 : vector<8x8xf32>
    %491 = vector.broadcast %433 : vector<8x1xf32> to vector<8x8xf32>
    %492 = arith.mulf %491, %481 : vector<8x8xf32>
    %cst_147 = arith.constant 1.000000e+00 : f32
    %493 = vector.broadcast %cst_147 : f32 to vector<8x1xf32>
    %494 = arith.subf %493, %433 : vector<8x1xf32>
    %495 = vector.broadcast %494 : vector<8x1xf32> to vector<8x8xf32>
    %496 = arith.mulf %495, %427 : vector<8x8xf32>
    %497 = arith.addf %492, %496 : vector<8x8xf32>
    %c48_148 = arith.constant 48 : index
    %c0_149 = arith.constant 0 : index
    %498 = vector.load %arg26[%c48_148, %c0_149] : memref<64x8xf32, #tpu.memory_space<vmem>>, vector<8x8xf32>
    tpu.vector_store %arg26[%c48_148, %c0_149], %453 {strides = array<i32>} : memref<64x8xf32, #tpu.memory_space<vmem>>, vector<8x8xf32>,
    %c8_150 = arith.constant 8 : index
    %c0_151 = arith.constant 0 : index
    %499 = vector.load %arg27[%c8_150, %c0_151] : memref<64x8xf32, #tpu.memory_space<vmem>>, vector<8x8xf32>
    tpu.vector_store %arg27[%c8_150, %c0_151], %485 {strides = array<i32>} : memref<64x8xf32, #tpu.memory_space<vmem>>, vector<8x8xf32>,
    %c7_152 = arith.constant 7 : index
    %c0_153 = arith.constant 0 : index
    %c0_154 = arith.constant 0 : index
    %500 = vector.load %arg2[%c7_152, %c0_153, %c0_154] : memref<8x8x1xf32, #tpu.memory_space<vmem>>, vector<1x8x1xf32>
    %501 = vector.shape_cast %500 : vector<1x8x1xf32> to vector<8x1xf32>
    %c0_155 = arith.constant 0 : index
    %c0_156 = arith.constant 0 : index
    %c0_157 = arith.constant 0 : index
    %502 = vector.load %arg2[%c0_155, %c0_156, %c0_157] : memref<8x8x1xf32, #tpu.memory_space<vmem>>, vector<1x8x1xf32>
    %503 = vector.shape_cast %502 : vector<1x8x1xf32> to vector<8x1xf32>
    %c56_158 = arith.constant 56 : index
    %c0_159 = arith.constant 0 : index
    %504 = vector.load %arg24[%c56_158, %c0_159] : memref<64x64xf32, #tpu.memory_space<vmem>>, vector<8x32xf32>
    %cst_160 = arith.constant dense<0.000000e+00> : vector<8x32xf32>
    %505 = tpu.matmul %458, %7, %cst_160 {dimension_numbers = #tpu.dot_dimension_numbers<[1], [0], [0], [1], [0, 0, 1, 1], [], []>} : vector<8x8xf32>, vector<8x32xf32>, vector<8x32xf32> -> vector<8x32xf32>
    %506 = arith.addf %504, %505 : vector<8x32xf32>
    %507 = arith.negf %506 : vector<8x32xf32>
    %508 = math.exp %507 : vector<8x32xf32>
    %cst_161 = arith.constant 1.000000e+00 : f32
    %509 = vector.broadcast %cst_161 : f32 to vector<8x32xf32>
    %510 = arith.addf %509, %508 : vector<8x32xf32>
    %511 = arith.divf %509, %510 : vector<8x32xf32>
    %512 = math.tanh %506 : vector<8x32xf32>
    %513 = vector.extract_strided_slice %511 {offsets = [0, 0], sizes = [8, 8], strides = [1, 1]} : vector<8x32xf32> to vector<8x8xf32>
    %514 = vector.extract_strided_slice %511 {offsets = [0, 8], sizes = [8, 8], strides = [1, 1]} : vector<8x32xf32> to vector<8x8xf32>
    %515 = vector.extract_strided_slice %512 {offsets = [0, 16], sizes = [8, 8], strides = [1, 1]} : vector<8x32xf32> to vector<8x8xf32>
    %516 = vector.extract_strided_slice %511 {offsets = [0, 24], sizes = [8, 8], strides = [1, 1]} : vector<8x32xf32> to vector<8x8xf32>
    %517 = arith.mulf %514, %465 : vector<8x8xf32>
    %518 = arith.mulf %513, %515 : vector<8x8xf32>
    %519 = arith.addf %517, %518 : vector<8x8xf32>
    %520 = math.tanh %519 : vector<8x8xf32>
    %521 = arith.mulf %516, %520 : vector<8x8xf32>
    %522 = vector.broadcast %501 : vector<8x1xf32> to vector<8x8xf32>
    %523 = arith.mulf %522, %521 : vector<8x8xf32>
    %c0_162 = arith.constant 0 : index
    %c32_163 = arith.constant 32 : index
    %524 = vector.load %arg24[%c0_162, %c32_163] : memref<64x64xf32, #tpu.memory_space<vmem>>, vector<8x32xf32>
    %cst_164 = arith.constant dense<0.000000e+00> : vector<8x32xf32>
    %525 = tpu.matmul %490, %8, %cst_164 {dimension_numbers = #tpu.dot_dimension_numbers<[1], [0], [0], [1], [0, 0, 1, 1], [], []>} : vector<8x8xf32>, vector<8x32xf32>, vector<8x32xf32> -> vector<8x32xf32>
    %526 = arith.addf %524, %525 : vector<8x32xf32>
    %527 = arith.negf %526 : vector<8x32xf32>
    %528 = math.exp %527 : vector<8x32xf32>
    %cst_165 = arith.constant 1.000000e+00 : f32
    %529 = vector.broadcast %cst_165 : f32 to vector<8x32xf32>
    %530 = arith.addf %529, %528 : vector<8x32xf32>
    %531 = arith.divf %529, %530 : vector<8x32xf32>
    %532 = math.tanh %526 : vector<8x32xf32>
    %533 = vector.extract_strided_slice %531 {offsets = [0, 0], sizes = [8, 8], strides = [1, 1]} : vector<8x32xf32> to vector<8x8xf32>
    %534 = vector.extract_strided_slice %531 {offsets = [0, 8], sizes = [8, 8], strides = [1, 1]} : vector<8x32xf32> to vector<8x8xf32>
    %535 = vector.extract_strided_slice %532 {offsets = [0, 16], sizes = [8, 8], strides = [1, 1]} : vector<8x32xf32> to vector<8x8xf32>
    %536 = vector.extract_strided_slice %531 {offsets = [0, 24], sizes = [8, 8], strides = [1, 1]} : vector<8x32xf32> to vector<8x8xf32>
    %537 = arith.mulf %534, %497 : vector<8x8xf32>
    %538 = arith.mulf %533, %535 : vector<8x8xf32>
    %539 = arith.addf %537, %538 : vector<8x8xf32>
    %540 = math.tanh %539 : vector<8x8xf32>
    %541 = arith.mulf %536, %540 : vector<8x8xf32>
    %542 = vector.broadcast %503 : vector<8x1xf32> to vector<8x8xf32>
    %543 = arith.mulf %542, %541 : vector<8x8xf32>
    %c56_166 = arith.constant 56 : index
    %c0_167 = arith.constant 0 : index
    %544 = vector.load %arg26[%c56_166, %c0_167] : memref<64x8xf32, #tpu.memory_space<vmem>>, vector<8x8xf32>
    tpu.vector_store %arg26[%c56_166, %c0_167], %523 {strides = array<i32>} : memref<64x8xf32, #tpu.memory_space<vmem>>, vector<8x8xf32>,
    %c0_168 = arith.constant 0 : index
    %c0_169 = arith.constant 0 : index
    %545 = vector.load %arg27[%c0_168, %c0_169] : memref<64x8xf32, #tpu.memory_space<vmem>>, vector<8x8xf32>
    tpu.vector_store %arg27[%c0_168, %c0_169], %543 {strides = array<i32>} : memref<64x8xf32, #tpu.memory_space<vmem>>, vector<8x8xf32>,
    %c0_170 = arith.constant 0 : index
    %c0_171 = arith.constant 0 : index
    %546 = vector.load %arg0[%c0_170, %c0_171] : memref<64x16xf32, #tpu.memory_space<vmem>>, vector<64x16xf32>
    %c0_172 = arith.constant 0 : index
    %c0_173 = arith.constant 0 : index
    %547 = vector.load %arg7[%c0_172, %c0_173] : memref<16x256xf32, #tpu.memory_space<vmem>>, vector<16x256xf32>
    %cst_174 = arith.constant dense<0.000000e+00> : vector<64x256xf32>
    %548 = tpu.matmul %546, %547, %cst_174 {dimension_numbers = #tpu.dot_dimension_numbers<[1], [0], [0], [1], [0, 0, 1, 1], [], []>} : vector<64x16xf32>, vector<16x256xf32>, vector<64x256xf32> -> vector<64x256xf32>
    %c0_175 = arith.constant 0 : index
    %c0_176 = arith.constant 0 : index
    %549 = vector.load %arg26[%c0_175, %c0_176] : memref<64x8xf32, #tpu.memory_space<vmem>>, vector<64x8xf32>
    %c0_177 = arith.constant 0 : index
    %c0_178 = arith.constant 0 : index
    %550 = vector.load %arg8[%c0_177, %c0_178] : memref<8x256xf32, #tpu.memory_space<vmem>>, vector<8x256xf32>
    %cst_179 = arith.constant dense<0.000000e+00> : vector<64x256xf32>
    %551 = tpu.matmul %549, %550, %cst_179 {dimension_numbers = #tpu.dot_dimension_numbers<[1], [0], [0], [1], [0, 0, 1, 1], [], []>} : vector<64x8xf32>, vector<8x256xf32>, vector<64x256xf32> -> vector<64x256xf32>
    %552 = arith.addf %548, %551 : vector<64x256xf32>
    %c0_180 = arith.constant 0 : index
    %c0_181 = arith.constant 0 : index
    %553 = vector.load %arg27[%c0_180, %c0_181] : memref<64x8xf32, #tpu.memory_space<vmem>>, vector<64x8xf32>
    %c0_182 = arith.constant 0 : index
    %c0_183 = arith.constant 0 : index
    %554 = vector.load %arg9[%c0_182, %c0_183] : memref<8x256xf32, #tpu.memory_space<vmem>>, vector<8x256xf32>
    %cst_184 = arith.constant dense<0.000000e+00> : vector<64x256xf32>
    %555 = tpu.matmul %553, %554, %cst_184 {dimension_numbers = #tpu.dot_dimension_numbers<[1], [0], [0], [1], [0, 0, 1, 1], [], []>} : vector<64x8xf32>, vector<8x256xf32>, vector<64x256xf32> -> vector<64x256xf32>
    %556 = arith.addf %552, %555 : vector<64x256xf32>
    %c0_185 = arith.constant 0 : index
    %c0_186 = arith.constant 0 : index
    %557 = vector.load %arg12[%c0_185, %c0_186] : memref<1x256xf32, #tpu.memory_space<vmem>>, vector<1x256xf32>
    %558 = vector.broadcast %557 : vector<1x256xf32> to vector<64x256xf32>
    %559 = arith.addf %556, %558 : vector<64x256xf32>
    %c0_187 = arith.constant 0 : index
    %c0_188 = arith.constant 0 : index
    %560 = vector.load %arg25[%c0_187, %c0_188] : memref<64x256xf32, #tpu.memory_space<vmem>>, vector<64x256xf32>
    tpu.vector_store %arg25[%c0_187, %c0_188], %559 {strides = array<i32>} : memref<64x256xf32, #tpu.memory_space<vmem>>, vector<64x256xf32>,
    %c0_189 = arith.constant 0 : index
    %c0_190 = arith.constant 0 : index
    %561 = vector.load %arg10[%c0_189, %c0_190] : memref<32x128xf32, #tpu.memory_space<vmem>>, vector<32x128xf32>
    %c0_191 = arith.constant 0 : index
    %c0_192 = arith.constant 0 : index
    %562 = vector.load %arg11[%c0_191, %c0_192] : memref<32x128xf32, #tpu.memory_space<vmem>>, vector<32x128xf32>
    %cst_193 = arith.constant 0.000000e+00 : f32
    %563 = vector.broadcast %cst_193 : f32 to vector<8x32xf32>
    %c0_194 = arith.constant 0 : index
    %c0_195 = arith.constant 0 : index
    %c0_196 = arith.constant 0 : index
    %564 = vector.load %arg2[%c0_194, %c0_195, %c0_196] : memref<8x8x1xf32, #tpu.memory_space<vmem>>, vector<1x8x1xf32>
    %565 = vector.shape_cast %564 : vector<1x8x1xf32> to vector<8x1xf32>
    %c7_197 = arith.constant 7 : index
    %c0_198 = arith.constant 0 : index
    %c0_199 = arith.constant 0 : index
    %566 = vector.load %arg2[%c7_197, %c0_198, %c0_199] : memref<8x8x1xf32, #tpu.memory_space<vmem>>, vector<1x8x1xf32>
    %567 = vector.shape_cast %566 : vector<1x8x1xf32> to vector<8x1xf32>
    %c0_200 = arith.constant 0 : index
    %c0_201 = arith.constant 0 : index
    %568 = vector.load %arg25[%c0_200, %c0_201] : memref<64x256xf32, #tpu.memory_space<vmem>>, vector<8x128xf32>
    %cst_202 = arith.constant dense<0.000000e+00> : vector<8x128xf32>
    %569 = tpu.matmul %563, %561, %cst_202 {dimension_numbers = #tpu.dot_dimension_numbers<[1], [0], [0], [1], [0, 0, 1, 1], [], []>} : vector<8x32xf32>, vector<32x128xf32>, vector<8x128xf32> -> vector<8x128xf32>
    %570 = arith.addf %568, %569 : vector<8x128xf32>
    %571 = arith.negf %570 : vector<8x128xf32>
    %572 = math.exp %571 : vector<8x128xf32>
    %cst_203 = arith.constant 1.000000e+00 : f32
    %573 = vector.broadcast %cst_203 : f32 to vector<8x128xf32>
    %574 = arith.addf %573, %572 : vector<8x128xf32>
    %575 = arith.divf %573, %574 : vector<8x128xf32>
    %576 = math.tanh %570 : vector<8x128xf32>
    %577 = vector.extract_strided_slice %575 {offsets = [0, 0], sizes = [8, 32], strides = [1, 1]} : vector<8x128xf32> to vector<8x32xf32>
    %578 = vector.extract_strided_slice %575 {offsets = [0, 32], sizes = [8, 32], strides = [1, 1]} : vector<8x128xf32> to vector<8x32xf32>
    %579 = vector.extract_strided_slice %576 {offsets = [0, 64], sizes = [8, 32], strides = [1, 1]} : vector<8x128xf32> to vector<8x32xf32>
    %580 = vector.extract_strided_slice %575 {offsets = [0, 96], sizes = [8, 32], strides = [1, 1]} : vector<8x128xf32> to vector<8x32xf32>
    %581 = arith.mulf %578, %563 : vector<8x32xf32>
    %582 = arith.mulf %577, %579 : vector<8x32xf32>
    %583 = arith.addf %581, %582 : vector<8x32xf32>
    %584 = math.tanh %583 : vector<8x32xf32>
    %585 = arith.mulf %580, %584 : vector<8x32xf32>
    %586 = vector.broadcast %565 : vector<8x1xf32> to vector<8x32xf32>
    %587 = arith.mulf %586, %585 : vector<8x32xf32>
    %cst_204 = arith.constant 1.000000e+00 : f32
    %588 = vector.broadcast %cst_204 : f32 to vector<8x1xf32>
    %589 = arith.subf %588, %565 : vector<8x1xf32>
    %590 = vector.broadcast %589 : vector<8x1xf32> to vector<8x32xf32>
    %591 = arith.mulf %590, %563 : vector<8x32xf32>
    %592 = arith.addf %587, %591 : vector<8x32xf32>
    %593 = vector.broadcast %565 : vector<8x1xf32> to vector<8x32xf32>
    %594 = arith.mulf %593, %583 : vector<8x32xf32>
    %cst_205 = arith.constant 1.000000e+00 : f32
    %595 = vector.broadcast %cst_205 : f32 to vector<8x1xf32>
    %596 = arith.subf %595, %565 : vector<8x1xf32>
    %597 = vector.broadcast %596 : vector<8x1xf32> to vector<8x32xf32>
    %598 = arith.mulf %597, %563 : vector<8x32xf32>
    %599 = arith.addf %594, %598 : vector<8x32xf32>
    %c56_206 = arith.constant 56 : index
    %c128 = arith.constant 128 : index
    %600 = vector.load %arg25[%c56_206, %c128] : memref<64x256xf32, #tpu.memory_space<vmem>>, vector<8x128xf32>
    %cst_207 = arith.constant dense<0.000000e+00> : vector<8x128xf32>
    %601 = tpu.matmul %563, %562, %cst_207 {dimension_numbers = #tpu.dot_dimension_numbers<[1], [0], [0], [1], [0, 0, 1, 1], [], []>} : vector<8x32xf32>, vector<32x128xf32>, vector<8x128xf32> -> vector<8x128xf32>
    %602 = arith.addf %600, %601 : vector<8x128xf32>
    %603 = arith.negf %602 : vector<8x128xf32>
    %604 = math.exp %603 : vector<8x128xf32>
    %cst_208 = arith.constant 1.000000e+00 : f32
    %605 = vector.broadcast %cst_208 : f32 to vector<8x128xf32>
    %606 = arith.addf %605, %604 : vector<8x128xf32>
    %607 = arith.divf %605, %606 : vector<8x128xf32>
    %608 = math.tanh %602 : vector<8x128xf32>
    %609 = vector.extract_strided_slice %607 {offsets = [0, 0], sizes = [8, 32], strides = [1, 1]} : vector<8x128xf32> to vector<8x32xf32>
    %610 = vector.extract_strided_slice %607 {offsets = [0, 32], sizes = [8, 32], strides = [1, 1]} : vector<8x128xf32> to vector<8x32xf32>
    %611 = vector.extract_strided_slice %608 {offsets = [0, 64], sizes = [8, 32], strides = [1, 1]} : vector<8x128xf32> to vector<8x32xf32>
    %612 = vector.extract_strided_slice %607 {offsets = [0, 96], sizes = [8, 32], strides = [1, 1]} : vector<8x128xf32> to vector<8x32xf32>
    %613 = arith.mulf %610, %563 : vector<8x32xf32>
    %614 = arith.mulf %609, %611 : vector<8x32xf32>
    %615 = arith.addf %613, %614 : vector<8x32xf32>
    %616 = math.tanh %615 : vector<8x32xf32>
    %617 = arith.mulf %612, %616 : vector<8x32xf32>
    %618 = vector.broadcast %567 : vector<8x1xf32> to vector<8x32xf32>
    %619 = arith.mulf %618, %617 : vector<8x32xf32>
    %cst_209 = arith.constant 1.000000e+00 : f32
    %620 = vector.broadcast %cst_209 : f32 to vector<8x1xf32>
    %621 = arith.subf %620, %567 : vector<8x1xf32>
    %622 = vector.broadcast %621 : vector<8x1xf32> to vector<8x32xf32>
    %623 = arith.mulf %622, %563 : vector<8x32xf32>
    %624 = arith.addf %619, %623 : vector<8x32xf32>
    %625 = vector.broadcast %567 : vector<8x1xf32> to vector<8x32xf32>
    %626 = arith.mulf %625, %615 : vector<8x32xf32>
    %cst_210 = arith.constant 1.000000e+00 : f32
    %627 = vector.broadcast %cst_210 : f32 to vector<8x1xf32>
    %628 = arith.subf %627, %567 : vector<8x1xf32>
    %629 = vector.broadcast %628 : vector<8x1xf32> to vector<8x32xf32>
    %630 = arith.mulf %629, %563 : vector<8x32xf32>
    %631 = arith.addf %626, %630 : vector<8x32xf32>
    %c0_211 = arith.constant 0 : index
    %c0_212 = arith.constant 0 : index
    %632 = vector.load %arg28[%c0_211, %c0_212] : memref<64x32xf32, #tpu.memory_space<vmem>>, vector<8x32xf32>
    tpu.vector_store %arg28[%c0_211, %c0_212], %587 {strides = array<i32>} : memref<64x32xf32, #tpu.memory_space<vmem>>, vector<8x32xf32>,
    %c56_213 = arith.constant 56 : index
    %c0_214 = arith.constant 0 : index
    %633 = vector.load %arg29[%c56_213, %c0_214] : memref<64x32xf32, #tpu.memory_space<vmem>>, vector<8x32xf32>
    tpu.vector_store %arg29[%c56_213, %c0_214], %619 {strides = array<i32>} : memref<64x32xf32, #tpu.memory_space<vmem>>, vector<8x32xf32>,
    %c1_215 = arith.constant 1 : index
    %c0_216 = arith.constant 0 : index
    %c0_217 = arith.constant 0 : index
    %634 = vector.load %arg2[%c1_215, %c0_216, %c0_217] : memref<8x8x1xf32, #tpu.memory_space<vmem>>, vector<1x8x1xf32>
    %635 = vector.shape_cast %634 : vector<1x8x1xf32> to vector<8x1xf32>
    %c6_218 = arith.constant 6 : index
    %c0_219 = arith.constant 0 : index
    %c0_220 = arith.constant 0 : index
    %636 = vector.load %arg2[%c6_218, %c0_219, %c0_220] : memref<8x8x1xf32, #tpu.memory_space<vmem>>, vector<1x8x1xf32>
    %637 = vector.shape_cast %636 : vector<1x8x1xf32> to vector<8x1xf32>
    %c8_221 = arith.constant 8 : index
    %c0_222 = arith.constant 0 : index
    %638 = vector.load %arg25[%c8_221, %c0_222] : memref<64x256xf32, #tpu.memory_space<vmem>>, vector<8x128xf32>
    %cst_223 = arith.constant dense<0.000000e+00> : vector<8x128xf32>
    %639 = tpu.matmul %592, %561, %cst_223 {dimension_numbers = #tpu.dot_dimension_numbers<[1], [0], [0], [1], [0, 0, 1, 1], [], []>} : vector<8x32xf32>, vector<32x128xf32>, vector<8x128xf32> -> vector<8x128xf32>
    %640 = arith.addf %638, %639 : vector<8x128xf32>
    %641 = arith.negf %640 : vector<8x128xf32>
    %642 = math.exp %641 : vector<8x128xf32>
    %cst_224 = arith.constant 1.000000e+00 : f32
    %643 = vector.broadcast %cst_224 : f32 to vector<8x128xf32>
    %644 = arith.addf %643, %642 : vector<8x128xf32>
    %645 = arith.divf %643, %644 : vector<8x128xf32>
    %646 = math.tanh %640 : vector<8x128xf32>
    %647 = vector.extract_strided_slice %645 {offsets = [0, 0], sizes = [8, 32], strides = [1, 1]} : vector<8x128xf32> to vector<8x32xf32>
    %648 = vector.extract_strided_slice %645 {offsets = [0, 32], sizes = [8, 32], strides = [1, 1]} : vector<8x128xf32> to vector<8x32xf32>
    %649 = vector.extract_strided_slice %646 {offsets = [0, 64], sizes = [8, 32], strides = [1, 1]} : vector<8x128xf32> to vector<8x32xf32>
    %650 = vector.extract_strided_slice %645 {offsets = [0, 96], sizes = [8, 32], strides = [1, 1]} : vector<8x128xf32> to vector<8x32xf32>
    %651 = arith.mulf %648, %599 : vector<8x32xf32>
    %652 = arith.mulf %647, %649 : vector<8x32xf32>
    %653 = arith.addf %651, %652 : vector<8x32xf32>
    %654 = math.tanh %653 : vector<8x32xf32>
    %655 = arith.mulf %650, %654 : vector<8x32xf32>
    %656 = vector.broadcast %635 : vector<8x1xf32> to vector<8x32xf32>
    %657 = arith.mulf %656, %655 : vector<8x32xf32>
    %cst_225 = arith.constant 1.000000e+00 : f32
    %658 = vector.broadcast %cst_225 : f32 to vector<8x1xf32>
    %659 = arith.subf %658, %635 : vector<8x1xf32>
    %660 = vector.broadcast %659 : vector<8x1xf32> to vector<8x32xf32>
    %661 = arith.mulf %660, %592 : vector<8x32xf32>
    %662 = arith.addf %657, %661 : vector<8x32xf32>
    %663 = vector.broadcast %635 : vector<8x1xf32> to vector<8x32xf32>
    %664 = arith.mulf %663, %653 : vector<8x32xf32>
    %cst_226 = arith.constant 1.000000e+00 : f32
    %665 = vector.broadcast %cst_226 : f32 to vector<8x1xf32>
    %666 = arith.subf %665, %635 : vector<8x1xf32>
    %667 = vector.broadcast %666 : vector<8x1xf32> to vector<8x32xf32>
    %668 = arith.mulf %667, %599 : vector<8x32xf32>
    %669 = arith.addf %664, %668 : vector<8x32xf32>
    %c48_227 = arith.constant 48 : index
    %c128_228 = arith.constant 128 : index
    %670 = vector.load %arg25[%c48_227, %c128_228] : memref<64x256xf32, #tpu.memory_space<vmem>>, vector<8x128xf32>
    %cst_229 = arith.constant dense<0.000000e+00> : vector<8x128xf32>
    %671 = tpu.matmul %624, %562, %cst_229 {dimension_numbers = #tpu.dot_dimension_numbers<[1], [0], [0], [1], [0, 0, 1, 1], [], []>} : vector<8x32xf32>, vector<32x128xf32>, vector<8x128xf32> -> vector<8x128xf32>
    %672 = arith.addf %670, %671 : vector<8x128xf32>
    %673 = arith.negf %672 : vector<8x128xf32>
    %674 = math.exp %673 : vector<8x128xf32>
    %cst_230 = arith.constant 1.000000e+00 : f32
    %675 = vector.broadcast %cst_230 : f32 to vector<8x128xf32>
    %676 = arith.addf %675, %674 : vector<8x128xf32>
    %677 = arith.divf %675, %676 : vector<8x128xf32>
    %678 = math.tanh %672 : vector<8x128xf32>
    %679 = vector.extract_strided_slice %677 {offsets = [0, 0], sizes = [8, 32], strides = [1, 1]} : vector<8x128xf32> to vector<8x32xf32>
    %680 = vector.extract_strided_slice %677 {offsets = [0, 32], sizes = [8, 32], strides = [1, 1]} : vector<8x128xf32> to vector<8x32xf32>
    %681 = vector.extract_strided_slice %678 {offsets = [0, 64], sizes = [8, 32], strides = [1, 1]} : vector<8x128xf32> to vector<8x32xf32>
    %682 = vector.extract_strided_slice %677 {offsets = [0, 96], sizes = [8, 32], strides = [1, 1]} : vector<8x128xf32> to vector<8x32xf32>
    %683 = arith.mulf %680, %631 : vector<8x32xf32>
    %684 = arith.mulf %679, %681 : vector<8x32xf32>
    %685 = arith.addf %683, %684 : vector<8x32xf32>
    %686 = math.tanh %685 : vector<8x32xf32>
    %687 = arith.mulf %682, %686 : vector<8x32xf32>
    %688 = vector.broadcast %637 : vector<8x1xf32> to vector<8x32xf32>
    %689 = arith.mulf %688, %687 : vector<8x32xf32>
    %cst_231 = arith.constant 1.000000e+00 : f32
    %690 = vector.broadcast %cst_231 : f32 to vector<8x1xf32>
    %691 = arith.subf %690, %637 : vector<8x1xf32>
    %692 = vector.broadcast %691 : vector<8x1xf32> to vector<8x32xf32>
    %693 = arith.mulf %692, %624 : vector<8x32xf32>
    %694 = arith.addf %689, %693 : vector<8x32xf32>
    %695 = vector.broadcast %637 : vector<8x1xf32> to vector<8x32xf32>
    %696 = arith.mulf %695, %685 : vector<8x32xf32>
    %cst_232 = arith.constant 1.000000e+00 : f32
    %697 = vector.broadcast %cst_232 : f32 to vector<8x1xf32>
    %698 = arith.subf %697, %637 : vector<8x1xf32>
    %699 = vector.broadcast %698 : vector<8x1xf32> to vector<8x32xf32>
    %700 = arith.mulf %699, %631 : vector<8x32xf32>
    %701 = arith.addf %696, %700 : vector<8x32xf32>
    %c8_233 = arith.constant 8 : index
    %c0_234 = arith.constant 0 : index
    %702 = vector.load %arg28[%c8_233, %c0_234] : memref<64x32xf32, #tpu.memory_space<vmem>>, vector<8x32xf32>
    tpu.vector_store %arg28[%c8_233, %c0_234], %657 {strides = array<i32>} : memref<64x32xf32, #tpu.memory_space<vmem>>, vector<8x32xf32>,
    %c48_235 = arith.constant 48 : index
    %c0_236 = arith.constant 0 : index
    %703 = vector.load %arg29[%c48_235, %c0_236] : memref<64x32xf32, #tpu.memory_space<vmem>>, vector<8x32xf32>
    tpu.vector_store %arg29[%c48_235, %c0_236], %689 {strides = array<i32>} : memref<64x32xf32, #tpu.memory_space<vmem>>, vector<8x32xf32>,
    %c2_237 = arith.constant 2 : index
    %c0_238 = arith.constant 0 : index
    %c0_239 = arith.constant 0 : index
    %704 = vector.load %arg2[%c2_237, %c0_238, %c0_239] : memref<8x8x1xf32, #tpu.memory_space<vmem>>, vector<1x8x1xf32>
    %705 = vector.shape_cast %704 : vector<1x8x1xf32> to vector<8x1xf32>
    %c5_240 = arith.constant 5 : index
    %c0_241 = arith.constant 0 : index
    %c0_242 = arith.constant 0 : index
    %706 = vector.load %arg2[%c5_240, %c0_241, %c0_242] : memref<8x8x1xf32, #tpu.memory_space<vmem>>, vector<1x8x1xf32>
    %707 = vector.shape_cast %706 : vector<1x8x1xf32> to vector<8x1xf32>
    %c16_243 = arith.constant 16 : index
    %c0_244 = arith.constant 0 : index
    %708 = vector.load %arg25[%c16_243, %c0_244] : memref<64x256xf32, #tpu.memory_space<vmem>>, vector<8x128xf32>
    %cst_245 = arith.constant dense<0.000000e+00> : vector<8x128xf32>
    %709 = tpu.matmul %662, %561, %cst_245 {dimension_numbers = #tpu.dot_dimension_numbers<[1], [0], [0], [1], [0, 0, 1, 1], [], []>} : vector<8x32xf32>, vector<32x128xf32>, vector<8x128xf32> -> vector<8x128xf32>
    %710 = arith.addf %708, %709 : vector<8x128xf32>
    %711 = arith.negf %710 : vector<8x128xf32>
    %712 = math.exp %711 : vector<8x128xf32>
    %cst_246 = arith.constant 1.000000e+00 : f32
    %713 = vector.broadcast %cst_246 : f32 to vector<8x128xf32>
    %714 = arith.addf %713, %712 : vector<8x128xf32>
    %715 = arith.divf %713, %714 : vector<8x128xf32>
    %716 = math.tanh %710 : vector<8x128xf32>
    %717 = vector.extract_strided_slice %715 {offsets = [0, 0], sizes = [8, 32], strides = [1, 1]} : vector<8x128xf32> to vector<8x32xf32>
    %718 = vector.extract_strided_slice %715 {offsets = [0, 32], sizes = [8, 32], strides = [1, 1]} : vector<8x128xf32> to vector<8x32xf32>
    %719 = vector.extract_strided_slice %716 {offsets = [0, 64], sizes = [8, 32], strides = [1, 1]} : vector<8x128xf32> to vector<8x32xf32>
    %720 = vector.extract_strided_slice %715 {offsets = [0, 96], sizes = [8, 32], strides = [1, 1]} : vector<8x128xf32> to vector<8x32xf32>
    %721 = arith.mulf %718, %669 : vector<8x32xf32>
    %722 = arith.mulf %717, %719 : vector<8x32xf32>
    %723 = arith.addf %721, %722 : vector<8x32xf32>
    %724 = math.tanh %723 : vector<8x32xf32>
    %725 = arith.mulf %720, %724 : vector<8x32xf32>
    %726 = vector.broadcast %705 : vector<8x1xf32> to vector<8x32xf32>
    %727 = arith.mulf %726, %725 : vector<8x32xf32>
    %cst_247 = arith.constant 1.000000e+00 : f32
    %728 = vector.broadcast %cst_247 : f32 to vector<8x1xf32>
    %729 = arith.subf %728, %705 : vector<8x1xf32>
    %730 = vector.broadcast %729 : vector<8x1xf32> to vector<8x32xf32>
    %731 = arith.mulf %730, %662 : vector<8x32xf32>
    %732 = arith.addf %727, %731 : vector<8x32xf32>
    %733 = vector.broadcast %705 : vector<8x1xf32> to vector<8x32xf32>
    %734 = arith.mulf %733, %723 : vector<8x32xf32>
    %cst_248 = arith.constant 1.000000e+00 : f32
    %735 = vector.broadcast %cst_248 : f32 to vector<8x1xf32>
    %736 = arith.subf %735, %705 : vector<8x1xf32>
    %737 = vector.broadcast %736 : vector<8x1xf32> to vector<8x32xf32>
    %738 = arith.mulf %737, %669 : vector<8x32xf32>
    %739 = arith.addf %734, %738 : vector<8x32xf32>
    %c40_249 = arith.constant 40 : index
    %c128_250 = arith.constant 128 : index
    %740 = vector.load %arg25[%c40_249, %c128_250] : memref<64x256xf32, #tpu.memory_space<vmem>>, vector<8x128xf32>
    %cst_251 = arith.constant dense<0.000000e+00> : vector<8x128xf32>
    %741 = tpu.matmul %694, %562, %cst_251 {dimension_numbers = #tpu.dot_dimension_numbers<[1], [0], [0], [1], [0, 0, 1, 1], [], []>} : vector<8x32xf32>, vector<32x128xf32>, vector<8x128xf32> -> vector<8x128xf32>
    %742 = arith.addf %740, %741 : vector<8x128xf32>
    %743 = arith.negf %742 : vector<8x128xf32>
    %744 = math.exp %743 : vector<8x128xf32>
    %cst_252 = arith.constant 1.000000e+00 : f32
    %745 = vector.broadcast %cst_252 : f32 to vector<8x128xf32>
    %746 = arith.addf %745, %744 : vector<8x128xf32>
    %747 = arith.divf %745, %746 : vector<8x128xf32>
    %748 = math.tanh %742 : vector<8x128xf32>
    %749 = vector.extract_strided_slice %747 {offsets = [0, 0], sizes = [8, 32], strides = [1, 1]} : vector<8x128xf32> to vector<8x32xf32>
    %750 = vector.extract_strided_slice %747 {offsets = [0, 32], sizes = [8, 32], strides = [1, 1]} : vector<8x128xf32> to vector<8x32xf32>
    %751 = vector.extract_strided_slice %748 {offsets = [0, 64], sizes = [8, 32], strides = [1, 1]} : vector<8x128xf32> to vector<8x32xf32>
    %752 = vector.extract_strided_slice %747 {offsets = [0, 96], sizes = [8, 32], strides = [1, 1]} : vector<8x128xf32> to vector<8x32xf32>
    %753 = arith.mulf %750, %701 : vector<8x32xf32>
    %754 = arith.mulf %749, %751 : vector<8x32xf32>
    %755 = arith.addf %753, %754 : vector<8x32xf32>
    %756 = math.tanh %755 : vector<8x32xf32>
    %757 = arith.mulf %752, %756 : vector<8x32xf32>
    %758 = vector.broadcast %707 : vector<8x1xf32> to vector<8x32xf32>
    %759 = arith.mulf %758, %757 : vector<8x32xf32>
    %cst_253 = arith.constant 1.000000e+00 : f32
    %760 = vector.broadcast %cst_253 : f32 to vector<8x1xf32>
    %761 = arith.subf %760, %707 : vector<8x1xf32>
    %762 = vector.broadcast %761 : vector<8x1xf32> to vector<8x32xf32>
    %763 = arith.mulf %762, %694 : vector<8x32xf32>
    %764 = arith.addf %759, %763 : vector<8x32xf32>
    %765 = vector.broadcast %707 : vector<8x1xf32> to vector<8x32xf32>
    %766 = arith.mulf %765, %755 : vector<8x32xf32>
    %cst_254 = arith.constant 1.000000e+00 : f32
    %767 = vector.broadcast %cst_254 : f32 to vector<8x1xf32>
    %768 = arith.subf %767, %707 : vector<8x1xf32>
    %769 = vector.broadcast %768 : vector<8x1xf32> to vector<8x32xf32>
    %770 = arith.mulf %769, %701 : vector<8x32xf32>
    %771 = arith.addf %766, %770 : vector<8x32xf32>
    %c16_255 = arith.constant 16 : index
    %c0_256 = arith.constant 0 : index
    %772 = vector.load %arg28[%c16_255, %c0_256] : memref<64x32xf32, #tpu.memory_space<vmem>>, vector<8x32xf32>
    tpu.vector_store %arg28[%c16_255, %c0_256], %727 {strides = array<i32>} : memref<64x32xf32, #tpu.memory_space<vmem>>, vector<8x32xf32>,
    %c40_257 = arith.constant 40 : index
    %c0_258 = arith.constant 0 : index
    %773 = vector.load %arg29[%c40_257, %c0_258] : memref<64x32xf32, #tpu.memory_space<vmem>>, vector<8x32xf32>
    tpu.vector_store %arg29[%c40_257, %c0_258], %759 {strides = array<i32>} : memref<64x32xf32, #tpu.memory_space<vmem>>, vector<8x32xf32>,
    %c3_259 = arith.constant 3 : index
    %c0_260 = arith.constant 0 : index
    %c0_261 = arith.constant 0 : index
    %774 = vector.load %arg2[%c3_259, %c0_260, %c0_261] : memref<8x8x1xf32, #tpu.memory_space<vmem>>, vector<1x8x1xf32>
    %775 = vector.shape_cast %774 : vector<1x8x1xf32> to vector<8x1xf32>
    %c4_262 = arith.constant 4 : index
    %c0_263 = arith.constant 0 : index
    %c0_264 = arith.constant 0 : index
    %776 = vector.load %arg2[%c4_262, %c0_263, %c0_264] : memref<8x8x1xf32, #tpu.memory_space<vmem>>, vector<1x8x1xf32>
    %777 = vector.shape_cast %776 : vector<1x8x1xf32> to vector<8x1xf32>
    %c24_265 = arith.constant 24 : index
    %c0_266 = arith.constant 0 : index
    %778 = vector.load %arg25[%c24_265, %c0_266] : memref<64x256xf32, #tpu.memory_space<vmem>>, vector<8x128xf32>
    %cst_267 = arith.constant dense<0.000000e+00> : vector<8x128xf32>
    %779 = tpu.matmul %732, %561, %cst_267 {dimension_numbers = #tpu.dot_dimension_numbers<[1], [0], [0], [1], [0, 0, 1, 1], [], []>} : vector<8x32xf32>, vector<32x128xf32>, vector<8x128xf32> -> vector<8x128xf32>
    %780 = arith.addf %778, %779 : vector<8x128xf32>
    %781 = arith.negf %780 : vector<8x128xf32>
    %782 = math.exp %781 : vector<8x128xf32>
    %cst_268 = arith.constant 1.000000e+00 : f32
    %783 = vector.broadcast %cst_268 : f32 to vector<8x128xf32>
    %784 = arith.addf %783, %782 : vector<8x128xf32>
    %785 = arith.divf %783, %784 : vector<8x128xf32>
    %786 = math.tanh %780 : vector<8x128xf32>
    %787 = vector.extract_strided_slice %785 {offsets = [0, 0], sizes = [8, 32], strides = [1, 1]} : vector<8x128xf32> to vector<8x32xf32>
    %788 = vector.extract_strided_slice %785 {offsets = [0, 32], sizes = [8, 32], strides = [1, 1]} : vector<8x128xf32> to vector<8x32xf32>
    %789 = vector.extract_strided_slice %786 {offsets = [0, 64], sizes = [8, 32], strides = [1, 1]} : vector<8x128xf32> to vector<8x32xf32>
    %790 = vector.extract_strided_slice %785 {offsets = [0, 96], sizes = [8, 32], strides = [1, 1]} : vector<8x128xf32> to vector<8x32xf32>
    %791 = arith.mulf %788, %739 : vector<8x32xf32>
    %792 = arith.mulf %787, %789 : vector<8x32xf32>
    %793 = arith.addf %791, %792 : vector<8x32xf32>
    %794 = math.tanh %793 : vector<8x32xf32>
    %795 = arith.mulf %790, %794 : vector<8x32xf32>
    %796 = vector.broadcast %775 : vector<8x1xf32> to vector<8x32xf32>
    %797 = arith.mulf %796, %795 : vector<8x32xf32>
    %cst_269 = arith.constant 1.000000e+00 : f32
    %798 = vector.broadcast %cst_269 : f32 to vector<8x1xf32>
    %799 = arith.subf %798, %775 : vector<8x1xf32>
    %800 = vector.broadcast %799 : vector<8x1xf32> to vector<8x32xf32>
    %801 = arith.mulf %800, %732 : vector<8x32xf32>
    %802 = arith.addf %797, %801 : vector<8x32xf32>
    %803 = vector.broadcast %775 : vector<8x1xf32> to vector<8x32xf32>
    %804 = arith.mulf %803, %793 : vector<8x32xf32>
    %cst_270 = arith.constant 1.000000e+00 : f32
    %805 = vector.broadcast %cst_270 : f32 to vector<8x1xf32>
    %806 = arith.subf %805, %775 : vector<8x1xf32>
    %807 = vector.broadcast %806 : vector<8x1xf32> to vector<8x32xf32>
    %808 = arith.mulf %807, %739 : vector<8x32xf32>
    %809 = arith.addf %804, %808 : vector<8x32xf32>
    %c32_271 = arith.constant 32 : index
    %c128_272 = arith.constant 128 : index
    %810 = vector.load %arg25[%c32_271, %c128_272] : memref<64x256xf32, #tpu.memory_space<vmem>>, vector<8x128xf32>
    %cst_273 = arith.constant dense<0.000000e+00> : vector<8x128xf32>
    %811 = tpu.matmul %764, %562, %cst_273 {dimension_numbers = #tpu.dot_dimension_numbers<[1], [0], [0], [1], [0, 0, 1, 1], [], []>} : vector<8x32xf32>, vector<32x128xf32>, vector<8x128xf32> -> vector<8x128xf32>
    %812 = arith.addf %810, %811 : vector<8x128xf32>
    %813 = arith.negf %812 : vector<8x128xf32>
    %814 = math.exp %813 : vector<8x128xf32>
    %cst_274 = arith.constant 1.000000e+00 : f32
    %815 = vector.broadcast %cst_274 : f32 to vector<8x128xf32>
    %816 = arith.addf %815, %814 : vector<8x128xf32>
    %817 = arith.divf %815, %816 : vector<8x128xf32>
    %818 = math.tanh %812 : vector<8x128xf32>
    %819 = vector.extract_strided_slice %817 {offsets = [0, 0], sizes = [8, 32], strides = [1, 1]} : vector<8x128xf32> to vector<8x32xf32>
    %820 = vector.extract_strided_slice %817 {offsets = [0, 32], sizes = [8, 32], strides = [1, 1]} : vector<8x128xf32> to vector<8x32xf32>
    %821 = vector.extract_strided_slice %818 {offsets = [0, 64], sizes = [8, 32], strides = [1, 1]} : vector<8x128xf32> to vector<8x32xf32>
    %822 = vector.extract_strided_slice %817 {offsets = [0, 96], sizes = [8, 32], strides = [1, 1]} : vector<8x128xf32> to vector<8x32xf32>
    %823 = arith.mulf %820, %771 : vector<8x32xf32>
    %824 = arith.mulf %819, %821 : vector<8x32xf32>
    %825 = arith.addf %823, %824 : vector<8x32xf32>
    %826 = math.tanh %825 : vector<8x32xf32>
    %827 = arith.mulf %822, %826 : vector<8x32xf32>
    %828 = vector.broadcast %777 : vector<8x1xf32> to vector<8x32xf32>
    %829 = arith.mulf %828, %827 : vector<8x32xf32>
    %cst_275 = arith.constant 1.000000e+00 : f32
    %830 = vector.broadcast %cst_275 : f32 to vector<8x1xf32>
    %831 = arith.subf %830, %777 : vector<8x1xf32>
    %832 = vector.broadcast %831 : vector<8x1xf32> to vector<8x32xf32>
    %833 = arith.mulf %832, %764 : vector<8x32xf32>
    %834 = arith.addf %829, %833 : vector<8x32xf32>
    %835 = vector.broadcast %777 : vector<8x1xf32> to vector<8x32xf32>
    %836 = arith.mulf %835, %825 : vector<8x32xf32>
    %cst_276 = arith.constant 1.000000e+00 : f32
    %837 = vector.broadcast %cst_276 : f32 to vector<8x1xf32>
    %838 = arith.subf %837, %777 : vector<8x1xf32>
    %839 = vector.broadcast %838 : vector<8x1xf32> to vector<8x32xf32>
    %840 = arith.mulf %839, %771 : vector<8x32xf32>
    %841 = arith.addf %836, %840 : vector<8x32xf32>
    %c24_277 = arith.constant 24 : index
    %c0_278 = arith.constant 0 : index
    %842 = vector.load %arg28[%c24_277, %c0_278] : memref<64x32xf32, #tpu.memory_space<vmem>>, vector<8x32xf32>
    tpu.vector_store %arg28[%c24_277, %c0_278], %797 {strides = array<i32>} : memref<64x32xf32, #tpu.memory_space<vmem>>, vector<8x32xf32>,
    %c32_279 = arith.constant 32 : index
    %c0_280 = arith.constant 0 : index
    %843 = vector.load %arg29[%c32_279, %c0_280] : memref<64x32xf32, #tpu.memory_space<vmem>>, vector<8x32xf32>
    tpu.vector_store %arg29[%c32_279, %c0_280], %829 {strides = array<i32>} : memref<64x32xf32, #tpu.memory_space<vmem>>, vector<8x32xf32>,
    %c4_281 = arith.constant 4 : index
    %c0_282 = arith.constant 0 : index
    %c0_283 = arith.constant 0 : index
    %844 = vector.load %arg2[%c4_281, %c0_282, %c0_283] : memref<8x8x1xf32, #tpu.memory_space<vmem>>, vector<1x8x1xf32>
    %845 = vector.shape_cast %844 : vector<1x8x1xf32> to vector<8x1xf32>
    %c3_284 = arith.constant 3 : index
    %c0_285 = arith.constant 0 : index
    %c0_286 = arith.constant 0 : index
    %846 = vector.load %arg2[%c3_284, %c0_285, %c0_286] : memref<8x8x1xf32, #tpu.memory_space<vmem>>, vector<1x8x1xf32>
    %847 = vector.shape_cast %846 : vector<1x8x1xf32> to vector<8x1xf32>
    %c32_287 = arith.constant 32 : index
    %c0_288 = arith.constant 0 : index
    %848 = vector.load %arg25[%c32_287, %c0_288] : memref<64x256xf32, #tpu.memory_space<vmem>>, vector<8x128xf32>
    %cst_289 = arith.constant dense<0.000000e+00> : vector<8x128xf32>
    %849 = tpu.matmul %802, %561, %cst_289 {dimension_numbers = #tpu.dot_dimension_numbers<[1], [0], [0], [1], [0, 0, 1, 1], [], []>} : vector<8x32xf32>, vector<32x128xf32>, vector<8x128xf32> -> vector<8x128xf32>
    %850 = arith.addf %848, %849 : vector<8x128xf32>
    %851 = arith.negf %850 : vector<8x128xf32>
    %852 = math.exp %851 : vector<8x128xf32>
    %cst_290 = arith.constant 1.000000e+00 : f32
    %853 = vector.broadcast %cst_290 : f32 to vector<8x128xf32>
    %854 = arith.addf %853, %852 : vector<8x128xf32>
    %855 = arith.divf %853, %854 : vector<8x128xf32>
    %856 = math.tanh %850 : vector<8x128xf32>
    %857 = vector.extract_strided_slice %855 {offsets = [0, 0], sizes = [8, 32], strides = [1, 1]} : vector<8x128xf32> to vector<8x32xf32>
    %858 = vector.extract_strided_slice %855 {offsets = [0, 32], sizes = [8, 32], strides = [1, 1]} : vector<8x128xf32> to vector<8x32xf32>
    %859 = vector.extract_strided_slice %856 {offsets = [0, 64], sizes = [8, 32], strides = [1, 1]} : vector<8x128xf32> to vector<8x32xf32>
    %860 = vector.extract_strided_slice %855 {offsets = [0, 96], sizes = [8, 32], strides = [1, 1]} : vector<8x128xf32> to vector<8x32xf32>
    %861 = arith.mulf %858, %809 : vector<8x32xf32>
    %862 = arith.mulf %857, %859 : vector<8x32xf32>
    %863 = arith.addf %861, %862 : vector<8x32xf32>
    %864 = math.tanh %863 : vector<8x32xf32>
    %865 = arith.mulf %860, %864 : vector<8x32xf32>
    %866 = vector.broadcast %845 : vector<8x1xf32> to vector<8x32xf32>
    %867 = arith.mulf %866, %865 : vector<8x32xf32>
    %cst_291 = arith.constant 1.000000e+00 : f32
    %868 = vector.broadcast %cst_291 : f32 to vector<8x1xf32>
    %869 = arith.subf %868, %845 : vector<8x1xf32>
    %870 = vector.broadcast %869 : vector<8x1xf32> to vector<8x32xf32>
    %871 = arith.mulf %870, %802 : vector<8x32xf32>
    %872 = arith.addf %867, %871 : vector<8x32xf32>
    %873 = vector.broadcast %845 : vector<8x1xf32> to vector<8x32xf32>
    %874 = arith.mulf %873, %863 : vector<8x32xf32>
    %cst_292 = arith.constant 1.000000e+00 : f32
    %875 = vector.broadcast %cst_292 : f32 to vector<8x1xf32>
    %876 = arith.subf %875, %845 : vector<8x1xf32>
    %877 = vector.broadcast %876 : vector<8x1xf32> to vector<8x32xf32>
    %878 = arith.mulf %877, %809 : vector<8x32xf32>
    %879 = arith.addf %874, %878 : vector<8x32xf32>
    %c24_293 = arith.constant 24 : index
    %c128_294 = arith.constant 128 : index
    %880 = vector.load %arg25[%c24_293, %c128_294] : memref<64x256xf32, #tpu.memory_space<vmem>>, vector<8x128xf32>
    %cst_295 = arith.constant dense<0.000000e+00> : vector<8x128xf32>
    %881 = tpu.matmul %834, %562, %cst_295 {dimension_numbers = #tpu.dot_dimension_numbers<[1], [0], [0], [1], [0, 0, 1, 1], [], []>} : vector<8x32xf32>, vector<32x128xf32>, vector<8x128xf32> -> vector<8x128xf32>
    %882 = arith.addf %880, %881 : vector<8x128xf32>
    %883 = arith.negf %882 : vector<8x128xf32>
    %884 = math.exp %883 : vector<8x128xf32>
    %cst_296 = arith.constant 1.000000e+00 : f32
    %885 = vector.broadcast %cst_296 : f32 to vector<8x128xf32>
    %886 = arith.addf %885, %884 : vector<8x128xf32>
    %887 = arith.divf %885, %886 : vector<8x128xf32>
    %888 = math.tanh %882 : vector<8x128xf32>
    %889 = vector.extract_strided_slice %887 {offsets = [0, 0], sizes = [8, 32], strides = [1, 1]} : vector<8x128xf32> to vector<8x32xf32>
    %890 = vector.extract_strided_slice %887 {offsets = [0, 32], sizes = [8, 32], strides = [1, 1]} : vector<8x128xf32> to vector<8x32xf32>
    %891 = vector.extract_strided_slice %888 {offsets = [0, 64], sizes = [8, 32], strides = [1, 1]} : vector<8x128xf32> to vector<8x32xf32>
    %892 = vector.extract_strided_slice %887 {offsets = [0, 96], sizes = [8, 32], strides = [1, 1]} : vector<8x128xf32> to vector<8x32xf32>
    %893 = arith.mulf %890, %841 : vector<8x32xf32>
    %894 = arith.mulf %889, %891 : vector<8x32xf32>
    %895 = arith.addf %893, %894 : vector<8x32xf32>
    %896 = math.tanh %895 : vector<8x32xf32>
    %897 = arith.mulf %892, %896 : vector<8x32xf32>
    %898 = vector.broadcast %847 : vector<8x1xf32> to vector<8x32xf32>
    %899 = arith.mulf %898, %897 : vector<8x32xf32>
    %cst_297 = arith.constant 1.000000e+00 : f32
    %900 = vector.broadcast %cst_297 : f32 to vector<8x1xf32>
    %901 = arith.subf %900, %847 : vector<8x1xf32>
    %902 = vector.broadcast %901 : vector<8x1xf32> to vector<8x32xf32>
    %903 = arith.mulf %902, %834 : vector<8x32xf32>
    %904 = arith.addf %899, %903 : vector<8x32xf32>
    %905 = vector.broadcast %847 : vector<8x1xf32> to vector<8x32xf32>
    %906 = arith.mulf %905, %895 : vector<8x32xf32>
    %cst_298 = arith.constant 1.000000e+00 : f32
    %907 = vector.broadcast %cst_298 : f32 to vector<8x1xf32>
    %908 = arith.subf %907, %847 : vector<8x1xf32>
    %909 = vector.broadcast %908 : vector<8x1xf32> to vector<8x32xf32>
    %910 = arith.mulf %909, %841 : vector<8x32xf32>
    %911 = arith.addf %906, %910 : vector<8x32xf32>
    %c32_299 = arith.constant 32 : index
    %c0_300 = arith.constant 0 : index
    %912 = vector.load %arg28[%c32_299, %c0_300] : memref<64x32xf32, #tpu.memory_space<vmem>>, vector<8x32xf32>
    tpu.vector_store %arg28[%c32_299, %c0_300], %867 {strides = array<i32>} : memref<64x32xf32, #tpu.memory_space<vmem>>, vector<8x32xf32>,
    %c24_301 = arith.constant 24 : index
    %c0_302 = arith.constant 0 : index
    %913 = vector.load %arg29[%c24_301, %c0_302] : memref<64x32xf32, #tpu.memory_space<vmem>>, vector<8x32xf32>
    tpu.vector_store %arg29[%c24_301, %c0_302], %899 {strides = array<i32>} : memref<64x32xf32, #tpu.memory_space<vmem>>, vector<8x32xf32>,
    %c5_303 = arith.constant 5 : index
    %c0_304 = arith.constant 0 : index
    %c0_305 = arith.constant 0 : index
    %914 = vector.load %arg2[%c5_303, %c0_304, %c0_305] : memref<8x8x1xf32, #tpu.memory_space<vmem>>, vector<1x8x1xf32>
    %915 = vector.shape_cast %914 : vector<1x8x1xf32> to vector<8x1xf32>
    %c2_306 = arith.constant 2 : index
    %c0_307 = arith.constant 0 : index
    %c0_308 = arith.constant 0 : index
    %916 = vector.load %arg2[%c2_306, %c0_307, %c0_308] : memref<8x8x1xf32, #tpu.memory_space<vmem>>, vector<1x8x1xf32>
    %917 = vector.shape_cast %916 : vector<1x8x1xf32> to vector<8x1xf32>
    %c40_309 = arith.constant 40 : index
    %c0_310 = arith.constant 0 : index
    %918 = vector.load %arg25[%c40_309, %c0_310] : memref<64x256xf32, #tpu.memory_space<vmem>>, vector<8x128xf32>
    %cst_311 = arith.constant dense<0.000000e+00> : vector<8x128xf32>
    %919 = tpu.matmul %872, %561, %cst_311 {dimension_numbers = #tpu.dot_dimension_numbers<[1], [0], [0], [1], [0, 0, 1, 1], [], []>} : vector<8x32xf32>, vector<32x128xf32>, vector<8x128xf32> -> vector<8x128xf32>
    %920 = arith.addf %918, %919 : vector<8x128xf32>
    %921 = arith.negf %920 : vector<8x128xf32>
    %922 = math.exp %921 : vector<8x128xf32>
    %cst_312 = arith.constant 1.000000e+00 : f32
    %923 = vector.broadcast %cst_312 : f32 to vector<8x128xf32>
    %924 = arith.addf %923, %922 : vector<8x128xf32>
    %925 = arith.divf %923, %924 : vector<8x128xf32>
    %926 = math.tanh %920 : vector<8x128xf32>
    %927 = vector.extract_strided_slice %925 {offsets = [0, 0], sizes = [8, 32], strides = [1, 1]} : vector<8x128xf32> to vector<8x32xf32>
    %928 = vector.extract_strided_slice %925 {offsets = [0, 32], sizes = [8, 32], strides = [1, 1]} : vector<8x128xf32> to vector<8x32xf32>
    %929 = vector.extract_strided_slice %926 {offsets = [0, 64], sizes = [8, 32], strides = [1, 1]} : vector<8x128xf32> to vector<8x32xf32>
    %930 = vector.extract_strided_slice %925 {offsets = [0, 96], sizes = [8, 32], strides = [1, 1]} : vector<8x128xf32> to vector<8x32xf32>
    %931 = arith.mulf %928, %879 : vector<8x32xf32>
    %932 = arith.mulf %927, %929 : vector<8x32xf32>
    %933 = arith.addf %931, %932 : vector<8x32xf32>
    %934 = math.tanh %933 : vector<8x32xf32>
    %935 = arith.mulf %930, %934 : vector<8x32xf32>
    %936 = vector.broadcast %915 : vector<8x1xf32> to vector<8x32xf32>
    %937 = arith.mulf %936, %935 : vector<8x32xf32>
    %cst_313 = arith.constant 1.000000e+00 : f32
    %938 = vector.broadcast %cst_313 : f32 to vector<8x1xf32>
    %939 = arith.subf %938, %915 : vector<8x1xf32>
    %940 = vector.broadcast %939 : vector<8x1xf32> to vector<8x32xf32>
    %941 = arith.mulf %940, %872 : vector<8x32xf32>
    %942 = arith.addf %937, %941 : vector<8x32xf32>
    %943 = vector.broadcast %915 : vector<8x1xf32> to vector<8x32xf32>
    %944 = arith.mulf %943, %933 : vector<8x32xf32>
    %cst_314 = arith.constant 1.000000e+00 : f32
    %945 = vector.broadcast %cst_314 : f32 to vector<8x1xf32>
    %946 = arith.subf %945, %915 : vector<8x1xf32>
    %947 = vector.broadcast %946 : vector<8x1xf32> to vector<8x32xf32>
    %948 = arith.mulf %947, %879 : vector<8x32xf32>
    %949 = arith.addf %944, %948 : vector<8x32xf32>
    %c16_315 = arith.constant 16 : index
    %c128_316 = arith.constant 128 : index
    %950 = vector.load %arg25[%c16_315, %c128_316] : memref<64x256xf32, #tpu.memory_space<vmem>>, vector<8x128xf32>
    %cst_317 = arith.constant dense<0.000000e+00> : vector<8x128xf32>
    %951 = tpu.matmul %904, %562, %cst_317 {dimension_numbers = #tpu.dot_dimension_numbers<[1], [0], [0], [1], [0, 0, 1, 1], [], []>} : vector<8x32xf32>, vector<32x128xf32>, vector<8x128xf32> -> vector<8x128xf32>
    %952 = arith.addf %950, %951 : vector<8x128xf32>
    %953 = arith.negf %952 : vector<8x128xf32>
    %954 = math.exp %953 : vector<8x128xf32>
    %cst_318 = arith.constant 1.000000e+00 : f32
    %955 = vector.broadcast %cst_318 : f32 to vector<8x128xf32>
    %956 = arith.addf %955, %954 : vector<8x128xf32>
    %957 = arith.divf %955, %956 : vector<8x128xf32>
    %958 = math.tanh %952 : vector<8x128xf32>
    %959 = vector.extract_strided_slice %957 {offsets = [0, 0], sizes = [8, 32], strides = [1, 1]} : vector<8x128xf32> to vector<8x32xf32>
    %960 = vector.extract_strided_slice %957 {offsets = [0, 32], sizes = [8, 32], strides = [1, 1]} : vector<8x128xf32> to vector<8x32xf32>
    %961 = vector.extract_strided_slice %958 {offsets = [0, 64], sizes = [8, 32], strides = [1, 1]} : vector<8x128xf32> to vector<8x32xf32>
    %962 = vector.extract_strided_slice %957 {offsets = [0, 96], sizes = [8, 32], strides = [1, 1]} : vector<8x128xf32> to vector<8x32xf32>
    %963 = arith.mulf %960, %911 : vector<8x32xf32>
    %964 = arith.mulf %959, %961 : vector<8x32xf32>
    %965 = arith.addf %963, %964 : vector<8x32xf32>
    %966 = math.tanh %965 : vector<8x32xf32>
    %967 = arith.mulf %962, %966 : vector<8x32xf32>
    %968 = vector.broadcast %917 : vector<8x1xf32> to vector<8x32xf32>
    %969 = arith.mulf %968, %967 : vector<8x32xf32>
    %cst_319 = arith.constant 1.000000e+00 : f32
    %970 = vector.broadcast %cst_319 : f32 to vector<8x1xf32>
    %971 = arith.subf %970, %917 : vector<8x1xf32>
    %972 = vector.broadcast %971 : vector<8x1xf32> to vector<8x32xf32>
    %973 = arith.mulf %972, %904 : vector<8x32xf32>
    %974 = arith.addf %969, %973 : vector<8x32xf32>
    %975 = vector.broadcast %917 : vector<8x1xf32> to vector<8x32xf32>
    %976 = arith.mulf %975, %965 : vector<8x32xf32>
    %cst_320 = arith.constant 1.000000e+00 : f32
    %977 = vector.broadcast %cst_320 : f32 to vector<8x1xf32>
    %978 = arith.subf %977, %917 : vector<8x1xf32>
    %979 = vector.broadcast %978 : vector<8x1xf32> to vector<8x32xf32>
    %980 = arith.mulf %979, %911 : vector<8x32xf32>
    %981 = arith.addf %976, %980 : vector<8x32xf32>
    %c40_321 = arith.constant 40 : index
    %c0_322 = arith.constant 0 : index
    %982 = vector.load %arg28[%c40_321, %c0_322] : memref<64x32xf32, #tpu.memory_space<vmem>>, vector<8x32xf32>
    tpu.vector_store %arg28[%c40_321, %c0_322], %937 {strides = array<i32>} : memref<64x32xf32, #tpu.memory_space<vmem>>, vector<8x32xf32>,
    %c16_323 = arith.constant 16 : index
    %c0_324 = arith.constant 0 : index
    %983 = vector.load %arg29[%c16_323, %c0_324] : memref<64x32xf32, #tpu.memory_space<vmem>>, vector<8x32xf32>
    tpu.vector_store %arg29[%c16_323, %c0_324], %969 {strides = array<i32>} : memref<64x32xf32, #tpu.memory_space<vmem>>, vector<8x32xf32>,
    %c6_325 = arith.constant 6 : index
    %c0_326 = arith.constant 0 : index
    %c0_327 = arith.constant 0 : index
    %984 = vector.load %arg2[%c6_325, %c0_326, %c0_327] : memref<8x8x1xf32, #tpu.memory_space<vmem>>, vector<1x8x1xf32>
    %985 = vector.shape_cast %984 : vector<1x8x1xf32> to vector<8x1xf32>
    %c1_328 = arith.constant 1 : index
    %c0_329 = arith.constant 0 : index
    %c0_330 = arith.constant 0 : index
    %986 = vector.load %arg2[%c1_328, %c0_329, %c0_330] : memref<8x8x1xf32, #tpu.memory_space<vmem>>, vector<1x8x1xf32>
    %987 = vector.shape_cast %986 : vector<1x8x1xf32> to vector<8x1xf32>
    %c48_331 = arith.constant 48 : index
    %c0_332 = arith.constant 0 : index
    %988 = vector.load %arg25[%c48_331, %c0_332] : memref<64x256xf32, #tpu.memory_space<vmem>>, vector<8x128xf32>
    %cst_333 = arith.constant dense<0.000000e+00> : vector<8x128xf32>
    %989 = tpu.matmul %942, %561, %cst_333 {dimension_numbers = #tpu.dot_dimension_numbers<[1], [0], [0], [1], [0, 0, 1, 1], [], []>} : vector<8x32xf32>, vector<32x128xf32>, vector<8x128xf32> -> vector<8x128xf32>
    %990 = arith.addf %988, %989 : vector<8x128xf32>
    %991 = arith.negf %990 : vector<8x128xf32>
    %992 = math.exp %991 : vector<8x128xf32>
    %cst_334 = arith.constant 1.000000e+00 : f32
    %993 = vector.broadcast %cst_334 : f32 to vector<8x128xf32>
    %994 = arith.addf %993, %992 : vector<8x128xf32>
    %995 = arith.divf %993, %994 : vector<8x128xf32>
    %996 = math.tanh %990 : vector<8x128xf32>
    %997 = vector.extract_strided_slice %995 {offsets = [0, 0], sizes = [8, 32], strides = [1, 1]} : vector<8x128xf32> to vector<8x32xf32>
    %998 = vector.extract_strided_slice %995 {offsets = [0, 32], sizes = [8, 32], strides = [1, 1]} : vector<8x128xf32> to vector<8x32xf32>
    %999 = vector.extract_strided_slice %996 {offsets = [0, 64], sizes = [8, 32], strides = [1, 1]} : vector<8x128xf32> to vector<8x32xf32>
    %1000 = vector.extract_strided_slice %995 {offsets = [0, 96], sizes = [8, 32], strides = [1, 1]} : vector<8x128xf32> to vector<8x32xf32>
    %1001 = arith.mulf %998, %949 : vector<8x32xf32>
    %1002 = arith.mulf %997, %999 : vector<8x32xf32>
    %1003 = arith.addf %1001, %1002 : vector<8x32xf32>
    %1004 = math.tanh %1003 : vector<8x32xf32>
    %1005 = arith.mulf %1000, %1004 : vector<8x32xf32>
    %1006 = vector.broadcast %985 : vector<8x1xf32> to vector<8x32xf32>
    %1007 = arith.mulf %1006, %1005 : vector<8x32xf32>
    %cst_335 = arith.constant 1.000000e+00 : f32
    %1008 = vector.broadcast %cst_335 : f32 to vector<8x1xf32>
    %1009 = arith.subf %1008, %985 : vector<8x1xf32>
    %1010 = vector.broadcast %1009 : vector<8x1xf32> to vector<8x32xf32>
    %1011 = arith.mulf %1010, %942 : vector<8x32xf32>
    %1012 = arith.addf %1007, %1011 : vector<8x32xf32>
    %1013 = vector.broadcast %985 : vector<8x1xf32> to vector<8x32xf32>
    %1014 = arith.mulf %1013, %1003 : vector<8x32xf32>
    %cst_336 = arith.constant 1.000000e+00 : f32
    %1015 = vector.broadcast %cst_336 : f32 to vector<8x1xf32>
    %1016 = arith.subf %1015, %985 : vector<8x1xf32>
    %1017 = vector.broadcast %1016 : vector<8x1xf32> to vector<8x32xf32>
    %1018 = arith.mulf %1017, %949 : vector<8x32xf32>
    %1019 = arith.addf %1014, %1018 : vector<8x32xf32>
    %c8_337 = arith.constant 8 : index
    %c128_338 = arith.constant 128 : index
    %1020 = vector.load %arg25[%c8_337, %c128_338] : memref<64x256xf32, #tpu.memory_space<vmem>>, vector<8x128xf32>
    %cst_339 = arith.constant dense<0.000000e+00> : vector<8x128xf32>
    %1021 = tpu.matmul %974, %562, %cst_339 {dimension_numbers = #tpu.dot_dimension_numbers<[1], [0], [0], [1], [0, 0, 1, 1], [], []>} : vector<8x32xf32>, vector<32x128xf32>, vector<8x128xf32> -> vector<8x128xf32>
    %1022 = arith.addf %1020, %1021 : vector<8x128xf32>
    %1023 = arith.negf %1022 : vector<8x128xf32>
    %1024 = math.exp %1023 : vector<8x128xf32>
    %cst_340 = arith.constant 1.000000e+00 : f32
    %1025 = vector.broadcast %cst_340 : f32 to vector<8x128xf32>
    %1026 = arith.addf %1025, %1024 : vector<8x128xf32>
    %1027 = arith.divf %1025, %1026 : vector<8x128xf32>
    %1028 = math.tanh %1022 : vector<8x128xf32>
    %1029 = vector.extract_strided_slice %1027 {offsets = [0, 0], sizes = [8, 32], strides = [1, 1]} : vector<8x128xf32> to vector<8x32xf32>
    %1030 = vector.extract_strided_slice %1027 {offsets = [0, 32], sizes = [8, 32], strides = [1, 1]} : vector<8x128xf32> to vector<8x32xf32>
    %1031 = vector.extract_strided_slice %1028 {offsets = [0, 64], sizes = [8, 32], strides = [1, 1]} : vector<8x128xf32> to vector<8x32xf32>
    %1032 = vector.extract_strided_slice %1027 {offsets = [0, 96], sizes = [8, 32], strides = [1, 1]} : vector<8x128xf32> to vector<8x32xf32>
    %1033 = arith.mulf %1030, %981 : vector<8x32xf32>
    %1034 = arith.mulf %1029, %1031 : vector<8x32xf32>
    %1035 = arith.addf %1033, %1034 : vector<8x32xf32>
    %1036 = math.tanh %1035 : vector<8x32xf32>
    %1037 = arith.mulf %1032, %1036 : vector<8x32xf32>
    %1038 = vector.broadcast %987 : vector<8x1xf32> to vector<8x32xf32>
    %1039 = arith.mulf %1038, %1037 : vector<8x32xf32>
    %cst_341 = arith.constant 1.000000e+00 : f32
    %1040 = vector.broadcast %cst_341 : f32 to vector<8x1xf32>
    %1041 = arith.subf %1040, %987 : vector<8x1xf32>
    %1042 = vector.broadcast %1041 : vector<8x1xf32> to vector<8x32xf32>
    %1043 = arith.mulf %1042, %974 : vector<8x32xf32>
    %1044 = arith.addf %1039, %1043 : vector<8x32xf32>
    %1045 = vector.broadcast %987 : vector<8x1xf32> to vector<8x32xf32>
    %1046 = arith.mulf %1045, %1035 : vector<8x32xf32>
    %cst_342 = arith.constant 1.000000e+00 : f32
    %1047 = vector.broadcast %cst_342 : f32 to vector<8x1xf32>
    %1048 = arith.subf %1047, %987 : vector<8x1xf32>
    %1049 = vector.broadcast %1048 : vector<8x1xf32> to vector<8x32xf32>
    %1050 = arith.mulf %1049, %981 : vector<8x32xf32>
    %1051 = arith.addf %1046, %1050 : vector<8x32xf32>
    %c48_343 = arith.constant 48 : index
    %c0_344 = arith.constant 0 : index
    %1052 = vector.load %arg28[%c48_343, %c0_344] : memref<64x32xf32, #tpu.memory_space<vmem>>, vector<8x32xf32>
    tpu.vector_store %arg28[%c48_343, %c0_344], %1007 {strides = array<i32>} : memref<64x32xf32, #tpu.memory_space<vmem>>, vector<8x32xf32>,
    %c8_345 = arith.constant 8 : index
    %c0_346 = arith.constant 0 : index
    %1053 = vector.load %arg29[%c8_345, %c0_346] : memref<64x32xf32, #tpu.memory_space<vmem>>, vector<8x32xf32>
    tpu.vector_store %arg29[%c8_345, %c0_346], %1039 {strides = array<i32>} : memref<64x32xf32, #tpu.memory_space<vmem>>, vector<8x32xf32>,
    %c7_347 = arith.constant 7 : index
    %c0_348 = arith.constant 0 : index
    %c0_349 = arith.constant 0 : index
    %1054 = vector.load %arg2[%c7_347, %c0_348, %c0_349] : memref<8x8x1xf32, #tpu.memory_space<vmem>>, vector<1x8x1xf32>
    %1055 = vector.shape_cast %1054 : vector<1x8x1xf32> to vector<8x1xf32>
    %c0_350 = arith.constant 0 : index
    %c0_351 = arith.constant 0 : index
    %c0_352 = arith.constant 0 : index
    %1056 = vector.load %arg2[%c0_350, %c0_351, %c0_352] : memref<8x8x1xf32, #tpu.memory_space<vmem>>, vector<1x8x1xf32>
    %1057 = vector.shape_cast %1056 : vector<1x8x1xf32> to vector<8x1xf32>
    %c56_353 = arith.constant 56 : index
    %c0_354 = arith.constant 0 : index
    %1058 = vector.load %arg25[%c56_353, %c0_354] : memref<64x256xf32, #tpu.memory_space<vmem>>, vector<8x128xf32>
    %cst_355 = arith.constant dense<0.000000e+00> : vector<8x128xf32>
    %1059 = tpu.matmul %1012, %561, %cst_355 {dimension_numbers = #tpu.dot_dimension_numbers<[1], [0], [0], [1], [0, 0, 1, 1], [], []>} : vector<8x32xf32>, vector<32x128xf32>, vector<8x128xf32> -> vector<8x128xf32>
    %1060 = arith.addf %1058, %1059 : vector<8x128xf32>
    %1061 = arith.negf %1060 : vector<8x128xf32>
    %1062 = math.exp %1061 : vector<8x128xf32>
    %cst_356 = arith.constant 1.000000e+00 : f32
    %1063 = vector.broadcast %cst_356 : f32 to vector<8x128xf32>
    %1064 = arith.addf %1063, %1062 : vector<8x128xf32>
    %1065 = arith.divf %1063, %1064 : vector<8x128xf32>
    %1066 = math.tanh %1060 : vector<8x128xf32>
    %1067 = vector.extract_strided_slice %1065 {offsets = [0, 0], sizes = [8, 32], strides = [1, 1]} : vector<8x128xf32> to vector<8x32xf32>
    %1068 = vector.extract_strided_slice %1065 {offsets = [0, 32], sizes = [8, 32], strides = [1, 1]} : vector<8x128xf32> to vector<8x32xf32>
    %1069 = vector.extract_strided_slice %1066 {offsets = [0, 64], sizes = [8, 32], strides = [1, 1]} : vector<8x128xf32> to vector<8x32xf32>
    %1070 = vector.extract_strided_slice %1065 {offsets = [0, 96], sizes = [8, 32], strides = [1, 1]} : vector<8x128xf32> to vector<8x32xf32>
    %1071 = arith.mulf %1068, %1019 : vector<8x32xf32>
    %1072 = arith.mulf %1067, %1069 : vector<8x32xf32>
    %1073 = arith.addf %1071, %1072 : vector<8x32xf32>
    %1074 = math.tanh %1073 : vector<8x32xf32>
    %1075 = arith.mulf %1070, %1074 : vector<8x32xf32>
    %1076 = vector.broadcast %1055 : vector<8x1xf32> to vector<8x32xf32>
    %1077 = arith.mulf %1076, %1075 : vector<8x32xf32>
    %c0_357 = arith.constant 0 : index
    %c128_358 = arith.constant 128 : index
    %1078 = vector.load %arg25[%c0_357, %c128_358] : memref<64x256xf32, #tpu.memory_space<vmem>>, vector<8x128xf32>
    %cst_359 = arith.constant dense<0.000000e+00> : vector<8x128xf32>
    %1079 = tpu.matmul %1044, %562, %cst_359 {dimension_numbers = #tpu.dot_dimension_numbers<[1], [0], [0], [1], [0, 0, 1, 1], [], []>} : vector<8x32xf32>, vector<32x128xf32>, vector<8x128xf32> -> vector<8x128xf32>
    %1080 = arith.addf %1078, %1079 : vector<8x128xf32>
    %1081 = arith.negf %1080 : vector<8x128xf32>
    %1082 = math.exp %1081 : vector<8x128xf32>
    %cst_360 = arith.constant 1.000000e+00 : f32
    %1083 = vector.broadcast %cst_360 : f32 to vector<8x128xf32>
    %1084 = arith.addf %1083, %1082 : vector<8x128xf32>
    %1085 = arith.divf %1083, %1084 : vector<8x128xf32>
    %1086 = math.tanh %1080 : vector<8x128xf32>
    %1087 = vector.extract_strided_slice %1085 {offsets = [0, 0], sizes = [8, 32], strides = [1, 1]} : vector<8x128xf32> to vector<8x32xf32>
    %1088 = vector.extract_strided_slice %1085 {offsets = [0, 32], sizes = [8, 32], strides = [1, 1]} : vector<8x128xf32> to vector<8x32xf32>
    %1089 = vector.extract_strided_slice %1086 {offsets = [0, 64], sizes = [8, 32], strides = [1, 1]} : vector<8x128xf32> to vector<8x32xf32>
    %1090 = vector.extract_strided_slice %1085 {offsets = [0, 96], sizes = [8, 32], strides = [1, 1]} : vector<8x128xf32> to vector<8x32xf32>
    %1091 = arith.mulf %1088, %1051 : vector<8x32xf32>
    %1092 = arith.mulf %1087, %1089 : vector<8x32xf32>
    %1093 = arith.addf %1091, %1092 : vector<8x32xf32>
    %1094 = math.tanh %1093 : vector<8x32xf32>
    %1095 = arith.mulf %1090, %1094 : vector<8x32xf32>
    %1096 = vector.broadcast %1057 : vector<8x1xf32> to vector<8x32xf32>
    %1097 = arith.mulf %1096, %1095 : vector<8x32xf32>
    %c56_361 = arith.constant 56 : index
    %c0_362 = arith.constant 0 : index
    %1098 = vector.load %arg28[%c56_361, %c0_362] : memref<64x32xf32, #tpu.memory_space<vmem>>, vector<8x32xf32>
    tpu.vector_store %arg28[%c56_361, %c0_362], %1077 {strides = array<i32>} : memref<64x32xf32, #tpu.memory_space<vmem>>, vector<8x32xf32>,
    %c0_363 = arith.constant 0 : index
    %c0_364 = arith.constant 0 : index
    %1099 = vector.load %arg29[%c0_363, %c0_364] : memref<64x32xf32, #tpu.memory_space<vmem>>, vector<8x32xf32>
    tpu.vector_store %arg29[%c0_363, %c0_364], %1097 {strides = array<i32>} : memref<64x32xf32, #tpu.memory_space<vmem>>, vector<8x32xf32>,
    %c0_365 = arith.constant 0 : index
    %c0_366 = arith.constant 0 : index
    %1100 = vector.load %arg28[%c0_365, %c0_366] : memref<64x32xf32, #tpu.memory_space<vmem>>, vector<64x32xf32>
    %c0_367 = arith.constant 0 : index
    %c0_368 = arith.constant 0 : index
    %1101 = vector.load %arg13[%c0_367, %c0_368] : memref<32x32xf32, #tpu.memory_space<vmem>>, vector<32x32xf32>
    %cst_369 = arith.constant dense<0.000000e+00> : vector<64x32xf32>
    %1102 = tpu.matmul %1100, %1101, %cst_369 {dimension_numbers = #tpu.dot_dimension_numbers<[1], [0], [0], [1], [0, 0, 1, 1], [], []>} : vector<64x32xf32>, vector<32x32xf32>, vector<64x32xf32> -> vector<64x32xf32>
    %c0_370 = arith.constant 0 : index
    %c0_371 = arith.constant 0 : index
    %1103 = vector.load %arg29[%c0_370, %c0_371] : memref<64x32xf32, #tpu.memory_space<vmem>>, vector<64x32xf32>
    %c0_372 = arith.constant 0 : index
    %c0_373 = arith.constant 0 : index
    %1104 = vector.load %arg14[%c0_372, %c0_373] : memref<32x32xf32, #tpu.memory_space<vmem>>, vector<32x32xf32>
    %cst_374 = arith.constant dense<0.000000e+00> : vector<64x32xf32>
    %1105 = tpu.matmul %1103, %1104, %cst_374 {dimension_numbers = #tpu.dot_dimension_numbers<[1], [0], [0], [1], [0, 0, 1, 1], [], []>} : vector<64x32xf32>, vector<32x32xf32>, vector<64x32xf32> -> vector<64x32xf32>
    %1106 = arith.addf %1102, %1105 : vector<64x32xf32>
    %c0_375 = arith.constant 0 : index
    %c0_376 = arith.constant 0 : index
    %1107 = vector.load %arg15[%c0_375, %c0_376] : memref<1x32xf32, #tpu.memory_space<vmem>>, vector<1x32xf32>
    %1108 = vector.broadcast %1107 : vector<1x32xf32> to vector<64x32xf32>
    %1109 = arith.addf %1106, %1108 : vector<64x32xf32>
    %1110 = math.tanh %1109 : vector<64x32xf32>
    %c0_377 = arith.constant 0 : index
    %c0_378 = arith.constant 0 : index
    %1111 = vector.load %arg16[%c0_377, %c0_378] : memref<1x32xf32, #tpu.memory_space<vmem>>, vector<1x32xf32>
    %1112 = vector.broadcast %1111 : vector<1x32xf32> to vector<64x32xf32>
    %1113 = arith.mulf %1110, %1112 : vector<64x32xf32>
    %cst_379 = arith.constant dense<0.000000e+00> : vector<64xf32>
    %1114 = vector.multi_reduction <add>, %1113, %cst_379 [1] : vector<64x32xf32> to vector<64xf32>
    %1115 = vector.shape_cast %1114 : vector<64xf32> to vector<64x1xf32>
    %c0_380 = arith.constant 0 : index
    %c0_381 = arith.constant 0 : index
    %1116 = vector.load %arg17[%c0_380, %c0_381] : memref<1x1xf32, #tpu.memory_space<vmem>>, vector<1x1xf32>
    %1117 = vector.broadcast %1116 : vector<1x1xf32> to vector<64x1xf32>
    %1118 = arith.addf %1115, %1117 : vector<64x1xf32>
    %c0_382 = arith.constant 0 : index
    %c0_383 = arith.constant 0 : index
    %c0_384 = arith.constant 0 : index
    %1119 = vector.load %arg2[%c0_382, %c0_383, %c0_384] : memref<8x8x1xf32, #tpu.memory_space<vmem>>, vector<1x8x1xf32>
    %1120 = vector.shape_cast %1119 : vector<1x8x1xf32> to vector<8x1xf32>
    %cst_385 = arith.constant 0.000000e+00 : f32
    %1121 = vector.broadcast %cst_385 : f32 to vector<8x1xf32>
    %1122 = arith.cmpf ogt, %1120, %1121 : vector<8x1xf32>
    %1123 = vector.extract_strided_slice %1118 {offsets = [0, 0], sizes = [8, 1], strides = [1, 1]} : vector<64x1xf32> to vector<8x1xf32>
    %cst_386 = arith.constant -1.000000e+30 : f32
    %1124 = vector.broadcast %cst_386 : f32 to vector<8x1xf32>
    %1125 = arith.select %1122, %1123, %1124 : vector<8x1xi1>, vector<8x1xf32>
    %c1_387 = arith.constant 1 : index
    %c0_388 = arith.constant 0 : index
    %c0_389 = arith.constant 0 : index
    %1126 = vector.load %arg2[%c1_387, %c0_388, %c0_389] : memref<8x8x1xf32, #tpu.memory_space<vmem>>, vector<1x8x1xf32>
    %1127 = vector.shape_cast %1126 : vector<1x8x1xf32> to vector<8x1xf32>
    %cst_390 = arith.constant 0.000000e+00 : f32
    %1128 = vector.broadcast %cst_390 : f32 to vector<8x1xf32>
    %1129 = arith.cmpf ogt, %1127, %1128 : vector<8x1xf32>
    %1130 = vector.extract_strided_slice %1118 {offsets = [8, 0], sizes = [8, 1], strides = [1, 1]} : vector<64x1xf32> to vector<8x1xf32>
    %cst_391 = arith.constant -1.000000e+30 : f32
    %1131 = vector.broadcast %cst_391 : f32 to vector<8x1xf32>
    %1132 = arith.select %1129, %1130, %1131 : vector<8x1xi1>, vector<8x1xf32>
    %c2_392 = arith.constant 2 : index
    %c0_393 = arith.constant 0 : index
    %c0_394 = arith.constant 0 : index
    %1133 = vector.load %arg2[%c2_392, %c0_393, %c0_394] : memref<8x8x1xf32, #tpu.memory_space<vmem>>, vector<1x8x1xf32>
    %1134 = vector.shape_cast %1133 : vector<1x8x1xf32> to vector<8x1xf32>
    %cst_395 = arith.constant 0.000000e+00 : f32
    %1135 = vector.broadcast %cst_395 : f32 to vector<8x1xf32>
    %1136 = arith.cmpf ogt, %1134, %1135 : vector<8x1xf32>
    %1137 = vector.extract_strided_slice %1118 {offsets = [16, 0], sizes = [8, 1], strides = [1, 1]} : vector<64x1xf32> to vector<8x1xf32>
    %cst_396 = arith.constant -1.000000e+30 : f32
    %1138 = vector.broadcast %cst_396 : f32 to vector<8x1xf32>
    %1139 = arith.select %1136, %1137, %1138 : vector<8x1xi1>, vector<8x1xf32>
    %c3_397 = arith.constant 3 : index
    %c0_398 = arith.constant 0 : index
    %c0_399 = arith.constant 0 : index
    %1140 = vector.load %arg2[%c3_397, %c0_398, %c0_399] : memref<8x8x1xf32, #tpu.memory_space<vmem>>, vector<1x8x1xf32>
    %1141 = vector.shape_cast %1140 : vector<1x8x1xf32> to vector<8x1xf32>
    %cst_400 = arith.constant 0.000000e+00 : f32
    %1142 = vector.broadcast %cst_400 : f32 to vector<8x1xf32>
    %1143 = arith.cmpf ogt, %1141, %1142 : vector<8x1xf32>
    %1144 = vector.extract_strided_slice %1118 {offsets = [24, 0], sizes = [8, 1], strides = [1, 1]} : vector<64x1xf32> to vector<8x1xf32>
    %cst_401 = arith.constant -1.000000e+30 : f32
    %1145 = vector.broadcast %cst_401 : f32 to vector<8x1xf32>
    %1146 = arith.select %1143, %1144, %1145 : vector<8x1xi1>, vector<8x1xf32>
    %c4_402 = arith.constant 4 : index
    %c0_403 = arith.constant 0 : index
    %c0_404 = arith.constant 0 : index
    %1147 = vector.load %arg2[%c4_402, %c0_403, %c0_404] : memref<8x8x1xf32, #tpu.memory_space<vmem>>, vector<1x8x1xf32>
    %1148 = vector.shape_cast %1147 : vector<1x8x1xf32> to vector<8x1xf32>
    %cst_405 = arith.constant 0.000000e+00 : f32
    %1149 = vector.broadcast %cst_405 : f32 to vector<8x1xf32>
    %1150 = arith.cmpf ogt, %1148, %1149 : vector<8x1xf32>
    %1151 = vector.extract_strided_slice %1118 {offsets = [32, 0], sizes = [8, 1], strides = [1, 1]} : vector<64x1xf32> to vector<8x1xf32>
    %cst_406 = arith.constant -1.000000e+30 : f32
    %1152 = vector.broadcast %cst_406 : f32 to vector<8x1xf32>
    %1153 = arith.select %1150, %1151, %1152 : vector<8x1xi1>, vector<8x1xf32>
    %c5_407 = arith.constant 5 : index
    %c0_408 = arith.constant 0 : index
    %c0_409 = arith.constant 0 : index
    %1154 = vector.load %arg2[%c5_407, %c0_408, %c0_409] : memref<8x8x1xf32, #tpu.memory_space<vmem>>, vector<1x8x1xf32>
    %1155 = vector.shape_cast %1154 : vector<1x8x1xf32> to vector<8x1xf32>
    %cst_410 = arith.constant 0.000000e+00 : f32
    %1156 = vector.broadcast %cst_410 : f32 to vector<8x1xf32>
    %1157 = arith.cmpf ogt, %1155, %1156 : vector<8x1xf32>
    %1158 = vector.extract_strided_slice %1118 {offsets = [40, 0], sizes = [8, 1], strides = [1, 1]} : vector<64x1xf32> to vector<8x1xf32>
    %cst_411 = arith.constant -1.000000e+30 : f32
    %1159 = vector.broadcast %cst_411 : f32 to vector<8x1xf32>
    %1160 = arith.select %1157, %1158, %1159 : vector<8x1xi1>, vector<8x1xf32>
    %c6_412 = arith.constant 6 : index
    %c0_413 = arith.constant 0 : index
    %c0_414 = arith.constant 0 : index
    %1161 = vector.load %arg2[%c6_412, %c0_413, %c0_414] : memref<8x8x1xf32, #tpu.memory_space<vmem>>, vector<1x8x1xf32>
    %1162 = vector.shape_cast %1161 : vector<1x8x1xf32> to vector<8x1xf32>
    %cst_415 = arith.constant 0.000000e+00 : f32
    %1163 = vector.broadcast %cst_415 : f32 to vector<8x1xf32>
    %1164 = arith.cmpf ogt, %1162, %1163 : vector<8x1xf32>
    %1165 = vector.extract_strided_slice %1118 {offsets = [48, 0], sizes = [8, 1], strides = [1, 1]} : vector<64x1xf32> to vector<8x1xf32>
    %cst_416 = arith.constant -1.000000e+30 : f32
    %1166 = vector.broadcast %cst_416 : f32 to vector<8x1xf32>
    %1167 = arith.select %1164, %1165, %1166 : vector<8x1xi1>, vector<8x1xf32>
    %c7_417 = arith.constant 7 : index
    %c0_418 = arith.constant 0 : index
    %c0_419 = arith.constant 0 : index
    %1168 = vector.load %arg2[%c7_417, %c0_418, %c0_419] : memref<8x8x1xf32, #tpu.memory_space<vmem>>, vector<1x8x1xf32>
    %1169 = vector.shape_cast %1168 : vector<1x8x1xf32> to vector<8x1xf32>
    %cst_420 = arith.constant 0.000000e+00 : f32
    %1170 = vector.broadcast %cst_420 : f32 to vector<8x1xf32>
    %1171 = arith.cmpf ogt, %1169, %1170 : vector<8x1xf32>
    %1172 = vector.extract_strided_slice %1118 {offsets = [56, 0], sizes = [8, 1], strides = [1, 1]} : vector<64x1xf32> to vector<8x1xf32>
    %cst_421 = arith.constant -1.000000e+30 : f32
    %1173 = vector.broadcast %cst_421 : f32 to vector<8x1xf32>
    %1174 = arith.select %1171, %1172, %1173 : vector<8x1xi1>, vector<8x1xf32>
    %1175 = arith.maximumf %1125, %1132 : vector<8x1xf32>
    %1176 = arith.maximumf %1175, %1139 : vector<8x1xf32>
    %1177 = arith.maximumf %1176, %1146 : vector<8x1xf32>
    %1178 = arith.maximumf %1177, %1153 : vector<8x1xf32>
    %1179 = arith.maximumf %1178, %1160 : vector<8x1xf32>
    %1180 = arith.maximumf %1179, %1167 : vector<8x1xf32>
    %1181 = arith.maximumf %1180, %1174 : vector<8x1xf32>
    %1182 = arith.subf %1125, %1181 : vector<8x1xf32>
    %1183 = math.exp %1182 : vector<8x1xf32>
    %1184 = arith.subf %1132, %1181 : vector<8x1xf32>
    %1185 = math.exp %1184 : vector<8x1xf32>
    %1186 = arith.subf %1139, %1181 : vector<8x1xf32>
    %1187 = math.exp %1186 : vector<8x1xf32>
    %1188 = arith.subf %1146, %1181 : vector<8x1xf32>
    %1189 = math.exp %1188 : vector<8x1xf32>
    %1190 = arith.subf %1153, %1181 : vector<8x1xf32>
    %1191 = math.exp %1190 : vector<8x1xf32>
    %1192 = arith.subf %1160, %1181 : vector<8x1xf32>
    %1193 = math.exp %1192 : vector<8x1xf32>
    %1194 = arith.subf %1167, %1181 : vector<8x1xf32>
    %1195 = math.exp %1194 : vector<8x1xf32>
    %1196 = arith.subf %1174, %1181 : vector<8x1xf32>
    %1197 = math.exp %1196 : vector<8x1xf32>
    %1198 = arith.addf %1183, %1185 : vector<8x1xf32>
    %1199 = arith.addf %1198, %1187 : vector<8x1xf32>
    %1200 = arith.addf %1199, %1189 : vector<8x1xf32>
    %1201 = arith.addf %1200, %1191 : vector<8x1xf32>
    %1202 = arith.addf %1201, %1193 : vector<8x1xf32>
    %1203 = arith.addf %1202, %1195 : vector<8x1xf32>
    %1204 = arith.addf %1203, %1197 : vector<8x1xf32>
    %1205 = tpu.reciprocal %1204 {approx = true} : vector<8x1xf32> -> vector<8x1xf32>
    %cst_422 = arith.constant 0.000000e+00 : f32
    %1206 = vector.broadcast %cst_422 : f32 to vector<8x32xf32>
    %cst_423 = arith.constant 0.000000e+00 : f32
    %1207 = vector.broadcast %cst_423 : f32 to vector<8x32xf32>
    %1208 = arith.mulf %1183, %1205 : vector<8x1xf32>
    %c0_424 = arith.constant 0 : index
    %c0_425 = arith.constant 0 : index
    %1209 = vector.load %arg28[%c0_424, %c0_425] : memref<64x32xf32, #tpu.memory_space<vmem>>, vector<8x32xf32>
    %1210 = vector.broadcast %1208 : vector<8x1xf32> to vector<8x32xf32>
    %1211 = arith.mulf %1210, %1209 : vector<8x32xf32>
    %1212 = arith.addf %1206, %1211 : vector<8x32xf32>
    %c0_426 = arith.constant 0 : index
    %c0_427 = arith.constant 0 : index
    %1213 = vector.load %arg29[%c0_426, %c0_427] : memref<64x32xf32, #tpu.memory_space<vmem>>, vector<8x32xf32>
    %1214 = vector.broadcast %1208 : vector<8x1xf32> to vector<8x32xf32>
    %1215 = arith.mulf %1214, %1213 : vector<8x32xf32>
    %1216 = arith.addf %1207, %1215 : vector<8x32xf32>
    %1217 = arith.mulf %1185, %1205 : vector<8x1xf32>
    %c8_428 = arith.constant 8 : index
    %c0_429 = arith.constant 0 : index
    %1218 = vector.load %arg28[%c8_428, %c0_429] : memref<64x32xf32, #tpu.memory_space<vmem>>, vector<8x32xf32>
    %1219 = vector.broadcast %1217 : vector<8x1xf32> to vector<8x32xf32>
    %1220 = arith.mulf %1219, %1218 : vector<8x32xf32>
    %1221 = arith.addf %1212, %1220 : vector<8x32xf32>
    %c8_430 = arith.constant 8 : index
    %c0_431 = arith.constant 0 : index
    %1222 = vector.load %arg29[%c8_430, %c0_431] : memref<64x32xf32, #tpu.memory_space<vmem>>, vector<8x32xf32>
    %1223 = vector.broadcast %1217 : vector<8x1xf32> to vector<8x32xf32>
    %1224 = arith.mulf %1223, %1222 : vector<8x32xf32>
    %1225 = arith.addf %1216, %1224 : vector<8x32xf32>
    %1226 = arith.mulf %1187, %1205 : vector<8x1xf32>
    %c16_432 = arith.constant 16 : index
    %c0_433 = arith.constant 0 : index
    %1227 = vector.load %arg28[%c16_432, %c0_433] : memref<64x32xf32, #tpu.memory_space<vmem>>, vector<8x32xf32>
    %1228 = vector.broadcast %1226 : vector<8x1xf32> to vector<8x32xf32>
    %1229 = arith.mulf %1228, %1227 : vector<8x32xf32>
    %1230 = arith.addf %1221, %1229 : vector<8x32xf32>
    %c16_434 = arith.constant 16 : index
    %c0_435 = arith.constant 0 : index
    %1231 = vector.load %arg29[%c16_434, %c0_435] : memref<64x32xf32, #tpu.memory_space<vmem>>, vector<8x32xf32>
    %1232 = vector.broadcast %1226 : vector<8x1xf32> to vector<8x32xf32>
    %1233 = arith.mulf %1232, %1231 : vector<8x32xf32>
    %1234 = arith.addf %1225, %1233 : vector<8x32xf32>
    %1235 = arith.mulf %1189, %1205 : vector<8x1xf32>
    %c24_436 = arith.constant 24 : index
    %c0_437 = arith.constant 0 : index
    %1236 = vector.load %arg28[%c24_436, %c0_437] : memref<64x32xf32, #tpu.memory_space<vmem>>, vector<8x32xf32>
    %1237 = vector.broadcast %1235 : vector<8x1xf32> to vector<8x32xf32>
    %1238 = arith.mulf %1237, %1236 : vector<8x32xf32>
    %1239 = arith.addf %1230, %1238 : vector<8x32xf32>
    %c24_438 = arith.constant 24 : index
    %c0_439 = arith.constant 0 : index
    %1240 = vector.load %arg29[%c24_438, %c0_439] : memref<64x32xf32, #tpu.memory_space<vmem>>, vector<8x32xf32>
    %1241 = vector.broadcast %1235 : vector<8x1xf32> to vector<8x32xf32>
    %1242 = arith.mulf %1241, %1240 : vector<8x32xf32>
    %1243 = arith.addf %1234, %1242 : vector<8x32xf32>
    %1244 = arith.mulf %1191, %1205 : vector<8x1xf32>
    %c32_440 = arith.constant 32 : index
    %c0_441 = arith.constant 0 : index
    %1245 = vector.load %arg28[%c32_440, %c0_441] : memref<64x32xf32, #tpu.memory_space<vmem>>, vector<8x32xf32>
    %1246 = vector.broadcast %1244 : vector<8x1xf32> to vector<8x32xf32>
    %1247 = arith.mulf %1246, %1245 : vector<8x32xf32>
    %1248 = arith.addf %1239, %1247 : vector<8x32xf32>
    %c32_442 = arith.constant 32 : index
    %c0_443 = arith.constant 0 : index
    %1249 = vector.load %arg29[%c32_442, %c0_443] : memref<64x32xf32, #tpu.memory_space<vmem>>, vector<8x32xf32>
    %1250 = vector.broadcast %1244 : vector<8x1xf32> to vector<8x32xf32>
    %1251 = arith.mulf %1250, %1249 : vector<8x32xf32>
    %1252 = arith.addf %1243, %1251 : vector<8x32xf32>
    %1253 = arith.mulf %1193, %1205 : vector<8x1xf32>
    %c40_444 = arith.constant 40 : index
    %c0_445 = arith.constant 0 : index
    %1254 = vector.load %arg28[%c40_444, %c0_445] : memref<64x32xf32, #tpu.memory_space<vmem>>, vector<8x32xf32>
    %1255 = vector.broadcast %1253 : vector<8x1xf32> to vector<8x32xf32>
    %1256 = arith.mulf %1255, %1254 : vector<8x32xf32>
    %1257 = arith.addf %1248, %1256 : vector<8x32xf32>
    %c40_446 = arith.constant 40 : index
    %c0_447 = arith.constant 0 : index
    %1258 = vector.load %arg29[%c40_446, %c0_447] : memref<64x32xf32, #tpu.memory_space<vmem>>, vector<8x32xf32>
    %1259 = vector.broadcast %1253 : vector<8x1xf32> to vector<8x32xf32>
    %1260 = arith.mulf %1259, %1258 : vector<8x32xf32>
    %1261 = arith.addf %1252, %1260 : vector<8x32xf32>
    %1262 = arith.mulf %1195, %1205 : vector<8x1xf32>
    %c48_448 = arith.constant 48 : index
    %c0_449 = arith.constant 0 : index
    %1263 = vector.load %arg28[%c48_448, %c0_449] : memref<64x32xf32, #tpu.memory_space<vmem>>, vector<8x32xf32>
    %1264 = vector.broadcast %1262 : vector<8x1xf32> to vector<8x32xf32>
    %1265 = arith.mulf %1264, %1263 : vector<8x32xf32>
    %1266 = arith.addf %1257, %1265 : vector<8x32xf32>
    %c48_450 = arith.constant 48 : index
    %c0_451 = arith.constant 0 : index
    %1267 = vector.load %arg29[%c48_450, %c0_451] : memref<64x32xf32, #tpu.memory_space<vmem>>, vector<8x32xf32>
    %1268 = vector.broadcast %1262 : vector<8x1xf32> to vector<8x32xf32>
    %1269 = arith.mulf %1268, %1267 : vector<8x32xf32>
    %1270 = arith.addf %1261, %1269 : vector<8x32xf32>
    %1271 = arith.mulf %1197, %1205 : vector<8x1xf32>
    %c56_452 = arith.constant 56 : index
    %c0_453 = arith.constant 0 : index
    %1272 = vector.load %arg28[%c56_452, %c0_453] : memref<64x32xf32, #tpu.memory_space<vmem>>, vector<8x32xf32>
    %1273 = vector.broadcast %1271 : vector<8x1xf32> to vector<8x32xf32>
    %1274 = arith.mulf %1273, %1272 : vector<8x32xf32>
    %1275 = arith.addf %1266, %1274 : vector<8x32xf32>
    %c56_454 = arith.constant 56 : index
    %c0_455 = arith.constant 0 : index
    %1276 = vector.load %arg29[%c56_454, %c0_455] : memref<64x32xf32, #tpu.memory_space<vmem>>, vector<8x32xf32>
    %1277 = vector.broadcast %1271 : vector<8x1xf32> to vector<8x32xf32>
    %1278 = arith.mulf %1277, %1276 : vector<8x32xf32>
    %1279 = arith.addf %1270, %1278 : vector<8x32xf32>
    %c0_456 = arith.constant 0 : index
    %c0_457 = arith.constant 0 : index
    %1280 = vector.load %arg18[%c0_456, %c0_457] : memref<32x32xf32, #tpu.memory_space<vmem>>, vector<32x32xf32>
    %cst_458 = arith.constant dense<0.000000e+00> : vector<8x32xf32>
    %1281 = tpu.matmul %1275, %1280, %cst_458 {dimension_numbers = #tpu.dot_dimension_numbers<[1], [0], [0], [1], [0, 0, 1, 1], [], []>} : vector<8x32xf32>, vector<32x32xf32>, vector<8x32xf32> -> vector<8x32xf32>
    %c0_459 = arith.constant 0 : index
    %c0_460 = arith.constant 0 : index
    %1282 = vector.load %arg19[%c0_459, %c0_460] : memref<32x32xf32, #tpu.memory_space<vmem>>, vector<32x32xf32>
    %cst_461 = arith.constant dense<0.000000e+00> : vector<8x32xf32>
    %1283 = tpu.matmul %1279, %1282, %cst_461 {dimension_numbers = #tpu.dot_dimension_numbers<[1], [0], [0], [1], [0, 0, 1, 1], [], []>} : vector<8x32xf32>, vector<32x32xf32>, vector<8x32xf32> -> vector<8x32xf32>
    %1284 = arith.addf %1281, %1283 : vector<8x32xf32>
    %c0_462 = arith.constant 0 : index
    %c0_463 = arith.constant 0 : index
    %1285 = vector.load %arg20[%c0_462, %c0_463] : memref<1x32xf32, #tpu.memory_space<vmem>>, vector<1x32xf32>
    %1286 = vector.broadcast %1285 : vector<1x32xf32> to vector<8x32xf32>
    %1287 = arith.addf %1284, %1286 : vector<8x32xf32>
    %c0_464 = arith.constant 0 : index
    %c0_465 = arith.constant 0 : index
    %1288 = vector.load %arg21[%c0_464, %c0_465] : memref<32x3xf32, #tpu.memory_space<vmem>>, vector<32x3xf32>
    %cst_466 = arith.constant dense<0.000000e+00> : vector<8x3xf32>
    %1289 = tpu.matmul %1287, %1288, %cst_466 {dimension_numbers = #tpu.dot_dimension_numbers<[1], [0], [0], [1], [0, 0, 1, 1], [], []>} : vector<8x32xf32>, vector<32x3xf32>, vector<8x3xf32> -> vector<8x3xf32>
    %c0_467 = arith.constant 0 : index
    %c0_468 = arith.constant 0 : index
    %1290 = vector.load %arg22[%c0_467, %c0_468] : memref<1x3xf32, #tpu.memory_space<vmem>>, vector<1x3xf32>
    %1291 = vector.broadcast %1290 : vector<1x3xf32> to vector<8x3xf32>
    %1292 = arith.addf %1289, %1291 : vector<8x3xf32>
    %c0_469 = arith.constant 0 : index
    %c0_470 = arith.constant 0 : index
    %1293 = vector.load %arg23[%c0_469, %c0_470] : memref<8x3xf32, #tpu.memory_space<vmem>>, vector<8x3xf32>
    tpu.vector_store %arg23[%c0_469, %c0_470], %1292 {strides = array<i32>} : memref<8x3xf32, #tpu.memory_space<vmem>>, vector<8x3xf32>,
    return
  }
}

</mosaic_0001>

<llo_original>
// kernel: forward.1
$region0: #{forward.1}
  #allocation0 [shape = 'u32[]', space=smem, size = 0x4, offset = 0x4, fixed_abs, tag = 'smem constant byte address 0x4 - core index']
  #allocation1 [shape = 'u32[144,128]{1,0:T(1,128)}', space=vmem, size = 0x12000, scoped, tag = 'internal scratch']
  #allocation2 [shape = 'f32[64,64]{1,0:T(8,128)}', space=vmem, size = 0x8000, scoped, tag = 'scratch operand']
  #allocation3 [shape = 'f32[64,256]{1,0:T(8,128)}', space=vmem, size = 0x10000, scoped, tag = 'scratch operand']
  #allocation4 [shape = 'f32[64,8]{1,0:T(8,128)}', space=vmem, size = 0x8000, scoped, tag = 'scratch operand']
  #allocation5 [shape = 'f32[64,8]{1,0:T(8,128)}', space=vmem, size = 0x8000, scoped, tag = 'scratch operand']
  #allocation6 [shape = 'f32[64,32]{1,0:T(8,128)}', space=vmem, size = 0x8000, scoped, tag = 'scratch operand']
  #allocation7 [shape = 'f32[64,32]{1,0:T(8,128)}', space=vmem, size = 0x8000, scoped, tag = 'scratch operand']
  #allocation8 [shape = 'f32[1,1]{1,0:T(1,128)S(1)}', space=vmem, size = 0x200, scoped, tag = 'scoped memory for forward.1']
  %s0 = inlined_call_operand.vmem [shape: f32[64,16], index: 0, kind: input, shape index: {}]
  %s1 = inlined_call_operand.vmem [shape: f32[64,8], index: 1, kind: input, shape index: {}]
  %s2 = inlined_call_operand.vmem [shape: f32[8,8,1], index: 2, kind: input, shape index: {}]
  %s3 = inlined_call_operand.vmem [shape: f32[8,64], index: 3, kind: input, shape index: {}]
  %s4 = inlined_call_operand.vmem [shape: f32[8,32], index: 4, kind: input, shape index: {}]
  %s5 = inlined_call_operand.vmem [shape: f32[8,32], index: 5, kind: input, shape index: {}]
  %s6 = inlined_call_operand.vmem [shape: f32[1,64], index: 6, kind: input, shape index: {}]
  %s7 = inlined_call_operand.vmem [shape: f32[16,256], index: 7, kind: input, shape index: {}]
  %s8 = inlined_call_operand.vmem [shape: f32[8,256], index: 8, kind: input, shape index: {}]
  %s9 = inlined_call_operand.vmem [shape: f32[8,256], index: 9, kind: input, shape index: {}]
  %s10 = inlined_call_operand.vmem [shape: f32[32,128], index: 10, kind: input, shape index: {}]
  %s11 = inlined_call_operand.vmem [shape: f32[32,128], index: 11, kind: input, shape index: {}]
  %s12 = inlined_call_operand.vmem [shape: f32[1,256], index: 12, kind: input, shape index: {}]
  %s13 = inlined_call_operand.vmem [shape: f32[32,32], index: 13, kind: input, shape index: {}]
  %s14 = inlined_call_operand.vmem [shape: f32[32,32], index: 14, kind: input, shape index: {}]
  %s15 = inlined_call_operand.vmem [shape: f32[1,32], index: 15, kind: input, shape index: {}]
  %s16 = inlined_call_operand.vmem [shape: f32[1,32], index: 16, kind: input, shape index: {}]
  %s17 = inlined_call_operand.<no memory space> [shape: f32[1,1], index: 17, kind: input, shape index: {}]
  %s18 = inlined_call_operand.vmem [shape: f32[32,32], index: 18, kind: input, shape index: {}]
  %s19 = inlined_call_operand.vmem [shape: f32[32,32], index: 19, kind: input, shape index: {}]
  %s20 = inlined_call_operand.vmem [shape: f32[1,32], index: 20, kind: input, shape index: {}]
  %s21 = inlined_call_operand.vmem [shape: f32[32,3], index: 21, kind: input, shape index: {}]
  %s22 = inlined_call_operand.vmem [shape: f32[1,3], index: 22, kind: input, shape index: {}]
  %s23 = inlined_call_operand.vmem [shape: f32[8,3], index: 23, kind: output, shape index: {}]
  %s24 = sld [smem:[#allocation0]]
  $region102: #{forward.1} parent=0
    _
  %s26 = ssub.s32 1, %s24
  %s27 = scalar_select 0, %s26, %s24
  %v28 = vstv %s17
  %29 = vst [vmem:[#allocation8] sm:$0x1] %v28
  // Predicated region
  $region2: #{forward.1} parent=0 // pred_check
    _
  $region3: #{forward.1} parent=0 // pred_check_branch
    %31 = sbr.rel (0) target = $region5
  $region4: #{forward.1} parent=0 // pred_region
    _
  $region5: #{forward.1} parent=0 // pred_fallthru
    _
  // Predicated region
  $region6: #{forward.1} parent=0 // pred_check
    _
  $region7: #{forward.1} parent=0 // pred_check_branch
    %33 = sbr.rel (0) target = $region9
  $region8: #{forward.1} parent=0 // pred_region
    _
  $region9: #{forward.1} parent=0 // pred_fallthru
    _
  // Predicated region
  $region10: #{forward.1} parent=0 // pred_check
    _
  $region11: #{forward.1} parent=0 // pred_check_branch
    %35 = sbr.rel (0) target = $region13
  $region12: #{forward.1} parent=0 // pred_region
    _
  $region13: #{forward.1} parent=0 // pred_fallthru
    _
  // Predicated region
  $region14: #{forward.1} parent=0 // pred_check
    _
  $region15: #{forward.1} parent=0 // pred_check_branch
    %37 = sbr.rel (0) target = $region17
  $region16: #{forward.1} parent=0 // pred_region
    _
  $region17: #{forward.1} parent=0 // pred_fallthru
    _
  // Predicated region
  $region18: #{forward.1} parent=0 // pred_check
    _
  $region19: #{forward.1} parent=0 // pred_check_branch
    %39 = sbr.rel (0) target = $region21
  $region20: #{forward.1} parent=0 // pred_region
    _
  $region21: #{forward.1} parent=0 // pred_fallthru
    _
  // Predicated region
  $region22: #{forward.1} parent=0 // pred_check
    _
  $region23: #{forward.1} parent=0 // pred_check_branch
    %41 = sbr.rel (0) target = $region25
  $region24: #{forward.1} parent=0 // pred_region
    _
  $region25: #{forward.1} parent=0 // pred_fallthru
    _
  // Predicated region
  $region26: #{forward.1} parent=0 // pred_check
    _
  $region27: #{forward.1} parent=0 // pred_check_branch
    %43 = sbr.rel (0) target = $region29
  $region28: #{forward.1} parent=0 // pred_region
    _
  $region29: #{forward.1} parent=0 // pred_fallthru
    _
  // Predicated region
  $region30: #{forward.1} parent=0 // pred_check
    _
  $region31: #{forward.1} parent=0 // pred_check_branch
    %45 = sbr.rel (0) target = $region33
  $region32: #{forward.1} parent=0 // pred_region
    _
  $region33: #{forward.1} parent=0 // pred_fallthru
    _
  // Predicated region
  $region34: #{forward.1} parent=0 // pred_check
    _
  $region35: #{forward.1} parent=0 // pred_check_branch
    %47 = sbr.rel (0) target = $region37
  $region36: #{forward.1} parent=0 // pred_region
    _
  $region37: #{forward.1} parent=0 // pred_fallthru
    _
  // Predicated region
  $region38: #{forward.1} parent=0 // pred_check
    _
  $region39: #{forward.1} parent=0 // pred_check_branch
    %49 = sbr.rel (0) target = $region41
  $region40: #{forward.1} parent=0 // pred_region
    _
  $region41: #{forward.1} parent=0 // pred_fallthru
    _
  // Predicated region
  $region42: #{forward.1} parent=0 // pred_check
    _
  $region43: #{forward.1} parent=0 // pred_check_branch
    %51 = sbr.rel (0) target = $region45
  $region44: #{forward.1} parent=0 // pred_region
    _
  $region45: #{forward.1} parent=0 // pred_fallthru
    _
  // Predicated region
  $region46: #{forward.1} parent=0 // pred_check
    _
  $region47: #{forward.1} parent=0 // pred_check_branch
    %53 = sbr.rel (0) target = $region49
  $region48: #{forward.1} parent=0 // pred_region
    _
  $region49: #{forward.1} parent=0 // pred_fallthru
    _
  // Predicated region
  $region50: #{forward.1} parent=0 // pred_check
    _
  $region51: #{forward.1} parent=0 // pred_check_branch
    %55 = sbr.rel (0) target = $region53
  $region52: #{forward.1} parent=0 // pred_region
    _
  $region53: #{forward.1} parent=0 // pred_fallthru
    _
  // Predicated region
  $region54: #{forward.1} parent=0 // pred_check
    _
  $region55: #{forward.1} parent=0 // pred_check_branch
    %57 = sbr.rel (0) target = $region57
  $region56: #{forward.1} parent=0 // pred_region
    _
  $region57: #{forward.1} parent=0 // pred_fallthru
    _
  // Predicated region
  $region58: #{forward.1} parent=0 // pred_check
    _
  $region59: #{forward.1} parent=0 // pred_check_branch
    %59 = sbr.rel (0) target = $region61
  $region60: #{forward.1} parent=0 // pred_region
    _
  $region61: #{forward.1} parent=0 // pred_fallthru
    _
  // Predicated region
  $region62: #{forward.1} parent=0 // pred_check
    _
  $region63: #{forward.1} parent=0 // pred_check_branch
    %61 = sbr.rel (0) target = $region65
  $region64: #{forward.1} parent=0 // pred_region
    _
  $region65: #{forward.1} parent=0 // pred_fallthru
    _
  // Predicated region
  $region66: #{forward.1} parent=0 // pred_check
    _
  $region67: #{forward.1} parent=0 // pred_check_branch
    %63 = sbr.rel (0) target = $region69
  $region68: #{forward.1} parent=0 // pred_region
    _
  $region69: #{forward.1} parent=0 // pred_fallthru
    _
  // Predicated region
  $region70: #{forward.1} parent=0 // pred_check
    _
  $region71: #{forward.1} parent=0 // pred_check_branch
    %65 = sbr.rel (0) target = $region73
  $region72: #{forward.1} parent=0 // pred_region
    _
  $region73: #{forward.1} parent=0 // pred_fallthru
    _
  // Predicated region
  $region74: #{forward.1} parent=0 // pred_check
    _
  $region75: #{forward.1} parent=0 // pred_check_branch
    %67 = sbr.rel (0) target = $region77
  $region76: #{forward.1} parent=0 // pred_region
    _
  $region77: #{forward.1} parent=0 // pred_fallthru
    _
  // Predicated region
  $region78: #{forward.1} parent=0 // pred_check
    _
  $region79: #{forward.1} parent=0 // pred_check_branch
    %69 = sbr.rel (0) target = $region81
  $region80: #{forward.1} parent=0 // pred_region
    _
  $region81: #{forward.1} parent=0 // pred_fallthru
    _
  // Predicated region
  $region82: #{forward.1} parent=0 // pred_check
    _
  $region83: #{forward.1} parent=0 // pred_check_branch
    %71 = sbr.rel (0) target = $region85
  $region84: #{forward.1} parent=0 // pred_region
    _
  $region85: #{forward.1} parent=0 // pred_fallthru
    _
  // Predicated region
  $region86: #{forward.1} parent=0 // pred_check
    _
  $region87: #{forward.1} parent=0 // pred_check_branch
    %73 = sbr.rel (0) target = $region89
  $region88: #{forward.1} parent=0 // pred_region
    _
  $region89: #{forward.1} parent=0 // pred_fallthru
    _
  // Predicated region
  $region90: #{forward.1} parent=0 // pred_check
    _
  $region91: #{forward.1} parent=0 // pred_check_branch
    %75 = sbr.rel (0) target = $region93
  $region92: #{forward.1} parent=0 // pred_region
    _
  $region93: #{forward.1} parent=0 // pred_fallthru
    _
  %v76 = vld [vmem:[%s1] sm:$0xff]
  %v77 = vld [vmem:[%s1 + $0x8] sm:$0xff]
  %v78 = vld [vmem:[%s1 + $0x10] sm:$0xff]
  %v79 = vld [vmem:[%s1 + $0x18] sm:$0xff]
  %v80 = vld [vmem:[%s1 + $0x20] sm:$0xff]
  %v81 = vld [vmem:[%s1 + $0x28] sm:$0xff]
  %v82 = vld [vmem:[%s1 + $0x30] sm:$0xff]
  %v83 = vld [vmem:[%s1 + $0x38] sm:$0xff]
  %v84 = vld [vmem:[%s3] sm:$0xff]
  %v85 = vld [vmem:[%s6] sm:$0x1]
  %v87 = vlaneseq
  %v88 = vshrl.u32 %v87, 7
  %v89 = vsub.s32 0, %v88
  %v90 = vrot.slane %v85, %v89
  %vm92 = vcmask 64512
  %v94 = vsel %vm92, %v76, 0
  %v97 = vsel %vm92, %v77, 0
  %v100 = vsel %vm92, %v78, 0
  %v103 = vsel %vm92, %v79, 0
  %v106 = vsel %vm92, %v80, 0
  %v109 = vsel %vm92, %v81, 0
  %v112 = vsel %vm92, %v82, 0
  %v115 = vsel %vm92, %v83, 0
  %117 = vmatprep.subr.mxu0 0.0
  %118 = vmatpush1.msra.mxu0 %v84
  %119 = vmatprep.subr.mxu0 0.0
  %120 = vmatpush1.msra.mxu0 0.0
  %121 = vmatprep.subr.mxu0 0.0
  %122 = vmatpush1.msra.mxu0 0.0
  %123 = vmatprep.subr.mxu0 0.0
  %124 = vmatpush1.msra.mxu0 0.0
  %125 = vmatprep.subr.mxu0 0.0
  %126 = vmatpush1.msra.mxu0 0.0
  %127 = vmatprep.subr.mxu0 0.0
  %128 = vmatpush1.msra.mxu0 0.0
  %129 = vmatprep.subr.mxu0 0.0
  %130 = vmatpush1.msra.mxu0 0.0
  %131 = vmatprep.subr.mxu0 0.0
  %132 = vmatpush1.msra.mxu0 0.0
  %133 = vmatprep.subr.mxu0 0.0
  %134 = vmatpush1.msra.mxu0 0.0
  %135 = vmatprep.subr.mxu0 0.0
  %136 = vmatpush1.msra.mxu0 0.0
  %137 = vmatprep.subr.mxu0 0.0
  %138 = vmatpush1.msra.mxu0 0.0
  %139 = vmatprep.subr.mxu0 0.0
  %140 = vmatpush1.msra.mxu0 0.0
  %141 = vmatprep.subr.mxu0 0.0
  %142 = vmatpush1.msra.mxu0 0.0
  %143 = vmatprep.subr.mxu0 0.0
  %144 = vmatpush1.msra.mxu0 0.0
  %145 = vmatprep.subr.mxu0 0.0
  %146 = vmatpush1.msra.mxu0 0.0
  %147 = vmatprep.subr.mxu0 0.0
  %148 = vmatpush1.msra.mxu0 0.0
  %149 = vmatprep.subr.mxu0 0.0
  %150 = vmatpush1.msra.mxu0 0.0
  %151 = vmatprep.subr.mxu0 0.0
  %152 = vmatpush1.msra.mxu0 0.0
  %153 = vmatprep.subr.mxu0 0.0
  %154 = vmatpush1.msra.mxu0 0.0
  %155 = vmatprep.subr.mxu0 0.0
  %156 = vmatpush1.msra.mxu0 0.0
  %157 = vmatprep.subr.mxu0 0.0
  %158 = vmatpush1.msra.mxu0 0.0
  %159 = vmatprep.subr.mxu0 0.0
  %160 = vmatpush1.msra.mxu0 0.0
  %161 = vmatprep.subr.mxu0 0.0
  %162 = vmatpush1.msra.mxu0 0.0
  %163 = vmatprep.subr.mxu0 0.0
  %164 = vmatpush1.msra.mxu0 0.0
  %165 = vmatprep.subr.mxu0 0.0
  %166 = vmatpush1.msra.mxu0 0.0
  %167 = vmatprep.subr.mxu0 0.0
  %168 = vmatpush1.msra.mxu0 0.0
  %169 = vmatprep.subr.mxu0 0.0
  %170 = vmatpush1.msra.mxu0 0.0
  %171 = vmatprep.subr.mxu0 0.0
  %172 = vmatpush1.msra.mxu0 0.0
  %173 = vmatprep.subr.mxu0 0.0
  %174 = vmatpush1.msra.mxu0 0.0
  %175 = vmatprep.subr.mxu0 0.0
  %176 = vmatpush1.msra.mxu0 0.0
  %177 = vmatprep.subr.mxu0 0.0
  %178 = vmatpush1.msra.mxu0 0.0
  %179 = vmatprep.subr.mxu0 0.0
  %180 = vmatpush1.msra.mxu0 0.0
  %181 = vmatprep.mubr.f32.mxu0 0.0
  %182 = vmatmul.mubr.f32.gmra.mrb[0].mxu0 %v94
  %v183 = vpop.f32.mrb[0].mxu0
  %v184 = vadd.f32 %v90, %v183
  %v185 = vpop.f32.mrb[0].mxu0
  %186 = vmatprep.mubr.f32.mxu0 0.0
  %187 = vmatmul.mubr.f32.gmra.mrb[0].mxu0 %v97
  %v188 = vpop.f32.mrb[0].mxu0
  %v189 = vadd.f32 %v90, %v188
  %v190 = vpop.f32.mrb[0].mxu0
  %191 = vmatprep.mubr.f32.mxu0 0.0
  %192 = vmatmul.mubr.f32.gmra.mrb[0].mxu0 %v100
  %v193 = vpop.f32.mrb[0].mxu0
  %v194 = vadd.f32 %v90, %v193
  %v195 = vpop.f32.mrb[0].mxu0
  %196 = vmatprep.mubr.f32.mxu0 0.0
  %197 = vmatmul.mubr.f32.gmra.mrb[0].mxu0 %v103
  %v198 = vpop.f32.mrb[0].mxu0
  %v199 = vadd.f32 %v90, %v198
  %v200 = vpop.f32.mrb[0].mxu0
  %201 = vmatprep.mubr.f32.mxu0 0.0
  %202 = vmatmul.mubr.f32.gmra.mrb[0].mxu0 %v106
  %v203 = vpop.f32.mrb[0].mxu0
  %v204 = vadd.f32 %v90, %v203
  %v205 = vpop.f32.mrb[0].mxu0
  %206 = vmatprep.mubr.f32.mxu0 0.0
  %207 = vmatmul.mubr.f32.gmra.mrb[0].mxu0 %v109
  %v208 = vpop.f32.mrb[0].mxu0
  %v209 = vadd.f32 %v90, %v208
  %v210 = vpop.f32.mrb[0].mxu0
  %211 = vmatprep.mubr.f32.mxu0 0.0
  %212 = vmatmul.mubr.f32.gmra.mrb[0].mxu0 %v112
  %v213 = vpop.f32.mrb[0].mxu0
  %v214 = vadd.f32 %v90, %v213
  %v215 = vpop.f32.mrb[0].mxu0
  %216 = vmatprep.mubr.f32.mxu0 0.0
  %217 = vmatmul.mubr.f32.gmra.mrb[0].mxu0 %v115
  %v218 = vpop.f32.mrb[0].mxu0
  %v219 = vadd.f32 %v90, %v218
  %v220 = vpop.f32.mrb[0].mxu0
  %221 = vdwg.mxu0
  %vm222 = vcmask 523264
  %223 = vst.msk [vmem:[#allocation2] sm:$0xff] %vm222, %v184
  %224 = vst.msk [vmem:[#allocation2 + $0x8] sm:$0xff] %vm222, %v189
  %225 = vst.msk [vmem:[#allocation2 + $0x10] sm:$0xff] %vm222, %v194
  %226 = vst.msk [vmem:[#allocation2 + $0x18] sm:$0xff] %vm222, %v199
  %227 = vst.msk [vmem:[#allocation2 + $0x20] sm:$0xff] %vm222, %v204
  %228 = vst.msk [vmem:[#allocation2 + $0x28] sm:$0xff] %vm222, %v209
  %229 = vst.msk [vmem:[#allocation2 + $0x30] sm:$0xff] %vm222, %v214
  %230 = vst.msk [vmem:[#allocation2 + $0x38] sm:$0xff] %vm222, %v219
  %v231 = vld [vmem:[%s4] sm:$0xff]
  %v232 = vld [vmem:[%s5] sm:$0xff]
  %v233 = vld [vmem:[%s2] sm:$0xff]
  %s234 = scalar_lea.vmem %s2, 56
  %v235 = vld [vmem:[%s234] sm:$0xff]
  %v236 = vld [vmem:[#allocation2] sm:$0xff]
  %v238 = vsel %vm92, 0.0, 0
  %240 = vmatprep.subr.mxu0 0.0
  %241 = vmatpush1.msra.mxu0 %v231
  %242 = vmatprep.subr.mxu0 0.0
  %243 = vmatpush1.msra.mxu0 0.0
  %244 = vmatprep.subr.mxu0 0.0
  %245 = vmatpush1.msra.mxu0 0.0
  %246 = vmatprep.subr.mxu0 0.0
  %247 = vmatpush1.msra.mxu0 0.0
  %248 = vmatprep.subr.mxu0 0.0
  %249 = vmatpush1.msra.mxu0 0.0
  %250 = vmatprep.subr.mxu0 0.0
  %251 = vmatpush1.msra.mxu0 0.0
  %252 = vmatprep.subr.mxu0 0.0
  %253 = vmatpush1.msra.mxu0 0.0
  %254 = vmatprep.subr.mxu0 0.0
  %255 = vmatpush1.msra.mxu0 0.0
  %256 = vmatprep.subr.mxu0 0.0
  %257 = vmatpush1.msra.mxu0 0.0
  %258 = vmatprep.subr.mxu0 0.0
  %259 = vmatpush1.msra.mxu0 0.0
  %260 = vmatprep.subr.mxu0 0.0
  %261 = vmatpush1.msra.mxu0 0.0
  %262 = vmatprep.subr.mxu0 0.0
  %263 = vmatpush1.msra.mxu0 0.0
  %264 = vmatprep.subr.mxu0 0.0
  %265 = vmatpush1.msra.mxu0 0.0
  %266 = vmatprep.subr.mxu0 0.0
  %267 = vmatpush1.msra.mxu0 0.0
  %268 = vmatprep.subr.mxu0 0.0
  %269 = vmatpush1.msra.mxu0 0.0
  %270 = vmatprep.subr.mxu0 0.0
  %271 = vmatpush1.msra.mxu0 0.0
  %272 = vmatprep.subr.mxu0 0.0
  %273 = vmatpush1.msra.mxu0 0.0
  %274 = vmatprep.subr.mxu0 0.0
  %275 = vmatpush1.msra.mxu0 0.0
  %276 = vmatprep.subr.mxu0 0.0
  %277 = vmatpush1.msra.mxu0 0.0
  %278 = vmatprep.subr.mxu0 0.0
  %279 = vmatpush1.msra.mxu0 0.0
  %280 = vmatprep.subr.mxu0 0.0
  %281 = vmatpush1.msra.mxu0 0.0
  %282 = vmatprep.subr.mxu0 0.0
  %283 = vmatpush1.msra.mxu0 0.0
  %284 = vmatprep.subr.mxu0 0.0
  %285 = vmatpush1.msra.mxu0 0.0
  %286 = vmatprep.subr.mxu0 0.0
  %287 = vmatpush1.msra.mxu0 0.0
  %288 = vmatprep.subr.mxu0 0.0
  %289 = vmatpush1.msra.mxu0 0.0
  %290 = vmatprep.subr.mxu0 0.0
  %291 = vmatpush1.msra.mxu0 0.0
  %292 = vmatprep.subr.mxu0 0.0
  %293 = vmatpush1.msra.mxu0 0.0
  %294 = vmatprep.subr.mxu0 0.0
  %295 = vmatpush1.msra.mxu0 0.0
  %296 = vmatprep.subr.mxu0 0.0
  %297 = vmatpush1.msra.mxu0 0.0
  %298 = vmatprep.subr.mxu0 0.0
  %299 = vmatpush1.msra.mxu0 0.0
  %300 = vmatprep.subr.mxu0 0.0
  %301 = vmatpush1.msra.mxu0 0.0
  %302 = vmatprep.subr.mxu0 0.0
  %303 = vmatpush1.msra.mxu0 0.0
  %304 = vmatprep.mubr.f32.mxu0 0.0
  %305 = vmatmul.mubr.f32.gmra.mrb[0].mxu0 %v238
  %v306 = vpop.f32.mrb[0].mxu0
  %v307 = vadd.f32 0.0, %v306
  %v308 = vpop.f32.mrb[0].mxu0
  %309 = vdwg.mxu0
  %v310 = vadd.f32 %v236, %v307
  %v311 = vxor.u32 %v310, 2147483648
  %v312 = vmul.f32 %v311, 1.442695
  %v313 = vpow.pop %v312
  %v314 = vadd.f32 %v313, 1.0
  %v315 = vrcp.pop %v314
  %v316 = vmul.f32 1.0, %v315
  %v317 = vtanh.pop %v310
  %v318 = vmul.f32 %v316, 0.0
  %320 = vrot.lane.b32.xlu0 %v317, 112
  %v321 = vpop.permute.xlu0 %320
  %v323 = vmul.f32 %v316, %v321
  %325 = vrot.lane.b32.xlu0 %v323, 8
  %v326 = vpop.permute.xlu0 %325
  %v328 = vadd.f32 %v318, %v326
  %v329 = vtanh.pop %v328
  %331 = vrot.lane.b32.xlu0 %v329, 16
  %v332 = vpop.permute.xlu0 %331
  %v334 = vmul.f32 %v316, %v332
  %336 = vset.pattern.permute.xlu0 0
  %337 = vperm.xlu0 %336, %v233
  %v338 = vpop.permute.xlu0 %337
  %v340 = vmul.f32 %v338, %v334
  %v341 = vsub.f32 1.0, %v233
  %343 = vset.pattern.permute.xlu0 0
  %344 = vperm.xlu0 %343, %v341
  %v345 = vpop.permute.xlu0 %344
  %v347 = vmul.f32 %v345, 0.0
  %v348 = vadd.f32 %v340, %v347
  %v349 = vmul.f32 %v338, %v328
  %v350 = vadd.f32 %v349, %v347
  %v351 = vld [vmem:[#allocation2 + $0x38] sm:$0xff]
  %352 = vmatprep.subr.mxu0 0.0
  %353 = vmatpush1.msra.mxu0 %v232
  %354 = vmatprep.subr.mxu0 0.0
  %355 = vmatpush1.msra.mxu0 0.0
  %356 = vmatprep.subr.mxu0 0.0
  %357 = vmatpush1.msra.mxu0 0.0
  %358 = vmatprep.subr.mxu0 0.0
  %359 = vmatpush1.msra.mxu0 0.0
  %360 = vmatprep.subr.mxu0 0.0
  %361 = vmatpush1.msra.mxu0 0.0
  %362 = vmatprep.subr.mxu0 0.0
  %363 = vmatpush1.msra.mxu0 0.0
  %364 = vmatprep.subr.mxu0 0.0
  %365 = vmatpush1.msra.mxu0 0.0
  %366 = vmatprep.subr.mxu0 0.0
  %367 = vmatpush1.msra.mxu0 0.0
  %368 = vmatprep.subr.mxu0 0.0
  %369 = vmatpush1.msra.mxu0 0.0
  %370 = vmatprep.subr.mxu0 0.0
  %371 = vmatpush1.msra.mxu0 0.0
  %372 = vmatprep.subr.mxu0 0.0
  %373 = vmatpush1.msra.mxu0 0.0
  %374 = vmatprep.subr.mxu0 0.0
  %375 = vmatpush1.msra.mxu0 0.0
  %376 = vmatprep.subr.mxu0 0.0
  %377 = vmatpush1.msra.mxu0 0.0
  %378 = vmatprep.subr.mxu0 0.0
  %379 = vmatpush1.msra.mxu0 0.0
  %380 = vmatprep.subr.mxu0 0.0
  %381 = vmatpush1.msra.mxu0 0.0
  %382 = vmatprep.subr.mxu0 0.0
  %383 = vmatpush1.msra.mxu0 0.0
  %384 = vmatprep.subr.mxu0 0.0
  %385 = vmatpush1.msra.mxu0 0.0
  %386 = vmatprep.subr.mxu0 0.0
  %387 = vmatpush1.msra.mxu0 0.0
  %388 = vmatprep.subr.mxu0 0.0
  %389 = vmatpush1.msra.mxu0 0.0
  %390 = vmatprep.subr.mxu0 0.0
  %391 = vmatpush1.msra.mxu0 0.0
  %392 = vmatprep.subr.mxu0 0.0
  %393 = vmatpush1.msra.mxu0 0.0
  %394 = vmatprep.subr.mxu0 0.0
  %395 = vmatpush1.msra.mxu0 0.0
  %396 = vmatprep.subr.mxu0 0.0
  %397 = vmatpush1.msra.mxu0 0.0
  %398 = vmatprep.subr.mxu0 0.0
  %399 = vmatpush1.msra.mxu0 0.0
  %400 = vmatprep.subr.mxu0 0.0
  %401 = vmatpush1.msra.mxu0 0.0
  %402 = vmatprep.subr.mxu0 0.0
  %403 = vmatpush1.msra.mxu0 0.0
  %404 = vmatprep.subr.mxu0 0.0
  %405 = vmatpush1.msra.mxu0 0.0
  %406 = vmatprep.subr.mxu0 0.0
  %407 = vmatpush1.msra.mxu0 0.0
  %408 = vmatprep.subr.mxu0 0.0
  %409 = vmatpush1.msra.mxu0 0.0
  %410 = vmatprep.subr.mxu0 0.0
  %411 = vmatpush1.msra.mxu0 0.0
  %412 = vmatprep.subr.mxu0 0.0
  %413 = vmatpush1.msra.mxu0 0.0
  %414 = vmatprep.subr.mxu0 0.0
  %415 = vmatpush1.msra.mxu0 0.0
  %416 = vmatprep.mubr.f32.mxu0 0.0
  %417 = vmatmul.mubr.f32.gmra.mrb[0].mxu0 %v238
  %v418 = vpop.f32.mrb[0].mxu0
  %v419 = vadd.f32 0.0, %v418
  %v420 = vpop.f32.mrb[0].mxu0
  %421 = vdwg.mxu0
  %423 = vrot.lane.b32.xlu0 %v419, 32
  %v424 = vpop.permute.xlu0 %423
  %v426 = vadd.f32 %v351, %v424
  %v427 = vxor.u32 %v426, 2147483648
  %v428 = vmul.f32 %v427, 1.442695
  %v429 = vpow.pop %v428
  %v430 = vadd.f32 %v429, 1.0
  %v431 = vrcp.pop %v430
  %v432 = vmul.f32 1.0, %v431
  %v433 = vtanh.pop %v426
  %v434 = vmul.f32 %v432, 0.0
  %436 = vrot.lane.b32.xlu0 %v433, 112
  %v437 = vpop.permute.xlu0 %436
  %v439 = vmul.f32 %v432, %v437
  %441 = vrot.lane.b32.xlu0 %v439, 8
  %v442 = vpop.permute.xlu0 %441
  %v444 = vadd.f32 %v434, %v442
  %v445 = vtanh.pop %v444
  %447 = vrot.lane.b32.xlu0 %v445, 16
  %v448 = vpop.permute.xlu0 %447
  %v450 = vmul.f32 %v432, %v448
  %452 = vset.pattern.permute.xlu0 0
  %453 = vperm.xlu0 %452, %v235
  %v454 = vpop.permute.xlu0 %453
  %v456 = vmul.f32 %v454, %v450
  %v457 = vsub.f32 1.0, %v235
  %459 = vset.pattern.permute.xlu0 0
  %460 = vperm.xlu0 %459, %v457
  %v461 = vpop.permute.xlu0 %460
  %v463 = vmul.f32 %v461, 0.0
  %v464 = vadd.f32 %v456, %v463
  %v465 = vmul.f32 %v454, %v444
  %v466 = vadd.f32 %v465, %v463
  %468 = vrot.lane.b32.xlu0 %v340, 104
  %v469 = vpop.permute.xlu0 %468
  %471 = vst.msk [vmem:[#allocation4] sm:$0xff] %vm92, %v469
  %473 = vrot.lane.b32.xlu0 %v456, 72
  %v474 = vpop.permute.xlu0 %473
  %476 = vst.msk [vmem:[#allocation5 + $0x38] sm:$0xff] %vm92, %v474
  %s477 = scalar_lea.vmem %s2, 8
  %v478 = vld [vmem:[%s477] sm:$0xff]
  %s479 = scalar_lea.vmem %s2, 48
  %v480 = vld [vmem:[%s479] sm:$0xff]
  %v481 = vld [vmem:[#allocation2 + $0x8] sm:$0xff]
  %483 = vrot.lane.b32.xlu0 %v348, 104
  %v484 = vpop.permute.xlu0 %483
  %v485 = vsel %vm92, %v484, 0
  %487 = vmatprep.subr.mxu0 0.0
  %488 = vmatpush1.msra.mxu0 %v231
  %489 = vmatprep.subr.mxu0 0.0
  %490 = vmatpush1.msra.mxu0 0.0
  %491 = vmatprep.subr.mxu0 0.0
  %492 = vmatpush1.msra.mxu0 0.0
  %493 = vmatprep.subr.mxu0 0.0
  %494 = vmatpush1.msra.mxu0 0.0
  %495 = vmatprep.subr.mxu0 0.0
  %496 = vmatpush1.msra.mxu0 0.0
  %497 = vmatprep.subr.mxu0 0.0
  %498 = vmatpush1.msra.mxu0 0.0
  %499 = vmatprep.subr.mxu0 0.0
  %500 = vmatpush1.msra.mxu0 0.0
  %501 = vmatprep.subr.mxu0 0.0
  %502 = vmatpush1.msra.mxu0 0.0
  %503 = vmatprep.subr.mxu0 0.0
  %504 = vmatpush1.msra.mxu0 0.0
  %505 = vmatprep.subr.mxu0 0.0
  %506 = vmatpush1.msra.mxu0 0.0
  %507 = vmatprep.subr.mxu0 0.0
  %508 = vmatpush1.msra.mxu0 0.0
  %509 = vmatprep.subr.mxu0 0.0
  %510 = vmatpush1.msra.mxu0 0.0
  %511 = vmatprep.subr.mxu0 0.0
  %512 = vmatpush1.msra.mxu0 0.0
  %513 = vmatprep.subr.mxu0 0.0
  %514 = vmatpush1.msra.mxu0 0.0
  %515 = vmatprep.subr.mxu0 0.0
  %516 = vmatpush1.msra.mxu0 0.0
  %517 = vmatprep.subr.mxu0 0.0
  %518 = vmatpush1.msra.mxu0 0.0
  %519 = vmatprep.subr.mxu0 0.0
  %520 = vmatpush1.msra.mxu0 0.0
  %521 = vmatprep.subr.mxu0 0.0
  %522 = vmatpush1.msra.mxu0 0.0
  %523 = vmatprep.subr.mxu0 0.0
  %524 = vmatpush1.msra.mxu0 0.0
  %525 = vmatprep.subr.mxu0 0.0
  %526 = vmatpush1.msra.mxu0 0.0
  %527 = vmatprep.subr.mxu0 0.0
  %528 = vmatpush1.msra.mxu0 0.0
  %529 = vmatprep.subr.mxu0 0.0
  %530 = vmatpush1.msra.mxu0 0.0
  %531 = vmatprep.subr.mxu0 0.0
  %532 = vmatpush1.msra.mxu0 0.0
  %533 = vmatprep.subr.mxu0 0.0
  %534 = vmatpush1.msra.mxu0 0.0
  %535 = vmatprep.subr.mxu0 0.0
  %536 = vmatpush1.msra.mxu0 0.0
  %537 = vmatprep.subr.mxu0 0.0
  %538 = vmatpush1.msra.mxu0 0.0
  %539 = vmatprep.subr.mxu0 0.0
  %540 = vmatpush1.msra.mxu0 0.0
  %541 = vmatprep.subr.mxu0 0.0
  %542 = vmatpush1.msra.mxu0 0.0
  %543 = vmatprep.subr.mxu0 0.0
  %544 = vmatpush1.msra.mxu0 0.0
  %545 = vmatprep.subr.mxu0 0.0
  %546 = vmatpush1.msra.mxu0 0.0
  %547 = vmatprep.subr.mxu0 0.0
  %548 = vmatpush1.msra.mxu0 0.0
  %549 = vmatprep.subr.mxu0 0.0
  %550 = vmatpush1.msra.mxu0 0.0
  %551 = vmatprep.mubr.f32.mxu0 0.0
  %552 = vmatmul.mubr.f32.gmra.mrb[0].mxu0 %v485
  %v553 = vpop.f32.mrb[0].mxu0
  %v554 = vadd.f32 0.0, %v553
  %v555 = vpop.f32.mrb[0].mxu0
  %556 = vdwg.mxu0
  %v557 = vadd.f32 %v481, %v554
  %v558 = vxor.u32 %v557, 2147483648
  %v559 = vmul.f32 %v558, 1.442695
  %v560 = vpow.pop %v559
  %v561 = vadd.f32 %v560, 1.0
  %v562 = vrcp.pop %v561
  %v563 = vmul.f32 1.0, %v562
  %v564 = vtanh.pop %v557
  %v565 = vmul.f32 %v563, %v350
  %567 = vrot.lane.b32.xlu0 %v564, 112
  %v568 = vpop.permute.xlu0 %567
  %v570 = vmul.f32 %v563, %v568
  %572 = vrot.lane.b32.xlu0 %v570, 8
  %v573 = vpop.permute.xlu0 %572
  %v575 = vadd.f32 %v565, %v573
  %v576 = vtanh.pop %v575
  %578 = vrot.lane.b32.xlu0 %v576, 16
  %v579 = vpop.permute.xlu0 %578
  %v581 = vmul.f32 %v563, %v579
  %583 = vset.pattern.permute.xlu0 0
  %584 = vperm.xlu0 %583, %v478
  %v585 = vpop.permute.xlu0 %584
  %v587 = vmul.f32 %v585, %v581
  %v588 = vsub.f32 1.0, %v478
  %590 = vset.pattern.permute.xlu0 0
  %591 = vperm.xlu0 %590, %v588
  %v592 = vpop.permute.xlu0 %591
  %v594 = vmul.f32 %v592, %v348
  %v595 = vadd.f32 %v587, %v594
  %v596 = vmul.f32 %v585, %v575
  %v597 = vmul.f32 %v592, %v350
  %v598 = vadd.f32 %v596, %v597
  %v599 = vld [vmem:[#allocation2 + $0x30] sm:$0xff]
  %601 = vrot.lane.b32.xlu0 %v464, 72
  %v602 = vpop.permute.xlu0 %601
  %v603 = vsel %vm92, %v602, 0
  %605 = vmatprep.subr.mxu0 0.0
  %606 = vmatpush1.msra.mxu0 %v232
  %607 = vmatprep.subr.mxu0 0.0
  %608 = vmatpush1.msra.mxu0 0.0
  %609 = vmatprep.subr.mxu0 0.0
  %610 = vmatpush1.msra.mxu0 0.0
  %611 = vmatprep.subr.mxu0 0.0
  %612 = vmatpush1.msra.mxu0 0.0
  %613 = vmatprep.subr.mxu0 0.0
  %614 = vmatpush1.msra.mxu0 0.0
  %615 = vmatprep.subr.mxu0 0.0
  %616 = vmatpush1.msra.mxu0 0.0
  %617 = vmatprep.subr.mxu0 0.0
  %618 = vmatpush1.msra.mxu0 0.0
  %619 = vmatprep.subr.mxu0 0.0
  %620 = vmatpush1.msra.mxu0 0.0
  %621 = vmatprep.subr.mxu0 0.0
  %622 = vmatpush1.msra.mxu0 0.0
  %623 = vmatprep.subr.mxu0 0.0
  %624 = vmatpush1.msra.mxu0 0.0
  %625 = vmatprep.subr.mxu0 0.0
  %626 = vmatpush1.msra.mxu0 0.0
  %627 = vmatprep.subr.mxu0 0.0
  %628 = vmatpush1.msra.mxu0 0.0
  %629 = vmatprep.subr.mxu0 0.0
  %630 = vmatpush1.msra.mxu0 0.0
  %631 = vmatprep.subr.mxu0 0.0
  %632 = vmatpush1.msra.mxu0 0.0
  %633 = vmatprep.subr.mxu0 0.0
  %634 = vmatpush1.msra.mxu0 0.0
  %635 = vmatprep.subr.mxu0 0.0
  %636 = vmatpush1.msra.mxu0 0.0
  %637 = vmatprep.subr.mxu0 0.0
  %638 = vmatpush1.msra.mxu0 0.0
  %639 = vmatprep.subr.mxu0 0.0
  %640 = vmatpush1.msra.mxu0 0.0
  %641 = vmatprep.subr.mxu0 0.0
  %642 = vmatpush1.msra.mxu0 0.0
  %643 = vmatprep.subr.mxu0 0.0
  %644 = vmatpush1.msra.mxu0 0.0
  %645 = vmatprep.subr.mxu0 0.0
  %646 = vmatpush1.msra.mxu0 0.0
  %647 = vmatprep.subr.mxu0 0.0
  %648 = vmatpush1.msra.mxu0 0.0
  %649 = vmatprep.subr.mxu0 0.0
  %650 = vmatpush1.msra.mxu0 0.0
  %651 = vmatprep.subr.mxu0 0.0
  %652 = vmatpush1.msra.mxu0 0.0
  %653 = vmatprep.subr.mxu0 0.0
  %654 = vmatpush1.msra.mxu0 0.0
  %655 = vmatprep.subr.mxu0 0.0
  %656 = vmatpush1.msra.mxu0 0.0
  %657 = vmatprep.subr.mxu0 0.0
  %658 = vmatpush1.msra.mxu0 0.0
  %659 = vmatprep.subr.mxu0 0.0
  %660 = vmatpush1.msra.mxu0 0.0
  %661 = vmatprep.subr.mxu0 0.0
  %662 = vmatpush1.msra.mxu0 0.0
  %663 = vmatprep.subr.mxu0 0.0
  %664 = vmatpush1.msra.mxu0 0.0
  %665 = vmatprep.subr.mxu0 0.0
  %666 = vmatpush1.msra.mxu0 0.0
  %667 = vmatprep.subr.mxu0 0.0
  %668 = vmatpush1.msra.mxu0 0.0
  %669 = vmatprep.mubr.f32.mxu0 0.0
  %670 = vmatmul.mubr.f32.gmra.mrb[0].mxu0 %v603
  %v671 = vpop.f32.mrb[0].mxu0
  %v672 = vadd.f32 0.0, %v671
  %v673 = vpop.f32.mrb[0].mxu0
  %674 = vdwg.mxu0
  %676 = vrot.lane.b32.xlu0 %v672, 32
  %v677 = vpop.permute.xlu0 %676
  %v679 = vadd.f32 %v599, %v677
  %v680 = vxor.u32 %v679, 2147483648
  %v681 = vmul.f32 %v680, 1.442695
  %v682 = vpow.pop %v681
  %v683 = vadd.f32 %v682, 1.0
  %v684 = vrcp.pop %v683
  %v685 = vmul.f32 1.0, %v684
  %v686 = vtanh.pop %v679
  %v687 = vmul.f32 %v685, %v466
  %689 = vrot.lane.b32.xlu0 %v686, 112
  %v690 = vpop.permute.xlu0 %689
  %v692 = vmul.f32 %v685, %v690
  %694 = vrot.lane.b32.xlu0 %v692, 8
  %v695 = vpop.permute.xlu0 %694
  %v697 = vadd.f32 %v687, %v695
  %v698 = vtanh.pop %v697
  %700 = vrot.lane.b32.xlu0 %v698, 16
  %v701 = vpop.permute.xlu0 %700
  %v703 = vmul.f32 %v685, %v701
  %705 = vset.pattern.permute.xlu0 0
  %706 = vperm.xlu0 %705, %v480
  %v707 = vpop.permute.xlu0 %706
  %v709 = vmul.f32 %v707, %v703
  %v710 = vsub.f32 1.0, %v480
  %712 = vset.pattern.permute.xlu0 0
  %713 = vperm.xlu0 %712, %v710
  %v714 = vpop.permute.xlu0 %713
  %v716 = vmul.f32 %v714, %v464
  %v717 = vadd.f32 %v709, %v716
  %v718 = vmul.f32 %v707, %v697
  %v719 = vmul.f32 %v714, %v466
  %v720 = vadd.f32 %v718, %v719
  %722 = vrot.lane.b32.xlu0 %v587, 104
  %v723 = vpop.permute.xlu0 %722
  %725 = vst.msk [vmem:[#allocation4 + $0x8] sm:$0xff] %vm92, %v723
  %727 = vrot.lane.b32.xlu0 %v709, 72
  %v728 = vpop.permute.xlu0 %727
  %730 = vst.msk [vmem:[#allocation5 + $0x30] sm:$0xff] %vm92, %v728
  %s731 = scalar_lea.vmem %s2, 16
  %v732 = vld [vmem:[%s731] sm:$0xff]
  %s733 = scalar_lea.vmem %s2, 40
  %v734 = vld [vmem:[%s733] sm:$0xff]
  %v735 = vld [vmem:[#allocation2 + $0x10] sm:$0xff]
  %737 = vrot.lane.b32.xlu0 %v595, 104
  %v738 = vpop.permute.xlu0 %737
  %v739 = vsel %vm92, %v738, 0
  %741 = vmatprep.subr.mxu0 0.0
  %742 = vmatpush1.msra.mxu0 %v231
  %743 = vmatprep.subr.mxu0 0.0
  %744 = vmatpush1.msra.mxu0 0.0
  %745 = vmatprep.subr.mxu0 0.0
  %746 = vmatpush1.msra.mxu0 0.0
  %747 = vmatprep.subr.mxu0 0.0
  %748 = vmatpush1.msra.mxu0 0.0
  %749 = vmatprep.subr.mxu0 0.0
  %750 = vmatpush1.msra.mxu0 0.0
  %751 = vmatprep.subr.mxu0 0.0
  %752 = vmatpush1.msra.mxu0 0.0
  %753 = vmatprep.subr.mxu0 0.0
  %754 = vmatpush1.msra.mxu0 0.0
  %755 = vmatprep.subr.mxu0 0.0
  %756 = vmatpush1.msra.mxu0 0.0
  %757 = vmatprep.subr.mxu0 0.0
  %758 = vmatpush1.msra.mxu0 0.0
  %759 = vmatprep.subr.mxu0 0.0
  %760 = vmatpush1.msra.mxu0 0.0
  %761 = vmatprep.subr.mxu0 0.0
  %762 = vmatpush1.msra.mxu0 0.0
  %763 = vmatprep.subr.mxu0 0.0
  %764 = vmatpush1.msra.mxu0 0.0
  %765 = vmatprep.subr.mxu0 0.0
  %766 = vmatpush1.msra.mxu0 0.0
  %767 = vmatprep.subr.mxu0 0.0
  %768 = vmatpush1.msra.mxu0 0.0
  %769 = vmatprep.subr.mxu0 0.0
  %770 = vmatpush1.msra.mxu0 0.0
  %771 = vmatprep.subr.mxu0 0.0
  %772 = vmatpush1.msra.mxu0 0.0
  %773 = vmatprep.subr.mxu0 0.0
  %774 = vmatpush1.msra.mxu0 0.0
  %775 = vmatprep.subr.mxu0 0.0
  %776 = vmatpush1.msra.mxu0 0.0
  %777 = vmatprep.subr.mxu0 0.0
  %778 = vmatpush1.msra.mxu0 0.0
  %779 = vmatprep.subr.mxu0 0.0
  %780 = vmatpush1.msra.mxu0 0.0
  %781 = vmatprep.subr.mxu0 0.0
  %782 = vmatpush1.msra.mxu0 0.0
  %783 = vmatprep.subr.mxu0 0.0
  %784 = vmatpush1.msra.mxu0 0.0
  %785 = vmatprep.subr.mxu0 0.0
  %786 = vmatpush1.msra.mxu0 0.0
  %787 = vmatprep.subr.mxu0 0.0
  %788 = vmatpush1.msra.mxu0 0.0
  %789 = vmatprep.subr.mxu0 0.0
  %790 = vmatpush1.msra.mxu0 0.0
  %791 = vmatprep.subr.mxu0 0.0
  %792 = vmatpush1.msra.mxu0 0.0
  %793 = vmatprep.subr.mxu0 0.0
  %794 = vmatpush1.msra.mxu0 0.0
  %795 = vmatprep.subr.mxu0 0.0
  %796 = vmatpush1.msra.mxu0 0.0
  %797 = vmatprep.subr.mxu0 0.0
  %798 = vmatpush1.msra.mxu0 0.0
  %799 = vmatprep.subr.mxu0 0.0
  %800 = vmatpush1.msra.mxu0 0.0
  %801 = vmatprep.subr.mxu0 0.0
  %802 = vmatpush1.msra.mxu0 0.0
  %803 = vmatprep.subr.mxu0 0.0
  %804 = vmatpush1.msra.mxu0 0.0
  %805 = vmatprep.mubr.f32.mxu0 0.0
  %806 = vmatmul.mubr.f32.gmra.mrb[0].mxu0 %v739
  %v807 = vpop.f32.mrb[0].mxu0
  %v808 = vadd.f32 0.0, %v807
  %v809 = vpop.f32.mrb[0].mxu0
  %810 = vdwg.mxu0
  %v811 = vadd.f32 %v735, %v808
  %v812 = vxor.u32 %v811, 2147483648
  %v813 = vmul.f32 %v812, 1.442695
  %v814 = vpow.pop %v813
  %v815 = vadd.f32 %v814, 1.0
  %v816 = vrcp.pop %v815
  %v817 = vmul.f32 1.0, %v816
  %v818 = vtanh.pop %v811
  %v819 = vmul.f32 %v817, %v598
  %821 = vrot.lane.b32.xlu0 %v818, 112
  %v822 = vpop.permute.xlu0 %821
  %v824 = vmul.f32 %v817, %v822
  %826 = vrot.lane.b32.xlu0 %v824, 8
  %v827 = vpop.permute.xlu0 %826
  %v829 = vadd.f32 %v819, %v827
  %v830 = vtanh.pop %v829
  %832 = vrot.lane.b32.xlu0 %v830, 16
  %v833 = vpop.permute.xlu0 %832
  %v835 = vmul.f32 %v817, %v833
  %837 = vset.pattern.permute.xlu0 0
  %838 = vperm.xlu0 %837, %v732
  %v839 = vpop.permute.xlu0 %838
  %v841 = vmul.f32 %v839, %v835
  %v842 = vsub.f32 1.0, %v732
  %844 = vset.pattern.permute.xlu0 0
  %845 = vperm.xlu0 %844, %v842
  %v846 = vpop.permute.xlu0 %845
  %v848 = vmul.f32 %v846, %v595
  %v849 = vadd.f32 %v841, %v848
  %v850 = vmul.f32 %v839, %v829
  %v851 = vmul.f32 %v846, %v598
  %v852 = vadd.f32 %v850, %v851
  %v853 = vld [vmem:[#allocation2 + $0x28] sm:$0xff]
  %855 = vrot.lane.b32.xlu0 %v717, 72
  %v856 = vpop.permute.xlu0 %855
  %v857 = vsel %vm92, %v856, 0
  %859 = vmatprep.subr.mxu0 0.0
  %860 = vmatpush1.msra.mxu0 %v232
  %861 = vmatprep.subr.mxu0 0.0
  %862 = vmatpush1.msra.mxu0 0.0
  %863 = vmatprep.subr.mxu0 0.0
  %864 = vmatpush1.msra.mxu0 0.0
  %865 = vmatprep.subr.mxu0 0.0
  %866 = vmatpush1.msra.mxu0 0.0
  %867 = vmatprep.subr.mxu0 0.0
  %868 = vmatpush1.msra.mxu0 0.0
  %869 = vmatprep.subr.mxu0 0.0
  %870 = vmatpush1.msra.mxu0 0.0
  %871 = vmatprep.subr.mxu0 0.0
  %872 = vmatpush1.msra.mxu0 0.0
  %873 = vmatprep.subr.mxu0 0.0
  %874 = vmatpush1.msra.mxu0 0.0
  %875 = vmatprep.subr.mxu0 0.0
  %876 = vmatpush1.msra.mxu0 0.0
  %877 = vmatprep.subr.mxu0 0.0
  %878 = vmatpush1.msra.mxu0 0.0
  %879 = vmatprep.subr.mxu0 0.0
  %880 = vmatpush1.msra.mxu0 0.0
  %881 = vmatprep.subr.mxu0 0.0
  %882 = vmatpush1.msra.mxu0 0.0
  %883 = vmatprep.subr.mxu0 0.0
  %884 = vmatpush1.msra.mxu0 0.0
  %885 = vmatprep.subr.mxu0 0.0
  %886 = vmatpush1.msra.mxu0 0.0
  %887 = vmatprep.subr.mxu0 0.0
  %888 = vmatpush1.msra.mxu0 0.0
  %889 = vmatprep.subr.mxu0 0.0
  %890 = vmatpush1.msra.mxu0 0.0
  %891 = vmatprep.subr.mxu0 0.0
  %892 = vmatpush1.msra.mxu0 0.0
  %893 = vmatprep.subr.mxu0 0.0
  %894 = vmatpush1.msra.mxu0 0.0
  %895 = vmatprep.subr.mxu0 0.0
  %896 = vmatpush1.msra.mxu0 0.0
  %897 = vmatprep.subr.mxu0 0.0
  %898 = vmatpush1.msra.mxu0 0.0
  %899 = vmatprep.subr.mxu0 0.0
  %900 = vmatpush1.msra.mxu0 0.0
  %901 = vmatprep.subr.mxu0 0.0
  %902 = vmatpush1.msra.mxu0 0.0
  %903 = vmatprep.subr.mxu0 0.0
  %904 = vmatpush1.msra.mxu0 0.0
  %905 = vmatprep.subr.mxu0 0.0
  %906 = vmatpush1.msra.mxu0 0.0
  %907 = vmatprep.subr.mxu0 0.0
  %908 = vmatpush1.msra.mxu0 0.0
  %909 = vmatprep.subr.mxu0 0.0
  %910 = vmatpush1.msra.mxu0 0.0
  %911 = vmatprep.subr.mxu0 0.0
  %912 = vmatpush1.msra.mxu0 0.0
  %913 = vmatprep.subr.mxu0 0.0
  %914 = vmatpush1.msra.mxu0 0.0
  %915 = vmatprep.subr.mxu0 0.0
  %916 = vmatpush1.msra.mxu0 0.0
  %917 = vmatprep.subr.mxu0 0.0
  %918 = vmatpush1.msra.mxu0 0.0
  %919 = vmatprep.subr.mxu0 0.0
  %920 = vmatpush1.msra.mxu0 0.0
  %921 = vmatprep.subr.mxu0 0.0
  %922 = vmatpush1.msra.mxu0 0.0
  %923 = vmatprep.mubr.f32.mxu0 0.0
  %924 = vmatmul.mubr.f32.gmra.mrb[0].mxu0 %v857
  %v925 = vpop.f32.mrb[0].mxu0
  %v926 = vadd.f32 0.0, %v925
  %v927 = vpop.f32.mrb[0].mxu0
  %928 = vdwg.mxu0
  %930 = vrot.lane.b32.xlu0 %v926, 32
  %v931 = vpop.permute.xlu0 %930
  %v933 = vadd.f32 %v853, %v931
  %v934 = vxor.u32 %v933, 2147483648
  %v935 = vmul.f32 %v934, 1.442695
  %v936 = vpow.pop %v935
  %v937 = vadd.f32 %v936, 1.0
  %v938 = vrcp.pop %v937
  %v939 = vmul.f32 1.0, %v938
  %v940 = vtanh.pop %v933
  %v941 = vmul.f32 %v939, %v720
  %943 = vrot.lane.b32.xlu0 %v940, 112
  %v944 = vpop.permute.xlu0 %943
  %v946 = vmul.f32 %v939, %v944
  %948 = vrot.lane.b32.xlu0 %v946, 8
  %v949 = vpop.permute.xlu0 %948
  %v951 = vadd.f32 %v941, %v949
  %v952 = vtanh.pop %v951
  %954 = vrot.lane.b32.xlu0 %v952, 16
  %v955 = vpop.permute.xlu0 %954
  %v957 = vmul.f32 %v939, %v955
  %959 = vset.pattern.permute.xlu0 0
  %960 = vperm.xlu0 %959, %v734
  %v961 = vpop.permute.xlu0 %960
  %v963 = vmul.f32 %v961, %v957
  %v964 = vsub.f32 1.0, %v734
  %966 = vset.pattern.permute.xlu0 0
  %967 = vperm.xlu0 %966, %v964
  %v968 = vpop.permute.xlu0 %967
  %v970 = vmul.f32 %v968, %v717
  %v971 = vadd.f32 %v963, %v970
  %v972 = vmul.f32 %v961, %v951
  %v973 = vmul.f32 %v968, %v720
  %v974 = vadd.f32 %v972, %v973
  %976 = vrot.lane.b32.xlu0 %v841, 104
  %v977 = vpop.permute.xlu0 %976
  %979 = vst.msk [vmem:[#allocation4 + $0x10] sm:$0xff] %vm92, %v977
  %981 = vrot.lane.b32.xlu0 %v963, 72
  %v982 = vpop.permute.xlu0 %981
  %984 = vst.msk [vmem:[#allocation5 + $0x28] sm:$0xff] %vm92, %v982
  %s985 = scalar_lea.vmem %s2, 24
  %v986 = vld [vmem:[%s985] sm:$0xff]
  %s987 = scalar_lea.vmem %s2, 32
  %v988 = vld [vmem:[%s987] sm:$0xff]
  %v989 = vld [vmem:[#allocation2 + $0x18] sm:$0xff]
  %991 = vrot.lane.b32.xlu0 %v849, 104
  %v992 = vpop.permute.xlu0 %991
  %v993 = vsel %vm92, %v992, 0
  %995 = vmatprep.subr.mxu0 0.0
  %996 = vmatpush1.msra.mxu0 %v231
  %997 = vmatprep.subr.mxu0 0.0
  %998 = vmatpush1.msra.mxu0 0.0
  %999 = vmatprep.subr.mxu0 0.0
  %1000 = vmatpush1.msra.mxu0 0.0
  %1001 = vmatprep.subr.mxu0 0.0
  %1002 = vmatpush1.msra.mxu0 0.0
  %1003 = vmatprep.subr.mxu0 0.0
  %1004 = vmatpush1.msra.mxu0 0.0
  %1005 = vmatprep.subr.mxu0 0.0
  %1006 = vmatpush1.msra.mxu0 0.0
  %1007 = vmatprep.subr.mxu0 0.0
  %1008 = vmatpush1.msra.mxu0 0.0
  %1009 = vmatprep.subr.mxu0 0.0
  %1010 = vmatpush1.msra.mxu0 0.0
  %1011 = vmatprep.subr.mxu0 0.0
  %1012 = vmatpush1.msra.mxu0 0.0
  %1013 = vmatprep.subr.mxu0 0.0
  %1014 = vmatpush1.msra.mxu0 0.0
  %1015 = vmatprep.subr.mxu0 0.0
  %1016 = vmatpush1.msra.mxu0 0.0
  %1017 = vmatprep.subr.mxu0 0.0
  %1018 = vmatpush1.msra.mxu0 0.0
  %1019 = vmatprep.subr.mxu0 0.0
  %1020 = vmatpush1.msra.mxu0 0.0
  %1021 = vmatprep.subr.mxu0 0.0
  %1022 = vmatpush1.msra.mxu0 0.0
  %1023 = vmatprep.subr.mxu0 0.0
  %1024 = vmatpush1.msra.mxu0 0.0
  %1025 = vmatprep.subr.mxu0 0.0
  %1026 = vmatpush1.msra.mxu0 0.0
  %1027 = vmatprep.subr.mxu0 0.0
  %1028 = vmatpush1.msra.mxu0 0.0
  %1029 = vmatprep.subr.mxu0 0.0
  %1030 = vmatpush1.msra.mxu0 0.0
  %1031 = vmatprep.subr.mxu0 0.0
  %1032 = vmatpush1.msra.mxu0 0.0
  %1033 = vmatprep.subr.mxu0 0.0
  %1034 = vmatpush1.msra.mxu0 0.0
  %1035 = vmatprep.subr.mxu0 0.0
  %1036 = vmatpush1.msra.mxu0 0.0
  %1037 = vmatprep.subr.mxu0 0.0
  %1038 = vmatpush1.msra.mxu0 0.0
  %1039 = vmatprep.subr.mxu0 0.0
  %1040 = vmatpush1.msra.mxu0 0.0
  %1041 = vmatprep.subr.mxu0 0.0
  %1042 = vmatpush1.msra.mxu0 0.0
  %1043 = vmatprep.subr.mxu0 0.0
  %1044 = vmatpush1.msra.mxu0 0.0
  %1045 = vmatprep.subr.mxu0 0.0
  %1046 = vmatpush1.msra.mxu0 0.0
  %1047 = vmatprep.subr.mxu0 0.0
  %1048 = vmatpush1.msra.mxu0 0.0
  %1049 = vmatprep.subr.mxu0 0.0
  %1050 = vmatpush1.msra.mxu0 0.0
  %1051 = vmatprep.subr.mxu0 0.0
  %1052 = vmatpush1.msra.mxu0 0.0
  %1053 = vmatprep.subr.mxu0 0.0
  %1054 = vmatpush1.msra.mxu0 0.0
  %1055 = vmatprep.subr.mxu0 0.0
  %1056 = vmatpush1.msra.mxu0 0.0
  %1057 = vmatprep.subr.mxu0 0.0
  %1058 = vmatpush1.msra.mxu0 0.0
  %1059 = vmatprep.mubr.f32.mxu0 0.0
  %1060 = vmatmul.mubr.f32.gmra.mrb[0].mxu0 %v993
  %v1061 = vpop.f32.mrb[0].mxu0
  %v1062 = vadd.f32 0.0, %v1061
  %v1063 = vpop.f32.mrb[0].mxu0
  %1064 = vdwg.mxu0
  %v1065 = vadd.f32 %v989, %v1062
  %v1066 = vxor.u32 %v1065, 2147483648
  %v1067 = vmul.f32 %v1066, 1.442695
  %v1068 = vpow.pop %v1067
  %v1069 = vadd.f32 %v1068, 1.0
  %v1070 = vrcp.pop %v1069
  %v1071 = vmul.f32 1.0, %v1070
  %v1072 = vtanh.pop %v1065
  %v1073 = vmul.f32 %v1071, %v852
  %1075 = vrot.lane.b32.xlu0 %v1072, 112
  %v1076 = vpop.permute.xlu0 %1075
  %v1078 = vmul.f32 %v1071, %v1076
  %1080 = vrot.lane.b32.xlu0 %v1078, 8
  %v1081 = vpop.permute.xlu0 %1080
  %v1083 = vadd.f32 %v1073, %v1081
  %v1084 = vtanh.pop %v1083
  %1086 = vrot.lane.b32.xlu0 %v1084, 16
  %v1087 = vpop.permute.xlu0 %1086
  %v1089 = vmul.f32 %v1071, %v1087
  %1091 = vset.pattern.permute.xlu0 0
  %1092 = vperm.xlu0 %1091, %v986
  %v1093 = vpop.permute.xlu0 %1092
  %v1095 = vmul.f32 %v1093, %v1089
  %v1096 = vsub.f32 1.0, %v986
  %1098 = vset.pattern.permute.xlu0 0
  %1099 = vperm.xlu0 %1098, %v1096
  %v1100 = vpop.permute.xlu0 %1099
  %v1102 = vmul.f32 %v1100, %v849
  %v1103 = vadd.f32 %v1095, %v1102
  %v1104 = vmul.f32 %v1093, %v1083
  %v1105 = vmul.f32 %v1100, %v852
  %v1106 = vadd.f32 %v1104, %v1105
  %v1107 = vld [vmem:[#allocation2 + $0x20] sm:$0xff]
  %1109 = vrot.lane.b32.xlu0 %v971, 72
  %v1110 = vpop.permute.xlu0 %1109
  %v1111 = vsel %vm92, %v1110, 0
  %1113 = vmatprep.subr.mxu0 0.0
  %1114 = vmatpush1.msra.mxu0 %v232
  %1115 = vmatprep.subr.mxu0 0.0
  %1116 = vmatpush1.msra.mxu0 0.0
  %1117 = vmatprep.subr.mxu0 0.0
  %1118 = vmatpush1.msra.mxu0 0.0
  %1119 = vmatprep.subr.mxu0 0.0
  %1120 = vmatpush1.msra.mxu0 0.0
  %1121 = vmatprep.subr.mxu0 0.0
  %1122 = vmatpush1.msra.mxu0 0.0
  %1123 = vmatprep.subr.mxu0 0.0
  %1124 = vmatpush1.msra.mxu0 0.0
  %1125 = vmatprep.subr.mxu0 0.0
  %1126 = vmatpush1.msra.mxu0 0.0
  %1127 = vmatprep.subr.mxu0 0.0
  %1128 = vmatpush1.msra.mxu0 0.0
  %1129 = vmatprep.subr.mxu0 0.0
  %1130 = vmatpush1.msra.mxu0 0.0
  %1131 = vmatprep.subr.mxu0 0.0
  %1132 = vmatpush1.msra.mxu0 0.0
  %1133 = vmatprep.subr.mxu0 0.0
  %1134 = vmatpush1.msra.mxu0 0.0
  %1135 = vmatprep.subr.mxu0 0.0
  %1136 = vmatpush1.msra.mxu0 0.0
  %1137 = vmatprep.subr.mxu0 0.0
  %1138 = vmatpush1.msra.mxu0 0.0
  %1139 = vmatprep.subr.mxu0 0.0
  %1140 = vmatpush1.msra.mxu0 0.0
  %1141 = vmatprep.subr.mxu0 0.0
  %1142 = vmatpush1.msra.mxu0 0.0
  %1143 = vmatprep.subr.mxu0 0.0
  %1144 = vmatpush1.msra.mxu0 0.0
  %1145 = vmatprep.subr.mxu0 0.0
  %1146 = vmatpush1.msra.mxu0 0.0
  %1147 = vmatprep.subr.mxu0 0.0
  %1148 = vmatpush1.msra.mxu0 0.0
  %1149 = vmatprep.subr.mxu0 0.0
  %1150 = vmatpush1.msra.mxu0 0.0
  %1151 = vmatprep.subr.mxu0 0.0
  %1152 = vmatpush1.msra.mxu0 0.0
  %1153 = vmatprep.subr.mxu0 0.0
  %1154 = vmatpush1.msra.mxu0 0.0
  %1155 = vmatprep.subr.mxu0 0.0
  %1156 = vmatpush1.msra.mxu0 0.0
  %1157 = vmatprep.subr.mxu0 0.0
  %1158 = vmatpush1.msra.mxu0 0.0
  %1159 = vmatprep.subr.mxu0 0.0
  %1160 = vmatpush1.msra.mxu0 0.0
  %1161 = vmatprep.subr.mxu0 0.0
  %1162 = vmatpush1.msra.mxu0 0.0
  %1163 = vmatprep.subr.mxu0 0.0
  %1164 = vmatpush1.msra.mxu0 0.0
  %1165 = vmatprep.subr.mxu0 0.0
  %1166 = vmatpush1.msra.mxu0 0.0
  %1167 = vmatprep.subr.mxu0 0.0
  %1168 = vmatpush1.msra.mxu0 0.0
  %1169 = vmatprep.subr.mxu0 0.0
  %1170 = vmatpush1.msra.mxu0 0.0
  %1171 = vmatprep.subr.mxu0 0.0
  %1172 = vmatpush1.msra.mxu0 0.0
  %1173 = vmatprep.subr.mxu0 0.0
  %1174 = vmatpush1.msra.mxu0 0.0
  %1175 = vmatprep.subr.mxu0 0.0
  %1176 = vmatpush1.msra.mxu0 0.0
  %1177 = vmatprep.mubr.f32.mxu0 0.0
  %1178 = vmatmul.mubr.f32.gmra.mrb[0].mxu0 %v1111
  %v1179 = vpop.f32.mrb[0].mxu0
  %v1180 = vadd.f32 0.0, %v1179
  %v1181 = vpop.f32.mrb[0].mxu0
  %1182 = vdwg.mxu0
  %1184 = vrot.lane.b32.xlu0 %v1180, 32
  %v1185 = vpop.permute.xlu0 %1184
  %v1187 = vadd.f32 %v1107, %v1185
  %v1188 = vxor.u32 %v1187, 2147483648
  %v1189 = vmul.f32 %v1188, 1.442695
  %v1190 = vpow.pop %v1189
  %v1191 = vadd.f32 %v1190, 1.0
  %v1192 = vrcp.pop %v1191
  %v1193 = vmul.f32 1.0, %v1192
  %v1194 = vtanh.pop %v1187
  %v1195 = vmul.f32 %v1193, %v974
  %1197 = vrot.lane.b32.xlu0 %v1194, 112
  %v1198 = vpop.permute.xlu0 %1197
  %v1200 = vmul.f32 %v1193, %v1198
  %1202 = vrot.lane.b32.xlu0 %v1200, 8
  %v1203 = vpop.permute.xlu0 %1202
  %v1205 = vadd.f32 %v1195, %v1203
  %v1206 = vtanh.pop %v1205
  %1208 = vrot.lane.b32.xlu0 %v1206, 16
  %v1209 = vpop.permute.xlu0 %1208
  %v1211 = vmul.f32 %v1193, %v1209
  %1213 = vset.pattern.permute.xlu0 0
  %1214 = vperm.xlu0 %1213, %v988
  %v1215 = vpop.permute.xlu0 %1214
  %v1217 = vmul.f32 %v1215, %v1211
  %v1218 = vsub.f32 1.0, %v988
  %1220 = vset.pattern.permute.xlu0 0
  %1221 = vperm.xlu0 %1220, %v1218
  %v1222 = vpop.permute.xlu0 %1221
  %v1224 = vmul.f32 %v1222, %v971
  %v1225 = vadd.f32 %v1217, %v1224
  %v1226 = vmul.f32 %v1215, %v1205
  %v1227 = vmul.f32 %v1222, %v974
  %v1228 = vadd.f32 %v1226, %v1227
  %1230 = vrot.lane.b32.xlu0 %v1095, 104
  %v1231 = vpop.permute.xlu0 %1230
  %1233 = vst.msk [vmem:[#allocation4 + $0x18] sm:$0xff] %vm92, %v1231
  %1235 = vrot.lane.b32.xlu0 %v1217, 72
  %v1236 = vpop.permute.xlu0 %1235
  %1238 = vst.msk [vmem:[#allocation5 + $0x20] sm:$0xff] %vm92, %v1236
  %v1239 = vld [vmem:[%s987] sm:$0xff]
  %v1240 = vld [vmem:[%s985] sm:$0xff]
  %v1241 = vld [vmem:[#allocation2 + $0x20] sm:$0xff]
  %1243 = vrot.lane.b32.xlu0 %v1103, 104
  %v1244 = vpop.permute.xlu0 %1243
  %v1245 = vsel %vm92, %v1244, 0
  %1247 = vmatprep.subr.mxu0 0.0
  %1248 = vmatpush1.msra.mxu0 %v231
  %1249 = vmatprep.subr.mxu0 0.0
  %1250 = vmatpush1.msra.mxu0 0.0
  %1251 = vmatprep.subr.mxu0 0.0
  %1252 = vmatpush1.msra.mxu0 0.0
  %1253 = vmatprep.subr.mxu0 0.0
  %1254 = vmatpush1.msra.mxu0 0.0
  %1255 = vmatprep.subr.mxu0 0.0
  %1256 = vmatpush1.msra.mxu0 0.0
  %1257 = vmatprep.subr.mxu0 0.0
  %1258 = vmatpush1.msra.mxu0 0.0
  %1259 = vmatprep.subr.mxu0 0.0
  %1260 = vmatpush1.msra.mxu0 0.0
  %1261 = vmatprep.subr.mxu0 0.0
  %1262 = vmatpush1.msra.mxu0 0.0
  %1263 = vmatprep.subr.mxu0 0.0
  %1264 = vmatpush1.msra.mxu0 0.0
  %1265 = vmatprep.subr.mxu0 0.0
  %1266 = vmatpush1.msra.mxu0 0.0
  %1267 = vmatprep.subr.mxu0 0.0
  %1268 = vmatpush1.msra.mxu0 0.0
  %1269 = vmatprep.subr.mxu0 0.0
  %1270 = vmatpush1.msra.mxu0 0.0
  %1271 = vmatprep.subr.mxu0 0.0
  %1272 = vmatpush1.msra.mxu0 0.0
  %1273 = vmatprep.subr.mxu0 0.0
  %1274 = vmatpush1.msra.mxu0 0.0
  %1275 = vmatprep.subr.mxu0 0.0
  %1276 = vmatpush1.msra.mxu0 0.0
  %1277 = vmatprep.subr.mxu0 0.0
  %1278 = vmatpush1.msra.mxu0 0.0
  %1279 = vmatprep.subr.mxu0 0.0
  %1280 = vmatpush1.msra.mxu0 0.0
  %1281 = vmatprep.subr.mxu0 0.0
  %1282 = vmatpush1.msra.mxu0 0.0
  %1283 = vmatprep.subr.mxu0 0.0
  %1284 = vmatpush1.msra.mxu0 0.0
  %1285 = vmatprep.subr.mxu0 0.0
  %1286 = vmatpush1.msra.mxu0 0.0
  %1287 = vmatprep.subr.mxu0 0.0
  %1288 = vmatpush1.msra.mxu0 0.0
  %1289 = vmatprep.subr.mxu0 0.0
  %1290 = vmatpush1.msra.mxu0 0.0
  %1291 = vmatprep.subr.mxu0 0.0
  %1292 = vmatpush1.msra.mxu0 0.0
  %1293 = vmatprep.subr.mxu0 0.0
  %1294 = vmatpush1.msra.mxu0 0.0
  %1295 = vmatprep.subr.mxu0 0.0
  %1296 = vmatpush1.msra.mxu0 0.0
  %1297 = vmatprep.subr.mxu0 0.0
  %1298 = vmatpush1.msra.mxu0 0.0
  %1299 = vmatprep.subr.mxu0 0.0
  %1300 = vmatpush1.msra.mxu0 0.0
  %1301 = vmatprep.subr.mxu0 0.0
  %1302 = vmatpush1.msra.mxu0 0.0
  %1303 = vmatprep.subr.mxu0 0.0
  %1304 = vmatpush1.msra.mxu0 0.0
  %1305 = vmatprep.subr.mxu0 0.0
  %1306 = vmatpush1.msra.mxu0 0.0
  %1307 = vmatprep.subr.mxu0 0.0
  %1308 = vmatpush1.msra.mxu0 0.0
  %1309 = vmatprep.subr.mxu0 0.0
  %1310 = vmatpush1.msra.mxu0 0.0
  %1311 = vmatprep.mubr.f32.mxu0 0.0
  %1312 = vmatmul.mubr.f32.gmra.mrb[0].mxu0 %v1245
  %v1313 = vpop.f32.mrb[0].mxu0
  %v1314 = vadd.f32 0.0, %v1313
  %v1315 = vpop.f32.mrb[0].mxu0
  %1316 = vdwg.mxu0
  %v1317 = vadd.f32 %v1241, %v1314
  %v1318 = vxor.u32 %v1317, 2147483648
  %v1319 = vmul.f32 %v1318, 1.442695
  %v1320 = vpow.pop %v1319
  %v1321 = vadd.f32 %v1320, 1.0
  %v1322 = vrcp.pop %v1321
  %v1323 = vmul.f32 1.0, %v1322
  %v1324 = vtanh.pop %v1317
  %v1325 = vmul.f32 %v1323, %v1106
  %1327 = vrot.lane.b32.xlu0 %v1324, 112
  %v1328 = vpop.permute.xlu0 %1327
  %v1330 = vmul.f32 %v1323, %v1328
  %1332 = vrot.lane.b32.xlu0 %v1330, 8
  %v1333 = vpop.permute.xlu0 %1332
  %v1335 = vadd.f32 %v1325, %v1333
  %v1336 = vtanh.pop %v1335
  %1338 = vrot.lane.b32.xlu0 %v1336, 16
  %v1339 = vpop.permute.xlu0 %1338
  %v1341 = vmul.f32 %v1323, %v1339
  %1343 = vset.pattern.permute.xlu0 0
  %1344 = vperm.xlu0 %1343, %v1239
  %v1345 = vpop.permute.xlu0 %1344
  %v1347 = vmul.f32 %v1345, %v1341
  %v1348 = vsub.f32 1.0, %v1239
  %1350 = vset.pattern.permute.xlu0 0
  %1351 = vperm.xlu0 %1350, %v1348
  %v1352 = vpop.permute.xlu0 %1351
  %v1354 = vmul.f32 %v1352, %v1103
  %v1355 = vadd.f32 %v1347, %v1354
  %v1356 = vmul.f32 %v1345, %v1335
  %v1357 = vmul.f32 %v1352, %v1106
  %v1358 = vadd.f32 %v1356, %v1357
  %v1359 = vld [vmem:[#allocation2 + $0x18] sm:$0xff]
  %1361 = vrot.lane.b32.xlu0 %v1225, 72
  %v1362 = vpop.permute.xlu0 %1361
  %v1363 = vsel %vm92, %v1362, 0
  %1365 = vmatprep.subr.mxu0 0.0
  %1366 = vmatpush1.msra.mxu0 %v232
  %1367 = vmatprep.subr.mxu0 0.0
  %1368 = vmatpush1.msra.mxu0 0.0
  %1369 = vmatprep.subr.mxu0 0.0
  %1370 = vmatpush1.msra.mxu0 0.0
  %1371 = vmatprep.subr.mxu0 0.0
  %1372 = vmatpush1.msra.mxu0 0.0
  %1373 = vmatprep.subr.mxu0 0.0
  %1374 = vmatpush1.msra.mxu0 0.0
  %1375 = vmatprep.subr.mxu0 0.0
  %1376 = vmatpush1.msra.mxu0 0.0
  %1377 = vmatprep.subr.mxu0 0.0
  %1378 = vmatpush1.msra.mxu0 0.0
  %1379 = vmatprep.subr.mxu0 0.0
  %1380 = vmatpush1.msra.mxu0 0.0
  %1381 = vmatprep.subr.mxu0 0.0
  %1382 = vmatpush1.msra.mxu0 0.0
  %1383 = vmatprep.subr.mxu0 0.0
  %1384 = vmatpush1.msra.mxu0 0.0
  %1385 = vmatprep.subr.mxu0 0.0
  %1386 = vmatpush1.msra.mxu0 0.0
  %1387 = vmatprep.subr.mxu0 0.0
  %1388 = vmatpush1.msra.mxu0 0.0
  %1389 = vmatprep.subr.mxu0 0.0
  %1390 = vmatpush1.msra.mxu0 0.0
  %1391 = vmatprep.subr.mxu0 0.0
  %1392 = vmatpush1.msra.mxu0 0.0
  %1393 = vmatprep.subr.mxu0 0.0
  %1394 = vmatpush1.msra.mxu0 0.0
  %1395 = vmatprep.subr.mxu0 0.0
  %1396 = vmatpush1.msra.mxu0 0.0
  %1397 = vmatprep.subr.mxu0 0.0
  %1398 = vmatpush1.msra.mxu0 0.0
  %1399 = vmatprep.subr.mxu0 0.0
  %1400 = vmatpush1.msra.mxu0 0.0
  %1401 = vmatprep.subr.mxu0 0.0
  %1402 = vmatpush1.msra.mxu0 0.0
  %1403 = vmatprep.subr.mxu0 0.0
  %1404 = vmatpush1.msra.mxu0 0.0
  %1405 = vmatprep.subr.mxu0 0.0
  %1406 = vmatpush1.msra.mxu0 0.0
  %1407 = vmatprep.subr.mxu0 0.0
  %1408 = vmatpush1.msra.mxu0 0.0
  %1409 = vmatprep.subr.mxu0 0.0
  %1410 = vmatpush1.msra.mxu0 0.0
  %1411 = vmatprep.subr.mxu0 0.0
  %1412 = vmatpush1.msra.mxu0 0.0
  %1413 = vmatprep.subr.mxu0 0.0
  %1414 = vmatpush1.msra.mxu0 0.0
  %1415 = vmatprep.subr.mxu0 0.0
  %1416 = vmatpush1.msra.mxu0 0.0
  %1417 = vmatprep.subr.mxu0 0.0
  %1418 = vmatpush1.msra.mxu0 0.0
  %1419 = vmatprep.subr.mxu0 0.0
  %1420 = vmatpush1.msra.mxu0 0.0
  %1421 = vmatprep.subr.mxu0 0.0
  %1422 = vmatpush1.msra.mxu0 0.0
  %1423 = vmatprep.subr.mxu0 0.0
  %1424 = vmatpush1.msra.mxu0 0.0
  %1425 = vmatprep.subr.mxu0 0.0
  %1426 = vmatpush1.msra.mxu0 0.0
  %1427 = vmatprep.subr.mxu0 0.0
  %1428 = vmatpush1.msra.mxu0 0.0
  %1429 = vmatprep.mubr.f32.mxu0 0.0
  %1430 = vmatmul.mubr.f32.gmra.mrb[0].mxu0 %v1363
  %v1431 = vpop.f32.mrb[0].mxu0
  %v1432 = vadd.f32 0.0, %v1431
  %v1433 = vpop.f32.mrb[0].mxu0
  %1434 = vdwg.mxu0
  %1436 = vrot.lane.b32.xlu0 %v1432, 32
  %v1437 = vpop.permute.xlu0 %1436
  %v1439 = vadd.f32 %v1359, %v1437
  %v1440 = vxor.u32 %v1439, 2147483648
  %v1441 = vmul.f32 %v1440, 1.442695
  %v1442 = vpow.pop %v1441
  %v1443 = vadd.f32 %v1442, 1.0
  %v1444 = vrcp.pop %v1443
  %v1445 = vmul.f32 1.0, %v1444
  %v1446 = vtanh.pop %v1439
  %v1447 = vmul.f32 %v1445, %v1228
  %1449 = vrot.lane.b32.xlu0 %v1446, 112
  %v1450 = vpop.permute.xlu0 %1449
  %v1452 = vmul.f32 %v1445, %v1450
  %1454 = vrot.lane.b32.xlu0 %v1452, 8
  %v1455 = vpop.permute.xlu0 %1454
  %v1457 = vadd.f32 %v1447, %v1455
  %v1458 = vtanh.pop %v1457
  %1460 = vrot.lane.b32.xlu0 %v1458, 16
  %v1461 = vpop.permute.xlu0 %1460
  %v1463 = vmul.f32 %v1445, %v1461
  %1465 = vset.pattern.permute.xlu0 0
  %1466 = vperm.xlu0 %1465, %v1240
  %v1467 = vpop.permute.xlu0 %1466
  %v1469 = vmul.f32 %v1467, %v1463
  %v1470 = vsub.f32 1.0, %v1240
  %1472 = vset.pattern.permute.xlu0 0
  %1473 = vperm.xlu0 %1472, %v1470
  %v1474 = vpop.permute.xlu0 %1473
  %v1476 = vmul.f32 %v1474, %v1225
  %v1477 = vadd.f32 %v1469, %v1476
  %v1478 = vmul.f32 %v1467, %v1457
  %v1479 = vmul.f32 %v1474, %v1228
  %v1480 = vadd.f32 %v1478, %v1479
  %1482 = vrot.lane.b32.xlu0 %v1347, 104
  %v1483 = vpop.permute.xlu0 %1482
  %1485 = vst.msk [vmem:[#allocation4 + $0x20] sm:$0xff] %vm92, %v1483
  %1487 = vrot.lane.b32.xlu0 %v1469, 72
  %v1488 = vpop.permute.xlu0 %1487
  %1490 = vst.msk [vmem:[#allocation5 + $0x18] sm:$0xff] %vm92, %v1488
  %v1491 = vld [vmem:[%s733] sm:$0xff]
  %v1492 = vld [vmem:[%s731] sm:$0xff]
  %v1493 = vld [vmem:[#allocation2 + $0x28] sm:$0xff]
  %1495 = vrot.lane.b32.xlu0 %v1355, 104
  %v1496 = vpop.permute.xlu0 %1495
  %v1497 = vsel %vm92, %v1496, 0
  %1499 = vmatprep.subr.mxu0 0.0
  %1500 = vmatpush1.msra.mxu0 %v231
  %1501 = vmatprep.subr.mxu0 0.0
  %1502 = vmatpush1.msra.mxu0 0.0
  %1503 = vmatprep.subr.mxu0 0.0
  %1504 = vmatpush1.msra.mxu0 0.0
  %1505 = vmatprep.subr.mxu0 0.0
  %1506 = vmatpush1.msra.mxu0 0.0
  %1507 = vmatprep.subr.mxu0 0.0
  %1508 = vmatpush1.msra.mxu0 0.0
  %1509 = vmatprep.subr.mxu0 0.0
  %1510 = vmatpush1.msra.mxu0 0.0
  %1511 = vmatprep.subr.mxu0 0.0
  %1512 = vmatpush1.msra.mxu0 0.0
  %1513 = vmatprep.subr.mxu0 0.0
  %1514 = vmatpush1.msra.mxu0 0.0
  %1515 = vmatprep.subr.mxu0 0.0
  %1516 = vmatpush1.msra.mxu0 0.0
  %1517 = vmatprep.subr.mxu0 0.0
  %1518 = vmatpush1.msra.mxu0 0.0
  %1519 = vmatprep.subr.mxu0 0.0
  %1520 = vmatpush1.msra.mxu0 0.0
  %1521 = vmatprep.subr.mxu0 0.0
  %1522 = vmatpush1.msra.mxu0 0.0
  %1523 = vmatprep.subr.mxu0 0.0
  %1524 = vmatpush1.msra.mxu0 0.0
  %1525 = vmatprep.subr.mxu0 0.0
  %1526 = vmatpush1.msra.mxu0 0.0
  %1527 = vmatprep.subr.mxu0 0.0
  %1528 = vmatpush1.msra.mxu0 0.0
  %1529 = vmatprep.subr.mxu0 0.0
  %1530 = vmatpush1.msra.mxu0 0.0
  %1531 = vmatprep.subr.mxu0 0.0
  %1532 = vmatpush1.msra.mxu0 0.0
  %1533 = vmatprep.subr.mxu0 0.0
  %1534 = vmatpush1.msra.mxu0 0.0
  %1535 = vmatprep.subr.mxu0 0.0
  %1536 = vmatpush1.msra.mxu0 0.0
  %1537 = vmatprep.subr.mxu0 0.0
  %1538 = vmatpush1.msra.mxu0 0.0
  %1539 = vmatprep.subr.mxu0 0.0
  %1540 = vmatpush1.msra.mxu0 0.0
  %1541 = vmatprep.subr.mxu0 0.0
  %1542 = vmatpush1.msra.mxu0 0.0
  %1543 = vmatprep.subr.mxu0 0.0
  %1544 = vmatpush1.msra.mxu0 0.0
  %1545 = vmatprep.subr.mxu0 0.0
  %1546 = vmatpush1.msra.mxu0 0.0
  %1547 = vmatprep.subr.mxu0 0.0
  %1548 = vmatpush1.msra.mxu0 0.0
  %1549 = vmatprep.subr.mxu0 0.0
  %1550 = vmatpush1.msra.mxu0 0.0
  %1551 = vmatprep.subr.mxu0 0.0
  %1552 = vmatpush1.msra.mxu0 0.0
  %1553 = vmatprep.subr.mxu0 0.0
  %1554 = vmatpush1.msra.mxu0 0.0
  %1555 = vmatprep.subr.mxu0 0.0
  %1556 = vmatpush1.msra.mxu0 0.0
  %1557 = vmatprep.subr.mxu0 0.0
  %1558 = vmatpush1.msra.mxu0 0.0
  %1559 = vmatprep.subr.mxu0 0.0
  %1560 = vmatpush1.msra.mxu0 0.0
  %1561 = vmatprep.subr.mxu0 0.0
  %1562 = vmatpush1.msra.mxu0 0.0
  %1563 = vmatprep.mubr.f32.mxu0 0.0
  %1564 = vmatmul.mubr.f32.gmra.mrb[0].mxu0 %v1497
  %v1565 = vpop.f32.mrb[0].mxu0
  %v1566 = vadd.f32 0.0, %v1565
  %v1567 = vpop.f32.mrb[0].mxu0
  %1568 = vdwg.mxu0
  %v1569 = vadd.f32 %v1493, %v1566
  %v1570 = vxor.u32 %v1569, 2147483648
  %v1571 = vmul.f32 %v1570, 1.442695
  %v1572 = vpow.pop %v1571
  %v1573 = vadd.f32 %v1572, 1.0
  %v1574 = vrcp.pop %v1573
  %v1575 = vmul.f32 1.0, %v1574
  %v1576 = vtanh.pop %v1569
  %v1577 = vmul.f32 %v1575, %v1358
  %1579 = vrot.lane.b32.xlu0 %v1576, 112
  %v1580 = vpop.permute.xlu0 %1579
  %v1582 = vmul.f32 %v1575, %v1580
  %1584 = vrot.lane.b32.xlu0 %v1582, 8
  %v1585 = vpop.permute.xlu0 %1584
  %v1587 = vadd.f32 %v1577, %v1585
  %v1588 = vtanh.pop %v1587
  %1590 = vrot.lane.b32.xlu0 %v1588, 16
  %v1591 = vpop.permute.xlu0 %1590
  %v1593 = vmul.f32 %v1575, %v1591
  %1595 = vset.pattern.permute.xlu0 0
  %1596 = vperm.xlu0 %1595, %v1491
  %v1597 = vpop.permute.xlu0 %1596
  %v1599 = vmul.f32 %v1597, %v1593
  %v1600 = vsub.f32 1.0, %v1491
  %1602 = vset.pattern.permute.xlu0 0
  %1603 = vperm.xlu0 %1602, %v1600
  %v1604 = vpop.permute.xlu0 %1603
  %v1606 = vmul.f32 %v1604, %v1355
  %v1607 = vadd.f32 %v1599, %v1606
  %v1608 = vmul.f32 %v1597, %v1587
  %v1609 = vmul.f32 %v1604, %v1358
  %v1610 = vadd.f32 %v1608, %v1609
  %v1611 = vld [vmem:[#allocation2 + $0x10] sm:$0xff]
  %1613 = vrot.lane.b32.xlu0 %v1477, 72
  %v1614 = vpop.permute.xlu0 %1613
  %v1615 = vsel %vm92, %v1614, 0
  %1617 = vmatprep.subr.mxu0 0.0
  %1618 = vmatpush1.msra.mxu0 %v232
  %1619 = vmatprep.subr.mxu0 0.0
  %1620 = vmatpush1.msra.mxu0 0.0
  %1621 = vmatprep.subr.mxu0 0.0
  %1622 = vmatpush1.msra.mxu0 0.0
  %1623 = vmatprep.subr.mxu0 0.0
  %1624 = vmatpush1.msra.mxu0 0.0
  %1625 = vmatprep.subr.mxu0 0.0
  %1626 = vmatpush1.msra.mxu0 0.0
  %1627 = vmatprep.subr.mxu0 0.0
  %1628 = vmatpush1.msra.mxu0 0.0
  %1629 = vmatprep.subr.mxu0 0.0
  %1630 = vmatpush1.msra.mxu0 0.0
  %1631 = vmatprep.subr.mxu0 0.0
  %1632 = vmatpush1.msra.mxu0 0.0
  %1633 = vmatprep.subr.mxu0 0.0
  %1634 = vmatpush1.msra.mxu0 0.0
  %1635 = vmatprep.subr.mxu0 0.0
  %1636 = vmatpush1.msra.mxu0 0.0
  %1637 = vmatprep.subr.mxu0 0.0
  %1638 = vmatpush1.msra.mxu0 0.0
  %1639 = vmatprep.subr.mxu0 0.0
  %1640 = vmatpush1.msra.mxu0 0.0
  %1641 = vmatprep.subr.mxu0 0.0
  %1642 = vmatpush1.msra.mxu0 0.0
  %1643 = vmatprep.subr.mxu0 0.0
  %1644 = vmatpush1.msra.mxu0 0.0
  %1645 = vmatprep.subr.mxu0 0.0
  %1646 = vmatpush1.msra.mxu0 0.0
  %1647 = vmatprep.subr.mxu0 0.0
  %1648 = vmatpush1.msra.mxu0 0.0
  %1649 = vmatprep.subr.mxu0 0.0
  %1650 = vmatpush1.msra.mxu0 0.0
  %1651 = vmatprep.subr.mxu0 0.0
  %1652 = vmatpush1.msra.mxu0 0.0
  %1653 = vmatprep.subr.mxu0 0.0
  %1654 = vmatpush1.msra.mxu0 0.0
  %1655 = vmatprep.subr.mxu0 0.0
  %1656 = vmatpush1.msra.mxu0 0.0
  %1657 = vmatprep.subr.mxu0 0.0
  %1658 = vmatpush1.msra.mxu0 0.0
  %1659 = vmatprep.subr.mxu0 0.0
  %1660 = vmatpush1.msra.mxu0 0.0
  %1661 = vmatprep.subr.mxu0 0.0
  %1662 = vmatpush1.msra.mxu0 0.0
  %1663 = vmatprep.subr.mxu0 0.0
  %1664 = vmatpush1.msra.mxu0 0.0
  %1665 = vmatprep.subr.mxu0 0.0
  %1666 = vmatpush1.msra.mxu0 0.0
  %1667 = vmatprep.subr.mxu0 0.0
  %1668 = vmatpush1.msra.mxu0 0.0
  %1669 = vmatprep.subr.mxu0 0.0
  %1670 = vmatpush1.msra.mxu0 0.0
  %1671 = vmatprep.subr.mxu0 0.0
  %1672 = vmatpush1.msra.mxu0 0.0
  %1673 = vmatprep.subr.mxu0 0.0
  %1674 = vmatpush1.msra.mxu0 0.0
  %1675 = vmatprep.subr.mxu0 0.0
  %1676 = vmatpush1.msra.mxu0 0.0
  %1677 = vmatprep.subr.mxu0 0.0
  %1678 = vmatpush1.msra.mxu0 0.0
  %1679 = vmatprep.subr.mxu0 0.0
  %1680 = vmatpush1.msra.mxu0 0.0
  %1681 = vmatprep.mubr.f32.mxu0 0.0
  %1682 = vmatmul.mubr.f32.gmra.mrb[0].mxu0 %v1615
  %v1683 = vpop.f32.mrb[0].mxu0
  %v1684 = vadd.f32 0.0, %v1683
  %v1685 = vpop.f32.mrb[0].mxu0
  %1686 = vdwg.mxu0
  %1688 = vrot.lane.b32.xlu0 %v1684, 32
  %v1689 = vpop.permute.xlu0 %1688
  %v1691 = vadd.f32 %v1611, %v1689
  %v1692 = vxor.u32 %v1691, 2147483648
  %v1693 = vmul.f32 %v1692, 1.442695
  %v1694 = vpow.pop %v1693
  %v1695 = vadd.f32 %v1694, 1.0
  %v1696 = vrcp.pop %v1695
  %v1697 = vmul.f32 1.0, %v1696
  %v1698 = vtanh.pop %v1691
  %v1699 = vmul.f32 %v1697, %v1480
  %1701 = vrot.lane.b32.xlu0 %v1698, 112
  %v1702 = vpop.permute.xlu0 %1701
  %v1704 = vmul.f32 %v1697, %v1702
  %1706 = vrot.lane.b32.xlu0 %v1704, 8
  %v1707 = vpop.permute.xlu0 %1706
  %v1709 = vadd.f32 %v1699, %v1707
  %v1710 = vtanh.pop %v1709
  %1712 = vrot.lane.b32.xlu0 %v1710, 16
  %v1713 = vpop.permute.xlu0 %1712
  %v1715 = vmul.f32 %v1697, %v1713
  %1717 = vset.pattern.permute.xlu0 0
  %1718 = vperm.xlu0 %1717, %v1492
  %v1719 = vpop.permute.xlu0 %1718
  %v1721 = vmul.f32 %v1719, %v1715
  %v1722 = vsub.f32 1.0, %v1492
  %1724 = vset.pattern.permute.xlu0 0
  %1725 = vperm.xlu0 %1724, %v1722
  %v1726 = vpop.permute.xlu0 %1725
  %v1728 = vmul.f32 %v1726, %v1477
  %v1729 = vadd.f32 %v1721, %v1728
  %v1730 = vmul.f32 %v1719, %v1709
  %v1731 = vmul.f32 %v1726, %v1480
  %v1732 = vadd.f32 %v1730, %v1731
  %1734 = vrot.lane.b32.xlu0 %v1599, 104
  %v1735 = vpop.permute.xlu0 %1734
  %1737 = vst.msk [vmem:[#allocation4 + $0x28] sm:$0xff] %vm92, %v1735
  %1739 = vrot.lane.b32.xlu0 %v1721, 72
  %v1740 = vpop.permute.xlu0 %1739
  %1742 = vst.msk [vmem:[#allocation5 + $0x10] sm:$0xff] %vm92, %v1740
  %v1743 = vld [vmem:[%s479] sm:$0xff]
  %v1744 = vld [vmem:[%s477] sm:$0xff]
  %v1745 = vld [vmem:[#allocation2 + $0x30] sm:$0xff]
  %1747 = vrot.lane.b32.xlu0 %v1607, 104
  %v1748 = vpop.permute.xlu0 %1747
  %v1749 = vsel %vm92, %v1748, 0
  %1751 = vmatprep.subr.mxu0 0.0
  %1752 = vmatpush1.msra.mxu0 %v231
  %1753 = vmatprep.subr.mxu0 0.0
  %1754 = vmatpush1.msra.mxu0 0.0
  %1755 = vmatprep.subr.mxu0 0.0
  %1756 = vmatpush1.msra.mxu0 0.0
  %1757 = vmatprep.subr.mxu0 0.0
  %1758 = vmatpush1.msra.mxu0 0.0
  %1759 = vmatprep.subr.mxu0 0.0
  %1760 = vmatpush1.msra.mxu0 0.0
  %1761 = vmatprep.subr.mxu0 0.0
  %1762 = vmatpush1.msra.mxu0 0.0
  %1763 = vmatprep.subr.mxu0 0.0
  %1764 = vmatpush1.msra.mxu0 0.0
  %1765 = vmatprep.subr.mxu0 0.0
  %1766 = vmatpush1.msra.mxu0 0.0
  %1767 = vmatprep.subr.mxu0 0.0
  %1768 = vmatpush1.msra.mxu0 0.0
  %1769 = vmatprep.subr.mxu0 0.0
  %1770 = vmatpush1.msra.mxu0 0.0
  %1771 = vmatprep.subr.mxu0 0.0
  %1772 = vmatpush1.msra.mxu0 0.0
  %1773 = vmatprep.subr.mxu0 0.0
  %1774 = vmatpush1.msra.mxu0 0.0
  %1775 = vmatprep.subr.mxu0 0.0
  %1776 = vmatpush1.msra.mxu0 0.0
  %1777 = vmatprep.subr.mxu0 0.0
  %1778 = vmatpush1.msra.mxu0 0.0
  %1779 = vmatprep.subr.mxu0 0.0
  %1780 = vmatpush1.msra.mxu0 0.0
  %1781 = vmatprep.subr.mxu0 0.0
  %1782 = vmatpush1.msra.mxu0 0.0
  %1783 = vmatprep.subr.mxu0 0.0
  %1784 = vmatpush1.msra.mxu0 0.0
  %1785 = vmatprep.subr.mxu0 0.0
  %1786 = vmatpush1.msra.mxu0 0.0
  %1787 = vmatprep.subr.mxu0 0.0
  %1788 = vmatpush1.msra.mxu0 0.0
  %1789 = vmatprep.subr.mxu0 0.0
  %1790 = vmatpush1.msra.mxu0 0.0
  %1791 = vmatprep.subr.mxu0 0.0
  %1792 = vmatpush1.msra.mxu0 0.0
  %1793 = vmatprep.subr.mxu0 0.0
  %1794 = vmatpush1.msra.mxu0 0.0
  %1795 = vmatprep.subr.mxu0 0.0
  %1796 = vmatpush1.msra.mxu0 0.0
  %1797 = vmatprep.subr.mxu0 0.0
  %1798 = vmatpush1.msra.mxu0 0.0
  %1799 = vmatprep.subr.mxu0 0.0
  %1800 = vmatpush1.msra.mxu0 0.0
  %1801 = vmatprep.subr.mxu0 0.0
  %1802 = vmatpush1.msra.mxu0 0.0
  %1803 = vmatprep.subr.mxu0 0.0
  %1804 = vmatpush1.msra.mxu0 0.0
  %1805 = vmatprep.subr.mxu0 0.0
  %1806 = vmatpush1.msra.mxu0 0.0
  %1807 = vmatprep.subr.mxu0 0.0
  %1808 = vmatpush1.msra.mxu0 0.0
  %1809 = vmatprep.subr.mxu0 0.0
  %1810 = vmatpush1.msra.mxu0 0.0
  %1811 = vmatprep.subr.mxu0 0.0
  %1812 = vmatpush1.msra.mxu0 0.0
  %1813 = vmatprep.subr.mxu0 0.0
  %1814 = vmatpush1.msra.mxu0 0.0
  %1815 = vmatprep.mubr.f32.mxu0 0.0
  %1816 = vmatmul.mubr.f32.gmra.mrb[0].mxu0 %v1749
  %v1817 = vpop.f32.mrb[0].mxu0
  %v1818 = vadd.f32 0.0, %v1817
  %v1819 = vpop.f32.mrb[0].mxu0
  %1820 = vdwg.mxu0
  %v1821 = vadd.f32 %v1745, %v1818
  %v1822 = vxor.u32 %v1821, 2147483648
  %v1823 = vmul.f32 %v1822, 1.442695
  %v1824 = vpow.pop %v1823
  %v1825 = vadd.f32 %v1824, 1.0
  %v1826 = vrcp.pop %v1825
  %v1827 = vmul.f32 1.0, %v1826
  %v1828 = vtanh.pop %v1821
  %v1829 = vmul.f32 %v1827, %v1610
  %1831 = vrot.lane.b32.xlu0 %v1828, 112
  %v1832 = vpop.permute.xlu0 %1831
  %v1834 = vmul.f32 %v1827, %v1832
  %1836 = vrot.lane.b32.xlu0 %v1834, 8
  %v1837 = vpop.permute.xlu0 %1836
  %v1839 = vadd.f32 %v1829, %v1837
  %v1840 = vtanh.pop %v1839
  %1842 = vrot.lane.b32.xlu0 %v1840, 16
  %v1843 = vpop.permute.xlu0 %1842
  %v1845 = vmul.f32 %v1827, %v1843
  %1847 = vset.pattern.permute.xlu0 0
  %1848 = vperm.xlu0 %1847, %v1743
  %v1849 = vpop.permute.xlu0 %1848
  %v1851 = vmul.f32 %v1849, %v1845
  %v1852 = vsub.f32 1.0, %v1743
  %1854 = vset.pattern.permute.xlu0 0
  %1855 = vperm.xlu0 %1854, %v1852
  %v1856 = vpop.permute.xlu0 %1855
  %v1858 = vmul.f32 %v1856, %v1607
  %v1859 = vadd.f32 %v1851, %v1858
  %v1860 = vmul.f32 %v1849, %v1839
  %v1861 = vmul.f32 %v1856, %v1610
  %v1862 = vadd.f32 %v1860, %v1861
  %v1863 = vld [vmem:[#allocation2 + $0x8] sm:$0xff]
  %1865 = vrot.lane.b32.xlu0 %v1729, 72
  %v1866 = vpop.permute.xlu0 %1865
  %v1867 = vsel %vm92, %v1866, 0
  %1869 = vmatprep.subr.mxu0 0.0
  %1870 = vmatpush1.msra.mxu0 %v232
  %1871 = vmatprep.subr.mxu0 0.0
  %1872 = vmatpush1.msra.mxu0 0.0
  %1873 = vmatprep.subr.mxu0 0.0
  %1874 = vmatpush1.msra.mxu0 0.0
  %1875 = vmatprep.subr.mxu0 0.0
  %1876 = vmatpush1.msra.mxu0 0.0
  %1877 = vmatprep.subr.mxu0 0.0
  %1878 = vmatpush1.msra.mxu0 0.0
  %1879 = vmatprep.subr.mxu0 0.0
  %1880 = vmatpush1.msra.mxu0 0.0
  %1881 = vmatprep.subr.mxu0 0.0
  %1882 = vmatpush1.msra.mxu0 0.0
  %1883 = vmatprep.subr.mxu0 0.0
  %1884 = vmatpush1.msra.mxu0 0.0
  %1885 = vmatprep.subr.mxu0 0.0
  %1886 = vmatpush1.msra.mxu0 0.0
  %1887 = vmatprep.subr.mxu0 0.0
  %1888 = vmatpush1.msra.mxu0 0.0
  %1889 = vmatprep.subr.mxu0 0.0
  %1890 = vmatpush1.msra.mxu0 0.0
  %1891 = vmatprep.subr.mxu0 0.0
  %1892 = vmatpush1.msra.mxu0 0.0
  %1893 = vmatprep.subr.mxu0 0.0
  %1894 = vmatpush1.msra.mxu0 0.0
  %1895 = vmatprep.subr.mxu0 0.0
  %1896 = vmatpush1.msra.mxu0 0.0
  %1897 = vmatprep.subr.mxu0 0.0
  %1898 = vmatpush1.msra.mxu0 0.0
  %1899 = vmatprep.subr.mxu0 0.0
  %1900 = vmatpush1.msra.mxu0 0.0
  %1901 = vmatprep.subr.mxu0 0.0
  %1902 = vmatpush1.msra.mxu0 0.0
  %1903 = vmatprep.subr.mxu0 0.0
  %1904 = vmatpush1.msra.mxu0 0.0
  %1905 = vmatprep.subr.mxu0 0.0
  %1906 = vmatpush1.msra.mxu0 0.0
  %1907 = vmatprep.subr.mxu0 0.0
  %1908 = vmatpush1.msra.mxu0 0.0
  %1909 = vmatprep.subr.mxu0 0.0
  %1910 = vmatpush1.msra.mxu0 0.0
  %1911 = vmatprep.subr.mxu0 0.0
  %1912 = vmatpush1.msra.mxu0 0.0
  %1913 = vmatprep.subr.mxu0 0.0
  %1914 = vmatpush1.msra.mxu0 0.0
  %1915 = vmatprep.subr.mxu0 0.0
  %1916 = vmatpush1.msra.mxu0 0.0
  %1917 = vmatprep.subr.mxu0 0.0
  %1918 = vmatpush1.msra.mxu0 0.0
  %1919 = vmatprep.subr.mxu0 0.0
  %1920 = vmatpush1.msra.mxu0 0.0
  %1921 = vmatprep.subr.mxu0 0.0
  %1922 = vmatpush1.msra.mxu0 0.0
  %1923 = vmatprep.subr.mxu0 0.0
  %1924 = vmatpush1.msra.mxu0 0.0
  %1925 = vmatprep.subr.mxu0 0.0
  %1926 = vmatpush1.msra.mxu0 0.0
  %1927 = vmatprep.subr.mxu0 0.0
  %1928 = vmatpush1.msra.mxu0 0.0
  %1929 = vmatprep.subr.mxu0 0.0
  %1930 = vmatpush1.msra.mxu0 0.0
  %1931 = vmatprep.subr.mxu0 0.0
  %1932 = vmatpush1.msra.mxu0 0.0
  %1933 = vmatprep.mubr.f32.mxu0 0.0
  %1934 = vmatmul.mubr.f32.gmra.mrb[0].mxu0 %v1867
  %v1935 = vpop.f32.mrb[0].mxu0
  %v1936 = vadd.f32 0.0, %v1935
  %v1937 = vpop.f32.mrb[0].mxu0
  %1938 = vdwg.mxu0
  %1940 = vrot.lane.b32.xlu0 %v1936, 32
  %v1941 = vpop.permute.xlu0 %1940
  %v1943 = vadd.f32 %v1863, %v1941
  %v1944 = vxor.u32 %v1943, 2147483648
  %v1945 = vmul.f32 %v1944, 1.442695
  %v1946 = vpow.pop %v1945
  %v1947 = vadd.f32 %v1946, 1.0
  %v1948 = vrcp.pop %v1947
  %v1949 = vmul.f32 1.0, %v1948
  %v1950 = vtanh.pop %v1943
  %v1951 = vmul.f32 %v1949, %v1732
  %1953 = vrot.lane.b32.xlu0 %v1950, 112
  %v1954 = vpop.permute.xlu0 %1953
  %v1956 = vmul.f32 %v1949, %v1954
  %1958 = vrot.lane.b32.xlu0 %v1956, 8
  %v1959 = vpop.permute.xlu0 %1958
  %v1961 = vadd.f32 %v1951, %v1959
  %v1962 = vtanh.pop %v1961
  %1964 = vrot.lane.b32.xlu0 %v1962, 16
  %v1965 = vpop.permute.xlu0 %1964
  %v1967 = vmul.f32 %v1949, %v1965
  %1969 = vset.pattern.permute.xlu0 0
  %1970 = vperm.xlu0 %1969, %v1744
  %v1971 = vpop.permute.xlu0 %1970
  %v1973 = vmul.f32 %v1971, %v1967
  %v1974 = vsub.f32 1.0, %v1744
  %1976 = vset.pattern.permute.xlu0 0
  %1977 = vperm.xlu0 %1976, %v1974
  %v1978 = vpop.permute.xlu0 %1977
  %v1980 = vmul.f32 %v1978, %v1729
  %v1981 = vadd.f32 %v1973, %v1980
  %v1982 = vmul.f32 %v1971, %v1961
  %v1983 = vmul.f32 %v1978, %v1732
  %v1984 = vadd.f32 %v1982, %v1983
  %1986 = vrot.lane.b32.xlu0 %v1851, 104
  %v1987 = vpop.permute.xlu0 %1986
  %1989 = vst.msk [vmem:[#allocation4 + $0x30] sm:$0xff] %vm92, %v1987
  %1991 = vrot.lane.b32.xlu0 %v1973, 72
  %v1992 = vpop.permute.xlu0 %1991
  %1994 = vst.msk [vmem:[#allocation5 + $0x8] sm:$0xff] %vm92, %v1992
  %v1995 = vld [vmem:[%s234] sm:$0xff]
  %v1996 = vld [vmem:[%s2] sm:$0xff]
  %v1997 = vld [vmem:[#allocation2 + $0x38] sm:$0xff]
  %1999 = vrot.lane.b32.xlu0 %v1859, 104
  %v2000 = vpop.permute.xlu0 %1999
  %v2001 = vsel %vm92, %v2000, 0
  %2003 = vmatprep.subr.mxu0 0.0
  %2004 = vmatpush1.msra.mxu0 %v231
  %2005 = vmatprep.subr.mxu0 0.0
  %2006 = vmatpush1.msra.mxu0 0.0
  %2007 = vmatprep.subr.mxu0 0.0
  %2008 = vmatpush1.msra.mxu0 0.0
  %2009 = vmatprep.subr.mxu0 0.0
  %2010 = vmatpush1.msra.mxu0 0.0
  %2011 = vmatprep.subr.mxu0 0.0
  %2012 = vmatpush1.msra.mxu0 0.0
  %2013 = vmatprep.subr.mxu0 0.0
  %2014 = vmatpush1.msra.mxu0 0.0
  %2015 = vmatprep.subr.mxu0 0.0
  %2016 = vmatpush1.msra.mxu0 0.0
  %2017 = vmatprep.subr.mxu0 0.0
  %2018 = vmatpush1.msra.mxu0 0.0
  %2019 = vmatprep.subr.mxu0 0.0
  %2020 = vmatpush1.msra.mxu0 0.0
  %2021 = vmatprep.subr.mxu0 0.0
  %2022 = vmatpush1.msra.mxu0 0.0
  %2023 = vmatprep.subr.mxu0 0.0
  %2024 = vmatpush1.msra.mxu0 0.0
  %2025 = vmatprep.subr.mxu0 0.0
  %2026 = vmatpush1.msra.mxu0 0.0
  %2027 = vmatprep.subr.mxu0 0.0
  %2028 = vmatpush1.msra.mxu0 0.0
  %2029 = vmatprep.subr.mxu0 0.0
  %2030 = vmatpush1.msra.mxu0 0.0
  %2031 = vmatprep.subr.mxu0 0.0
  %2032 = vmatpush1.msra.mxu0 0.0
  %2033 = vmatprep.subr.mxu0 0.0
  %2034 = vmatpush1.msra.mxu0 0.0
  %2035 = vmatprep.subr.mxu0 0.0
  %2036 = vmatpush1.msra.mxu0 0.0
  %2037 = vmatprep.subr.mxu0 0.0
  %2038 = vmatpush1.msra.mxu0 0.0
  %2039 = vmatprep.subr.mxu0 0.0
  %2040 = vmatpush1.msra.mxu0 0.0
  %2041 = vmatprep.subr.mxu0 0.0
  %2042 = vmatpush1.msra.mxu0 0.0
  %2043 = vmatprep.subr.mxu0 0.0
  %2044 = vmatpush1.msra.mxu0 0.0
  %2045 = vmatprep.subr.mxu0 0.0
  %2046 = vmatpush1.msra.mxu0 0.0
  %2047 = vmatprep.subr.mxu0 0.0
  %2048 = vmatpush1.msra.mxu0 0.0
  %2049 = vmatprep.subr.mxu0 0.0
  %2050 = vmatpush1.msra.mxu0 0.0
  %2051 = vmatprep.subr.mxu0 0.0
  %2052 = vmatpush1.msra.mxu0 0.0
  %2053 = vmatprep.subr.mxu0 0.0
  %2054 = vmatpush1.msra.mxu0 0.0
  %2055 = vmatprep.subr.mxu0 0.0
  %2056 = vmatpush1.msra.mxu0 0.0
  %2057 = vmatprep.subr.mxu0 0.0
  %2058 = vmatpush1.msra.mxu0 0.0
  %2059 = vmatprep.subr.mxu0 0.0
  %2060 = vmatpush1.msra.mxu0 0.0
  %2061 = vmatprep.subr.mxu0 0.0
  %2062 = vmatpush1.msra.mxu0 0.0
  %2063 = vmatprep.subr.mxu0 0.0
  %2064 = vmatpush1.msra.mxu0 0.0
  %2065 = vmatprep.subr.mxu0 0.0
  %2066 = vmatpush1.msra.mxu0 0.0
  %2067 = vmatprep.mubr.f32.mxu0 0.0
  %2068 = vmatmul.mubr.f32.gmra.mrb[0].mxu0 %v2001
  %v2069 = vpop.f32.mrb[0].mxu0
  %v2070 = vadd.f32 0.0, %v2069
  %v2071 = vpop.f32.mrb[0].mxu0
  %2072 = vdwg.mxu0
  %v2073 = vadd.f32 %v1997, %v2070
  %v2074 = vxor.u32 %v2073, 2147483648
  %v2075 = vmul.f32 %v2074, 1.442695
  %v2076 = vpow.pop %v2075
  %v2077 = vadd.f32 %v2076, 1.0
  %v2078 = vrcp.pop %v2077
  %v2079 = vmul.f32 1.0, %v2078
  %v2080 = vtanh.pop %v2073
  %v2081 = vmul.f32 %v2079, %v1862
  %2083 = vrot.lane.b32.xlu0 %v2080, 112
  %v2084 = vpop.permute.xlu0 %2083
  %v2086 = vmul.f32 %v2079, %v2084
  %2088 = vrot.lane.b32.xlu0 %v2086, 8
  %v2089 = vpop.permute.xlu0 %2088
  %v2091 = vadd.f32 %v2081, %v2089
  %v2092 = vtanh.pop %v2091
  %2094 = vrot.lane.b32.xlu0 %v2092, 16
  %v2095 = vpop.permute.xlu0 %2094
  %v2097 = vmul.f32 %v2079, %v2095
  %2099 = vset.pattern.permute.xlu0 0
  %2100 = vperm.xlu0 %2099, %v1995
  %v2101 = vpop.permute.xlu0 %2100
  %v2103 = vmul.f32 %v2101, %v2097
  %v2104 = vld [vmem:[#allocation2] sm:$0xff]
  %2106 = vrot.lane.b32.xlu0 %v1981, 72
  %v2107 = vpop.permute.xlu0 %2106
  %v2108 = vsel %vm92, %v2107, 0
  %2110 = vmatprep.subr.mxu0 0.0
  %2111 = vmatpush1.msra.mxu0 %v232
  %2112 = vmatprep.subr.mxu0 0.0
  %2113 = vmatpush1.msra.mxu0 0.0
  %2114 = vmatprep.subr.mxu0 0.0
  %2115 = vmatpush1.msra.mxu0 0.0
  %2116 = vmatprep.subr.mxu0 0.0
  %2117 = vmatpush1.msra.mxu0 0.0
  %2118 = vmatprep.subr.mxu0 0.0
  %2119 = vmatpush1.msra.mxu0 0.0
  %2120 = vmatprep.subr.mxu0 0.0
  %2121 = vmatpush1.msra.mxu0 0.0
  %2122 = vmatprep.subr.mxu0 0.0
  %2123 = vmatpush1.msra.mxu0 0.0
  %2124 = vmatprep.subr.mxu0 0.0
  %2125 = vmatpush1.msra.mxu0 0.0
  %2126 = vmatprep.subr.mxu0 0.0
  %2127 = vmatpush1.msra.mxu0 0.0
  %2128 = vmatprep.subr.mxu0 0.0
  %2129 = vmatpush1.msra.mxu0 0.0
  %2130 = vmatprep.subr.mxu0 0.0
  %2131 = vmatpush1.msra.mxu0 0.0
  %2132 = vmatprep.subr.mxu0 0.0
  %2133 = vmatpush1.msra.mxu0 0.0
  %2134 = vmatprep.subr.mxu0 0.0
  %2135 = vmatpush1.msra.mxu0 0.0
  %2136 = vmatprep.subr.mxu0 0.0
  %2137 = vmatpush1.msra.mxu0 0.0
  %2138 = vmatprep.subr.mxu0 0.0
  %2139 = vmatpush1.msra.mxu0 0.0
  %2140 = vmatprep.subr.mxu0 0.0
  %2141 = vmatpush1.msra.mxu0 0.0
  %2142 = vmatprep.subr.mxu0 0.0
  %2143 = vmatpush1.msra.mxu0 0.0
  %2144 = vmatprep.subr.mxu0 0.0
  %2145 = vmatpush1.msra.mxu0 0.0
  %2146 = vmatprep.subr.mxu0 0.0
  %2147 = vmatpush1.msra.mxu0 0.0
  %2148 = vmatprep.subr.mxu0 0.0
  %2149 = vmatpush1.msra.mxu0 0.0
  %2150 = vmatprep.subr.mxu0 0.0
  %2151 = vmatpush1.msra.mxu0 0.0
  %2152 = vmatprep.subr.mxu0 0.0
  %2153 = vmatpush1.msra.mxu0 0.0
  %2154 = vmatprep.subr.mxu0 0.0
  %2155 = vmatpush1.msra.mxu0 0.0
  %2156 = vmatprep.subr.mxu0 0.0
  %2157 = vmatpush1.msra.mxu0 0.0
  %2158 = vmatprep.subr.mxu0 0.0
  %2159 = vmatpush1.msra.mxu0 0.0
  %2160 = vmatprep.subr.mxu0 0.0
  %2161 = vmatpush1.msra.mxu0 0.0
  %2162 = vmatprep.subr.mxu0 0.0
  %2163 = vmatpush1.msra.mxu0 0.0
  %2164 = vmatprep.subr.mxu0 0.0
  %2165 = vmatpush1.msra.mxu0 0.0
  %2166 = vmatprep.subr.mxu0 0.0
  %2167 = vmatpush1.msra.mxu0 0.0
  %2168 = vmatprep.subr.mxu0 0.0
  %2169 = vmatpush1.msra.mxu0 0.0
  %2170 = vmatprep.subr.mxu0 0.0
  %2171 = vmatpush1.msra.mxu0 0.0
  %2172 = vmatprep.subr.mxu0 0.0
  %2173 = vmatpush1.msra.mxu0 0.0
  %2174 = vmatprep.mubr.f32.mxu0 0.0
  %2175 = vmatmul.mubr.f32.gmra.mrb[0].mxu0 %v2108
  %v2176 = vpop.f32.mrb[0].mxu0
  %v2177 = vadd.f32 0.0, %v2176
  %v2178 = vpop.f32.mrb[0].mxu0
  %2179 = vdwg.mxu0
  %2181 = vrot.lane.b32.xlu0 %v2177, 32
  %v2182 = vpop.permute.xlu0 %2181
  %v2184 = vadd.f32 %v2104, %v2182
  %v2185 = vxor.u32 %v2184, 2147483648
  %v2186 = vmul.f32 %v2185, 1.442695
  %v2187 = vpow.pop %v2186
  %v2188 = vadd.f32 %v2187, 1.0
  %v2189 = vrcp.pop %v2188
  %v2190 = vmul.f32 1.0, %v2189
  %v2191 = vtanh.pop %v2184
  %v2192 = vmul.f32 %v2190, %v1984
  %2194 = vrot.lane.b32.xlu0 %v2191, 112
  %v2195 = vpop.permute.xlu0 %2194
  %v2197 = vmul.f32 %v2190, %v2195
  %2199 = vrot.lane.b32.xlu0 %v2197, 8
  %v2200 = vpop.permute.xlu0 %2199
  %v2202 = vadd.f32 %v2192, %v2200
  %v2203 = vtanh.pop %v2202
  %2205 = vrot.lane.b32.xlu0 %v2203, 16
  %v2206 = vpop.permute.xlu0 %2205
  %v2208 = vmul.f32 %v2190, %v2206
  %2210 = vset.pattern.permute.xlu0 0
  %2211 = vperm.xlu0 %2210, %v1996
  %v2212 = vpop.permute.xlu0 %2211
  %v2214 = vmul.f32 %v2212, %v2208
  %2216 = vrot.lane.b32.xlu0 %v2103, 104
  %v2217 = vpop.permute.xlu0 %2216
  %2219 = vst.msk [vmem:[#allocation4 + $0x38] sm:$0xff] %vm92, %v2217
  %2221 = vrot.lane.b32.xlu0 %v2214, 72
  %v2222 = vpop.permute.xlu0 %2221
  %2224 = vst.msk [vmem:[#allocation5] sm:$0xff] %vm92, %v2222
  %v2225 = vld [vmem:[%s0] sm:$0xff]
  %v2226 = vld [vmem:[%s0 + $0x8] sm:$0xff]
  %v2227 = vld [vmem:[%s0 + $0x10] sm:$0xff]
  %v2228 = vld [vmem:[%s0 + $0x18] sm:$0xff]
  %v2229 = vld [vmem:[%s0 + $0x20] sm:$0xff]
  %v2230 = vld [vmem:[%s0 + $0x28] sm:$0xff]
  %v2231 = vld [vmem:[%s0 + $0x30] sm:$0xff]
  %v2232 = vld [vmem:[%s0 + $0x38] sm:$0xff]
  %v2233 = vld [vmem:[%s7] sm:$0xff]
  %v2234 = vld [vmem:[%s7 + $0x8] sm:$0xff]
  %v2235 = vld [vmem:[%s7 + $0x10] sm:$0xff]
  %v2236 = vld [vmem:[%s7 + $0x18] sm:$0xff]
  %v2237 = vld [vmem:[#allocation4] sm:$0xff]
  %v2238 = vld [vmem:[#allocation4 + $0x8] sm:$0xff]
  %v2239 = vld [vmem:[#allocation4 + $0x10] sm:$0xff]
  %v2240 = vld [vmem:[#allocation4 + $0x18] sm:$0xff]
  %v2241 = vld [vmem:[#allocation4 + $0x20] sm:$0xff]
  %v2242 = vld [vmem:[#allocation4 + $0x28] sm:$0xff]
  %v2243 = vld [vmem:[#allocation4 + $0x30] sm:$0xff]
  %v2244 = vld [vmem:[#allocation4 + $0x38] sm:$0xff]
  %v2245 = vld [vmem:[%s8] sm:$0xff]
  %v2246 = vld [vmem:[%s8 + $0x8] sm:$0xff]
  %v2248 = vsel %vm92, %v2237, 0
  %v2251 = vsel %vm92, %v2238, 0
  %v2254 = vsel %vm92, %v2239, 0
  %v2257 = vsel %vm92, %v2240, 0
  %v2260 = vsel %vm92, %v2241, 0
  %v2263 = vsel %vm92, %v2242, 0
  %v2266 = vsel %vm92, %v2243, 0
  %v2269 = vsel %vm92, %v2244, 0
  %2271 = vmatprep.subr.mxu0 %v2246
  %2272 = vmatpush1.msra.mxu0 %v2245
  %2273 = vmatprep.subr.mxu0 0.0
  %2274 = vmatpush1.msra.mxu0 0.0
  %2275 = vmatprep.subr.mxu0 0.0
  %2276 = vmatpush1.msra.mxu0 0.0
  %2277 = vmatprep.subr.mxu0 0.0
  %2278 = vmatpush1.msra.mxu0 0.0
  %2279 = vmatprep.subr.mxu0 0.0
  %2280 = vmatpush1.msra.mxu0 0.0
  %2281 = vmatprep.subr.mxu0 0.0
  %2282 = vmatpush1.msra.mxu0 0.0
  %2283 = vmatprep.subr.mxu0 0.0
  %2284 = vmatpush1.msra.mxu0 0.0
  %2285 = vmatprep.subr.mxu0 0.0
  %2286 = vmatpush1.msra.mxu0 0.0
  %2287 = vmatprep.subr.mxu0 0.0
  %2288 = vmatpush1.msra.mxu0 0.0
  %2289 = vmatprep.subr.mxu0 0.0
  %2290 = vmatpush1.msra.mxu0 0.0
  %2291 = vmatprep.subr.mxu0 0.0
  %2292 = vmatpush1.msra.mxu0 0.0
  %2293 = vmatprep.subr.mxu0 0.0
  %2294 = vmatpush1.msra.mxu0 0.0
  %2295 = vmatprep.subr.mxu0 0.0
  %2296 = vmatpush1.msra.mxu0 0.0
  %2297 = vmatprep.subr.mxu0 0.0
  %2298 = vmatpush1.msra.mxu0 0.0
  %2299 = vmatprep.subr.mxu0 0.0
  %2300 = vmatpush1.msra.mxu0 0.0
  %2301 = vmatprep.subr.mxu0 0.0
  %2302 = vmatpush1.msra.mxu0 0.0
  %2303 = vmatprep.subr.mxu0 0.0
  %2304 = vmatpush1.msra.mxu0 0.0
  %2305 = vmatprep.subr.mxu0 0.0
  %2306 = vmatpush1.msra.mxu0 0.0
  %2307 = vmatprep.subr.mxu0 0.0
  %2308 = vmatpush1.msra.mxu0 0.0
  %2309 = vmatprep.subr.mxu0 0.0
  %2310 = vmatpush1.msra.mxu0 0.0
  %2311 = vmatprep.subr.mxu0 0.0
  %2312 = vmatpush1.msra.mxu0 0.0
  %2313 = vmatprep.subr.mxu0 0.0
  %2314 = vmatpush1.msra.mxu0 0.0
  %2315 = vmatprep.subr.mxu0 0.0
  %2316 = vmatpush1.msra.mxu0 0.0
  %2317 = vmatprep.subr.mxu0 0.0
  %2318 = vmatpush1.msra.mxu0 0.0
  %2319 = vmatprep.subr.mxu0 0.0
  %2320 = vmatpush1.msra.mxu0 0.0
  %2321 = vmatprep.subr.mxu0 0.0
  %2322 = vmatpush1.msra.mxu0 0.0
  %2323 = vmatprep.subr.mxu0 0.0
  %2324 = vmatpush1.msra.mxu0 0.0
  %2325 = vmatprep.subr.mxu0 0.0
  %2326 = vmatpush1.msra.mxu0 0.0
  %2327 = vmatprep.subr.mxu0 0.0
  %2328 = vmatpush1.msra.mxu0 0.0
  %2329 = vmatprep.subr.mxu0 0.0
  %2330 = vmatpush1.msra.mxu0 0.0
  %2331 = vmatprep.subr.mxu0 0.0
  %2332 = vmatpush1.msra.mxu0 0.0
  %2333 = vmatprep.subr.mxu0 0.0
  %2334 = vmatpush1.msra.mxu0 0.0
  %2335 = vmatprep.mubr.f32.mxu0 0.0
  %2336 = vmatmul.mubr.f32.gmra.mrb[0].mxu0 %v2248
  %v2337 = vpop.f32.mrb[0].mxu0
  %v2338 = vadd.f32 0.0, %v2337
  %v2339 = vpop.f32.mrb[0].mxu0
  %v2340 = vadd.f32 0.0, %v2339
  %2341 = vmatprep.mubr.f32.mxu0 0.0
  %2342 = vmatmul.mubr.f32.gmra.mrb[0].mxu0 %v2251
  %v2343 = vpop.f32.mrb[0].mxu0
  %v2344 = vadd.f32 0.0, %v2343
  %v2345 = vpop.f32.mrb[0].mxu0
  %v2346 = vadd.f32 0.0, %v2345
  %2347 = vmatprep.mubr.f32.mxu0 0.0
  %2348 = vmatmul.mubr.f32.gmra.mrb[0].mxu0 %v2254
  %v2349 = vpop.f32.mrb[0].mxu0
  %v2350 = vadd.f32 0.0, %v2349
  %v2351 = vpop.f32.mrb[0].mxu0
  %v2352 = vadd.f32 0.0, %v2351
  %2353 = vmatprep.mubr.f32.mxu0 0.0
  %2354 = vmatmul.mubr.f32.gmra.mrb[0].mxu0 %v2257
  %v2355 = vpop.f32.mrb[0].mxu0
  %v2356 = vadd.f32 0.0, %v2355
  %v2357 = vpop.f32.mrb[0].mxu0
  %v2358 = vadd.f32 0.0, %v2357
  %2359 = vmatprep.mubr.f32.mxu0 0.0
  %2360 = vmatmul.mubr.f32.gmra.mrb[0].mxu0 %v2260
  %v2361 = vpop.f32.mrb[0].mxu0
  %v2362 = vadd.f32 0.0, %v2361
  %v2363 = vpop.f32.mrb[0].mxu0
  %v2364 = vadd.f32 0.0, %v2363
  %2365 = vmatprep.mubr.f32.mxu0 0.0
  %2366 = vmatmul.mubr.f32.gmra.mrb[0].mxu0 %v2263
  %v2367 = vpop.f32.mrb[0].mxu0
  %v2368 = vadd.f32 0.0, %v2367
  %v2369 = vpop.f32.mrb[0].mxu0
  %v2370 = vadd.f32 0.0, %v2369
  %2371 = vmatprep.mubr.f32.mxu0 0.0
  %2372 = vmatmul.mubr.f32.gmra.mrb[0].mxu0 %v2266
  %v2373 = vpop.f32.mrb[0].mxu0
  %v2374 = vadd.f32 0.0, %v2373
  %v2375 = vpop.f32.mrb[0].mxu0
  %v2376 = vadd.f32 0.0, %v2375
  %2377 = vmatprep.mubr.f32.mxu0 0.0
  %2378 = vmatmul.mubr.f32.gmra.mrb[0].mxu0 %v2269
  %v2379 = vpop.f32.mrb[0].mxu0
  %v2380 = vadd.f32 0.0, %v2379
  %v2381 = vpop.f32.mrb[0].mxu0
  %v2382 = vadd.f32 0.0, %v2381
  %2383 = vdwg.mxu0
  %vm2384 = vcmask 130048
  %v2386 = vsel %vm2384, %v2225, 0
  %v2389 = vsel %vm2384, %v2226, 0
  %v2392 = vsel %vm2384, %v2227, 0
  %v2395 = vsel %vm2384, %v2228, 0
  %v2398 = vsel %vm2384, %v2229, 0
  %v2401 = vsel %vm2384, %v2230, 0
  %v2404 = vsel %vm2384, %v2231, 0
  %v2407 = vsel %vm2384, %v2232, 0
  %2409 = vmatprep.subr.mxu0 %v2234
  %2410 = vmatpush1.msra.mxu0 %v2233
  %2411 = vmatprep.subr.mxu0 %v2236
  %2412 = vmatpush1.msra.mxu0 %v2235
  %2413 = vmatprep.subr.mxu0 0.0
  %2414 = vmatpush1.msra.mxu0 0.0
  %2415 = vmatprep.subr.mxu0 0.0
  %2416 = vmatpush1.msra.mxu0 0.0
  %2417 = vmatprep.subr.mxu0 0.0
  %2418 = vmatpush1.msra.mxu0 0.0
  %2419 = vmatprep.subr.mxu0 0.0
  %2420 = vmatpush1.msra.mxu0 0.0
  %2421 = vmatprep.subr.mxu0 0.0
  %2422 = vmatpush1.msra.mxu0 0.0
  %2423 = vmatprep.subr.mxu0 0.0
  %2424 = vmatpush1.msra.mxu0 0.0
  %2425 = vmatprep.subr.mxu0 0.0
  %2426 = vmatpush1.msra.mxu0 0.0
  %2427 = vmatprep.subr.mxu0 0.0
  %2428 = vmatpush1.msra.mxu0 0.0
  %2429 = vmatprep.subr.mxu0 0.0
  %2430 = vmatpush1.msra.mxu0 0.0
  %2431 = vmatprep.subr.mxu0 0.0
  %2432 = vmatpush1.msra.mxu0 0.0
  %2433 = vmatprep.subr.mxu0 0.0
  %2434 = vmatpush1.msra.mxu0 0.0
  %2435 = vmatprep.subr.mxu0 0.0
  %2436 = vmatpush1.msra.mxu0 0.0
  %2437 = vmatprep.subr.mxu0 0.0
  %2438 = vmatpush1.msra.mxu0 0.0
  %2439 = vmatprep.subr.mxu0 0.0
  %2440 = vmatpush1.msra.mxu0 0.0
  %2441 = vmatprep.subr.mxu0 0.0
  %2442 = vmatpush1.msra.mxu0 0.0
  %2443 = vmatprep.subr.mxu0 0.0
  %2444 = vmatpush1.msra.mxu0 0.0
  %2445 = vmatprep.subr.mxu0 0.0
  %2446 = vmatpush1.msra.mxu0 0.0
  %2447 = vmatprep.subr.mxu0 0.0
  %2448 = vmatpush1.msra.mxu0 0.0
  %2449 = vmatprep.subr.mxu0 0.0
  %2450 = vmatpush1.msra.mxu0 0.0
  %2451 = vmatprep.subr.mxu0 0.0
  %2452 = vmatpush1.msra.mxu0 0.0
  %2453 = vmatprep.subr.mxu0 0.0
  %2454 = vmatpush1.msra.mxu0 0.0
  %2455 = vmatprep.subr.mxu0 0.0
  %2456 = vmatpush1.msra.mxu0 0.0
  %2457 = vmatprep.subr.mxu0 0.0
  %2458 = vmatpush1.msra.mxu0 0.0
  %2459 = vmatprep.subr.mxu0 0.0
  %2460 = vmatpush1.msra.mxu0 0.0
  %2461 = vmatprep.subr.mxu0 0.0
  %2462 = vmatpush1.msra.mxu0 0.0
  %2463 = vmatprep.subr.mxu0 0.0
  %2464 = vmatpush1.msra.mxu0 0.0
  %2465 = vmatprep.subr.mxu0 0.0
  %2466 = vmatpush1.msra.mxu0 0.0
  %2467 = vmatprep.subr.mxu0 0.0
  %2468 = vmatpush1.msra.mxu0 0.0
  %2469 = vmatprep.subr.mxu0 0.0
  %2470 = vmatpush1.msra.mxu0 0.0
  %2471 = vmatprep.subr.mxu0 0.0
  %2472 = vmatpush1.msra.mxu0 0.0
  %2473 = vmatprep.mubr.f32.mxu0 0.0
  %2474 = vmatmul.mubr.f32.gmra.mrb[0].mxu0 %v2386
  %v2475 = vpop.f32.mrb[0].mxu0
  %v2476 = vadd.f32 %v2338, %v2475
  %v2477 = vpop.f32.mrb[0].mxu0
  %v2478 = vadd.f32 %v2340, %v2477
  %2479 = vmatprep.mubr.f32.mxu0 0.0
  %2480 = vmatmul.mubr.f32.gmra.mrb[0].mxu0 %v2389
  %v2481 = vpop.f32.mrb[0].mxu0
  %v2482 = vadd.f32 %v2344, %v2481
  %v2483 = vpop.f32.mrb[0].mxu0
  %v2484 = vadd.f32 %v2346, %v2483
  %2485 = vmatprep.mubr.f32.mxu0 0.0
  %2486 = vmatmul.mubr.f32.gmra.mrb[0].mxu0 %v2392
  %v2487 = vpop.f32.mrb[0].mxu0
  %v2488 = vadd.f32 %v2350, %v2487
  %v2489 = vpop.f32.mrb[0].mxu0
  %v2490 = vadd.f32 %v2352, %v2489
  %2491 = vmatprep.mubr.f32.mxu0 0.0
  %2492 = vmatmul.mubr.f32.gmra.mrb[0].mxu0 %v2395
  %v2493 = vpop.f32.mrb[0].mxu0
  %v2494 = vadd.f32 %v2356, %v2493
  %v2495 = vpop.f32.mrb[0].mxu0
  %v2496 = vadd.f32 %v2358, %v2495
  %2497 = vmatprep.mubr.f32.mxu0 0.0
  %2498 = vmatmul.mubr.f32.gmra.mrb[0].mxu0 %v2398
  %v2499 = vpop.f32.mrb[0].mxu0
  %v2500 = vadd.f32 %v2362, %v2499
  %v2501 = vpop.f32.mrb[0].mxu0
  %v2502 = vadd.f32 %v2364, %v2501
  %2503 = vmatprep.mubr.f32.mxu0 0.0
  %2504 = vmatmul.mubr.f32.gmra.mrb[0].mxu0 %v2401
  %v2505 = vpop.f32.mrb[0].mxu0
  %v2506 = vadd.f32 %v2368, %v2505
  %v2507 = vpop.f32.mrb[0].mxu0
  %v2508 = vadd.f32 %v2370, %v2507
  %2509 = vmatprep.mubr.f32.mxu0 0.0
  %2510 = vmatmul.mubr.f32.gmra.mrb[0].mxu0 %v2404
  %v2511 = vpop.f32.mrb[0].mxu0
  %v2512 = vadd.f32 %v2374, %v2511
  %v2513 = vpop.f32.mrb[0].mxu0
  %v2514 = vadd.f32 %v2376, %v2513
  %2515 = vmatprep.mubr.f32.mxu0 0.0
  %2516 = vmatmul.mubr.f32.gmra.mrb[0].mxu0 %v2407
  %v2517 = vpop.f32.mrb[0].mxu0
  %v2518 = vadd.f32 %v2380, %v2517
  %v2519 = vpop.f32.mrb[0].mxu0
  %v2520 = vadd.f32 %v2382, %v2519
  %2521 = vdwg.mxu0
  %v2522 = vld [vmem:[#allocation5] sm:$0xff]
  %v2523 = vld [vmem:[#allocation5 + $0x8] sm:$0xff]
  %v2524 = vld [vmem:[#allocation5 + $0x10] sm:$0xff]
  %v2525 = vld [vmem:[#allocation5 + $0x18] sm:$0xff]
  %v2526 = vld [vmem:[#allocation5 + $0x20] sm:$0xff]
  %v2527 = vld [vmem:[#allocation5 + $0x28] sm:$0xff]
  %v2528 = vld [vmem:[#allocation5 + $0x30] sm:$0xff]
  %v2529 = vld [vmem:[#allocation5 + $0x38] sm:$0xff]
  %v2530 = vld [vmem:[%s9] sm:$0xff]
  %v2531 = vld [vmem:[%s9 + $0x8] sm:$0xff]
  %v2533 = vsel %vm92, %v2522, 0
  %v2536 = vsel %vm92, %v2523, 0
  %v2539 = vsel %vm92, %v2524, 0
  %v2542 = vsel %vm92, %v2525, 0
  %v2545 = vsel %vm92, %v2526, 0
  %v2548 = vsel %vm92, %v2527, 0
  %v2551 = vsel %vm92, %v2528, 0
  %v2554 = vsel %vm92, %v2529, 0
  %2556 = vmatprep.subr.mxu0 %v2531
  %2557 = vmatpush1.msra.mxu0 %v2530
  %2558 = vmatprep.subr.mxu0 0.0
  %2559 = vmatpush1.msra.mxu0 0.0
  %2560 = vmatprep.subr.mxu0 0.0
  %2561 = vmatpush1.msra.mxu0 0.0
  %2562 = vmatprep.subr.mxu0 0.0
  %2563 = vmatpush1.msra.mxu0 0.0
  %2564 = vmatprep.subr.mxu0 0.0
  %2565 = vmatpush1.msra.mxu0 0.0
  %2566 = vmatprep.subr.mxu0 0.0
  %2567 = vmatpush1.msra.mxu0 0.0
  %2568 = vmatprep.subr.mxu0 0.0
  %2569 = vmatpush1.msra.mxu0 0.0
  %2570 = vmatprep.subr.mxu0 0.0
  %2571 = vmatpush1.msra.mxu0 0.0
  %2572 = vmatprep.subr.mxu0 0.0
  %2573 = vmatpush1.msra.mxu0 0.0
  %2574 = vmatprep.subr.mxu0 0.0
  %2575 = vmatpush1.msra.mxu0 0.0
  %2576 = vmatprep.subr.mxu0 0.0
  %2577 = vmatpush1.msra.mxu0 0.0
  %2578 = vmatprep.subr.mxu0 0.0
  %2579 = vmatpush1.msra.mxu0 0.0
  %2580 = vmatprep.subr.mxu0 0.0
  %2581 = vmatpush1.msra.mxu0 0.0
  %2582 = vmatprep.subr.mxu0 0.0
  %2583 = vmatpush1.msra.mxu0 0.0
  %2584 = vmatprep.subr.mxu0 0.0
  %2585 = vmatpush1.msra.mxu0 0.0
  %2586 = vmatprep.subr.mxu0 0.0
  %2587 = vmatpush1.msra.mxu0 0.0
  %2588 = vmatprep.subr.mxu0 0.0
  %2589 = vmatpush1.msra.mxu0 0.0
  %2590 = vmatprep.subr.mxu0 0.0
  %2591 = vmatpush1.msra.mxu0 0.0
  %2592 = vmatprep.subr.mxu0 0.0
  %2593 = vmatpush1.msra.mxu0 0.0
  %2594 = vmatprep.subr.mxu0 0.0
  %2595 = vmatpush1.msra.mxu0 0.0
  %2596 = vmatprep.subr.mxu0 0.0
  %2597 = vmatpush1.msra.mxu0 0.0
  %2598 = vmatprep.subr.mxu0 0.0
  %2599 = vmatpush1.msra.mxu0 0.0
  %2600 = vmatprep.subr.mxu0 0.0
  %2601 = vmatpush1.msra.mxu0 0.0
  %2602 = vmatprep.subr.mxu0 0.0
  %2603 = vmatpush1.msra.mxu0 0.0
  %2604 = vmatprep.subr.mxu0 0.0
  %2605 = vmatpush1.msra.mxu0 0.0
  %2606 = vmatprep.subr.mxu0 0.0
  %2607 = vmatpush1.msra.mxu0 0.0
  %2608 = vmatprep.subr.mxu0 0.0
  %2609 = vmatpush1.msra.mxu0 0.0
  %2610 = vmatprep.subr.mxu0 0.0
  %2611 = vmatpush1.msra.mxu0 0.0
  %2612 = vmatprep.subr.mxu0 0.0
  %2613 = vmatpush1.msra.mxu0 0.0
  %2614 = vmatprep.subr.mxu0 0.0
  %2615 = vmatpush1.msra.mxu0 0.0
  %2616 = vmatprep.subr.mxu0 0.0
  %2617 = vmatpush1.msra.mxu0 0.0
  %2618 = vmatprep.subr.mxu0 0.0
  %2619 = vmatpush1.msra.mxu0 0.0
  %2620 = vmatprep.mubr.f32.mxu0 0.0
  %2621 = vmatmul.mubr.f32.gmra.mrb[0].mxu0 %v2533
  %v2622 = vpop.f32.mrb[0].mxu0
  %v2623 = vadd.f32 0.0, %v2622
  %v2624 = vpop.f32.mrb[0].mxu0
  %v2625 = vadd.f32 0.0, %v2624
  %2626 = vmatprep.mubr.f32.mxu0 0.0
  %2627 = vmatmul.mubr.f32.gmra.mrb[0].mxu0 %v2536
  %v2628 = vpop.f32.mrb[0].mxu0
  %v2629 = vadd.f32 0.0, %v2628
  %v2630 = vpop.f32.mrb[0].mxu0
  %v2631 = vadd.f32 0.0, %v2630
  %2632 = vmatprep.mubr.f32.mxu0 0.0
  %2633 = vmatmul.mubr.f32.gmra.mrb[0].mxu0 %v2539
  %v2634 = vpop.f32.mrb[0].mxu0
  %v2635 = vadd.f32 0.0, %v2634
  %v2636 = vpop.f32.mrb[0].mxu0
  %v2637 = vadd.f32 0.0, %v2636
  %2638 = vmatprep.mubr.f32.mxu0 0.0
  %2639 = vmatmul.mubr.f32.gmra.mrb[0].mxu0 %v2542
  %v2640 = vpop.f32.mrb[0].mxu0
  %v2641 = vadd.f32 0.0, %v2640
  %v2642 = vpop.f32.mrb[0].mxu0
  %v2643 = vadd.f32 0.0, %v2642
  %2644 = vmatprep.mubr.f32.mxu0 0.0
  %2645 = vmatmul.mubr.f32.gmra.mrb[0].mxu0 %v2545
  %v2646 = vpop.f32.mrb[0].mxu0
  %v2647 = vadd.f32 0.0, %v2646
  %v2648 = vpop.f32.mrb[0].mxu0
  %v2649 = vadd.f32 0.0, %v2648
  %2650 = vmatprep.mubr.f32.mxu0 0.0
  %2651 = vmatmul.mubr.f32.gmra.mrb[0].mxu0 %v2548
  %v2652 = vpop.f32.mrb[0].mxu0
  %v2653 = vadd.f32 0.0, %v2652
  %v2654 = vpop.f32.mrb[0].mxu0
  %v2655 = vadd.f32 0.0, %v2654
  %2656 = vmatprep.mubr.f32.mxu0 0.0
  %2657 = vmatmul.mubr.f32.gmra.mrb[0].mxu0 %v2551
  %v2658 = vpop.f32.mrb[0].mxu0
  %v2659 = vadd.f32 0.0, %v2658
  %v2660 = vpop.f32.mrb[0].mxu0
  %v2661 = vadd.f32 0.0, %v2660
  %2662 = vmatprep.mubr.f32.mxu0 0.0
  %2663 = vmatmul.mubr.f32.gmra.mrb[0].mxu0 %v2554
  %v2664 = vpop.f32.mrb[0].mxu0
  %v2665 = vadd.f32 0.0, %v2664
  %v2666 = vpop.f32.mrb[0].mxu0
  %v2667 = vadd.f32 0.0, %v2666
  %2668 = vdwg.mxu0
  %v2669 = vadd.f32 %v2476, %v2623
  %v2670 = vadd.f32 %v2478, %v2625
  %v2671 = vadd.f32 %v2482, %v2629
  %v2672 = vadd.f32 %v2484, %v2631
  %v2673 = vadd.f32 %v2488, %v2635
  %v2674 = vadd.f32 %v2490, %v2637
  %v2675 = vadd.f32 %v2494, %v2641
  %v2676 = vadd.f32 %v2496, %v2643
  %v2677 = vadd.f32 %v2500, %v2647
  %v2678 = vadd.f32 %v2502, %v2649
  %v2679 = vadd.f32 %v2506, %v2653
  %v2680 = vadd.f32 %v2508, %v2655
  %v2681 = vadd.f32 %v2512, %v2659
  %v2682 = vadd.f32 %v2514, %v2661
  %v2683 = vadd.f32 %v2518, %v2665
  %v2684 = vadd.f32 %v2520, %v2667
  %v2685 = vld [vmem:[%s12] sm:$0x3]
  %v2687 = vlaneseq
  %v2688 = vshrl.u32 %v2687, 7
  %v2689 = vsub.s32 0, %v2688
  %v2690 = vrot.slane %v2685, %v2689
  %v2691 = vlaneseq
  %v2692 = vshrl.u32 %v2691, 7
  %v2693 = vsub.s32 1, %v2692
  %v2694 = vrot.slane %v2685, %v2693
  %v2697 = vadd.f32 %v2669, %v2690
  %v2698 = vadd.f32 %v2670, %v2694
  %v2699 = vadd.f32 %v2671, %v2690
  %v2700 = vadd.f32 %v2672, %v2694
  %v2701 = vadd.f32 %v2673, %v2690
  %v2702 = vadd.f32 %v2674, %v2694
  %v2703 = vadd.f32 %v2675, %v2690
  %v2704 = vadd.f32 %v2676, %v2694
  %v2705 = vadd.f32 %v2677, %v2690
  %v2706 = vadd.f32 %v2678, %v2694
  %v2707 = vadd.f32 %v2679, %v2690
  %v2708 = vadd.f32 %v2680, %v2694
  %v2709 = vadd.f32 %v2681, %v2690
  %v2710 = vadd.f32 %v2682, %v2694
  %v2711 = vadd.f32 %v2683, %v2690
  %v2712 = vadd.f32 %v2684, %v2694
  %2713 = vst [vmem:[#allocation3] sm:$0xff] %v2697
  %2714 = vst [vmem:[#allocation3 + $0x8] sm:$0xff] %v2698
  %2715 = vst [vmem:[#allocation3 + $0x10] sm:$0xff] %v2699
  %2716 = vst [vmem:[#allocation3 + $0x18] sm:$0xff] %v2700
  %2717 = vst [vmem:[#allocation3 + $0x20] sm:$0xff] %v2701
  %2718 = vst [vmem:[#allocation3 + $0x28] sm:$0xff] %v2702
  %2719 = vst [vmem:[#allocation3 + $0x30] sm:$0xff] %v2703
  %2720 = vst [vmem:[#allocation3 + $0x38] sm:$0xff] %v2704
  %2721 = vst [vmem:[#allocation3 + $0x40] sm:$0xff] %v2705
  %2722 = vst [vmem:[#allocation3 + $0x48] sm:$0xff] %v2706
  %2723 = vst [vmem:[#allocation3 + $0x50] sm:$0xff] %v2707
  %2724 = vst [vmem:[#allocation3 + $0x58] sm:$0xff] %v2708
  %2725 = vst [vmem:[#allocation3 + $0x60] sm:$0xff] %v2709
  %2726 = vst [vmem:[#allocation3 + $0x68] sm:$0xff] %v2710
  %2727 = vst [vmem:[#allocation3 + $0x70] sm:$0xff] %v2711
  %2728 = vst [vmem:[#allocation3 + $0x78] sm:$0xff] %v2712
  %v2729 = vld [vmem:[%s10] sm:$0xff]
  %v2730 = vld [vmem:[%s10 + $0x8] sm:$0xff]
  %v2731 = vld [vmem:[%s10 + $0x10] sm:$0xff]
  %v2732 = vld [vmem:[%s10 + $0x18] sm:$0xff]
  %v2733 = vld [vmem:[%s11] sm:$0xff]
  %v2734 = vld [vmem:[%s11 + $0x8] sm:$0xff]
  %v2735 = vld [vmem:[%s11 + $0x10] sm:$0xff]
  %v2736 = vld [vmem:[%s11 + $0x18] sm:$0xff]
  %v2737 = vld [vmem:[%s2] sm:$0xff]
  %v2738 = vld [vmem:[%s234] sm:$0xff]
  %v2739 = vld [vmem:[#allocation3] sm:$0xff]
  %vm2740 = vcmask 261120
  %v2741 = vsel %vm2740, 0.0, 0
  %2743 = vmatprep.subr.mxu0 0.0
  %2744 = vmatpush1.msra.mxu0 %v2729
  %2745 = vmatprep.subr.mxu0 0.0
  %2746 = vmatpush1.msra.mxu0 %v2730
  %2747 = vmatprep.subr.mxu0 0.0
  %2748 = vmatpush1.msra.mxu0 %v2731
  %2749 = vmatprep.subr.mxu0 0.0
  %2750 = vmatpush1.msra.mxu0 %v2732
  %2751 = vmatprep.subr.mxu0 0.0
  %2752 = vmatpush1.msra.mxu0 0.0
  %2753 = vmatprep.subr.mxu0 0.0
  %2754 = vmatpush1.msra.mxu0 0.0
  %2755 = vmatprep.subr.mxu0 0.0
  %2756 = vmatpush1.msra.mxu0 0.0
  %2757 = vmatprep.subr.mxu0 0.0
  %2758 = vmatpush1.msra.mxu0 0.0
  %2759 = vmatprep.subr.mxu0 0.0
  %2760 = vmatpush1.msra.mxu0 0.0
  %2761 = vmatprep.subr.mxu0 0.0
  %2762 = vmatpush1.msra.mxu0 0.0
  %2763 = vmatprep.subr.mxu0 0.0
  %2764 = vmatpush1.msra.mxu0 0.0
  %2765 = vmatprep.subr.mxu0 0.0
  %2766 = vmatpush1.msra.mxu0 0.0
  %2767 = vmatprep.subr.mxu0 0.0
  %2768 = vmatpush1.msra.mxu0 0.0
  %2769 = vmatprep.subr.mxu0 0.0
  %2770 = vmatpush1.msra.mxu0 0.0
  %2771 = vmatprep.subr.mxu0 0.0
  %2772 = vmatpush1.msra.mxu0 0.0
  %2773 = vmatprep.subr.mxu0 0.0
  %2774 = vmatpush1.msra.mxu0 0.0
  %2775 = vmatprep.subr.mxu0 0.0
  %2776 = vmatpush1.msra.mxu0 0.0
  %2777 = vmatprep.subr.mxu0 0.0
  %2778 = vmatpush1.msra.mxu0 0.0
  %2779 = vmatprep.subr.mxu0 0.0
  %2780 = vmatpush1.msra.mxu0 0.0
  %2781 = vmatprep.subr.mxu0 0.0
  %2782 = vmatpush1.msra.mxu0 0.0
  %2783 = vmatprep.subr.mxu0 0.0
  %2784 = vmatpush1.msra.mxu0 0.0
  %2785 = vmatprep.subr.mxu0 0.0
  %2786 = vmatpush1.msra.mxu0 0.0
  %2787 = vmatprep.subr.mxu0 0.0
  %2788 = vmatpush1.msra.mxu0 0.0
  %2789 = vmatprep.subr.mxu0 0.0
  %2790 = vmatpush1.msra.mxu0 0.0
  %2791 = vmatprep.subr.mxu0 0.0
  %2792 = vmatpush1.msra.mxu0 0.0
  %2793 = vmatprep.subr.mxu0 0.0
  %2794 = vmatpush1.msra.mxu0 0.0
  %2795 = vmatprep.subr.mxu0 0.0
  %2796 = vmatpush1.msra.mxu0 0.0
  %2797 = vmatprep.subr.mxu0 0.0
  %2798 = vmatpush1.msra.mxu0 0.0
  %2799 = vmatprep.subr.mxu0 0.0
  %2800 = vmatpush1.msra.mxu0 0.0
  %2801 = vmatprep.subr.mxu0 0.0
  %2802 = vmatpush1.msra.mxu0 0.0
  %2803 = vmatprep.subr.mxu0 0.0
  %2804 = vmatpush1.msra.mxu0 0.0
  %2805 = vmatprep.subr.mxu0 0.0
  %2806 = vmatpush1.msra.mxu0 0.0
  %2807 = vmatprep.mubr.f32.mxu0 0.0
  %2808 = vmatmul.mubr.f32.gmra.mrb[0].mxu0 %v2741
  %v2809 = vpop.f32.mrb[0].mxu0
  %v2810 = vadd.f32 0.0, %v2809
  %v2811 = vpop.f32.mrb[0].mxu0
  %2812 = vdwg.mxu0
  %v2813 = vadd.f32 %v2739, %v2810
  %v2814 = vxor.u32 %v2813, 2147483648
  %v2815 = vmul.f32 %v2814, 1.442695
  %v2816 = vpow.pop %v2815
  %v2817 = vadd.f32 %v2816, 1.0
  %v2818 = vrcp.pop %v2817
  %v2819 = vmul.f32 1.0, %v2818
  %v2820 = vtanh.pop %v2813
  %v2821 = vmul.f32 %v2819, 0.0
  %2823 = vrot.lane.b32.xlu0 %v2820, 64
  %v2824 = vpop.permute.xlu0 %2823
  %v2826 = vmul.f32 %v2819, %v2824
  %2828 = vrot.lane.b32.xlu0 %v2826, 32
  %v2829 = vpop.permute.xlu0 %2828
  %v2831 = vadd.f32 %v2821, %v2829
  %v2832 = vtanh.pop %v2831
  %2834 = vrot.lane.b32.xlu0 %v2832, 64
  %v2835 = vpop.permute.xlu0 %2834
  %v2837 = vmul.f32 %v2819, %v2835
  %2839 = vset.pattern.permute.xlu0 0
  %2840 = vperm.xlu0 %2839, %v2737
  %v2841 = vpop.permute.xlu0 %2840
  %v2843 = vmul.f32 %v2841, %v2837
  %v2844 = vsub.f32 1.0, %v2737
  %2846 = vset.pattern.permute.xlu0 0
  %2847 = vperm.xlu0 %2846, %v2844
  %v2848 = vpop.permute.xlu0 %2847
  %v2850 = vmul.f32 %v2848, 0.0
  %v2851 = vadd.f32 %v2843, %v2850
  %v2852 = vmul.f32 %v2841, %v2831
  %v2853 = vadd.f32 %v2852, %v2850
  %v2854 = vld [vmem:[#allocation3 + $0x78] sm:$0xff]
  %2855 = vmatprep.subr.mxu0 0.0
  %2856 = vmatpush1.msra.mxu0 %v2733
  %2857 = vmatprep.subr.mxu0 0.0
  %2858 = vmatpush1.msra.mxu0 %v2734
  %2859 = vmatprep.subr.mxu0 0.0
  %2860 = vmatpush1.msra.mxu0 %v2735
  %2861 = vmatprep.subr.mxu0 0.0
  %2862 = vmatpush1.msra.mxu0 %v2736
  %2863 = vmatprep.subr.mxu0 0.0
  %2864 = vmatpush1.msra.mxu0 0.0
  %2865 = vmatprep.subr.mxu0 0.0
  %2866 = vmatpush1.msra.mxu0 0.0
  %2867 = vmatprep.subr.mxu0 0.0
  %2868 = vmatpush1.msra.mxu0 0.0
  %2869 = vmatprep.subr.mxu0 0.0
  %2870 = vmatpush1.msra.mxu0 0.0
  %2871 = vmatprep.subr.mxu0 0.0
  %2872 = vmatpush1.msra.mxu0 0.0
  %2873 = vmatprep.subr.mxu0 0.0
  %2874 = vmatpush1.msra.mxu0 0.0
  %2875 = vmatprep.subr.mxu0 0.0
  %2876 = vmatpush1.msra.mxu0 0.0
  %2877 = vmatprep.subr.mxu0 0.0
  %2878 = vmatpush1.msra.mxu0 0.0
  %2879 = vmatprep.subr.mxu0 0.0
  %2880 = vmatpush1.msra.mxu0 0.0
  %2881 = vmatprep.subr.mxu0 0.0
  %2882 = vmatpush1.msra.mxu0 0.0
  %2883 = vmatprep.subr.mxu0 0.0
  %2884 = vmatpush1.msra.mxu0 0.0
  %2885 = vmatprep.subr.mxu0 0.0
  %2886 = vmatpush1.msra.mxu0 0.0
  %2887 = vmatprep.subr.mxu0 0.0
  %2888 = vmatpush1.msra.mxu0 0.0
  %2889 = vmatprep.subr.mxu0 0.0
  %2890 = vmatpush1.msra.mxu0 0.0
  %2891 = vmatprep.subr.mxu0 0.0
  %2892 = vmatpush1.msra.mxu0 0.0
  %2893 = vmatprep.subr.mxu0 0.0
  %2894 = vmatpush1.msra.mxu0 0.0
  %2895 = vmatprep.subr.mxu0 0.0
  %2896 = vmatpush1.msra.mxu0 0.0
  %2897 = vmatprep.subr.mxu0 0.0
  %2898 = vmatpush1.msra.mxu0 0.0
  %2899 = vmatprep.subr.mxu0 0.0
  %2900 = vmatpush1.msra.mxu0 0.0
  %2901 = vmatprep.subr.mxu0 0.0
  %2902 = vmatpush1.msra.mxu0 0.0
  %2903 = vmatprep.subr.mxu0 0.0
  %2904 = vmatpush1.msra.mxu0 0.0
  %2905 = vmatprep.subr.mxu0 0.0
  %2906 = vmatpush1.msra.mxu0 0.0
  %2907 = vmatprep.subr.mxu0 0.0
  %2908 = vmatpush1.msra.mxu0 0.0
  %2909 = vmatprep.subr.mxu0 0.0
  %2910 = vmatpush1.msra.mxu0 0.0
  %2911 = vmatprep.subr.mxu0 0.0
  %2912 = vmatpush1.msra.mxu0 0.0
  %2913 = vmatprep.subr.mxu0 0.0
  %2914 = vmatpush1.msra.mxu0 0.0
  %2915 = vmatprep.subr.mxu0 0.0
  %2916 = vmatpush1.msra.mxu0 0.0
  %2917 = vmatprep.subr.mxu0 0.0
  %2918 = vmatpush1.msra.mxu0 0.0
  %2919 = vmatprep.mubr.f32.mxu0 0.0
  %2920 = vmatmul.mubr.f32.gmra.mrb[0].mxu0 %v2741
  %v2921 = vpop.f32.mrb[0].mxu0
  %v2922 = vadd.f32 0.0, %v2921
  %v2923 = vpop.f32.mrb[0].mxu0
  %2924 = vdwg.mxu0
  %v2925 = vadd.f32 %v2854, %v2922
  %v2926 = vxor.u32 %v2925, 2147483648
  %v2927 = vmul.f32 %v2926, 1.442695
  %v2928 = vpow.pop %v2927
  %v2929 = vadd.f32 %v2928, 1.0
  %v2930 = vrcp.pop %v2929
  %v2931 = vmul.f32 1.0, %v2930
  %v2932 = vtanh.pop %v2925
  %v2933 = vmul.f32 %v2931, 0.0
  %2935 = vrot.lane.b32.xlu0 %v2932, 64
  %v2936 = vpop.permute.xlu0 %2935
  %v2938 = vmul.f32 %v2931, %v2936
  %2940 = vrot.lane.b32.xlu0 %v2938, 32
  %v2941 = vpop.permute.xlu0 %2940
  %v2943 = vadd.f32 %v2933, %v2941
  %v2944 = vtanh.pop %v2943
  %2946 = vrot.lane.b32.xlu0 %v2944, 64
  %v2947 = vpop.permute.xlu0 %2946
  %v2949 = vmul.f32 %v2931, %v2947
  %2951 = vset.pattern.permute.xlu0 0
  %2952 = vperm.xlu0 %2951, %v2738
  %v2953 = vpop.permute.xlu0 %2952
  %v2955 = vmul.f32 %v2953, %v2949
  %v2956 = vsub.f32 1.0, %v2738
  %2958 = vset.pattern.permute.xlu0 0
  %2959 = vperm.xlu0 %2958, %v2956
  %v2960 = vpop.permute.xlu0 %2959
  %v2962 = vmul.f32 %v2960, 0.0
  %v2963 = vadd.f32 %v2955, %v2962
  %v2964 = vmul.f32 %v2953, %v2943
  %v2965 = vadd.f32 %v2964, %v2962
  %2967 = vrot.lane.b32.xlu0 %v2843, 32
  %v2968 = vpop.permute.xlu0 %2967
  %2970 = vst.msk [vmem:[#allocation6] sm:$0xff] %vm2740, %v2968
  %2972 = vrot.lane.b32.xlu0 %v2955, 32
  %v2973 = vpop.permute.xlu0 %2972
  %2975 = vst.msk [vmem:[#allocation7 + $0x38] sm:$0xff] %vm2740, %v2973
  %v2976 = vld [vmem:[%s477] sm:$0xff]
  %v2977 = vld [vmem:[%s479] sm:$0xff]
  %v2978 = vld [vmem:[#allocation3 + $0x10] sm:$0xff]
  %2980 = vrot.lane.b32.xlu0 %v2851, 32
  %v2981 = vpop.permute.xlu0 %2980
  %v2982 = vsel %vm2740, %v2981, 0
  %2984 = vmatprep.subr.mxu0 0.0
  %2985 = vmatpush1.msra.mxu0 %v2729
  %2986 = vmatprep.subr.mxu0 0.0
  %2987 = vmatpush1.msra.mxu0 %v2730
  %2988 = vmatprep.subr.mxu0 0.0
  %2989 = vmatpush1.msra.mxu0 %v2731
  %2990 = vmatprep.subr.mxu0 0.0
  %2991 = vmatpush1.msra.mxu0 %v2732
  %2992 = vmatprep.subr.mxu0 0.0
  %2993 = vmatpush1.msra.mxu0 0.0
  %2994 = vmatprep.subr.mxu0 0.0
  %2995 = vmatpush1.msra.mxu0 0.0
  %2996 = vmatprep.subr.mxu0 0.0
  %2997 = vmatpush1.msra.mxu0 0.0
  %2998 = vmatprep.subr.mxu0 0.0
  %2999 = vmatpush1.msra.mxu0 0.0
  %3000 = vmatprep.subr.mxu0 0.0
  %3001 = vmatpush1.msra.mxu0 0.0
  %3002 = vmatprep.subr.mxu0 0.0
  %3003 = vmatpush1.msra.mxu0 0.0
  %3004 = vmatprep.subr.mxu0 0.0
  %3005 = vmatpush1.msra.mxu0 0.0
  %3006 = vmatprep.subr.mxu0 0.0
  %3007 = vmatpush1.msra.mxu0 0.0
  %3008 = vmatprep.subr.mxu0 0.0
  %3009 = vmatpush1.msra.mxu0 0.0
  %3010 = vmatprep.subr.mxu0 0.0
  %3011 = vmatpush1.msra.mxu0 0.0
  %3012 = vmatprep.subr.mxu0 0.0
  %3013 = vmatpush1.msra.mxu0 0.0
  %3014 = vmatprep.subr.mxu0 0.0
  %3015 = vmatpush1.msra.mxu0 0.0
  %3016 = vmatprep.subr.mxu0 0.0
  %3017 = vmatpush1.msra.mxu0 0.0
  %3018 = vmatprep.subr.mxu0 0.0
  %3019 = vmatpush1.msra.mxu0 0.0
  %3020 = vmatprep.subr.mxu0 0.0
  %3021 = vmatpush1.msra.mxu0 0.0
  %3022 = vmatprep.subr.mxu0 0.0
  %3023 = vmatpush1.msra.mxu0 0.0
  %3024 = vmatprep.subr.mxu0 0.0
  %3025 = vmatpush1.msra.mxu0 0.0
  %3026 = vmatprep.subr.mxu0 0.0
  %3027 = vmatpush1.msra.mxu0 0.0
  %3028 = vmatprep.subr.mxu0 0.0
  %3029 = vmatpush1.msra.mxu0 0.0
  %3030 = vmatprep.subr.mxu0 0.0
  %3031 = vmatpush1.msra.mxu0 0.0
  %3032 = vmatprep.subr.mxu0 0.0
  %3033 = vmatpush1.msra.mxu0 0.0
  %3034 = vmatprep.subr.mxu0 0.0
  %3035 = vmatpush1.msra.mxu0 0.0
  %3036 = vmatprep.subr.mxu0 0.0
  %3037 = vmatpush1.msra.mxu0 0.0
  %3038 = vmatprep.subr.mxu0 0.0
  %3039 = vmatpush1.msra.mxu0 0.0
  %3040 = vmatprep.subr.mxu0 0.0
  %3041 = vmatpush1.msra.mxu0 0.0
  %3042 = vmatprep.subr.mxu0 0.0
  %3043 = vmatpush1.msra.mxu0 0.0
  %3044 = vmatprep.subr.mxu0 0.0
  %3045 = vmatpush1.msra.mxu0 0.0
  %3046 = vmatprep.subr.mxu0 0.0
  %3047 = vmatpush1.msra.mxu0 0.0
  %3048 = vmatprep.mubr.f32.mxu0 0.0
  %3049 = vmatmul.mubr.f32.gmra.mrb[0].mxu0 %v2982
  %v3050 = vpop.f32.mrb[0].mxu0
  %v3051 = vadd.f32 0.0, %v3050
  %v3052 = vpop.f32.mrb[0].mxu0
  %3053 = vdwg.mxu0
  %v3054 = vadd.f32 %v2978, %v3051
  %v3055 = vxor.u32 %v3054, 2147483648
  %v3056 = vmul.f32 %v3055, 1.442695
  %v3057 = vpow.pop %v3056
  %v3058 = vadd.f32 %v3057, 1.0
  %v3059 = vrcp.pop %v3058
  %v3060 = vmul.f32 1.0, %v3059
  %v3061 = vtanh.pop %v3054
  %v3062 = vmul.f32 %v3060, %v2853
  %3064 = vrot.lane.b32.xlu0 %v3061, 64
  %v3065 = vpop.permute.xlu0 %3064
  %v3067 = vmul.f32 %v3060, %v3065
  %3069 = vrot.lane.b32.xlu0 %v3067, 32
  %v3070 = vpop.permute.xlu0 %3069
  %v3072 = vadd.f32 %v3062, %v3070
  %v3073 = vtanh.pop %v3072
  %3075 = vrot.lane.b32.xlu0 %v3073, 64
  %v3076 = vpop.permute.xlu0 %3075
  %v3078 = vmul.f32 %v3060, %v3076
  %3080 = vset.pattern.permute.xlu0 0
  %3081 = vperm.xlu0 %3080, %v2976
  %v3082 = vpop.permute.xlu0 %3081
  %v3084 = vmul.f32 %v3082, %v3078
  %v3085 = vsub.f32 1.0, %v2976
  %3087 = vset.pattern.permute.xlu0 0
  %3088 = vperm.xlu0 %3087, %v3085
  %v3089 = vpop.permute.xlu0 %3088
  %v3091 = vmul.f32 %v3089, %v2851
  %v3092 = vadd.f32 %v3084, %v3091
  %v3093 = vmul.f32 %v3082, %v3072
  %v3094 = vmul.f32 %v3089, %v2853
  %v3095 = vadd.f32 %v3093, %v3094
  %v3096 = vld [vmem:[#allocation3 + $0x68] sm:$0xff]
  %3098 = vrot.lane.b32.xlu0 %v2963, 32
  %v3099 = vpop.permute.xlu0 %3098
  %v3100 = vsel %vm2740, %v3099, 0
  %3102 = vmatprep.subr.mxu0 0.0
  %3103 = vmatpush1.msra.mxu0 %v2733
  %3104 = vmatprep.subr.mxu0 0.0
  %3105 = vmatpush1.msra.mxu0 %v2734
  %3106 = vmatprep.subr.mxu0 0.0
  %3107 = vmatpush1.msra.mxu0 %v2735
  %3108 = vmatprep.subr.mxu0 0.0
  %3109 = vmatpush1.msra.mxu0 %v2736
  %3110 = vmatprep.subr.mxu0 0.0
  %3111 = vmatpush1.msra.mxu0 0.0
  %3112 = vmatprep.subr.mxu0 0.0
  %3113 = vmatpush1.msra.mxu0 0.0
  %3114 = vmatprep.subr.mxu0 0.0
  %3115 = vmatpush1.msra.mxu0 0.0
  %3116 = vmatprep.subr.mxu0 0.0
  %3117 = vmatpush1.msra.mxu0 0.0
  %3118 = vmatprep.subr.mxu0 0.0
  %3119 = vmatpush1.msra.mxu0 0.0
  %3120 = vmatprep.subr.mxu0 0.0
  %3121 = vmatpush1.msra.mxu0 0.0
  %3122 = vmatprep.subr.mxu0 0.0
  %3123 = vmatpush1.msra.mxu0 0.0
  %3124 = vmatprep.subr.mxu0 0.0
  %3125 = vmatpush1.msra.mxu0 0.0
  %3126 = vmatprep.subr.mxu0 0.0
  %3127 = vmatpush1.msra.mxu0 0.0
  %3128 = vmatprep.subr.mxu0 0.0
  %3129 = vmatpush1.msra.mxu0 0.0
  %3130 = vmatprep.subr.mxu0 0.0
  %3131 = vmatpush1.msra.mxu0 0.0
  %3132 = vmatprep.subr.mxu0 0.0
  %3133 = vmatpush1.msra.mxu0 0.0
  %3134 = vmatprep.subr.mxu0 0.0
  %3135 = vmatpush1.msra.mxu0 0.0
  %3136 = vmatprep.subr.mxu0 0.0
  %3137 = vmatpush1.msra.mxu0 0.0
  %3138 = vmatprep.subr.mxu0 0.0
  %3139 = vmatpush1.msra.mxu0 0.0
  %3140 = vmatprep.subr.mxu0 0.0
  %3141 = vmatpush1.msra.mxu0 0.0
  %3142 = vmatprep.subr.mxu0 0.0
  %3143 = vmatpush1.msra.mxu0 0.0
  %3144 = vmatprep.subr.mxu0 0.0
  %3145 = vmatpush1.msra.mxu0 0.0
  %3146 = vmatprep.subr.mxu0 0.0
  %3147 = vmatpush1.msra.mxu0 0.0
  %3148 = vmatprep.subr.mxu0 0.0
  %3149 = vmatpush1.msra.mxu0 0.0
  %3150 = vmatprep.subr.mxu0 0.0
  %3151 = vmatpush1.msra.mxu0 0.0
  %3152 = vmatprep.subr.mxu0 0.0
  %3153 = vmatpush1.msra.mxu0 0.0
  %3154 = vmatprep.subr.mxu0 0.0
  %3155 = vmatpush1.msra.mxu0 0.0
  %3156 = vmatprep.subr.mxu0 0.0
  %3157 = vmatpush1.msra.mxu0 0.0
  %3158 = vmatprep.subr.mxu0 0.0
  %3159 = vmatpush1.msra.mxu0 0.0
  %3160 = vmatprep.subr.mxu0 0.0
  %3161 = vmatpush1.msra.mxu0 0.0
  %3162 = vmatprep.subr.mxu0 0.0
  %3163 = vmatpush1.msra.mxu0 0.0
  %3164 = vmatprep.subr.mxu0 0.0
  %3165 = vmatpush1.msra.mxu0 0.0
  %3166 = vmatprep.mubr.f32.mxu0 0.0
  %3167 = vmatmul.mubr.f32.gmra.mrb[0].mxu0 %v3100
  %v3168 = vpop.f32.mrb[0].mxu0
  %v3169 = vadd.f32 0.0, %v3168
  %v3170 = vpop.f32.mrb[0].mxu0
  %3171 = vdwg.mxu0
  %v3172 = vadd.f32 %v3096, %v3169
  %v3173 = vxor.u32 %v3172, 2147483648
  %v3174 = vmul.f32 %v3173, 1.442695
  %v3175 = vpow.pop %v3174
  %v3176 = vadd.f32 %v3175, 1.0
  %v3177 = vrcp.pop %v3176
  %v3178 = vmul.f32 1.0, %v3177
  %v3179 = vtanh.pop %v3172
  %v3180 = vmul.f32 %v3178, %v2965
  %3182 = vrot.lane.b32.xlu0 %v3179, 64
  %v3183 = vpop.permute.xlu0 %3182
  %v3185 = vmul.f32 %v3178, %v3183
  %3187 = vrot.lane.b32.xlu0 %v3185, 32
  %v3188 = vpop.permute.xlu0 %3187
  %v3190 = vadd.f32 %v3180, %v3188
  %v3191 = vtanh.pop %v3190
  %3193 = vrot.lane.b32.xlu0 %v3191, 64
  %v3194 = vpop.permute.xlu0 %3193
  %v3196 = vmul.f32 %v3178, %v3194
  %3198 = vset.pattern.permute.xlu0 0
  %3199 = vperm.xlu0 %3198, %v2977
  %v3200 = vpop.permute.xlu0 %3199
  %v3202 = vmul.f32 %v3200, %v3196
  %v3203 = vsub.f32 1.0, %v2977
  %3205 = vset.pattern.permute.xlu0 0
  %3206 = vperm.xlu0 %3205, %v3203
  %v3207 = vpop.permute.xlu0 %3206
  %v3209 = vmul.f32 %v3207, %v2963
  %v3210 = vadd.f32 %v3202, %v3209
  %v3211 = vmul.f32 %v3200, %v3190
  %v3212 = vmul.f32 %v3207, %v2965
  %v3213 = vadd.f32 %v3211, %v3212
  %3215 = vrot.lane.b32.xlu0 %v3084, 32
  %v3216 = vpop.permute.xlu0 %3215
  %3218 = vst.msk [vmem:[#allocation6 + $0x8] sm:$0xff] %vm2740, %v3216
  %3220 = vrot.lane.b32.xlu0 %v3202, 32
  %v3221 = vpop.permute.xlu0 %3220
  %3223 = vst.msk [vmem:[#allocation7 + $0x30] sm:$0xff] %vm2740, %v3221
  %v3224 = vld [vmem:[%s731] sm:$0xff]
  %v3225 = vld [vmem:[%s733] sm:$0xff]
  %v3226 = vld [vmem:[#allocation3 + $0x20] sm:$0xff]
  %3228 = vrot.lane.b32.xlu0 %v3092, 32
  %v3229 = vpop.permute.xlu0 %3228
  %v3230 = vsel %vm2740, %v3229, 0
  %3232 = vmatprep.subr.mxu0 0.0
  %3233 = vmatpush1.msra.mxu0 %v2729
  %3234 = vmatprep.subr.mxu0 0.0
  %3235 = vmatpush1.msra.mxu0 %v2730
  %3236 = vmatprep.subr.mxu0 0.0
  %3237 = vmatpush1.msra.mxu0 %v2731
  %3238 = vmatprep.subr.mxu0 0.0
  %3239 = vmatpush1.msra.mxu0 %v2732
  %3240 = vmatprep.subr.mxu0 0.0
  %3241 = vmatpush1.msra.mxu0 0.0
  %3242 = vmatprep.subr.mxu0 0.0
  %3243 = vmatpush1.msra.mxu0 0.0
  %3244 = vmatprep.subr.mxu0 0.0
  %3245 = vmatpush1.msra.mxu0 0.0
  %3246 = vmatprep.subr.mxu0 0.0
  %3247 = vmatpush1.msra.mxu0 0.0
  %3248 = vmatprep.subr.mxu0 0.0
  %3249 = vmatpush1.msra.mxu0 0.0
  %3250 = vmatprep.subr.mxu0 0.0
  %3251 = vmatpush1.msra.mxu0 0.0
  %3252 = vmatprep.subr.mxu0 0.0
  %3253 = vmatpush1.msra.mxu0 0.0
  %3254 = vmatprep.subr.mxu0 0.0
  %3255 = vmatpush1.msra.mxu0 0.0
  %3256 = vmatprep.subr.mxu0 0.0
  %3257 = vmatpush1.msra.mxu0 0.0
  %3258 = vmatprep.subr.mxu0 0.0
  %3259 = vmatpush1.msra.mxu0 0.0
  %3260 = vmatprep.subr.mxu0 0.0
  %3261 = vmatpush1.msra.mxu0 0.0
  %3262 = vmatprep.subr.mxu0 0.0
  %3263 = vmatpush1.msra.mxu0 0.0
  %3264 = vmatprep.subr.mxu0 0.0
  %3265 = vmatpush1.msra.mxu0 0.0
  %3266 = vmatprep.subr.mxu0 0.0
  %3267 = vmatpush1.msra.mxu0 0.0
  %3268 = vmatprep.subr.mxu0 0.0
  %3269 = vmatpush1.msra.mxu0 0.0
  %3270 = vmatprep.subr.mxu0 0.0
  %3271 = vmatpush1.msra.mxu0 0.0
  %3272 = vmatprep.subr.mxu0 0.0
  %3273 = vmatpush1.msra.mxu0 0.0
  %3274 = vmatprep.subr.mxu0 0.0
  %3275 = vmatpush1.msra.mxu0 0.0
  %3276 = vmatprep.subr.mxu0 0.0
  %3277 = vmatpush1.msra.mxu0 0.0
  %3278 = vmatprep.subr.mxu0 0.0
  %3279 = vmatpush1.msra.mxu0 0.0
  %3280 = vmatprep.subr.mxu0 0.0
  %3281 = vmatpush1.msra.mxu0 0.0
  %3282 = vmatprep.subr.mxu0 0.0
  %3283 = vmatpush1.msra.mxu0 0.0
  %3284 = vmatprep.subr.mxu0 0.0
  %3285 = vmatpush1.msra.mxu0 0.0
  %3286 = vmatprep.subr.mxu0 0.0
  %3287 = vmatpush1.msra.mxu0 0.0
  %3288 = vmatprep.subr.mxu0 0.0
  %3289 = vmatpush1.msra.mxu0 0.0
  %3290 = vmatprep.subr.mxu0 0.0
  %3291 = vmatpush1.msra.mxu0 0.0
  %3292 = vmatprep.subr.mxu0 0.0
  %3293 = vmatpush1.msra.mxu0 0.0
  %3294 = vmatprep.subr.mxu0 0.0
  %3295 = vmatpush1.msra.mxu0 0.0
  %3296 = vmatprep.mubr.f32.mxu0 0.0
  %3297 = vmatmul.mubr.f32.gmra.mrb[0].mxu0 %v3230
  %v3298 = vpop.f32.mrb[0].mxu0
  %v3299 = vadd.f32 0.0, %v3298
  %v3300 = vpop.f32.mrb[0].mxu0
  %3301 = vdwg.mxu0
  %v3302 = vadd.f32 %v3226, %v3299
  %v3303 = vxor.u32 %v3302, 2147483648
  %v3304 = vmul.f32 %v3303, 1.442695
  %v3305 = vpow.pop %v3304
  %v3306 = vadd.f32 %v3305, 1.0
  %v3307 = vrcp.pop %v3306
  %v3308 = vmul.f32 1.0, %v3307
  %v3309 = vtanh.pop %v3302
  %v3310 = vmul.f32 %v3308, %v3095
  %3312 = vrot.lane.b32.xlu0 %v3309, 64
  %v3313 = vpop.permute.xlu0 %3312
  %v3315 = vmul.f32 %v3308, %v3313
  %3317 = vrot.lane.b32.xlu0 %v3315, 32
  %v3318 = vpop.permute.xlu0 %3317
  %v3320 = vadd.f32 %v3310, %v3318
  %v3321 = vtanh.pop %v3320
  %3323 = vrot.lane.b32.xlu0 %v3321, 64
  %v3324 = vpop.permute.xlu0 %3323
  %v3326 = vmul.f32 %v3308, %v3324
  %3328 = vset.pattern.permute.xlu0 0
  %3329 = vperm.xlu0 %3328, %v3224
  %v3330 = vpop.permute.xlu0 %3329
  %v3332 = vmul.f32 %v3330, %v3326
  %v3333 = vsub.f32 1.0, %v3224
  %3335 = vset.pattern.permute.xlu0 0
  %3336 = vperm.xlu0 %3335, %v3333
  %v3337 = vpop.permute.xlu0 %3336
  %v3339 = vmul.f32 %v3337, %v3092
  %v3340 = vadd.f32 %v3332, %v3339
  %v3341 = vmul.f32 %v3330, %v3320
  %v3342 = vmul.f32 %v3337, %v3095
  %v3343 = vadd.f32 %v3341, %v3342
  %v3344 = vld [vmem:[#allocation3 + $0x58] sm:$0xff]
  %3346 = vrot.lane.b32.xlu0 %v3210, 32
  %v3347 = vpop.permute.xlu0 %3346
  %v3348 = vsel %vm2740, %v3347, 0
  %3350 = vmatprep.subr.mxu0 0.0
  %3351 = vmatpush1.msra.mxu0 %v2733
  %3352 = vmatprep.subr.mxu0 0.0
  %3353 = vmatpush1.msra.mxu0 %v2734
  %3354 = vmatprep.subr.mxu0 0.0
  %3355 = vmatpush1.msra.mxu0 %v2735
  %3356 = vmatprep.subr.mxu0 0.0
  %3357 = vmatpush1.msra.mxu0 %v2736
  %3358 = vmatprep.subr.mxu0 0.0
  %3359 = vmatpush1.msra.mxu0 0.0
  %3360 = vmatprep.subr.mxu0 0.0
  %3361 = vmatpush1.msra.mxu0 0.0
  %3362 = vmatprep.subr.mxu0 0.0
  %3363 = vmatpush1.msra.mxu0 0.0
  %3364 = vmatprep.subr.mxu0 0.0
  %3365 = vmatpush1.msra.mxu0 0.0
  %3366 = vmatprep.subr.mxu0 0.0
  %3367 = vmatpush1.msra.mxu0 0.0
  %3368 = vmatprep.subr.mxu0 0.0
  %3369 = vmatpush1.msra.mxu0 0.0
  %3370 = vmatprep.subr.mxu0 0.0
  %3371 = vmatpush1.msra.mxu0 0.0
  %3372 = vmatprep.subr.mxu0 0.0
  %3373 = vmatpush1.msra.mxu0 0.0
  %3374 = vmatprep.subr.mxu0 0.0
  %3375 = vmatpush1.msra.mxu0 0.0
  %3376 = vmatprep.subr.mxu0 0.0
  %3377 = vmatpush1.msra.mxu0 0.0
  %3378 = vmatprep.subr.mxu0 0.0
  %3379 = vmatpush1.msra.mxu0 0.0
  %3380 = vmatprep.subr.mxu0 0.0
  %3381 = vmatpush1.msra.mxu0 0.0
  %3382 = vmatprep.subr.mxu0 0.0
  %3383 = vmatpush1.msra.mxu0 0.0
  %3384 = vmatprep.subr.mxu0 0.0
  %3385 = vmatpush1.msra.mxu0 0.0
  %3386 = vmatprep.subr.mxu0 0.0
  %3387 = vmatpush1.msra.mxu0 0.0
  %3388 = vmatprep.subr.mxu0 0.0
  %3389 = vmatpush1.msra.mxu0 0.0
  %3390 = vmatprep.subr.mxu0 0.0
  %3391 = vmatpush1.msra.mxu0 0.0
  %3392 = vmatprep.subr.mxu0 0.0
  %3393 = vmatpush1.msra.mxu0 0.0
  %3394 = vmatprep.subr.mxu0 0.0
  %3395 = vmatpush1.msra.mxu0 0.0
  %3396 = vmatprep.subr.mxu0 0.0
  %3397 = vmatpush1.msra.mxu0 0.0
  %3398 = vmatprep.subr.mxu0 0.0
  %3399 = vmatpush1.msra.mxu0 0.0
  %3400 = vmatprep.subr.mxu0 0.0
  %3401 = vmatpush1.msra.mxu0 0.0
  %3402 = vmatprep.subr.mxu0 0.0
  %3403 = vmatpush1.msra.mxu0 0.0
  %3404 = vmatprep.subr.mxu0 0.0
  %3405 = vmatpush1.msra.mxu0 0.0
  %3406 = vmatprep.subr.mxu0 0.0
  %3407 = vmatpush1.msra.mxu0 0.0
  %3408 = vmatprep.subr.mxu0 0.0
  %3409 = vmatpush1.msra.mxu0 0.0
  %3410 = vmatprep.subr.mxu0 0.0
  %3411 = vmatpush1.msra.mxu0 0.0
  %3412 = vmatprep.subr.mxu0 0.0
  %3413 = vmatpush1.msra.mxu0 0.0
  %3414 = vmatprep.mubr.f32.mxu0 0.0
  %3415 = vmatmul.mubr.f32.gmra.mrb[0].mxu0 %v3348
  %v3416 = vpop.f32.mrb[0].mxu0
  %v3417 = vadd.f32 0.0, %v3416
  %v3418 = vpop.f32.mrb[0].mxu0
  %3419 = vdwg.mxu0
  %v3420 = vadd.f32 %v3344, %v3417
  %v3421 = vxor.u32 %v3420, 2147483648
  %v3422 = vmul.f32 %v3421, 1.442695
  %v3423 = vpow.pop %v3422
  %v3424 = vadd.f32 %v3423, 1.0
  %v3425 = vrcp.pop %v3424
  %v3426 = vmul.f32 1.0, %v3425
  %v3427 = vtanh.pop %v3420
  %v3428 = vmul.f32 %v3426, %v3213
  %3430 = vrot.lane.b32.xlu0 %v3427, 64
  %v3431 = vpop.permute.xlu0 %3430
  %v3433 = vmul.f32 %v3426, %v3431
  %3435 = vrot.lane.b32.xlu0 %v3433, 32
  %v3436 = vpop.permute.xlu0 %3435
  %v3438 = vadd.f32 %v3428, %v3436
  %v3439 = vtanh.pop %v3438
  %3441 = vrot.lane.b32.xlu0 %v3439, 64
  %v3442 = vpop.permute.xlu0 %3441
  %v3444 = vmul.f32 %v3426, %v3442
  %3446 = vset.pattern.permute.xlu0 0
  %3447 = vperm.xlu0 %3446, %v3225
  %v3448 = vpop.permute.xlu0 %3447
  %v3450 = vmul.f32 %v3448, %v3444
  %v3451 = vsub.f32 1.0, %v3225
  %3453 = vset.pattern.permute.xlu0 0
  %3454 = vperm.xlu0 %3453, %v3451
  %v3455 = vpop.permute.xlu0 %3454
  %v3457 = vmul.f32 %v3455, %v3210
  %v3458 = vadd.f32 %v3450, %v3457
  %v3459 = vmul.f32 %v3448, %v3438
  %v3460 = vmul.f32 %v3455, %v3213
  %v3461 = vadd.f32 %v3459, %v3460
  %3463 = vrot.lane.b32.xlu0 %v3332, 32
  %v3464 = vpop.permute.xlu0 %3463
  %3466 = vst.msk [vmem:[#allocation6 + $0x10] sm:$0xff] %vm2740, %v3464
  %3468 = vrot.lane.b32.xlu0 %v3450, 32
  %v3469 = vpop.permute.xlu0 %3468
  %3471 = vst.msk [vmem:[#allocation7 + $0x28] sm:$0xff] %vm2740, %v3469
  %v3472 = vld [vmem:[%s985] sm:$0xff]
  %v3473 = vld [vmem:[%s987] sm:$0xff]
  %v3474 = vld [vmem:[#allocation3 + $0x30] sm:$0xff]
  %3476 = vrot.lane.b32.xlu0 %v3340, 32
  %v3477 = vpop.permute.xlu0 %3476
  %v3478 = vsel %vm2740, %v3477, 0
  %3480 = vmatprep.subr.mxu0 0.0
  %3481 = vmatpush1.msra.mxu0 %v2729
  %3482 = vmatprep.subr.mxu0 0.0
  %3483 = vmatpush1.msra.mxu0 %v2730
  %3484 = vmatprep.subr.mxu0 0.0
  %3485 = vmatpush1.msra.mxu0 %v2731
  %3486 = vmatprep.subr.mxu0 0.0
  %3487 = vmatpush1.msra.mxu0 %v2732
  %3488 = vmatprep.subr.mxu0 0.0
  %3489 = vmatpush1.msra.mxu0 0.0
  %3490 = vmatprep.subr.mxu0 0.0
  %3491 = vmatpush1.msra.mxu0 0.0
  %3492 = vmatprep.subr.mxu0 0.0
  %3493 = vmatpush1.msra.mxu0 0.0
  %3494 = vmatprep.subr.mxu0 0.0
  %3495 = vmatpush1.msra.mxu0 0.0
  %3496 = vmatprep.subr.mxu0 0.0
  %3497 = vmatpush1.msra.mxu0 0.0
  %3498 = vmatprep.subr.mxu0 0.0
  %3499 = vmatpush1.msra.mxu0 0.0
  %3500 = vmatprep.subr.mxu0 0.0
  %3501 = vmatpush1.msra.mxu0 0.0
  %3502 = vmatprep.subr.mxu0 0.0
  %3503 = vmatpush1.msra.mxu0 0.0
  %3504 = vmatprep.subr.mxu0 0.0
  %3505 = vmatpush1.msra.mxu0 0.0
  %3506 = vmatprep.subr.mxu0 0.0
  %3507 = vmatpush1.msra.mxu0 0.0
  %3508 = vmatprep.subr.mxu0 0.0
  %3509 = vmatpush1.msra.mxu0 0.0
  %3510 = vmatprep.subr.mxu0 0.0
  %3511 = vmatpush1.msra.mxu0 0.0
  %3512 = vmatprep.subr.mxu0 0.0
  %3513 = vmatpush1.msra.mxu0 0.0
  %3514 = vmatprep.subr.mxu0 0.0
  %3515 = vmatpush1.msra.mxu0 0.0
  %3516 = vmatprep.subr.mxu0 0.0
  %3517 = vmatpush1.msra.mxu0 0.0
  %3518 = vmatprep.subr.mxu0 0.0
  %3519 = vmatpush1.msra.mxu0 0.0
  %3520 = vmatprep.subr.mxu0 0.0
  %3521 = vmatpush1.msra.mxu0 0.0
  %3522 = vmatprep.subr.mxu0 0.0
  %3523 = vmatpush1.msra.mxu0 0.0
  %3524 = vmatprep.subr.mxu0 0.0
  %3525 = vmatpush1.msra.mxu0 0.0
  %3526 = vmatprep.subr.mxu0 0.0
  %3527 = vmatpush1.msra.mxu0 0.0
  %3528 = vmatprep.subr.mxu0 0.0
  %3529 = vmatpush1.msra.mxu0 0.0
  %3530 = vmatprep.subr.mxu0 0.0
  %3531 = vmatpush1.msra.mxu0 0.0
  %3532 = vmatprep.subr.mxu0 0.0
  %3533 = vmatpush1.msra.mxu0 0.0
  %3534 = vmatprep.subr.mxu0 0.0
  %3535 = vmatpush1.msra.mxu0 0.0
  %3536 = vmatprep.subr.mxu0 0.0
  %3537 = vmatpush1.msra.mxu0 0.0
  %3538 = vmatprep.subr.mxu0 0.0
  %3539 = vmatpush1.msra.mxu0 0.0
  %3540 = vmatprep.subr.mxu0 0.0
  %3541 = vmatpush1.msra.mxu0 0.0
  %3542 = vmatprep.subr.mxu0 0.0
  %3543 = vmatpush1.msra.mxu0 0.0
  %3544 = vmatprep.mubr.f32.mxu0 0.0
  %3545 = vmatmul.mubr.f32.gmra.mrb[0].mxu0 %v3478
  %v3546 = vpop.f32.mrb[0].mxu0
  %v3547 = vadd.f32 0.0, %v3546
  %v3548 = vpop.f32.mrb[0].mxu0
  %3549 = vdwg.mxu0
  %v3550 = vadd.f32 %v3474, %v3547
  %v3551 = vxor.u32 %v3550, 2147483648
  %v3552 = vmul.f32 %v3551, 1.442695
  %v3553 = vpow.pop %v3552
  %v3554 = vadd.f32 %v3553, 1.0
  %v3555 = vrcp.pop %v3554
  %v3556 = vmul.f32 1.0, %v3555
  %v3557 = vtanh.pop %v3550
  %v3558 = vmul.f32 %v3556, %v3343
  %3560 = vrot.lane.b32.xlu0 %v3557, 64
  %v3561 = vpop.permute.xlu0 %3560
  %v3563 = vmul.f32 %v3556, %v3561
  %3565 = vrot.lane.b32.xlu0 %v3563, 32
  %v3566 = vpop.permute.xlu0 %3565
  %v3568 = vadd.f32 %v3558, %v3566
  %v3569 = vtanh.pop %v3568
  %3571 = vrot.lane.b32.xlu0 %v3569, 64
  %v3572 = vpop.permute.xlu0 %3571
  %v3574 = vmul.f32 %v3556, %v3572
  %3576 = vset.pattern.permute.xlu0 0
  %3577 = vperm.xlu0 %3576, %v3472
  %v3578 = vpop.permute.xlu0 %3577
  %v3580 = vmul.f32 %v3578, %v3574
  %v3581 = vsub.f32 1.0, %v3472
  %3583 = vset.pattern.permute.xlu0 0
  %3584 = vperm.xlu0 %3583, %v3581
  %v3585 = vpop.permute.xlu0 %3584
  %v3587 = vmul.f32 %v3585, %v3340
  %v3588 = vadd.f32 %v3580, %v3587
  %v3589 = vmul.f32 %v3578, %v3568
  %v3590 = vmul.f32 %v3585, %v3343
  %v3591 = vadd.f32 %v3589, %v3590
  %v3592 = vld [vmem:[#allocation3 + $0x48] sm:$0xff]
  %3594 = vrot.lane.b32.xlu0 %v3458, 32
  %v3595 = vpop.permute.xlu0 %3594
  %v3596 = vsel %vm2740, %v3595, 0
  %3598 = vmatprep.subr.mxu0 0.0
  %3599 = vmatpush1.msra.mxu0 %v2733
  %3600 = vmatprep.subr.mxu0 0.0
  %3601 = vmatpush1.msra.mxu0 %v2734
  %3602 = vmatprep.subr.mxu0 0.0
  %3603 = vmatpush1.msra.mxu0 %v2735
  %3604 = vmatprep.subr.mxu0 0.0
  %3605 = vmatpush1.msra.mxu0 %v2736
  %3606 = vmatprep.subr.mxu0 0.0
  %3607 = vmatpush1.msra.mxu0 0.0
  %3608 = vmatprep.subr.mxu0 0.0
  %3609 = vmatpush1.msra.mxu0 0.0
  %3610 = vmatprep.subr.mxu0 0.0
  %3611 = vmatpush1.msra.mxu0 0.0
  %3612 = vmatprep.subr.mxu0 0.0
  %3613 = vmatpush1.msra.mxu0 0.0
  %3614 = vmatprep.subr.mxu0 0.0
  %3615 = vmatpush1.msra.mxu0 0.0
  %3616 = vmatprep.subr.mxu0 0.0
  %3617 = vmatpush1.msra.mxu0 0.0
  %3618 = vmatprep.subr.mxu0 0.0
  %3619 = vmatpush1.msra.mxu0 0.0
  %3620 = vmatprep.subr.mxu0 0.0
  %3621 = vmatpush1.msra.mxu0 0.0
  %3622 = vmatprep.subr.mxu0 0.0
  %3623 = vmatpush1.msra.mxu0 0.0
  %3624 = vmatprep.subr.mxu0 0.0
  %3625 = vmatpush1.msra.mxu0 0.0
  %3626 = vmatprep.subr.mxu0 0.0
  %3627 = vmatpush1.msra.mxu0 0.0
  %3628 = vmatprep.subr.mxu0 0.0
  %3629 = vmatpush1.msra.mxu0 0.0
  %3630 = vmatprep.subr.mxu0 0.0
  %3631 = vmatpush1.msra.mxu0 0.0
  %3632 = vmatprep.subr.mxu0 0.0
  %3633 = vmatpush1.msra.mxu0 0.0
  %3634 = vmatprep.subr.mxu0 0.0
  %3635 = vmatpush1.msra.mxu0 0.0
  %3636 = vmatprep.subr.mxu0 0.0
  %3637 = vmatpush1.msra.mxu0 0.0
  %3638 = vmatprep.subr.mxu0 0.0
  %3639 = vmatpush1.msra.mxu0 0.0
  %3640 = vmatprep.subr.mxu0 0.0
  %3641 = vmatpush1.msra.mxu0 0.0
  %3642 = vmatprep.subr.mxu0 0.0
  %3643 = vmatpush1.msra.mxu0 0.0
  %3644 = vmatprep.subr.mxu0 0.0
  %3645 = vmatpush1.msra.mxu0 0.0
  %3646 = vmatprep.subr.mxu0 0.0
  %3647 = vmatpush1.msra.mxu0 0.0
  %3648 = vmatprep.subr.mxu0 0.0
  %3649 = vmatpush1.msra.mxu0 0.0
  %3650 = vmatprep.subr.mxu0 0.0
  %3651 = vmatpush1.msra.mxu0 0.0
  %3652 = vmatprep.subr.mxu0 0.0
  %3653 = vmatpush1.msra.mxu0 0.0
  %3654 = vmatprep.subr.mxu0 0.0
  %3655 = vmatpush1.msra.mxu0 0.0
  %3656 = vmatprep.subr.mxu0 0.0
  %3657 = vmatpush1.msra.mxu0 0.0
  %3658 = vmatprep.subr.mxu0 0.0
  %3659 = vmatpush1.msra.mxu0 0.0
  %3660 = vmatprep.subr.mxu0 0.0
  %3661 = vmatpush1.msra.mxu0 0.0
  %3662 = vmatprep.mubr.f32.mxu0 0.0
  %3663 = vmatmul.mubr.f32.gmra.mrb[0].mxu0 %v3596
  %v3664 = vpop.f32.mrb[0].mxu0
  %v3665 = vadd.f32 0.0, %v3664
  %v3666 = vpop.f32.mrb[0].mxu0
  %3667 = vdwg.mxu0
  %v3668 = vadd.f32 %v3592, %v3665
  %v3669 = vxor.u32 %v3668, 2147483648
  %v3670 = vmul.f32 %v3669, 1.442695
  %v3671 = vpow.pop %v3670
  %v3672 = vadd.f32 %v3671, 1.0
  %v3673 = vrcp.pop %v3672
  %v3674 = vmul.f32 1.0, %v3673
  %v3675 = vtanh.pop %v3668
  %v3676 = vmul.f32 %v3674, %v3461
  %3678 = vrot.lane.b32.xlu0 %v3675, 64
  %v3679 = vpop.permute.xlu0 %3678
  %v3681 = vmul.f32 %v3674, %v3679
  %3683 = vrot.lane.b32.xlu0 %v3681, 32
  %v3684 = vpop.permute.xlu0 %3683
  %v3686 = vadd.f32 %v3676, %v3684
  %v3687 = vtanh.pop %v3686
  %3689 = vrot.lane.b32.xlu0 %v3687, 64
  %v3690 = vpop.permute.xlu0 %3689
  %v3692 = vmul.f32 %v3674, %v3690
  %3694 = vset.pattern.permute.xlu0 0
  %3695 = vperm.xlu0 %3694, %v3473
  %v3696 = vpop.permute.xlu0 %3695
  %v3698 = vmul.f32 %v3696, %v3692
  %v3699 = vsub.f32 1.0, %v3473
  %3701 = vset.pattern.permute.xlu0 0
  %3702 = vperm.xlu0 %3701, %v3699
  %v3703 = vpop.permute.xlu0 %3702
  %v3705 = vmul.f32 %v3703, %v3458
  %v3706 = vadd.f32 %v3698, %v3705
  %v3707 = vmul.f32 %v3696, %v3686
  %v3708 = vmul.f32 %v3703, %v3461
  %v3709 = vadd.f32 %v3707, %v3708
  %3711 = vrot.lane.b32.xlu0 %v3580, 32
  %v3712 = vpop.permute.xlu0 %3711
  %3714 = vst.msk [vmem:[#allocation6 + $0x18] sm:$0xff] %vm2740, %v3712
  %3716 = vrot.lane.b32.xlu0 %v3698, 32
  %v3717 = vpop.permute.xlu0 %3716
  %3719 = vst.msk [vmem:[#allocation7 + $0x20] sm:$0xff] %vm2740, %v3717
  %v3720 = vld [vmem:[%s987] sm:$0xff]
  %v3721 = vld [vmem:[%s985] sm:$0xff]
  %v3722 = vld [vmem:[#allocation3 + $0x40] sm:$0xff]
  %3724 = vrot.lane.b32.xlu0 %v3588, 32
  %v3725 = vpop.permute.xlu0 %3724
  %v3726 = vsel %vm2740, %v3725, 0
  %3728 = vmatprep.subr.mxu0 0.0
  %3729 = vmatpush1.msra.mxu0 %v2729
  %3730 = vmatprep.subr.mxu0 0.0
  %3731 = vmatpush1.msra.mxu0 %v2730
  %3732 = vmatprep.subr.mxu0 0.0
  %3733 = vmatpush1.msra.mxu0 %v2731
  %3734 = vmatprep.subr.mxu0 0.0
  %3735 = vmatpush1.msra.mxu0 %v2732
  %3736 = vmatprep.subr.mxu0 0.0
  %3737 = vmatpush1.msra.mxu0 0.0
  %3738 = vmatprep.subr.mxu0 0.0
  %3739 = vmatpush1.msra.mxu0 0.0
  %3740 = vmatprep.subr.mxu0 0.0
  %3741 = vmatpush1.msra.mxu0 0.0
  %3742 = vmatprep.subr.mxu0 0.0
  %3743 = vmatpush1.msra.mxu0 0.0
  %3744 = vmatprep.subr.mxu0 0.0
  %3745 = vmatpush1.msra.mxu0 0.0
  %3746 = vmatprep.subr.mxu0 0.0
  %3747 = vmatpush1.msra.mxu0 0.0
  %3748 = vmatprep.subr.mxu0 0.0
  %3749 = vmatpush1.msra.mxu0 0.0
  %3750 = vmatprep.subr.mxu0 0.0
  %3751 = vmatpush1.msra.mxu0 0.0
  %3752 = vmatprep.subr.mxu0 0.0
  %3753 = vmatpush1.msra.mxu0 0.0
  %3754 = vmatprep.subr.mxu0 0.0
  %3755 = vmatpush1.msra.mxu0 0.0
  %3756 = vmatprep.subr.mxu0 0.0
  %3757 = vmatpush1.msra.mxu0 0.0
  %3758 = vmatprep.subr.mxu0 0.0
  %3759 = vmatpush1.msra.mxu0 0.0
  %3760 = vmatprep.subr.mxu0 0.0
  %3761 = vmatpush1.msra.mxu0 0.0
  %3762 = vmatprep.subr.mxu0 0.0
  %3763 = vmatpush1.msra.mxu0 0.0
  %3764 = vmatprep.subr.mxu0 0.0
  %3765 = vmatpush1.msra.mxu0 0.0
  %3766 = vmatprep.subr.mxu0 0.0
  %3767 = vmatpush1.msra.mxu0 0.0
  %3768 = vmatprep.subr.mxu0 0.0
  %3769 = vmatpush1.msra.mxu0 0.0
  %3770 = vmatprep.subr.mxu0 0.0
  %3771 = vmatpush1.msra.mxu0 0.0
  %3772 = vmatprep.subr.mxu0 0.0
  %3773 = vmatpush1.msra.mxu0 0.0
  %3774 = vmatprep.subr.mxu0 0.0
  %3775 = vmatpush1.msra.mxu0 0.0
  %3776 = vmatprep.subr.mxu0 0.0
  %3777 = vmatpush1.msra.mxu0 0.0
  %3778 = vmatprep.subr.mxu0 0.0
  %3779 = vmatpush1.msra.mxu0 0.0
  %3780 = vmatprep.subr.mxu0 0.0
  %3781 = vmatpush1.msra.mxu0 0.0
  %3782 = vmatprep.subr.mxu0 0.0
  %3783 = vmatpush1.msra.mxu0 0.0
  %3784 = vmatprep.subr.mxu0 0.0
  %3785 = vmatpush1.msra.mxu0 0.0
  %3786 = vmatprep.subr.mxu0 0.0
  %3787 = vmatpush1.msra.mxu0 0.0
  %3788 = vmatprep.subr.mxu0 0.0
  %3789 = vmatpush1.msra.mxu0 0.0
  %3790 = vmatprep.subr.mxu0 0.0
  %3791 = vmatpush1.msra.mxu0 0.0
  %3792 = vmatprep.mubr.f32.mxu0 0.0
  %3793 = vmatmul.mubr.f32.gmra.mrb[0].mxu0 %v3726
  %v3794 = vpop.f32.mrb[0].mxu0
  %v3795 = vadd.f32 0.0, %v3794
  %v3796 = vpop.f32.mrb[0].mxu0
  %3797 = vdwg.mxu0
  %v3798 = vadd.f32 %v3722, %v3795
  %v3799 = vxor.u32 %v3798, 2147483648
  %v3800 = vmul.f32 %v3799, 1.442695
  %v3801 = vpow.pop %v3800
  %v3802 = vadd.f32 %v3801, 1.0
  %v3803 = vrcp.pop %v3802
  %v3804 = vmul.f32 1.0, %v3803
  %v3805 = vtanh.pop %v3798
  %v3806 = vmul.f32 %v3804, %v3591
  %3808 = vrot.lane.b32.xlu0 %v3805, 64
  %v3809 = vpop.permute.xlu0 %3808
  %v3811 = vmul.f32 %v3804, %v3809
  %3813 = vrot.lane.b32.xlu0 %v3811, 32
  %v3814 = vpop.permute.xlu0 %3813
  %v3816 = vadd.f32 %v3806, %v3814
  %v3817 = vtanh.pop %v3816
  %3819 = vrot.lane.b32.xlu0 %v3817, 64
  %v3820 = vpop.permute.xlu0 %3819
  %v3822 = vmul.f32 %v3804, %v3820
  %3824 = vset.pattern.permute.xlu0 0
  %3825 = vperm.xlu0 %3824, %v3720
  %v3826 = vpop.permute.xlu0 %3825
  %v3828 = vmul.f32 %v3826, %v3822
  %v3829 = vsub.f32 1.0, %v3720
  %3831 = vset.pattern.permute.xlu0 0
  %3832 = vperm.xlu0 %3831, %v3829
  %v3833 = vpop.permute.xlu0 %3832
  %v3835 = vmul.f32 %v3833, %v3588
  %v3836 = vadd.f32 %v3828, %v3835
  %v3837 = vmul.f32 %v3826, %v3816
  %v3838 = vmul.f32 %v3833, %v3591
  %v3839 = vadd.f32 %v3837, %v3838
  %v3840 = vld [vmem:[#allocation3 + $0x38] sm:$0xff]
  %3842 = vrot.lane.b32.xlu0 %v3706, 32
  %v3843 = vpop.permute.xlu0 %3842
  %v3844 = vsel %vm2740, %v3843, 0
  %3846 = vmatprep.subr.mxu0 0.0
  %3847 = vmatpush1.msra.mxu0 %v2733
  %3848 = vmatprep.subr.mxu0 0.0
  %3849 = vmatpush1.msra.mxu0 %v2734
  %3850 = vmatprep.subr.mxu0 0.0
  %3851 = vmatpush1.msra.mxu0 %v2735
  %3852 = vmatprep.subr.mxu0 0.0
  %3853 = vmatpush1.msra.mxu0 %v2736
  %3854 = vmatprep.subr.mxu0 0.0
  %3855 = vmatpush1.msra.mxu0 0.0
  %3856 = vmatprep.subr.mxu0 0.0
  %3857 = vmatpush1.msra.mxu0 0.0
  %3858 = vmatprep.subr.mxu0 0.0
  %3859 = vmatpush1.msra.mxu0 0.0
  %3860 = vmatprep.subr.mxu0 0.0
  %3861 = vmatpush1.msra.mxu0 0.0
  %3862 = vmatprep.subr.mxu0 0.0
  %3863 = vmatpush1.msra.mxu0 0.0
  %3864 = vmatprep.subr.mxu0 0.0
  %3865 = vmatpush1.msra.mxu0 0.0
  %3866 = vmatprep.subr.mxu0 0.0
  %3867 = vmatpush1.msra.mxu0 0.0
  %3868 = vmatprep.subr.mxu0 0.0
  %3869 = vmatpush1.msra.mxu0 0.0
  %3870 = vmatprep.subr.mxu0 0.0
  %3871 = vmatpush1.msra.mxu0 0.0
  %3872 = vmatprep.subr.mxu0 0.0
  %3873 = vmatpush1.msra.mxu0 0.0
  %3874 = vmatprep.subr.mxu0 0.0
  %3875 = vmatpush1.msra.mxu0 0.0
  %3876 = vmatprep.subr.mxu0 0.0
  %3877 = vmatpush1.msra.mxu0 0.0
  %3878 = vmatprep.subr.mxu0 0.0
  %3879 = vmatpush1.msra.mxu0 0.0
  %3880 = vmatprep.subr.mxu0 0.0
  %3881 = vmatpush1.msra.mxu0 0.0
  %3882 = vmatprep.subr.mxu0 0.0
  %3883 = vmatpush1.msra.mxu0 0.0
  %3884 = vmatprep.subr.mxu0 0.0
  %3885 = vmatpush1.msra.mxu0 0.0
  %3886 = vmatprep.subr.mxu0 0.0
  %3887 = vmatpush1.msra.mxu0 0.0
  %3888 = vmatprep.subr.mxu0 0.0
  %3889 = vmatpush1.msra.mxu0 0.0
  %3890 = vmatprep.subr.mxu0 0.0
  %3891 = vmatpush1.msra.mxu0 0.0
  %3892 = vmatprep.subr.mxu0 0.0
  %3893 = vmatpush1.msra.mxu0 0.0
  %3894 = vmatprep.subr.mxu0 0.0
  %3895 = vmatpush1.msra.mxu0 0.0
  %3896 = vmatprep.subr.mxu0 0.0
  %3897 = vmatpush1.msra.mxu0 0.0
  %3898 = vmatprep.subr.mxu0 0.0
  %3899 = vmatpush1.msra.mxu0 0.0
  %3900 = vmatprep.subr.mxu0 0.0
  %3901 = vmatpush1.msra.mxu0 0.0
  %3902 = vmatprep.subr.mxu0 0.0
  %3903 = vmatpush1.msra.mxu0 0.0
  %3904 = vmatprep.subr.mxu0 0.0
  %3905 = vmatpush1.msra.mxu0 0.0
  %3906 = vmatprep.subr.mxu0 0.0
  %3907 = vmatpush1.msra.mxu0 0.0
  %3908 = vmatprep.subr.mxu0 0.0
  %3909 = vmatpush1.msra.mxu0 0.0
  %3910 = vmatprep.mubr.f32.mxu0 0.0
  %3911 = vmatmul.mubr.f32.gmra.mrb[0].mxu0 %v3844
  %v3912 = vpop.f32.mrb[0].mxu0
  %v3913 = vadd.f32 0.0, %v3912
  %v3914 = vpop.f32.mrb[0].mxu0
  %3915 = vdwg.mxu0
  %v3916 = vadd.f32 %v3840, %v3913
  %v3917 = vxor.u32 %v3916, 2147483648
  %v3918 = vmul.f32 %v3917, 1.442695
  %v3919 = vpow.pop %v3918
  %v3920 = vadd.f32 %v3919, 1.0
  %v3921 = vrcp.pop %v3920
  %v3922 = vmul.f32 1.0, %v3921
  %v3923 = vtanh.pop %v3916
  %v3924 = vmul.f32 %v3922, %v3709
  %3926 = vrot.lane.b32.xlu0 %v3923, 64
  %v3927 = vpop.permute.xlu0 %3926
  %v3929 = vmul.f32 %v3922, %v3927
  %3931 = vrot.lane.b32.xlu0 %v3929, 32
  %v3932 = vpop.permute.xlu0 %3931
  %v3934 = vadd.f32 %v3924, %v3932
  %v3935 = vtanh.pop %v3934
  %3937 = vrot.lane.b32.xlu0 %v3935, 64
  %v3938 = vpop.permute.xlu0 %3937
  %v3940 = vmul.f32 %v3922, %v3938
  %3942 = vset.pattern.permute.xlu0 0
  %3943 = vperm.xlu0 %3942, %v3721
  %v3944 = vpop.permute.xlu0 %3943
  %v3946 = vmul.f32 %v3944, %v3940
  %v3947 = vsub.f32 1.0, %v3721
  %3949 = vset.pattern.permute.xlu0 0
  %3950 = vperm.xlu0 %3949, %v3947
  %v3951 = vpop.permute.xlu0 %3950
  %v3953 = vmul.f32 %v3951, %v3706
  %v3954 = vadd.f32 %v3946, %v3953
  %v3955 = vmul.f32 %v3944, %v3934
  %v3956 = vmul.f32 %v3951, %v3709
  %v3957 = vadd.f32 %v3955, %v3956
  %3959 = vrot.lane.b32.xlu0 %v3828, 32
  %v3960 = vpop.permute.xlu0 %3959
  %3962 = vst.msk [vmem:[#allocation6 + $0x20] sm:$0xff] %vm2740, %v3960
  %3964 = vrot.lane.b32.xlu0 %v3946, 32
  %v3965 = vpop.permute.xlu0 %3964
  %3967 = vst.msk [vmem:[#allocation7 + $0x18] sm:$0xff] %vm2740, %v3965
  %v3968 = vld [vmem:[%s733] sm:$0xff]
  %v3969 = vld [vmem:[%s731] sm:$0xff]
  %v3970 = vld [vmem:[#allocation3 + $0x50] sm:$0xff]
  %3972 = vrot.lane.b32.xlu0 %v3836, 32
  %v3973 = vpop.permute.xlu0 %3972
  %v3974 = vsel %vm2740, %v3973, 0
  %3976 = vmatprep.subr.mxu0 0.0
  %3977 = vmatpush1.msra.mxu0 %v2729
  %3978 = vmatprep.subr.mxu0 0.0
  %3979 = vmatpush1.msra.mxu0 %v2730
  %3980 = vmatprep.subr.mxu0 0.0
  %3981 = vmatpush1.msra.mxu0 %v2731
  %3982 = vmatprep.subr.mxu0 0.0
  %3983 = vmatpush1.msra.mxu0 %v2732
  %3984 = vmatprep.subr.mxu0 0.0
  %3985 = vmatpush1.msra.mxu0 0.0
  %3986 = vmatprep.subr.mxu0 0.0
  %3987 = vmatpush1.msra.mxu0 0.0
  %3988 = vmatprep.subr.mxu0 0.0
  %3989 = vmatpush1.msra.mxu0 0.0
  %3990 = vmatprep.subr.mxu0 0.0
  %3991 = vmatpush1.msra.mxu0 0.0
  %3992 = vmatprep.subr.mxu0 0.0
  %3993 = vmatpush1.msra.mxu0 0.0
  %3994 = vmatprep.subr.mxu0 0.0
  %3995 = vmatpush1.msra.mxu0 0.0
  %3996 = vmatprep.subr.mxu0 0.0
  %3997 = vmatpush1.msra.mxu0 0.0
  %3998 = vmatprep.subr.mxu0 0.0
  %3999 = vmatpush1.msra.mxu0 0.0
  %4000 = vmatprep.subr.mxu0 0.0
  %4001 = vmatpush1.msra.mxu0 0.0
  %4002 = vmatprep.subr.mxu0 0.0
  %4003 = vmatpush1.msra.mxu0 0.0
  %4004 = vmatprep.subr.mxu0 0.0
  %4005 = vmatpush1.msra.mxu0 0.0
  %4006 = vmatprep.subr.mxu0 0.0
  %4007 = vmatpush1.msra.mxu0 0.0
  %4008 = vmatprep.subr.mxu0 0.0
  %4009 = vmatpush1.msra.mxu0 0.0
  %4010 = vmatprep.subr.mxu0 0.0
  %4011 = vmatpush1.msra.mxu0 0.0
  %4012 = vmatprep.subr.mxu0 0.0
  %4013 = vmatpush1.msra.mxu0 0.0
  %4014 = vmatprep.subr.mxu0 0.0
  %4015 = vmatpush1.msra.mxu0 0.0
  %4016 = vmatprep.subr.mxu0 0.0
  %4017 = vmatpush1.msra.mxu0 0.0
  %4018 = vmatprep.subr.mxu0 0.0
  %4019 = vmatpush1.msra.mxu0 0.0
  %4020 = vmatprep.subr.mxu0 0.0
  %4021 = vmatpush1.msra.mxu0 0.0
  %4022 = vmatprep.subr.mxu0 0.0
  %4023 = vmatpush1.msra.mxu0 0.0
  %4024 = vmatprep.subr.mxu0 0.0
  %4025 = vmatpush1.msra.mxu0 0.0
  %4026 = vmatprep.subr.mxu0 0.0
  %4027 = vmatpush1.msra.mxu0 0.0
  %4028 = vmatprep.subr.mxu0 0.0
  %4029 = vmatpush1.msra.mxu0 0.0
  %4030 = vmatprep.subr.mxu0 0.0
  %4031 = vmatpush1.msra.mxu0 0.0
  %4032 = vmatprep.subr.mxu0 0.0
  %4033 = vmatpush1.msra.mxu0 0.0
  %4034 = vmatprep.subr.mxu0 0.0
  %4035 = vmatpush1.msra.mxu0 0.0
  %4036 = vmatprep.subr.mxu0 0.0
  %4037 = vmatpush1.msra.mxu0 0.0
  %4038 = vmatprep.subr.mxu0 0.0
  %4039 = vmatpush1.msra.mxu0 0.0
  %4040 = vmatprep.mubr.f32.mxu0 0.0
  %4041 = vmatmul.mubr.f32.gmra.mrb[0].mxu0 %v3974
  %v4042 = vpop.f32.mrb[0].mxu0
  %v4043 = vadd.f32 0.0, %v4042
  %v4044 = vpop.f32.mrb[0].mxu0
  %4045 = vdwg.mxu0
  %v4046 = vadd.f32 %v3970, %v4043
  %v4047 = vxor.u32 %v4046, 2147483648
  %v4048 = vmul.f32 %v4047, 1.442695
  %v4049 = vpow.pop %v4048
  %v4050 = vadd.f32 %v4049, 1.0
  %v4051 = vrcp.pop %v4050
  %v4052 = vmul.f32 1.0, %v4051
  %v4053 = vtanh.pop %v4046
  %v4054 = vmul.f32 %v4052, %v3839
  %4056 = vrot.lane.b32.xlu0 %v4053, 64
  %v4057 = vpop.permute.xlu0 %4056
  %v4059 = vmul.f32 %v4052, %v4057
  %4061 = vrot.lane.b32.xlu0 %v4059, 32
  %v4062 = vpop.permute.xlu0 %4061
  %v4064 = vadd.f32 %v4054, %v4062
  %v4065 = vtanh.pop %v4064
  %4067 = vrot.lane.b32.xlu0 %v4065, 64
  %v4068 = vpop.permute.xlu0 %4067
  %v4070 = vmul.f32 %v4052, %v4068
  %4072 = vset.pattern.permute.xlu0 0
  %4073 = vperm.xlu0 %4072, %v3968
  %v4074 = vpop.permute.xlu0 %4073
  %v4076 = vmul.f32 %v4074, %v4070
  %v4077 = vsub.f32 1.0, %v3968
  %4079 = vset.pattern.permute.xlu0 0
  %4080 = vperm.xlu0 %4079, %v4077
  %v4081 = vpop.permute.xlu0 %4080
  %v4083 = vmul.f32 %v4081, %v3836
  %v4084 = vadd.f32 %v4076, %v4083
  %v4085 = vmul.f32 %v4074, %v4064
  %v4086 = vmul.f32 %v4081, %v3839
  %v4087 = vadd.f32 %v4085, %v4086
  %v4088 = vld [vmem:[#allocation3 + $0x28] sm:$0xff]
  %4090 = vrot.lane.b32.xlu0 %v3954, 32
  %v4091 = vpop.permute.xlu0 %4090
  %v4092 = vsel %vm2740, %v4091, 0
  %4094 = vmatprep.subr.mxu0 0.0
  %4095 = vmatpush1.msra.mxu0 %v2733
  %4096 = vmatprep.subr.mxu0 0.0
  %4097 = vmatpush1.msra.mxu0 %v2734
  %4098 = vmatprep.subr.mxu0 0.0
  %4099 = vmatpush1.msra.mxu0 %v2735
  %4100 = vmatprep.subr.mxu0 0.0
  %4101 = vmatpush1.msra.mxu0 %v2736
  %4102 = vmatprep.subr.mxu0 0.0
  %4103 = vmatpush1.msra.mxu0 0.0
  %4104 = vmatprep.subr.mxu0 0.0
  %4105 = vmatpush1.msra.mxu0 0.0
  %4106 = vmatprep.subr.mxu0 0.0
  %4107 = vmatpush1.msra.mxu0 0.0
  %4108 = vmatprep.subr.mxu0 0.0
  %4109 = vmatpush1.msra.mxu0 0.0
  %4110 = vmatprep.subr.mxu0 0.0
  %4111 = vmatpush1.msra.mxu0 0.0
  %4112 = vmatprep.subr.mxu0 0.0
  %4113 = vmatpush1.msra.mxu0 0.0
  %4114 = vmatprep.subr.mxu0 0.0
  %4115 = vmatpush1.msra.mxu0 0.0
  %4116 = vmatprep.subr.mxu0 0.0
  %4117 = vmatpush1.msra.mxu0 0.0
  %4118 = vmatprep.subr.mxu0 0.0
  %4119 = vmatpush1.msra.mxu0 0.0
  %4120 = vmatprep.subr.mxu0 0.0
  %4121 = vmatpush1.msra.mxu0 0.0
  %4122 = vmatprep.subr.mxu0 0.0
  %4123 = vmatpush1.msra.mxu0 0.0
  %4124 = vmatprep.subr.mxu0 0.0
  %4125 = vmatpush1.msra.mxu0 0.0
  %4126 = vmatprep.subr.mxu0 0.0
  %4127 = vmatpush1.msra.mxu0 0.0
  %4128 = vmatprep.subr.mxu0 0.0
  %4129 = vmatpush1.msra.mxu0 0.0
  %4130 = vmatprep.subr.mxu0 0.0
  %4131 = vmatpush1.msra.mxu0 0.0
  %4132 = vmatprep.subr.mxu0 0.0
  %4133 = vmatpush1.msra.mxu0 0.0
  %4134 = vmatprep.subr.mxu0 0.0
  %4135 = vmatpush1.msra.mxu0 0.0
  %4136 = vmatprep.subr.mxu0 0.0
  %4137 = vmatpush1.msra.mxu0 0.0
  %4138 = vmatprep.subr.mxu0 0.0
  %4139 = vmatpush1.msra.mxu0 0.0
  %4140 = vmatprep.subr.mxu0 0.0
  %4141 = vmatpush1.msra.mxu0 0.0
  %4142 = vmatprep.subr.mxu0 0.0
  %4143 = vmatpush1.msra.mxu0 0.0
  %4144 = vmatprep.subr.mxu0 0.0
  %4145 = vmatpush1.msra.mxu0 0.0
  %4146 = vmatprep.subr.mxu0 0.0
  %4147 = vmatpush1.msra.mxu0 0.0
  %4148 = vmatprep.subr.mxu0 0.0
  %4149 = vmatpush1.msra.mxu0 0.0
  %4150 = vmatprep.subr.mxu0 0.0
  %4151 = vmatpush1.msra.mxu0 0.0
  %4152 = vmatprep.subr.mxu0 0.0
  %4153 = vmatpush1.msra.mxu0 0.0
  %4154 = vmatprep.subr.mxu0 0.0
  %4155 = vmatpush1.msra.mxu0 0.0
  %4156 = vmatprep.subr.mxu0 0.0
  %4157 = vmatpush1.msra.mxu0 0.0
  %4158 = vmatprep.mubr.f32.mxu0 0.0
  %4159 = vmatmul.mubr.f32.gmra.mrb[0].mxu0 %v4092
  %v4160 = vpop.f32.mrb[0].mxu0
  %v4161 = vadd.f32 0.0, %v4160
  %v4162 = vpop.f32.mrb[0].mxu0
  %4163 = vdwg.mxu0
  %v4164 = vadd.f32 %v4088, %v4161
  %v4165 = vxor.u32 %v4164, 2147483648
  %v4166 = vmul.f32 %v4165, 1.442695
  %v4167 = vpow.pop %v4166
  %v4168 = vadd.f32 %v4167, 1.0
  %v4169 = vrcp.pop %v4168
  %v4170 = vmul.f32 1.0, %v4169
  %v4171 = vtanh.pop %v4164
  %v4172 = vmul.f32 %v4170, %v3957
  %4174 = vrot.lane.b32.xlu0 %v4171, 64
  %v4175 = vpop.permute.xlu0 %4174
  %v4177 = vmul.f32 %v4170, %v4175
  %4179 = vrot.lane.b32.xlu0 %v4177, 32
  %v4180 = vpop.permute.xlu0 %4179
  %v4182 = vadd.f32 %v4172, %v4180
  %v4183 = vtanh.pop %v4182
  %4185 = vrot.lane.b32.xlu0 %v4183, 64
  %v4186 = vpop.permute.xlu0 %4185
  %v4188 = vmul.f32 %v4170, %v4186
  %4190 = vset.pattern.permute.xlu0 0
  %4191 = vperm.xlu0 %4190, %v3969
  %v4192 = vpop.permute.xlu0 %4191
  %v4194 = vmul.f32 %v4192, %v4188
  %v4195 = vsub.f32 1.0, %v3969
  %4197 = vset.pattern.permute.xlu0 0
  %4198 = vperm.xlu0 %4197, %v4195
  %v4199 = vpop.permute.xlu0 %4198
  %v4201 = vmul.f32 %v4199, %v3954
  %v4202 = vadd.f32 %v4194, %v4201
  %v4203 = vmul.f32 %v4192, %v4182
  %v4204 = vmul.f32 %v4199, %v3957
  %v4205 = vadd.f32 %v4203, %v4204
  %4207 = vrot.lane.b32.xlu0 %v4076, 32
  %v4208 = vpop.permute.xlu0 %4207
  %4210 = vst.msk [vmem:[#allocation6 + $0x28] sm:$0xff] %vm2740, %v4208
  %4212 = vrot.lane.b32.xlu0 %v4194, 32
  %v4213 = vpop.permute.xlu0 %4212
  %4215 = vst.msk [vmem:[#allocation7 + $0x10] sm:$0xff] %vm2740, %v4213
  %v4216 = vld [vmem:[%s479] sm:$0xff]
  %v4217 = vld [vmem:[%s477] sm:$0xff]
  %v4218 = vld [vmem:[#allocation3 + $0x60] sm:$0xff]
  %4220 = vrot.lane.b32.xlu0 %v4084, 32
  %v4221 = vpop.permute.xlu0 %4220
  %v4222 = vsel %vm2740, %v4221, 0
  %4224 = vmatprep.subr.mxu0 0.0
  %4225 = vmatpush1.msra.mxu0 %v2729
  %4226 = vmatprep.subr.mxu0 0.0
  %4227 = vmatpush1.msra.mxu0 %v2730
  %4228 = vmatprep.subr.mxu0 0.0
  %4229 = vmatpush1.msra.mxu0 %v2731
  %4230 = vmatprep.subr.mxu0 0.0
  %4231 = vmatpush1.msra.mxu0 %v2732
  %4232 = vmatprep.subr.mxu0 0.0
  %4233 = vmatpush1.msra.mxu0 0.0
  %4234 = vmatprep.subr.mxu0 0.0
  %4235 = vmatpush1.msra.mxu0 0.0
  %4236 = vmatprep.subr.mxu0 0.0
  %4237 = vmatpush1.msra.mxu0 0.0
  %4238 = vmatprep.subr.mxu0 0.0
  %4239 = vmatpush1.msra.mxu0 0.0
  %4240 = vmatprep.subr.mxu0 0.0
  %4241 = vmatpush1.msra.mxu0 0.0
  %4242 = vmatprep.subr.mxu0 0.0
  %4243 = vmatpush1.msra.mxu0 0.0
  %4244 = vmatprep.subr.mxu0 0.0
  %4245 = vmatpush1.msra.mxu0 0.0
  %4246 = vmatprep.subr.mxu0 0.0
  %4247 = vmatpush1.msra.mxu0 0.0
  %4248 = vmatprep.subr.mxu0 0.0
  %4249 = vmatpush1.msra.mxu0 0.0
  %4250 = vmatprep.subr.mxu0 0.0
  %4251 = vmatpush1.msra.mxu0 0.0
  %4252 = vmatprep.subr.mxu0 0.0
  %4253 = vmatpush1.msra.mxu0 0.0
  %4254 = vmatprep.subr.mxu0 0.0
  %4255 = vmatpush1.msra.mxu0 0.0
  %4256 = vmatprep.subr.mxu0 0.0
  %4257 = vmatpush1.msra.mxu0 0.0
  %4258 = vmatprep.subr.mxu0 0.0
  %4259 = vmatpush1.msra.mxu0 0.0
  %4260 = vmatprep.subr.mxu0 0.0
  %4261 = vmatpush1.msra.mxu0 0.0
  %4262 = vmatprep.subr.mxu0 0.0
  %4263 = vmatpush1.msra.mxu0 0.0
  %4264 = vmatprep.subr.mxu0 0.0
  %4265 = vmatpush1.msra.mxu0 0.0
  %4266 = vmatprep.subr.mxu0 0.0
  %4267 = vmatpush1.msra.mxu0 0.0
  %4268 = vmatprep.subr.mxu0 0.0
  %4269 = vmatpush1.msra.mxu0 0.0
  %4270 = vmatprep.subr.mxu0 0.0
  %4271 = vmatpush1.msra.mxu0 0.0
  %4272 = vmatprep.subr.mxu0 0.0
  %4273 = vmatpush1.msra.mxu0 0.0
  %4274 = vmatprep.subr.mxu0 0.0
  %4275 = vmatpush1.msra.mxu0 0.0
  %4276 = vmatprep.subr.mxu0 0.0
  %4277 = vmatpush1.msra.mxu0 0.0
  %4278 = vmatprep.subr.mxu0 0.0
  %4279 = vmatpush1.msra.mxu0 0.0
  %4280 = vmatprep.subr.mxu0 0.0
  %4281 = vmatpush1.msra.mxu0 0.0
  %4282 = vmatprep.subr.mxu0 0.0
  %4283 = vmatpush1.msra.mxu0 0.0
  %4284 = vmatprep.subr.mxu0 0.0
  %4285 = vmatpush1.msra.mxu0 0.0
  %4286 = vmatprep.subr.mxu0 0.0
  %4287 = vmatpush1.msra.mxu0 0.0
  %4288 = vmatprep.mubr.f32.mxu0 0.0
  %4289 = vmatmul.mubr.f32.gmra.mrb[0].mxu0 %v4222
  %v4290 = vpop.f32.mrb[0].mxu0
  %v4291 = vadd.f32 0.0, %v4290
  %v4292 = vpop.f32.mrb[0].mxu0
  %4293 = vdwg.mxu0
  %v4294 = vadd.f32 %v4218, %v4291
  %v4295 = vxor.u32 %v4294, 2147483648
  %v4296 = vmul.f32 %v4295, 1.442695
  %v4297 = vpow.pop %v4296
  %v4298 = vadd.f32 %v4297, 1.0
  %v4299 = vrcp.pop %v4298
  %v4300 = vmul.f32 1.0, %v4299
  %v4301 = vtanh.pop %v4294
  %v4302 = vmul.f32 %v4300, %v4087
  %4304 = vrot.lane.b32.xlu0 %v4301, 64
  %v4305 = vpop.permute.xlu0 %4304
  %v4307 = vmul.f32 %v4300, %v4305
  %4309 = vrot.lane.b32.xlu0 %v4307, 32
  %v4310 = vpop.permute.xlu0 %4309
  %v4312 = vadd.f32 %v4302, %v4310
  %v4313 = vtanh.pop %v4312
  %4315 = vrot.lane.b32.xlu0 %v4313, 64
  %v4316 = vpop.permute.xlu0 %4315
  %v4318 = vmul.f32 %v4300, %v4316
  %4320 = vset.pattern.permute.xlu0 0
  %4321 = vperm.xlu0 %4320, %v4216
  %v4322 = vpop.permute.xlu0 %4321
  %v4324 = vmul.f32 %v4322, %v4318
  %v4325 = vsub.f32 1.0, %v4216
  %4327 = vset.pattern.permute.xlu0 0
  %4328 = vperm.xlu0 %4327, %v4325
  %v4329 = vpop.permute.xlu0 %4328
  %v4331 = vmul.f32 %v4329, %v4084
  %v4332 = vadd.f32 %v4324, %v4331
  %v4333 = vmul.f32 %v4322, %v4312
  %v4334 = vmul.f32 %v4329, %v4087
  %v4335 = vadd.f32 %v4333, %v4334
  %v4336 = vld [vmem:[#allocation3 + $0x18] sm:$0xff]
  %4338 = vrot.lane.b32.xlu0 %v4202, 32
  %v4339 = vpop.permute.xlu0 %4338
  %v4340 = vsel %vm2740, %v4339, 0
  %4342 = vmatprep.subr.mxu0 0.0
  %4343 = vmatpush1.msra.mxu0 %v2733
  %4344 = vmatprep.subr.mxu0 0.0
  %4345 = vmatpush1.msra.mxu0 %v2734
  %4346 = vmatprep.subr.mxu0 0.0
  %4347 = vmatpush1.msra.mxu0 %v2735
  %4348 = vmatprep.subr.mxu0 0.0
  %4349 = vmatpush1.msra.mxu0 %v2736
  %4350 = vmatprep.subr.mxu0 0.0
  %4351 = vmatpush1.msra.mxu0 0.0
  %4352 = vmatprep.subr.mxu0 0.0
  %4353 = vmatpush1.msra.mxu0 0.0
  %4354 = vmatprep.subr.mxu0 0.0
  %4355 = vmatpush1.msra.mxu0 0.0
  %4356 = vmatprep.subr.mxu0 0.0
  %4357 = vmatpush1.msra.mxu0 0.0
  %4358 = vmatprep.subr.mxu0 0.0
  %4359 = vmatpush1.msra.mxu0 0.0
  %4360 = vmatprep.subr.mxu0 0.0
  %4361 = vmatpush1.msra.mxu0 0.0
  %4362 = vmatprep.subr.mxu0 0.0
  %4363 = vmatpush1.msra.mxu0 0.0
  %4364 = vmatprep.subr.mxu0 0.0
  %4365 = vmatpush1.msra.mxu0 0.0
  %4366 = vmatprep.subr.mxu0 0.0
  %4367 = vmatpush1.msra.mxu0 0.0
  %4368 = vmatprep.subr.mxu0 0.0
  %4369 = vmatpush1.msra.mxu0 0.0
  %4370 = vmatprep.subr.mxu0 0.0
  %4371 = vmatpush1.msra.mxu0 0.0
  %4372 = vmatprep.subr.mxu0 0.0
  %4373 = vmatpush1.msra.mxu0 0.0
  %4374 = vmatprep.subr.mxu0 0.0
  %4375 = vmatpush1.msra.mxu0 0.0
  %4376 = vmatprep.subr.mxu0 0.0
  %4377 = vmatpush1.msra.mxu0 0.0
  %4378 = vmatprep.subr.mxu0 0.0
  %4379 = vmatpush1.msra.mxu0 0.0
  %4380 = vmatprep.subr.mxu0 0.0
  %4381 = vmatpush1.msra.mxu0 0.0
  %4382 = vmatprep.subr.mxu0 0.0
  %4383 = vmatpush1.msra.mxu0 0.0
  %4384 = vmatprep.subr.mxu0 0.0
  %4385 = vmatpush1.msra.mxu0 0.0
  %4386 = vmatprep.subr.mxu0 0.0
  %4387 = vmatpush1.msra.mxu0 0.0
  %4388 = vmatprep.subr.mxu0 0.0
  %4389 = vmatpush1.msra.mxu0 0.0
  %4390 = vmatprep.subr.mxu0 0.0
  %4391 = vmatpush1.msra.mxu0 0.0
  %4392 = vmatprep.subr.mxu0 0.0
  %4393 = vmatpush1.msra.mxu0 0.0
  %4394 = vmatprep.subr.mxu0 0.0
  %4395 = vmatpush1.msra.mxu0 0.0
  %4396 = vmatprep.subr.mxu0 0.0
  %4397 = vmatpush1.msra.mxu0 0.0
  %4398 = vmatprep.subr.mxu0 0.0
  %4399 = vmatpush1.msra.mxu0 0.0
  %4400 = vmatprep.subr.mxu0 0.0
  %4401 = vmatpush1.msra.mxu0 0.0
  %4402 = vmatprep.subr.mxu0 0.0
  %4403 = vmatpush1.msra.mxu0 0.0
  %4404 = vmatprep.subr.mxu0 0.0
  %4405 = vmatpush1.msra.mxu0 0.0
  %4406 = vmatprep.mubr.f32.mxu0 0.0
  %4407 = vmatmul.mubr.f32.gmra.mrb[0].mxu0 %v4340
  %v4408 = vpop.f32.mrb[0].mxu0
  %v4409 = vadd.f32 0.0, %v4408
  %v4410 = vpop.f32.mrb[0].mxu0
  %4411 = vdwg.mxu0
  %v4412 = vadd.f32 %v4336, %v4409
  %v4413 = vxor.u32 %v4412, 2147483648
  %v4414 = vmul.f32 %v4413, 1.442695
  %v4415 = vpow.pop %v4414
  %v4416 = vadd.f32 %v4415, 1.0
  %v4417 = vrcp.pop %v4416
  %v4418 = vmul.f32 1.0, %v4417
  %v4419 = vtanh.pop %v4412
  %v4420 = vmul.f32 %v4418, %v4205
  %4422 = vrot.lane.b32.xlu0 %v4419, 64
  %v4423 = vpop.permute.xlu0 %4422
  %v4425 = vmul.f32 %v4418, %v4423
  %4427 = vrot.lane.b32.xlu0 %v4425, 32
  %v4428 = vpop.permute.xlu0 %4427
  %v4430 = vadd.f32 %v4420, %v4428
  %v4431 = vtanh.pop %v4430
  %4433 = vrot.lane.b32.xlu0 %v4431, 64
  %v4434 = vpop.permute.xlu0 %4433
  %v4436 = vmul.f32 %v4418, %v4434
  %4438 = vset.pattern.permute.xlu0 0
  %4439 = vperm.xlu0 %4438, %v4217
  %v4440 = vpop.permute.xlu0 %4439
  %v4442 = vmul.f32 %v4440, %v4436
  %v4443 = vsub.f32 1.0, %v4217
  %4445 = vset.pattern.permute.xlu0 0
  %4446 = vperm.xlu0 %4445, %v4443
  %v4447 = vpop.permute.xlu0 %4446
  %v4449 = vmul.f32 %v4447, %v4202
  %v4450 = vadd.f32 %v4442, %v4449
  %v4451 = vmul.f32 %v4440, %v4430
  %v4452 = vmul.f32 %v4447, %v4205
  %v4453 = vadd.f32 %v4451, %v4452
  %4455 = vrot.lane.b32.xlu0 %v4324, 32
  %v4456 = vpop.permute.xlu0 %4455
  %4458 = vst.msk [vmem:[#allocation6 + $0x30] sm:$0xff] %vm2740, %v4456
  %4460 = vrot.lane.b32.xlu0 %v4442, 32
  %v4461 = vpop.permute.xlu0 %4460
  %4463 = vst.msk [vmem:[#allocation7 + $0x8] sm:$0xff] %vm2740, %v4461
  %v4464 = vld [vmem:[%s234] sm:$0xff]
  %v4465 = vld [vmem:[%s2] sm:$0xff]
  %v4466 = vld [vmem:[#allocation3 + $0x70] sm:$0xff]
  %4468 = vrot.lane.b32.xlu0 %v4332, 32
  %v4469 = vpop.permute.xlu0 %4468
  %v4470 = vsel %vm2740, %v4469, 0
  %4472 = vmatprep.subr.mxu0 0.0
  %4473 = vmatpush1.msra.mxu0 %v2729
  %4474 = vmatprep.subr.mxu0 0.0
  %4475 = vmatpush1.msra.mxu0 %v2730
  %4476 = vmatprep.subr.mxu0 0.0
  %4477 = vmatpush1.msra.mxu0 %v2731
  %4478 = vmatprep.subr.mxu0 0.0
  %4479 = vmatpush1.msra.mxu0 %v2732
  %4480 = vmatprep.subr.mxu0 0.0
  %4481 = vmatpush1.msra.mxu0 0.0
  %4482 = vmatprep.subr.mxu0 0.0
  %4483 = vmatpush1.msra.mxu0 0.0
  %4484 = vmatprep.subr.mxu0 0.0
  %4485 = vmatpush1.msra.mxu0 0.0
  %4486 = vmatprep.subr.mxu0 0.0
  %4487 = vmatpush1.msra.mxu0 0.0
  %4488 = vmatprep.subr.mxu0 0.0
  %4489 = vmatpush1.msra.mxu0 0.0
  %4490 = vmatprep.subr.mxu0 0.0
  %4491 = vmatpush1.msra.mxu0 0.0
  %4492 = vmatprep.subr.mxu0 0.0
  %4493 = vmatpush1.msra.mxu0 0.0
  %4494 = vmatprep.subr.mxu0 0.0
  %4495 = vmatpush1.msra.mxu0 0.0
  %4496 = vmatprep.subr.mxu0 0.0
  %4497 = vmatpush1.msra.mxu0 0.0
  %4498 = vmatprep.subr.mxu0 0.0
  %4499 = vmatpush1.msra.mxu0 0.0
  %4500 = vmatprep.subr.mxu0 0.0
  %4501 = vmatpush1.msra.mxu0 0.0
  %4502 = vmatprep.subr.mxu0 0.0
  %4503 = vmatpush1.msra.mxu0 0.0
  %4504 = vmatprep.subr.mxu0 0.0
  %4505 = vmatpush1.msra.mxu0 0.0
  %4506 = vmatprep.subr.mxu0 0.0
  %4507 = vmatpush1.msra.mxu0 0.0
  %4508 = vmatprep.subr.mxu0 0.0
  %4509 = vmatpush1.msra.mxu0 0.0
  %4510 = vmatprep.subr.mxu0 0.0
  %4511 = vmatpush1.msra.mxu0 0.0
  %4512 = vmatprep.subr.mxu0 0.0
  %4513 = vmatpush1.msra.mxu0 0.0
  %4514 = vmatprep.subr.mxu0 0.0
  %4515 = vmatpush1.msra.mxu0 0.0
  %4516 = vmatprep.subr.mxu0 0.0
  %4517 = vmatpush1.msra.mxu0 0.0
  %4518 = vmatprep.subr.mxu0 0.0
  %4519 = vmatpush1.msra.mxu0 0.0
  %4520 = vmatprep.subr.mxu0 0.0
  %4521 = vmatpush1.msra.mxu0 0.0
  %4522 = vmatprep.subr.mxu0 0.0
  %4523 = vmatpush1.msra.mxu0 0.0
  %4524 = vmatprep.subr.mxu0 0.0
  %4525 = vmatpush1.msra.mxu0 0.0
  %4526 = vmatprep.subr.mxu0 0.0
  %4527 = vmatpush1.msra.mxu0 0.0
  %4528 = vmatprep.subr.mxu0 0.0
  %4529 = vmatpush1.msra.mxu0 0.0
  %4530 = vmatprep.subr.mxu0 0.0
  %4531 = vmatpush1.msra.mxu0 0.0
  %4532 = vmatprep.subr.mxu0 0.0
  %4533 = vmatpush1.msra.mxu0 0.0
  %4534 = vmatprep.subr.mxu0 0.0
  %4535 = vmatpush1.msra.mxu0 0.0
  %4536 = vmatprep.mubr.f32.mxu0 0.0
  %4537 = vmatmul.mubr.f32.gmra.mrb[0].mxu0 %v4470
  %v4538 = vpop.f32.mrb[0].mxu0
  %v4539 = vadd.f32 0.0, %v4538
  %v4540 = vpop.f32.mrb[0].mxu0
  %4541 = vdwg.mxu0
  %v4542 = vadd.f32 %v4466, %v4539
  %v4543 = vxor.u32 %v4542, 2147483648
  %v4544 = vmul.f32 %v4543, 1.442695
  %v4545 = vpow.pop %v4544
  %v4546 = vadd.f32 %v4545, 1.0
  %v4547 = vrcp.pop %v4546
  %v4548 = vmul.f32 1.0, %v4547
  %v4549 = vtanh.pop %v4542
  %v4550 = vmul.f32 %v4548, %v4335
  %4552 = vrot.lane.b32.xlu0 %v4549, 64
  %v4553 = vpop.permute.xlu0 %4552
  %v4555 = vmul.f32 %v4548, %v4553
  %4557 = vrot.lane.b32.xlu0 %v4555, 32
  %v4558 = vpop.permute.xlu0 %4557
  %v4560 = vadd.f32 %v4550, %v4558
  %v4561 = vtanh.pop %v4560
  %4563 = vrot.lane.b32.xlu0 %v4561, 64
  %v4564 = vpop.permute.xlu0 %4563
  %v4566 = vmul.f32 %v4548, %v4564
  %4568 = vset.pattern.permute.xlu0 0
  %4569 = vperm.xlu0 %4568, %v4464
  %v4570 = vpop.permute.xlu0 %4569
  %v4572 = vmul.f32 %v4570, %v4566
  %v4573 = vld [vmem:[#allocation3 + $0x8] sm:$0xff]
  %4575 = vrot.lane.b32.xlu0 %v4450, 32
  %v4576 = vpop.permute.xlu0 %4575
  %v4577 = vsel %vm2740, %v4576, 0
  %4579 = vmatprep.subr.mxu0 0.0
  %4580 = vmatpush1.msra.mxu0 %v2733
  %4581 = vmatprep.subr.mxu0 0.0
  %4582 = vmatpush1.msra.mxu0 %v2734
  %4583 = vmatprep.subr.mxu0 0.0
  %4584 = vmatpush1.msra.mxu0 %v2735
  %4585 = vmatprep.subr.mxu0 0.0
  %4586 = vmatpush1.msra.mxu0 %v2736
  %4587 = vmatprep.subr.mxu0 0.0
  %4588 = vmatpush1.msra.mxu0 0.0
  %4589 = vmatprep.subr.mxu0 0.0
  %4590 = vmatpush1.msra.mxu0 0.0
  %4591 = vmatprep.subr.mxu0 0.0
  %4592 = vmatpush1.msra.mxu0 0.0
  %4593 = vmatprep.subr.mxu0 0.0
  %4594 = vmatpush1.msra.mxu0 0.0
  %4595 = vmatprep.subr.mxu0 0.0
  %4596 = vmatpush1.msra.mxu0 0.0
  %4597 = vmatprep.subr.mxu0 0.0
  %4598 = vmatpush1.msra.mxu0 0.0
  %4599 = vmatprep.subr.mxu0 0.0
  %4600 = vmatpush1.msra.mxu0 0.0
  %4601 = vmatprep.subr.mxu0 0.0
  %4602 = vmatpush1.msra.mxu0 0.0
  %4603 = vmatprep.subr.mxu0 0.0
  %4604 = vmatpush1.msra.mxu0 0.0
  %4605 = vmatprep.subr.mxu0 0.0
  %4606 = vmatpush1.msra.mxu0 0.0
  %4607 = vmatprep.subr.mxu0 0.0
  %4608 = vmatpush1.msra.mxu0 0.0
  %4609 = vmatprep.subr.mxu0 0.0
  %4610 = vmatpush1.msra.mxu0 0.0
  %4611 = vmatprep.subr.mxu0 0.0
  %4612 = vmatpush1.msra.mxu0 0.0
  %4613 = vmatprep.subr.mxu0 0.0
  %4614 = vmatpush1.msra.mxu0 0.0
  %4615 = vmatprep.subr.mxu0 0.0
  %4616 = vmatpush1.msra.mxu0 0.0
  %4617 = vmatprep.subr.mxu0 0.0
  %4618 = vmatpush1.msra.mxu0 0.0
  %4619 = vmatprep.subr.mxu0 0.0
  %4620 = vmatpush1.msra.mxu0 0.0
  %4621 = vmatprep.subr.mxu0 0.0
  %4622 = vmatpush1.msra.mxu0 0.0
  %4623 = vmatprep.subr.mxu0 0.0
  %4624 = vmatpush1.msra.mxu0 0.0
  %4625 = vmatprep.subr.mxu0 0.0
  %4626 = vmatpush1.msra.mxu0 0.0
  %4627 = vmatprep.subr.mxu0 0.0
  %4628 = vmatpush1.msra.mxu0 0.0
  %4629 = vmatprep.subr.mxu0 0.0
  %4630 = vmatpush1.msra.mxu0 0.0
  %4631 = vmatprep.subr.mxu0 0.0
  %4632 = vmatpush1.msra.mxu0 0.0
  %4633 = vmatprep.subr.mxu0 0.0
  %4634 = vmatpush1.msra.mxu0 0.0
  %4635 = vmatprep.subr.mxu0 0.0
  %4636 = vmatpush1.msra.mxu0 0.0
  %4637 = vmatprep.subr.mxu0 0.0
  %4638 = vmatpush1.msra.mxu0 0.0
  %4639 = vmatprep.subr.mxu0 0.0
  %4640 = vmatpush1.msra.mxu0 0.0
  %4641 = vmatprep.subr.mxu0 0.0
  %4642 = vmatpush1.msra.mxu0 0.0
  %4643 = vmatprep.mubr.f32.mxu0 0.0
  %4644 = vmatmul.mubr.f32.gmra.mrb[0].mxu0 %v4577
  %v4645 = vpop.f32.mrb[0].mxu0
  %v4646 = vadd.f32 0.0, %v4645
  %v4647 = vpop.f32.mrb[0].mxu0
  %4648 = vdwg.mxu0
  %v4649 = vadd.f32 %v4573, %v4646
  %v4650 = vxor.u32 %v4649, 2147483648
  %v4651 = vmul.f32 %v4650, 1.442695
  %v4652 = vpow.pop %v4651
  %v4653 = vadd.f32 %v4652, 1.0
  %v4654 = vrcp.pop %v4653
  %v4655 = vmul.f32 1.0, %v4654
  %v4656 = vtanh.pop %v4649
  %v4657 = vmul.f32 %v4655, %v4453
  %4659 = vrot.lane.b32.xlu0 %v4656, 64
  %v4660 = vpop.permute.xlu0 %4659
  %v4662 = vmul.f32 %v4655, %v4660
  %4664 = vrot.lane.b32.xlu0 %v4662, 32
  %v4665 = vpop.permute.xlu0 %4664
  %v4667 = vadd.f32 %v4657, %v4665
  %v4668 = vtanh.pop %v4667
  %4670 = vrot.lane.b32.xlu0 %v4668, 64
  %v4671 = vpop.permute.xlu0 %4670
  %v4673 = vmul.f32 %v4655, %v4671
  %4675 = vset.pattern.permute.xlu0 0
  %4676 = vperm.xlu0 %4675, %v4465
  %v4677 = vpop.permute.xlu0 %4676
  %v4679 = vmul.f32 %v4677, %v4673
  %4681 = vrot.lane.b32.xlu0 %v4572, 32
  %v4682 = vpop.permute.xlu0 %4681
  %4684 = vst.msk [vmem:[#allocation6 + $0x38] sm:$0xff] %vm2740, %v4682
  %4686 = vrot.lane.b32.xlu0 %v4679, 32
  %v4687 = vpop.permute.xlu0 %4686
  %4689 = vst.msk [vmem:[#allocation7] sm:$0xff] %vm2740, %v4687
  %v4690 = vld [vmem:[#allocation6] sm:$0xff]
  %v4691 = vld [vmem:[#allocation6 + $0x8] sm:$0xff]
  %v4692 = vld [vmem:[#allocation6 + $0x10] sm:$0xff]
  %v4693 = vld [vmem:[#allocation6 + $0x18] sm:$0xff]
  %v4694 = vld [vmem:[#allocation6 + $0x20] sm:$0xff]
  %v4695 = vld [vmem:[#allocation6 + $0x28] sm:$0xff]
  %v4696 = vld [vmem:[#allocation6 + $0x30] sm:$0xff]
  %v4697 = vld [vmem:[#allocation6 + $0x38] sm:$0xff]
  %v4698 = vld [vmem:[%s13] sm:$0xff]
  %v4699 = vld [vmem:[%s13 + $0x8] sm:$0xff]
  %v4700 = vld [vmem:[%s13 + $0x10] sm:$0xff]
  %v4701 = vld [vmem:[%s13 + $0x18] sm:$0xff]
  %v4702 = vld [vmem:[#allocation7] sm:$0xff]
  %v4703 = vld [vmem:[#allocation7 + $0x8] sm:$0xff]
  %v4704 = vld [vmem:[#allocation7 + $0x10] sm:$0xff]
  %v4705 = vld [vmem:[#allocation7 + $0x18] sm:$0xff]
  %v4706 = vld [vmem:[#allocation7 + $0x20] sm:$0xff]
  %v4707 = vld [vmem:[#allocation7 + $0x28] sm:$0xff]
  %v4708 = vld [vmem:[#allocation7 + $0x30] sm:$0xff]
  %v4709 = vld [vmem:[#allocation7 + $0x38] sm:$0xff]
  %v4710 = vld [vmem:[%s14] sm:$0xff]
  %v4711 = vld [vmem:[%s14 + $0x8] sm:$0xff]
  %v4712 = vld [vmem:[%s14 + $0x10] sm:$0xff]
  %v4713 = vld [vmem:[%s14 + $0x18] sm:$0xff]
  %v4715 = vsel %vm2740, %v4702, 0
  %v4718 = vsel %vm2740, %v4703, 0
  %v4721 = vsel %vm2740, %v4704, 0
  %v4724 = vsel %vm2740, %v4705, 0
  %v4727 = vsel %vm2740, %v4706, 0
  %v4730 = vsel %vm2740, %v4707, 0
  %v4733 = vsel %vm2740, %v4708, 0
  %v4736 = vsel %vm2740, %v4709, 0
  %4738 = vmatprep.subr.mxu0 0.0
  %4739 = vmatpush1.msra.mxu0 %v4710
  %4740 = vmatprep.subr.mxu0 0.0
  %4741 = vmatpush1.msra.mxu0 %v4711
  %4742 = vmatprep.subr.mxu0 0.0
  %4743 = vmatpush1.msra.mxu0 %v4712
  %4744 = vmatprep.subr.mxu0 0.0
  %4745 = vmatpush1.msra.mxu0 %v4713
  %4746 = vmatprep.subr.mxu0 0.0
  %4747 = vmatpush1.msra.mxu0 0.0
  %4748 = vmatprep.subr.mxu0 0.0
  %4749 = vmatpush1.msra.mxu0 0.0
  %4750 = vmatprep.subr.mxu0 0.0
  %4751 = vmatpush1.msra.mxu0 0.0
  %4752 = vmatprep.subr.mxu0 0.0
  %4753 = vmatpush1.msra.mxu0 0.0
  %4754 = vmatprep.subr.mxu0 0.0
  %4755 = vmatpush1.msra.mxu0 0.0
  %4756 = vmatprep.subr.mxu0 0.0
  %4757 = vmatpush1.msra.mxu0 0.0
  %4758 = vmatprep.subr.mxu0 0.0
  %4759 = vmatpush1.msra.mxu0 0.0
  %4760 = vmatprep.subr.mxu0 0.0
  %4761 = vmatpush1.msra.mxu0 0.0
  %4762 = vmatprep.subr.mxu0 0.0
  %4763 = vmatpush1.msra.mxu0 0.0
  %4764 = vmatprep.subr.mxu0 0.0
  %4765 = vmatpush1.msra.mxu0 0.0
  %4766 = vmatprep.subr.mxu0 0.0
  %4767 = vmatpush1.msra.mxu0 0.0
  %4768 = vmatprep.subr.mxu0 0.0
  %4769 = vmatpush1.msra.mxu0 0.0
  %4770 = vmatprep.subr.mxu0 0.0
  %4771 = vmatpush1.msra.mxu0 0.0
  %4772 = vmatprep.subr.mxu0 0.0
  %4773 = vmatpush1.msra.mxu0 0.0
  %4774 = vmatprep.subr.mxu0 0.0
  %4775 = vmatpush1.msra.mxu0 0.0
  %4776 = vmatprep.subr.mxu0 0.0
  %4777 = vmatpush1.msra.mxu0 0.0
  %4778 = vmatprep.subr.mxu0 0.0
  %4779 = vmatpush1.msra.mxu0 0.0
  %4780 = vmatprep.subr.mxu0 0.0
  %4781 = vmatpush1.msra.mxu0 0.0
  %4782 = vmatprep.subr.mxu0 0.0
  %4783 = vmatpush1.msra.mxu0 0.0
  %4784 = vmatprep.subr.mxu0 0.0
  %4785 = vmatpush1.msra.mxu0 0.0
  %4786 = vmatprep.subr.mxu0 0.0
  %4787 = vmatpush1.msra.mxu0 0.0
  %4788 = vmatprep.subr.mxu0 0.0
  %4789 = vmatpush1.msra.mxu0 0.0
  %4790 = vmatprep.subr.mxu0 0.0
  %4791 = vmatpush1.msra.mxu0 0.0
  %4792 = vmatprep.subr.mxu0 0.0
  %4793 = vmatpush1.msra.mxu0 0.0
  %4794 = vmatprep.subr.mxu0 0.0
  %4795 = vmatpush1.msra.mxu0 0.0
  %4796 = vmatprep.subr.mxu0 0.0
  %4797 = vmatpush1.msra.mxu0 0.0
  %4798 = vmatprep.subr.mxu0 0.0
  %4799 = vmatpush1.msra.mxu0 0.0
  %4800 = vmatprep.subr.mxu0 0.0
  %4801 = vmatpush1.msra.mxu0 0.0
  %4802 = vmatprep.mubr.f32.mxu0 0.0
  %4803 = vmatmul.mubr.f32.gmra.mrb[0].mxu0 %v4715
  %v4804 = vpop.f32.mrb[0].mxu0
  %v4805 = vadd.f32 0.0, %v4804
  %v4806 = vpop.f32.mrb[0].mxu0
  %4807 = vmatprep.mubr.f32.mxu0 0.0
  %4808 = vmatmul.mubr.f32.gmra.mrb[0].mxu0 %v4718
  %v4809 = vpop.f32.mrb[0].mxu0
  %v4810 = vadd.f32 0.0, %v4809
  %v4811 = vpop.f32.mrb[0].mxu0
  %4812 = vmatprep.mubr.f32.mxu0 0.0
  %4813 = vmatmul.mubr.f32.gmra.mrb[0].mxu0 %v4721
  %v4814 = vpop.f32.mrb[0].mxu0
  %v4815 = vadd.f32 0.0, %v4814
  %v4816 = vpop.f32.mrb[0].mxu0
  %4817 = vmatprep.mubr.f32.mxu0 0.0
  %4818 = vmatmul.mubr.f32.gmra.mrb[0].mxu0 %v4724
  %v4819 = vpop.f32.mrb[0].mxu0
  %v4820 = vadd.f32 0.0, %v4819
  %v4821 = vpop.f32.mrb[0].mxu0
  %4822 = vmatprep.mubr.f32.mxu0 0.0
  %4823 = vmatmul.mubr.f32.gmra.mrb[0].mxu0 %v4727
  %v4824 = vpop.f32.mrb[0].mxu0
  %v4825 = vadd.f32 0.0, %v4824
  %v4826 = vpop.f32.mrb[0].mxu0
  %4827 = vmatprep.mubr.f32.mxu0 0.0
  %4828 = vmatmul.mubr.f32.gmra.mrb[0].mxu0 %v4730
  %v4829 = vpop.f32.mrb[0].mxu0
  %v4830 = vadd.f32 0.0, %v4829
  %v4831 = vpop.f32.mrb[0].mxu0
  %4832 = vmatprep.mubr.f32.mxu0 0.0
  %4833 = vmatmul.mubr.f32.gmra.mrb[0].mxu0 %v4733
  %v4834 = vpop.f32.mrb[0].mxu0
  %v4835 = vadd.f32 0.0, %v4834
  %v4836 = vpop.f32.mrb[0].mxu0
  %4837 = vmatprep.mubr.f32.mxu0 0.0
  %4838 = vmatmul.mubr.f32.gmra.mrb[0].mxu0 %v4736
  %v4839 = vpop.f32.mrb[0].mxu0
  %v4840 = vadd.f32 0.0, %v4839
  %v4841 = vpop.f32.mrb[0].mxu0
  %4842 = vdwg.mxu0
  %v4844 = vsel %vm2740, %v4690, 0
  %v4847 = vsel %vm2740, %v4691, 0
  %v4850 = vsel %vm2740, %v4692, 0
  %v4853 = vsel %vm2740, %v4693, 0
  %v4856 = vsel %vm2740, %v4694, 0
  %v4859 = vsel %vm2740, %v4695, 0
  %v4862 = vsel %vm2740, %v4696, 0
  %v4865 = vsel %vm2740, %v4697, 0
  %4867 = vmatprep.subr.mxu0 0.0
  %4868 = vmatpush1.msra.mxu0 %v4698
  %4869 = vmatprep.subr.mxu0 0.0
  %4870 = vmatpush1.msra.mxu0 %v4699
  %4871 = vmatprep.subr.mxu0 0.0
  %4872 = vmatpush1.msra.mxu0 %v4700
  %4873 = vmatprep.subr.mxu0 0.0
  %4874 = vmatpush1.msra.mxu0 %v4701
  %4875 = vmatprep.subr.mxu0 0.0
  %4876 = vmatpush1.msra.mxu0 0.0
  %4877 = vmatprep.subr.mxu0 0.0
  %4878 = vmatpush1.msra.mxu0 0.0
  %4879 = vmatprep.subr.mxu0 0.0
  %4880 = vmatpush1.msra.mxu0 0.0
  %4881 = vmatprep.subr.mxu0 0.0
  %4882 = vmatpush1.msra.mxu0 0.0
  %4883 = vmatprep.subr.mxu0 0.0
  %4884 = vmatpush1.msra.mxu0 0.0
  %4885 = vmatprep.subr.mxu0 0.0
  %4886 = vmatpush1.msra.mxu0 0.0
  %4887 = vmatprep.subr.mxu0 0.0
  %4888 = vmatpush1.msra.mxu0 0.0
  %4889 = vmatprep.subr.mxu0 0.0
  %4890 = vmatpush1.msra.mxu0 0.0
  %4891 = vmatprep.subr.mxu0 0.0
  %4892 = vmatpush1.msra.mxu0 0.0
  %4893 = vmatprep.subr.mxu0 0.0
  %4894 = vmatpush1.msra.mxu0 0.0
  %4895 = vmatprep.subr.mxu0 0.0
  %4896 = vmatpush1.msra.mxu0 0.0
  %4897 = vmatprep.subr.mxu0 0.0
  %4898 = vmatpush1.msra.mxu0 0.0
  %4899 = vmatprep.subr.mxu0 0.0
  %4900 = vmatpush1.msra.mxu0 0.0
  %4901 = vmatprep.subr.mxu0 0.0
  %4902 = vmatpush1.msra.mxu0 0.0
  %4903 = vmatprep.subr.mxu0 0.0
  %4904 = vmatpush1.msra.mxu0 0.0
  %4905 = vmatprep.subr.mxu0 0.0
  %4906 = vmatpush1.msra.mxu0 0.0
  %4907 = vmatprep.subr.mxu0 0.0
  %4908 = vmatpush1.msra.mxu0 0.0
  %4909 = vmatprep.subr.mxu0 0.0
  %4910 = vmatpush1.msra.mxu0 0.0
  %4911 = vmatprep.subr.mxu0 0.0
  %4912 = vmatpush1.msra.mxu0 0.0
  %4913 = vmatprep.subr.mxu0 0.0
  %4914 = vmatpush1.msra.mxu0 0.0
  %4915 = vmatprep.subr.mxu0 0.0
  %4916 = vmatpush1.msra.mxu0 0.0
  %4917 = vmatprep.subr.mxu0 0.0
  %4918 = vmatpush1.msra.mxu0 0.0
  %4919 = vmatprep.subr.mxu0 0.0
  %4920 = vmatpush1.msra.mxu0 0.0
  %4921 = vmatprep.subr.mxu0 0.0
  %4922 = vmatpush1.msra.mxu0 0.0
  %4923 = vmatprep.subr.mxu0 0.0
  %4924 = vmatpush1.msra.mxu0 0.0
  %4925 = vmatprep.subr.mxu0 0.0
  %4926 = vmatpush1.msra.mxu0 0.0
  %4927 = vmatprep.subr.mxu0 0.0
  %4928 = vmatpush1.msra.mxu0 0.0
  %4929 = vmatprep.subr.mxu0 0.0
  %4930 = vmatpush1.msra.mxu0 0.0
  %4931 = vmatprep.mubr.f32.mxu0 0.0
  %4932 = vmatmul.mubr.f32.gmra.mrb[0].mxu0 %v4844
  %v4933 = vpop.f32.mrb[0].mxu0
  %v4934 = vadd.f32 %v4805, %v4933
  %v4935 = vpop.f32.mrb[0].mxu0
  %4936 = vmatprep.mubr.f32.mxu0 0.0
  %4937 = vmatmul.mubr.f32.gmra.mrb[0].mxu0 %v4847
  %v4938 = vpop.f32.mrb[0].mxu0
  %v4939 = vadd.f32 %v4810, %v4938
  %v4940 = vpop.f32.mrb[0].mxu0
  %4941 = vmatprep.mubr.f32.mxu0 0.0
  %4942 = vmatmul.mubr.f32.gmra.mrb[0].mxu0 %v4850
  %v4943 = vpop.f32.mrb[0].mxu0
  %v4944 = vadd.f32 %v4815, %v4943
  %v4945 = vpop.f32.mrb[0].mxu0
  %4946 = vmatprep.mubr.f32.mxu0 0.0
  %4947 = vmatmul.mubr.f32.gmra.mrb[0].mxu0 %v4853
  %v4948 = vpop.f32.mrb[0].mxu0
  %v4949 = vadd.f32 %v4820, %v4948
  %v4950 = vpop.f32.mrb[0].mxu0
  %4951 = vmatprep.mubr.f32.mxu0 0.0
  %4952 = vmatmul.mubr.f32.gmra.mrb[0].mxu0 %v4856
  %v4953 = vpop.f32.mrb[0].mxu0
  %v4954 = vadd.f32 %v4825, %v4953
  %v4955 = vpop.f32.mrb[0].mxu0
  %4956 = vmatprep.mubr.f32.mxu0 0.0
  %4957 = vmatmul.mubr.f32.gmra.mrb[0].mxu0 %v4859
  %v4958 = vpop.f32.mrb[0].mxu0
  %v4959 = vadd.f32 %v4830, %v4958
  %v4960 = vpop.f32.mrb[0].mxu0
  %4961 = vmatprep.mubr.f32.mxu0 0.0
  %4962 = vmatmul.mubr.f32.gmra.mrb[0].mxu0 %v4862
  %v4963 = vpop.f32.mrb[0].mxu0
  %v4964 = vadd.f32 %v4835, %v4963
  %v4965 = vpop.f32.mrb[0].mxu0
  %4966 = vmatprep.mubr.f32.mxu0 0.0
  %4967 = vmatmul.mubr.f32.gmra.mrb[0].mxu0 %v4865
  %v4968 = vpop.f32.mrb[0].mxu0
  %v4969 = vadd.f32 %v4840, %v4968
  %v4970 = vpop.f32.mrb[0].mxu0
  %4971 = vdwg.mxu0
  %v4972 = vld [vmem:[%s15] sm:$0x1]
  %v4974 = vlaneseq
  %v4975 = vshrl.u32 %v4974, 7
  %v4976 = vsub.s32 0, %v4975
  %v4977 = vrot.slane %v4972, %v4976
  %v4979 = vadd.f32 %v4934, %v4977
  %v4980 = vadd.f32 %v4939, %v4977
  %v4981 = vadd.f32 %v4944, %v4977
  %v4982 = vadd.f32 %v4949, %v4977
  %v4983 = vadd.f32 %v4954, %v4977
  %v4984 = vadd.f32 %v4959, %v4977
  %v4985 = vadd.f32 %v4964, %v4977
  %v4986 = vadd.f32 %v4969, %v4977
  %v4987 = vtanh.pop %v4979
  %v4988 = vtanh.pop %v4980
  %v4989 = vtanh.pop %v4981
  %v4990 = vtanh.pop %v4982
  %v4991 = vtanh.pop %v4983
  %v4992 = vtanh.pop %v4984
  %v4993 = vtanh.pop %v4985
  %v4994 = vtanh.pop %v4986
  %v4995 = vld [vmem:[%s16] sm:$0x1]
  %v4997 = vlaneseq
  %v4998 = vshrl.u32 %v4997, 7
  %v4999 = vsub.s32 0, %v4998
  %v5000 = vrot.slane %v4995, %v4999
  %v5002 = vmul.f32 %v4987, %v5000
  %v5003 = vmul.f32 %v4988, %v5000
  %v5004 = vmul.f32 %v4989, %v5000
  %v5005 = vmul.f32 %v4990, %v5000
  %v5006 = vmul.f32 %v4991, %v5000
  %v5007 = vmul.f32 %v4992, %v5000
  %v5008 = vmul.f32 %v4993, %v5000
  %v5009 = vmul.f32 %v4994, %v5000
  %v5010 = vsel %vm2740, %v5002, 0.0
  %5011 = vadd.xlane.f32.xlu0 %v5010
  %v5012 = vpop.xlane.xlu0 %5011
  %v5013 = vsel %vm2740, %v5003, 0.0
  %5014 = vadd.xlane.f32.xlu0 %v5013
  %v5015 = vpop.xlane.xlu0 %5014
  %v5016 = vsel %vm2740, %v5004, 0.0
  %5017 = vadd.xlane.f32.xlu0 %v5016
  %v5018 = vpop.xlane.xlu0 %5017
  %v5019 = vsel %vm2740, %v5005, 0.0
  %5020 = vadd.xlane.f32.xlu0 %v5019
  %v5021 = vpop.xlane.xlu0 %5020
  %v5022 = vsel %vm2740, %v5006, 0.0
  %5023 = vadd.xlane.f32.xlu0 %v5022
  %v5024 = vpop.xlane.xlu0 %5023
  %v5025 = vsel %vm2740, %v5007, 0.0
  %5026 = vadd.xlane.f32.xlu0 %v5025
  %v5027 = vpop.xlane.xlu0 %5026
  %v5028 = vsel %vm2740, %v5008, 0.0
  %5029 = vadd.xlane.f32.xlu0 %v5028
  %v5030 = vpop.xlane.xlu0 %5029
  %v5031 = vsel %vm2740, %v5009, 0.0
  %5032 = vadd.xlane.f32.xlu0 %v5031
  %v5033 = vpop.xlane.xlu0 %5032
  %v5034 = vld [vmem:[#allocation8] sm:$0x1]
  %v5036 = vlaneseq
  %v5037 = vshrl.u32 %v5036, 7
  %v5038 = vsub.s32 0, %v5037
  %v5039 = vrot.slane %v5034, %v5038
  %v5041 = vadd.f32 %v5012, %v5039
  %v5042 = vadd.f32 %v5015, %v5039
  %v5043 = vadd.f32 %v5018, %v5039
  %v5044 = vadd.f32 %v5021, %v5039
  %v5045 = vadd.f32 %v5024, %v5039
  %v5046 = vadd.f32 %v5027, %v5039
  %v5047 = vadd.f32 %v5030, %v5039
  %v5048 = vadd.f32 %v5033, %v5039
  %v5049 = vld [vmem:[%s2] sm:$0xff]
  %vm5050 = vcmp.gt.f32.partialorder %v5049, 0.0
  %v5051 = vsel %vm5050, %v5041, -1e+30
  %v5052 = vld [vmem:[%s477] sm:$0xff]
  %vm5053 = vcmp.gt.f32.partialorder %v5052, 0.0
  %v5054 = vsel %vm5053, %v5042, -1e+30
  %v5055 = vld [vmem:[%s731] sm:$0xff]
  %vm5056 = vcmp.gt.f32.partialorder %v5055, 0.0
  %v5057 = vsel %vm5056, %v5043, -1e+30
  %v5058 = vld [vmem:[%s985] sm:$0xff]
  %vm5059 = vcmp.gt.f32.partialorder %v5058, 0.0
  %v5060 = vsel %vm5059, %v5044, -1e+30
  %v5061 = vld [vmem:[%s987] sm:$0xff]
  %vm5062 = vcmp.gt.f32.partialorder %v5061, 0.0
  %v5063 = vsel %vm5062, %v5045, -1e+30
  %v5064 = vld [vmem:[%s733] sm:$0xff]
  %vm5065 = vcmp.gt.f32.partialorder %v5064, 0.0
  %v5066 = vsel %vm5065, %v5046, -1e+30
  %v5067 = vld [vmem:[%s479] sm:$0xff]
  %vm5068 = vcmp.gt.f32.partialorder %v5067, 0.0
  %v5069 = vsel %vm5068, %v5047, -1e+30
  %v5070 = vld [vmem:[%s234] sm:$0xff]
  %vm5071 = vcmp.gt.f32.partialorder %v5070, 0.0
  %v5072 = vsel %vm5071, %v5048, -1e+30
  %v5073 = vmax.f32 %v5051, %v5054
  %v5074 = vmax.f32 %v5073, %v5057
  %v5075 = vmax.f32 %v5074, %v5060
  %v5076 = vmax.f32 %v5075, %v5063
  %v5077 = vmax.f32 %v5076, %v5066
  %v5078 = vmax.f32 %v5077, %v5069
  %v5079 = vmax.f32 %v5078, %v5072
  %v5080 = vsub.f32 %v5051, %v5079
  %v5081 = vmul.f32 %v5080, 1.442695
  %v5082 = vpow.pop %v5081
  %v5083 = vsub.f32 %v5054, %v5079
  %v5084 = vmul.f32 %v5083, 1.442695
  %v5085 = vpow.pop %v5084
  %v5086 = vsub.f32 %v5057, %v5079
  %v5087 = vmul.f32 %v5086, 1.442695
  %v5088 = vpow.pop %v5087
  %v5089 = vsub.f32 %v5060, %v5079
  %v5090 = vmul.f32 %v5089, 1.442695
  %v5091 = vpow.pop %v5090
  %v5092 = vsub.f32 %v5063, %v5079
  %v5093 = vmul.f32 %v5092, 1.442695
  %v5094 = vpow.pop %v5093
  %v5095 = vsub.f32 %v5066, %v5079
  %v5096 = vmul.f32 %v5095, 1.442695
  %v5097 = vpow.pop %v5096
  %v5098 = vsub.f32 %v5069, %v5079
  %v5099 = vmul.f32 %v5098, 1.442695
  %v5100 = vpow.pop %v5099
  %v5101 = vsub.f32 %v5072, %v5079
  %v5102 = vmul.f32 %v5101, 1.442695
  %v5103 = vpow.pop %v5102
  %v5104 = vadd.f32 %v5082, %v5085
  %v5105 = vadd.f32 %v5104, %v5088
  %v5106 = vadd.f32 %v5105, %v5091
  %v5107 = vadd.f32 %v5106, %v5094
  %v5108 = vadd.f32 %v5107, %v5097
  %v5109 = vadd.f32 %v5108, %v5100
  %v5110 = vadd.f32 %v5109, %v5103
  %v5111 = vrcp.pop %v5110
  %v5112 = vmul.f32 %v5082, %v5111
  %v5113 = vld [vmem:[#allocation6] sm:$0xff]
  %5115 = vset.pattern.permute.xlu0 0
  %5116 = vperm.xlu0 %5115, %v5112
  %v5117 = vpop.permute.xlu0 %5116
  %v5119 = vmul.f32 %v5117, %v5113
  %v5120 = vadd.f32 %v5119, 0.0
  %v5121 = vld [vmem:[#allocation7] sm:$0xff]
  %v5122 = vmul.f32 %v5117, %v5121
  %v5123 = vadd.f32 %v5122, 0.0
  %v5124 = vmul.f32 %v5085, %v5111
  %v5125 = vld [vmem:[#allocation6 + $0x8] sm:$0xff]
  %5127 = vset.pattern.permute.xlu0 0
  %5128 = vperm.xlu0 %5127, %v5124
  %v5129 = vpop.permute.xlu0 %5128
  %v5131 = vmul.f32 %v5129, %v5125
  %v5132 = vadd.f32 %v5120, %v5131
  %v5133 = vld [vmem:[#allocation7 + $0x8] sm:$0xff]
  %v5134 = vmul.f32 %v5129, %v5133
  %v5135 = vadd.f32 %v5123, %v5134
  %v5136 = vmul.f32 %v5088, %v5111
  %v5137 = vld [vmem:[#allocation6 + $0x10] sm:$0xff]
  %5139 = vset.pattern.permute.xlu0 0
  %5140 = vperm.xlu0 %5139, %v5136
  %v5141 = vpop.permute.xlu0 %5140
  %v5143 = vmul.f32 %v5141, %v5137
  %v5144 = vadd.f32 %v5132, %v5143
  %v5145 = vld [vmem:[#allocation7 + $0x10] sm:$0xff]
  %v5146 = vmul.f32 %v5141, %v5145
  %v5147 = vadd.f32 %v5135, %v5146
  %v5148 = vmul.f32 %v5091, %v5111
  %v5149 = vld [vmem:[#allocation6 + $0x18] sm:$0xff]
  %5151 = vset.pattern.permute.xlu0 0
  %5152 = vperm.xlu0 %5151, %v5148
  %v5153 = vpop.permute.xlu0 %5152
  %v5155 = vmul.f32 %v5153, %v5149
  %v5156 = vadd.f32 %v5144, %v5155
  %v5157 = vld [vmem:[#allocation7 + $0x18] sm:$0xff]
  %v5158 = vmul.f32 %v5153, %v5157
  %v5159 = vadd.f32 %v5147, %v5158
  %v5160 = vmul.f32 %v5094, %v5111
  %v5161 = vld [vmem:[#allocation6 + $0x20] sm:$0xff]
  %5163 = vset.pattern.permute.xlu0 0
  %5164 = vperm.xlu0 %5163, %v5160
  %v5165 = vpop.permute.xlu0 %5164
  %v5167 = vmul.f32 %v5165, %v5161
  %v5168 = vadd.f32 %v5156, %v5167
  %v5169 = vld [vmem:[#allocation7 + $0x20] sm:$0xff]
  %v5170 = vmul.f32 %v5165, %v5169
  %v5171 = vadd.f32 %v5159, %v5170
  %v5172 = vmul.f32 %v5097, %v5111
  %v5173 = vld [vmem:[#allocation6 + $0x28] sm:$0xff]
  %5175 = vset.pattern.permute.xlu0 0
  %5176 = vperm.xlu0 %5175, %v5172
  %v5177 = vpop.permute.xlu0 %5176
  %v5179 = vmul.f32 %v5177, %v5173
  %v5180 = vadd.f32 %v5168, %v5179
  %v5181 = vld [vmem:[#allocation7 + $0x28] sm:$0xff]
  %v5182 = vmul.f32 %v5177, %v5181
  %v5183 = vadd.f32 %v5171, %v5182
  %v5184 = vmul.f32 %v5100, %v5111
  %v5185 = vld [vmem:[#allocation6 + $0x30] sm:$0xff]
  %5187 = vset.pattern.permute.xlu0 0
  %5188 = vperm.xlu0 %5187, %v5184
  %v5189 = vpop.permute.xlu0 %5188
  %v5191 = vmul.f32 %v5189, %v5185
  %v5192 = vadd.f32 %v5180, %v5191
  %v5193 = vld [vmem:[#allocation7 + $0x30] sm:$0xff]
  %v5194 = vmul.f32 %v5189, %v5193
  %v5195 = vadd.f32 %v5183, %v5194
  %v5196 = vmul.f32 %v5103, %v5111
  %5198 = vset.pattern.permute.xlu0 0
  %5199 = vperm.xlu0 %5198, %v5196
  %v5200 = vpop.permute.xlu0 %5199
  %v5202 = vmul.f32 %v5200, %v4697
  %v5203 = vadd.f32 %v5192, %v5202
  %v5204 = vmul.f32 %v5200, %v4709
  %v5205 = vadd.f32 %v5195, %v5204
  %v5206 = vld [vmem:[%s18] sm:$0xff]
  %v5207 = vld [vmem:[%s18 + $0x8] sm:$0xff]
  %v5208 = vld [vmem:[%s18 + $0x10] sm:$0xff]
  %v5209 = vld [vmem:[%s18 + $0x18] sm:$0xff]
  %v5210 = vld [vmem:[%s19] sm:$0xff]
  %v5211 = vld [vmem:[%s19 + $0x8] sm:$0xff]
  %v5212 = vld [vmem:[%s19 + $0x10] sm:$0xff]
  %v5213 = vld [vmem:[%s19 + $0x18] sm:$0xff]
  %v5215 = vsel %vm2740, %v5205, 0
  %5217 = vmatprep.subr.mxu0 0.0
  %5218 = vmatpush1.msra.mxu0 %v5210
  %5219 = vmatprep.subr.mxu0 0.0
  %5220 = vmatpush1.msra.mxu0 %v5211
  %5221 = vmatprep.subr.mxu0 0.0
  %5222 = vmatpush1.msra.mxu0 %v5212
  %5223 = vmatprep.subr.mxu0 0.0
  %5224 = vmatpush1.msra.mxu0 %v5213
  %5225 = vmatprep.subr.mxu0 0.0
  %5226 = vmatpush1.msra.mxu0 0.0
  %5227 = vmatprep.subr.mxu0 0.0
  %5228 = vmatpush1.msra.mxu0 0.0
  %5229 = vmatprep.subr.mxu0 0.0
  %5230 = vmatpush1.msra.mxu0 0.0
  %5231 = vmatprep.subr.mxu0 0.0
  %5232 = vmatpush1.msra.mxu0 0.0
  %5233 = vmatprep.subr.mxu0 0.0
  %5234 = vmatpush1.msra.mxu0 0.0
  %5235 = vmatprep.subr.mxu0 0.0
  %5236 = vmatpush1.msra.mxu0 0.0
  %5237 = vmatprep.subr.mxu0 0.0
  %5238 = vmatpush1.msra.mxu0 0.0
  %5239 = vmatprep.subr.mxu0 0.0
  %5240 = vmatpush1.msra.mxu0 0.0
  %5241 = vmatprep.subr.mxu0 0.0
  %5242 = vmatpush1.msra.mxu0 0.0
  %5243 = vmatprep.subr.mxu0 0.0
  %5244 = vmatpush1.msra.mxu0 0.0
  %5245 = vmatprep.subr.mxu0 0.0
  %5246 = vmatpush1.msra.mxu0 0.0
  %5247 = vmatprep.subr.mxu0 0.0
  %5248 = vmatpush1.msra.mxu0 0.0
  %5249 = vmatprep.subr.mxu0 0.0
  %5250 = vmatpush1.msra.mxu0 0.0
  %5251 = vmatprep.subr.mxu0 0.0
  %5252 = vmatpush1.msra.mxu0 0.0
  %5253 = vmatprep.subr.mxu0 0.0
  %5254 = vmatpush1.msra.mxu0 0.0
  %5255 = vmatprep.subr.mxu0 0.0
  %5256 = vmatpush1.msra.mxu0 0.0
  %5257 = vmatprep.subr.mxu0 0.0
  %5258 = vmatpush1.msra.mxu0 0.0
  %5259 = vmatprep.subr.mxu0 0.0
  %5260 = vmatpush1.msra.mxu0 0.0
  %5261 = vmatprep.subr.mxu0 0.0
  %5262 = vmatpush1.msra.mxu0 0.0
  %5263 = vmatprep.subr.mxu0 0.0
  %5264 = vmatpush1.msra.mxu0 0.0
  %5265 = vmatprep.subr.mxu0 0.0
  %5266 = vmatpush1.msra.mxu0 0.0
  %5267 = vmatprep.subr.mxu0 0.0
  %5268 = vmatpush1.msra.mxu0 0.0
  %5269 = vmatprep.subr.mxu0 0.0
  %5270 = vmatpush1.msra.mxu0 0.0
  %5271 = vmatprep.subr.mxu0 0.0
  %5272 = vmatpush1.msra.mxu0 0.0
  %5273 = vmatprep.subr.mxu0 0.0
  %5274 = vmatpush1.msra.mxu0 0.0
  %5275 = vmatprep.subr.mxu0 0.0
  %5276 = vmatpush1.msra.mxu0 0.0
  %5277 = vmatprep.subr.mxu0 0.0
  %5278 = vmatpush1.msra.mxu0 0.0
  %5279 = vmatprep.subr.mxu0 0.0
  %5280 = vmatpush1.msra.mxu0 0.0
  %5281 = vmatprep.mubr.f32.mxu0 0.0
  %5282 = vmatmul.mubr.f32.gmra.mrb[0].mxu0 %v5215
  %v5283 = vpop.f32.mrb[0].mxu0
  %v5284 = vadd.f32 0.0, %v5283
  %v5285 = vpop.f32.mrb[0].mxu0
  %5286 = vdwg.mxu0
  %v5288 = vsel %vm2740, %v5203, 0
  %5290 = vmatprep.subr.mxu0 0.0
  %5291 = vmatpush1.msra.mxu0 %v5206
  %5292 = vmatprep.subr.mxu0 0.0
  %5293 = vmatpush1.msra.mxu0 %v5207
  %5294 = vmatprep.subr.mxu0 0.0
  %5295 = vmatpush1.msra.mxu0 %v5208
  %5296 = vmatprep.subr.mxu0 0.0
  %5297 = vmatpush1.msra.mxu0 %v5209
  %5298 = vmatprep.subr.mxu0 0.0
  %5299 = vmatpush1.msra.mxu0 0.0
  %5300 = vmatprep.subr.mxu0 0.0
  %5301 = vmatpush1.msra.mxu0 0.0
  %5302 = vmatprep.subr.mxu0 0.0
  %5303 = vmatpush1.msra.mxu0 0.0
  %5304 = vmatprep.subr.mxu0 0.0
  %5305 = vmatpush1.msra.mxu0 0.0
  %5306 = vmatprep.subr.mxu0 0.0
  %5307 = vmatpush1.msra.mxu0 0.0
  %5308 = vmatprep.subr.mxu0 0.0
  %5309 = vmatpush1.msra.mxu0 0.0
  %5310 = vmatprep.subr.mxu0 0.0
  %5311 = vmatpush1.msra.mxu0 0.0
  %5312 = vmatprep.subr.mxu0 0.0
  %5313 = vmatpush1.msra.mxu0 0.0
  %5314 = vmatprep.subr.mxu0 0.0
  %5315 = vmatpush1.msra.mxu0 0.0
  %5316 = vmatprep.subr.mxu0 0.0
  %5317 = vmatpush1.msra.mxu0 0.0
  %5318 = vmatprep.subr.mxu0 0.0
  %5319 = vmatpush1.msra.mxu0 0.0
  %5320 = vmatprep.subr.mxu0 0.0
  %5321 = vmatpush1.msra.mxu0 0.0
  %5322 = vmatprep.subr.mxu0 0.0
  %5323 = vmatpush1.msra.mxu0 0.0
  %5324 = vmatprep.subr.mxu0 0.0
  %5325 = vmatpush1.msra.mxu0 0.0
  %5326 = vmatprep.subr.mxu0 0.0
  %5327 = vmatpush1.msra.mxu0 0.0
  %5328 = vmatprep.subr.mxu0 0.0
  %5329 = vmatpush1.msra.mxu0 0.0
  %5330 = vmatprep.subr.mxu0 0.0
  %5331 = vmatpush1.msra.mxu0 0.0
  %5332 = vmatprep.subr.mxu0 0.0
  %5333 = vmatpush1.msra.mxu0 0.0
  %5334 = vmatprep.subr.mxu0 0.0
  %5335 = vmatpush1.msra.mxu0 0.0
  %5336 = vmatprep.subr.mxu0 0.0
  %5337 = vmatpush1.msra.mxu0 0.0
  %5338 = vmatprep.subr.mxu0 0.0
  %5339 = vmatpush1.msra.mxu0 0.0
  %5340 = vmatprep.subr.mxu0 0.0
  %5341 = vmatpush1.msra.mxu0 0.0
  %5342 = vmatprep.subr.mxu0 0.0
  %5343 = vmatpush1.msra.mxu0 0.0
  %5344 = vmatprep.subr.mxu0 0.0
  %5345 = vmatpush1.msra.mxu0 0.0
  %5346 = vmatprep.subr.mxu0 0.0
  %5347 = vmatpush1.msra.mxu0 0.0
  %5348 = vmatprep.subr.mxu0 0.0
  %5349 = vmatpush1.msra.mxu0 0.0
  %5350 = vmatprep.subr.mxu0 0.0
  %5351 = vmatpush1.msra.mxu0 0.0
  %5352 = vmatprep.subr.mxu0 0.0
  %5353 = vmatpush1.msra.mxu0 0.0
  %5354 = vmatprep.mubr.f32.mxu0 0.0
  %5355 = vmatmul.mubr.f32.gmra.mrb[0].mxu0 %v5288
  %v5356 = vpop.f32.mrb[0].mxu0
  %v5357 = vadd.f32 %v5284, %v5356
  %v5358 = vpop.f32.mrb[0].mxu0
  %5359 = vdwg.mxu0
  %v5360 = vld [vmem:[%s20] sm:$0x1]
  %v5362 = vlaneseq
  %v5363 = vshrl.u32 %v5362, 7
  %v5364 = vsub.s32 0, %v5363
  %v5365 = vrot.slane %v5360, %v5364
  %v5367 = vadd.f32 %v5357, %v5365
  %v5368 = vld [vmem:[%s21] sm:$0xff]
  %v5369 = vld [vmem:[%s21 + $0x8] sm:$0xff]
  %v5370 = vld [vmem:[%s21 + $0x10] sm:$0xff]
  %v5371 = vld [vmem:[%s21 + $0x18] sm:$0xff]
  %v5372 = vld [vmem:[%s22] sm:$0x1]
  %v5374 = vlaneseq
  %v5375 = vshrl.u32 %v5374, 7
  %v5376 = vsub.s32 0, %v5375
  %v5377 = vrot.slane %v5372, %v5376
  %v5380 = vsel %vm2740, %v5367, 0
  %5382 = vmatprep.subr.mxu0 0.0
  %5383 = vmatpush1.msra.mxu0 %v5368
  %5384 = vmatprep.subr.mxu0 0.0
  %5385 = vmatpush1.msra.mxu0 %v5369
  %5386 = vmatprep.subr.mxu0 0.0
  %5387 = vmatpush1.msra.mxu0 %v5370
  %5388 = vmatprep.subr.mxu0 0.0
  %5389 = vmatpush1.msra.mxu0 %v5371
  %5390 = vmatprep.subr.mxu0 0.0
  %5391 = vmatpush1.msra.mxu0 0.0
  %5392 = vmatprep.subr.mxu0 0.0
  %5393 = vmatpush1.msra.mxu0 0.0
  %5394 = vmatprep.subr.mxu0 0.0
  %5395 = vmatpush1.msra.mxu0 0.0
  %5396 = vmatprep.subr.mxu0 0.0
  %5397 = vmatpush1.msra.mxu0 0.0
  %5398 = vmatprep.subr.mxu0 0.0
  %5399 = vmatpush1.msra.mxu0 0.0
  %5400 = vmatprep.subr.mxu0 0.0
  %5401 = vmatpush1.msra.mxu0 0.0
  %5402 = vmatprep.subr.mxu0 0.0
  %5403 = vmatpush1.msra.mxu0 0.0
  %5404 = vmatprep.subr.mxu0 0.0
  %5405 = vmatpush1.msra.mxu0 0.0
  %5406 = vmatprep.subr.mxu0 0.0
  %5407 = vmatpush1.msra.mxu0 0.0
  %5408 = vmatprep.subr.mxu0 0.0
  %5409 = vmatpush1.msra.mxu0 0.0
  %5410 = vmatprep.subr.mxu0 0.0
  %5411 = vmatpush1.msra.mxu0 0.0
  %5412 = vmatprep.subr.mxu0 0.0
  %5413 = vmatpush1.msra.mxu0 0.0
  %5414 = vmatprep.subr.mxu0 0.0
  %5415 = vmatpush1.msra.mxu0 0.0
  %5416 = vmatprep.subr.mxu0 0.0
  %5417 = vmatpush1.msra.mxu0 0.0
  %5418 = vmatprep.subr.mxu0 0.0
  %5419 = vmatpush1.msra.mxu0 0.0
  %5420 = vmatprep.subr.mxu0 0.0
  %5421 = vmatpush1.msra.mxu0 0.0
  %5422 = vmatprep.subr.mxu0 0.0
  %5423 = vmatpush1.msra.mxu0 0.0
  %5424 = vmatprep.subr.mxu0 0.0
  %5425 = vmatpush1.msra.mxu0 0.0
  %5426 = vmatprep.subr.mxu0 0.0
  %5427 = vmatpush1.msra.mxu0 0.0
  %5428 = vmatprep.subr.mxu0 0.0
  %5429 = vmatpush1.msra.mxu0 0.0
  %5430 = vmatprep.subr.mxu0 0.0
  %5431 = vmatpush1.msra.mxu0 0.0
  %5432 = vmatprep.subr.mxu0 0.0
  %5433 = vmatpush1.msra.mxu0 0.0
  %5434 = vmatprep.subr.mxu0 0.0
  %5435 = vmatpush1.msra.mxu0 0.0
  %5436 = vmatprep.subr.mxu0 0.0
  %5437 = vmatpush1.msra.mxu0 0.0
  %5438 = vmatprep.subr.mxu0 0.0
  %5439 = vmatpush1.msra.mxu0 0.0
  %5440 = vmatprep.subr.mxu0 0.0
  %5441 = vmatpush1.msra.mxu0 0.0
  %5442 = vmatprep.subr.mxu0 0.0
  %5443 = vmatpush1.msra.mxu0 0.0
  %5444 = vmatprep.subr.mxu0 0.0
  %5445 = vmatpush1.msra.mxu0 0.0
  %5446 = vmatprep.mubr.f32.mxu0 0.0
  %5447 = vmatmul.mubr.f32.gmra.mrb[0].mxu0 %v5380
  %v5448 = vpop.f32.mrb[0].mxu0
  %v5449 = vadd.f32 %v5377, %v5448
  %v5450 = vpop.f32.mrb[0].mxu0
  %5451 = vdwg.mxu0
  %vm5452 = vcmask 23552
  %5453 = vst.msk [vmem:[%s23] sm:$0xff] %vm5452, %v5449
  // Predicated region
  $region94: #{forward.1} parent=0 // pred_check
    _
  $region95: #{forward.1} parent=0 // pred_check_branch
    %5455 = sbr.rel (0) target = $region97
  $region96: #{forward.1} parent=0 // pred_region
    _
  $region97: #{forward.1} parent=0 // pred_fallthru
    _
  // Predicated region
  $region98: #{forward.1} parent=0 // pred_check
    _
  $region99: #{forward.1} parent=0 // pred_check_branch
    %5457 = sbr.rel (0) target = $region101
  $region100: #{forward.1} parent=0 // pred_region
    _
  $region101: #{forward.1} parent=0 // pred_fallthru
    _

</llo_original>
